<compile_context>
chip_gen: v6e
topology: v6e:2x2x1
jax: 0.10.0
libtpu: 0.0.40
codegen_flags: <defaults>
</compile_context>

<pallas_src>
import functools

import jax
import jax.numpy as jnp
from jax.experimental import pallas as pl
from jax.experimental.pallas import tpu as pltpu


# ---------------------------------------------------------------------------
# Fused BasicBlock kernel
# ---------------------------------------------------------------------------
def _basic_block_kernel(*refs, N, H, W, Cin, Cout, L):
    """Fused L x (3x3 conv + bias + ReLU) followed by 2x2/stride-2 max-pool.

    refs = (x, w_0, b_0, ..., w_{L-1}, b_{L-1}, o, pad_in, pad_mid)
      x       : (N, H, W, Cin)              NHWC input
      w_l     : (9*C_l, Cout)               packed HWIO weights (C_0 = Cin)
      b_l     : (1, Cout)
      o       : (N, H//2, (W//2)*Cout)      lane-dense pooled output
      pad_in  : (N, H+2, W+2, Cin)   VMEM scratch, zero-padded layer-0 input
      pad_mid : (N, H+2, W+2, Cout)  VMEM scratch, zero-padded hidden acts
    """
    x_ref = refs[0]
    w_refs = [refs[1 + 2 * l] for l in range(L)]
    b_refs = [refs[2 + 2 * l] for l in range(L)]
    o_ref = refs[1 + 2 * L]
    pad_in = refs[2 + 2 * L]
    pad_mid = refs[3 + 2 * L]

    M = N * H * W

    # In-kernel zero padding: zero the buffers once, then only ever write the
    # interior, so the 1-pixel halo stays zero for every layer.
    pad_in[...] = jnp.zeros_like(pad_in)
    if L > 1:
        pad_mid[...] = jnp.zeros_like(pad_mid)
    pad_in[:, 1:H + 1, 1:W + 1, :] = x_ref[...]

    cur_pad = pad_in
    y = None
    for l in range(L):
        cl = cur_pad.shape[-1]
        # im2col: 9 shifted views concatenated along channels, so each layer
        # is a single packed (M, 9*cl) x (9*cl, Cout) MXU matmul instead of
        # nine near-empty K=cl matmuls.
        cols = []
        for ky in range(3):
            for kx in range(3):
                cols.append(
                    cur_pad[:, ky:ky + H, kx:kx + W, :].reshape(M, cl))
        patch = jnp.concatenate(cols, axis=1)                   # (M, 9*cl)
        # NOTE: for realistic channel counts on v6e/v7x, cast patch/weights
        # to bf16 here (keep preferred_element_type=f32). Kept f32 at C=4/8.
        acc = jnp.dot(patch, w_refs[l][...],
                      preferred_element_type=jnp.float32)       # (M, Cout)
        acc = jnp.maximum(acc + b_refs[l][...], 0.0)            # bias + ReLU
        y = acc.reshape(N, H, W, Cout)
        if l + 1 < L:
            # Inter-layer activation stays in VMEM — no HBM round-trip.
            pad_mid[:, 1:H + 1, 1:W + 1, :] = y.astype(pad_mid.dtype)
            cur_pad = pad_mid

    # Fused 2x2 / stride-2 max pool in the epilogue; store lane-dense as
    # (N, H//2, (W//2)*Cout) so the final store is not a masked 8-lane vst.
    Ho, Wo = H // 2, W // 2
    yw = jnp.max(y.reshape(N * H, Wo, 2, Cout), axis=2)         # pool along W
    yhw = jnp.max(yw.reshape(N, Ho, 2, Wo * Cout), axis=2)      # pool along H
    o_ref[...] = yhw.astype(o_ref.dtype)


# ---------------------------------------------------------------------------
# Wrapper
# ---------------------------------------------------------------------------
def basic_block_forward(params, x_nhwc):
    """Fused BasicBlock forward. x_nhwc: (N,H,W,Cin) -> (N,H//2,W//2,Cout)."""
    N, H, W, Cin = x_nhwc.shape
    assert H % 2 == 0 and W % 2 == 0, "MaxPool2d(2,2) path assumes even H, W"
    L = len(params)
    Cout = params[0][0].shape[-1]
    Ho, Wo = H // 2, W // 2

    # Pack weights (3,3,Cl,Cout) -> (9*Cl, Cout) matching the in-kernel
    # (ky, kx, ci) im2col channel order; biases as (1, Cout) rows.
    flat_inputs = [x_nhwc]
    in_specs = [pl.BlockSpec((N, H, W, Cin), lambda i: (0, 0, 0, 0))]
    for (w, b) in params:
        kcl = w.shape[0] * w.shape[1] * w.shape[2]
        flat_inputs.append(w.reshape(kcl, Cout).astype(jnp.float32))
        flat_inputs.append(b.reshape(1, Cout).astype(jnp.float32))
        in_specs.append(pl.BlockSpec((kcl, Cout), lambda i: (0, 0)))
        in_specs.append(pl.BlockSpec((1, Cout), lambda i: (0, 0)))

    kernel = functools.partial(
        _basic_block_kernel, N=N, H=H, W=W, Cin=Cin, Cout=Cout, L=L)

    out = pl.pallas_call(
        kernel,
        out_shape=jax.ShapeDtypeStruct((N, Ho, Wo * Cout), x_nhwc.dtype),
        grid_spec=pltpu.PrefetchScalarGridSpec(
            num_scalar_prefetch=0,
            grid=(1,),  # whole block in one invocation; batch folded into M
            in_specs=in_specs,
            out_specs=pl.BlockSpec((N, Ho, Wo * Cout), lambda i: (0, 0, 0)),
            scratch_shapes=[
                pltpu.VMEM((N, H + 2, W + 2, Cin), jnp.float32),
                pltpu.VMEM((N, H + 2, W + 2, Cout), jnp.float32),
            ],
        ),
        compiler_params=pltpu.CompilerParams(
            dimension_semantics=("arbitrary",),
        ),
    )(*flat_inputs)

    # Free reshape (NHWC contiguity) back to (N, H//2, W//2, Cout).
    return out.reshape(N, Ho, Wo, Cout)


# ---------------------------------------------------------------------------
# Parameters (batchnorm=False, matching the module's default usage)
# ---------------------------------------------------------------------------
def init_basic_block_params(key, layer_num, in_channels, out_channels):
    """Deterministic synthetic params: list of (w, b) with w in HWIO layout."""
    params = []
    cin = in_channels
    for _ in range(layer_num):
        key, kw, kb = jax.random.split(key, 3)
        fan_in = cin * 3 * 3
        w = jax.random.normal(kw, (3, 3, cin, out_channels), jnp.float32)
        w = w * (1.0 / jnp.sqrt(fan_in))
        b = 0.01 * jax.random.normal(kb, (out_channels,), jnp.float32)
        params.append((w, b))
        cin = out_channels
    return params
    # TODO(synk): batchnorm=True branch not implemented (default is False);
    # it would fold into a per-channel scale/shift before the ReLU in-kernel.


# ---------------------------------------------------------------------------
# Pure-JAX reference (correctness sanity check)
# ---------------------------------------------------------------------------
def basic_block_reference(params, x_nhwc):
    y = x_nhwc
    for (w, b) in params:
        y = jax.lax.conv_general_dilated(
            y, w, window_strides=(1, 1), padding="SAME",
            dimension_numbers=("NHWC", "HWIO", "NHWC"),
        )
        y = jnp.maximum(y + b, 0.0)
    y = jax.lax.reduce_window(
        y, -jnp.inf, jax.lax.max,
        window_dimensions=(1, 2, 2, 1),
        window_strides=(1, 2, 2, 1),
        padding="VALID",
    )
    return y


if __name__ == "__main__":
    # Module config: BasicBlock(layer_num=2, in_channels=4, out_channels=8)
    layer_num, in_ch, out_ch = 2, 4, 8
    N, H, W = 2, 16, 16

    key = jax.random.PRNGKey(0)
    key, kx = jax.random.split(key)
    # PyTorch-style NCHW input, transposed to NHWC for the kernel.
    x_nchw = jax.random.normal(kx, (N, in_ch, H, W), jnp.float32)
    x_nhwc = jnp.transpose(x_nchw, (0, 2, 3, 1))

    params = init_basic_block_params(key, layer_num, in_ch, out_ch)

    out = basic_block_forward(params, x_nhwc)
    out = jax.block_until_ready(out)

    ref = basic_block_reference(params, x_nhwc)
    assert out.shape == (N, H // 2, W // 2, out_ch), out.shape
    assert jnp.allclose(out, ref, atol=1e-4, rtol=1e-4), "mismatch vs reference"

    print("KERNEL_OK")
</pallas_src>

<mosaic_0001>
module attributes {stable_mosaic.version = 11 : i64} {
  func.func @_basic_block_kernel(%arg0: i32, %arg1: memref<2x16x16x4xf32, #tpu.memory_space<vmem>>, %arg2: memref<36x8xf32, #tpu.memory_space<vmem>>, %arg3: memref<1x8xf32, #tpu.memory_space<vmem>>, %arg4: memref<72x8xf32, #tpu.memory_space<vmem>>, %arg5: memref<1x8xf32, #tpu.memory_space<vmem>>, %arg6: memref<2x8x64xf32, #tpu.memory_space<vmem>>, %arg7: memref<2x18x18x4xf32, #tpu.memory_space<vmem>>, %arg8: memref<2x18x18x8xf32, #tpu.memory_space<vmem>>) attributes {dimension_semantics = [#tpu.dimension_semantics<arbitrary>], iteration_bounds = array<i64: 1>, scalar_prefetch = 0 : i64, scratch_operands = 2 : i64, tpu.core_type = #tpu.core_type<tc>, window_params = [{pipeline_mode = #tpu.pipeline_mode<synchronous>, transform_indices = @transform_0, window_bounds = array<i64: 2, 16, 16, 4>}, {pipeline_mode = #tpu.pipeline_mode<synchronous>, transform_indices = @transform_1, window_bounds = array<i64: 36, 8>}, {pipeline_mode = #tpu.pipeline_mode<synchronous>, transform_indices = @transform_2, window_bounds = array<i64: 1, 8>}, {pipeline_mode = #tpu.pipeline_mode<synchronous>, transform_indices = @transform_3, window_bounds = array<i64: 72, 8>}, {pipeline_mode = #tpu.pipeline_mode<synchronous>, transform_indices = @transform_4, window_bounds = array<i64: 1, 8>}, {pipeline_mode = #tpu.pipeline_mode<synchronous>, transform_indices = @transform_5, window_bounds = array<i64: 2, 8, 64>}]} {
    %cst = arith.constant 0.000000e+00 : f32
    %0 = vector.broadcast %cst : f32 to vector<2x18x18x4xf32>
    %c0 = arith.constant 0 : index
    %c0_0 = arith.constant 0 : index
    %c0_1 = arith.constant 0 : index
    %c0_2 = arith.constant 0 : index
    %1 = vector.load %arg7[%c0, %c0_0, %c0_1, %c0_2] : memref<2x18x18x4xf32, #tpu.memory_space<vmem>>, vector<2x18x18x4xf32>
    tpu.vector_store %arg7[%c0, %c0_0, %c0_1, %c0_2], %0 {strides = array<i32>} : memref<2x18x18x4xf32, #tpu.memory_space<vmem>>, vector<2x18x18x4xf32>,
    %cst_3 = arith.constant 0.000000e+00 : f32
    %2 = vector.broadcast %cst_3 : f32 to vector<2x18x18x8xf32>
    %c0_4 = arith.constant 0 : index
    %c0_5 = arith.constant 0 : index
    %c0_6 = arith.constant 0 : index
    %c0_7 = arith.constant 0 : index
    %3 = vector.load %arg8[%c0_4, %c0_5, %c0_6, %c0_7] : memref<2x18x18x8xf32, #tpu.memory_space<vmem>>, vector<2x18x18x8xf32>
    tpu.vector_store %arg8[%c0_4, %c0_5, %c0_6, %c0_7], %2 {strides = array<i32>} : memref<2x18x18x8xf32, #tpu.memory_space<vmem>>, vector<2x18x18x8xf32>,
    %c0_8 = arith.constant 0 : index
    %c0_9 = arith.constant 0 : index
    %c0_10 = arith.constant 0 : index
    %c0_11 = arith.constant 0 : index
    %4 = vector.load %arg1[%c0_8, %c0_9, %c0_10, %c0_11] : memref<2x16x16x4xf32, #tpu.memory_space<vmem>>, vector<2x16x16x4xf32>
    %c0_12 = arith.constant 0 : index
    %c1 = arith.constant 1 : index
    %c1_13 = arith.constant 1 : index
    %c0_14 = arith.constant 0 : index
    %5 = vector.load %arg7[%c0_12, %c1, %c1_13, %c0_14] : memref<2x18x18x4xf32, #tpu.memory_space<vmem>>, vector<2x16x16x4xf32>
    tpu.vector_store %arg7[%c0_12, %c1, %c1_13, %c0_14], %4 {strides = array<i32>} : memref<2x18x18x4xf32, #tpu.memory_space<vmem>>, vector<2x16x16x4xf32>,
    %c0_15 = arith.constant 0 : index
    %c0_16 = arith.constant 0 : index
    %c0_17 = arith.constant 0 : index
    %c0_18 = arith.constant 0 : index
    %6 = vector.load %arg7[%c0_15, %c0_16, %c0_17, %c0_18] : memref<2x18x18x4xf32, #tpu.memory_space<vmem>>, vector<2x16x16x4xf32>
    %7 = vector.shape_cast %6 : vector<2x16x16x4xf32> to vector<512x4xf32>
    %c0_19 = arith.constant 0 : index
    %c0_20 = arith.constant 0 : index
    %c1_21 = arith.constant 1 : index
    %c0_22 = arith.constant 0 : index
    %8 = vector.load %arg7[%c0_19, %c0_20, %c1_21, %c0_22] : memref<2x18x18x4xf32, #tpu.memory_space<vmem>>, vector<2x16x16x4xf32>
    %9 = vector.shape_cast %8 : vector<2x16x16x4xf32> to vector<512x4xf32>
    %c0_23 = arith.constant 0 : index
    %c0_24 = arith.constant 0 : index
    %c2 = arith.constant 2 : index
    %c0_25 = arith.constant 0 : index
    %10 = vector.load %arg7[%c0_23, %c0_24, %c2, %c0_25] : memref<2x18x18x4xf32, #tpu.memory_space<vmem>>, vector<2x16x16x4xf32>
    %11 = vector.shape_cast %10 : vector<2x16x16x4xf32> to vector<512x4xf32>
    %c0_26 = arith.constant 0 : index
    %c1_27 = arith.constant 1 : index
    %c0_28 = arith.constant 0 : index
    %c0_29 = arith.constant 0 : index
    %12 = vector.load %arg7[%c0_26, %c1_27, %c0_28, %c0_29] : memref<2x18x18x4xf32, #tpu.memory_space<vmem>>, vector<2x16x16x4xf32>
    %13 = vector.shape_cast %12 : vector<2x16x16x4xf32> to vector<512x4xf32>
    %c0_30 = arith.constant 0 : index
    %c1_31 = arith.constant 1 : index
    %c1_32 = arith.constant 1 : index
    %c0_33 = arith.constant 0 : index
    %14 = vector.load %arg7[%c0_30, %c1_31, %c1_32, %c0_33] : memref<2x18x18x4xf32, #tpu.memory_space<vmem>>, vector<2x16x16x4xf32>
    %15 = vector.shape_cast %14 : vector<2x16x16x4xf32> to vector<512x4xf32>
    %c0_34 = arith.constant 0 : index
    %c1_35 = arith.constant 1 : index
    %c2_36 = arith.constant 2 : index
    %c0_37 = arith.constant 0 : index
    %16 = vector.load %arg7[%c0_34, %c1_35, %c2_36, %c0_37] : memref<2x18x18x4xf32, #tpu.memory_space<vmem>>, vector<2x16x16x4xf32>
    %17 = vector.shape_cast %16 : vector<2x16x16x4xf32> to vector<512x4xf32>
    %c0_38 = arith.constant 0 : index
    %c2_39 = arith.constant 2 : index
    %c0_40 = arith.constant 0 : index
    %c0_41 = arith.constant 0 : index
    %18 = vector.load %arg7[%c0_38, %c2_39, %c0_40, %c0_41] : memref<2x18x18x4xf32, #tpu.memory_space<vmem>>, vector<2x16x16x4xf32>
    %19 = vector.shape_cast %18 : vector<2x16x16x4xf32> to vector<512x4xf32>
    %c0_42 = arith.constant 0 : index
    %c2_43 = arith.constant 2 : index
    %c1_44 = arith.constant 1 : index
    %c0_45 = arith.constant 0 : index
    %20 = vector.load %arg7[%c0_42, %c2_43, %c1_44, %c0_45] : memref<2x18x18x4xf32, #tpu.memory_space<vmem>>, vector<2x16x16x4xf32>
    %21 = vector.shape_cast %20 : vector<2x16x16x4xf32> to vector<512x4xf32>
    %c0_46 = arith.constant 0 : index
    %c2_47 = arith.constant 2 : index
    %c2_48 = arith.constant 2 : index
    %c0_49 = arith.constant 0 : index
    %22 = vector.load %arg7[%c0_46, %c2_47, %c2_48, %c0_49] : memref<2x18x18x4xf32, #tpu.memory_space<vmem>>, vector<2x16x16x4xf32>
    %23 = vector.shape_cast %22 : vector<2x16x16x4xf32> to vector<512x4xf32>
    %24 = tpu.concatenate %7, %9, %11, %13, %15, %17, %19, %21, %23 in 1 : vector<512x4xf32>, vector<512x4xf32>, vector<512x4xf32>, vector<512x4xf32>, vector<512x4xf32>, vector<512x4xf32>, vector<512x4xf32>, vector<512x4xf32>, vector<512x4xf32> -> vector<512x36xf32>
    %c0_50 = arith.constant 0 : index
    %c0_51 = arith.constant 0 : index
    %25 = vector.load %arg2[%c0_50, %c0_51] : memref<36x8xf32, #tpu.memory_space<vmem>>, vector<36x8xf32>
    %cst_52 = arith.constant dense<0.000000e+00> : vector<512x8xf32>
    %26 = tpu.matmul %24, %25, %cst_52 {dimension_numbers = #tpu.dot_dimension_numbers<[1], [0], [0], [1], [0, 0, 1, 1], [], []>} : vector<512x36xf32>, vector<36x8xf32>, vector<512x8xf32> -> vector<512x8xf32>
    %c0_53 = arith.constant 0 : index
    %c0_54 = arith.constant 0 : index
    %27 = vector.load %arg3[%c0_53, %c0_54] : memref<1x8xf32, #tpu.memory_space<vmem>>, vector<1x8xf32>
    %28 = vector.broadcast %27 : vector<1x8xf32> to vector<512x8xf32>
    %29 = arith.addf %26, %28 : vector<512x8xf32>
    %cst_55 = arith.constant 0.000000e+00 : f32
    %30 = vector.broadcast %cst_55 : f32 to vector<512x8xf32>
    %31 = arith.maximumf %29, %30 : vector<512x8xf32>
    %32 = vector.shape_cast %31 : vector<512x8xf32> to vector<2x16x16x8xf32>
    %c0_56 = arith.constant 0 : index
    %c1_57 = arith.constant 1 : index
    %c1_58 = arith.constant 1 : index
    %c0_59 = arith.constant 0 : index
    %33 = vector.load %arg8[%c0_56, %c1_57, %c1_58, %c0_59] : memref<2x18x18x8xf32, #tpu.memory_space<vmem>>, vector<2x16x16x8xf32>
    tpu.vector_store %arg8[%c0_56, %c1_57, %c1_58, %c0_59], %32 {strides = array<i32>} : memref<2x18x18x8xf32, #tpu.memory_space<vmem>>, vector<2x16x16x8xf32>,
    %c0_60 = arith.constant 0 : index
    %c0_61 = arith.constant 0 : index
    %c0_62 = arith.constant 0 : index
    %c0_63 = arith.constant 0 : index
    %34 = vector.load %arg8[%c0_60, %c0_61, %c0_62, %c0_63] : memref<2x18x18x8xf32, #tpu.memory_space<vmem>>, vector<2x16x16x8xf32>
    %35 = vector.shape_cast %34 : vector<2x16x16x8xf32> to vector<512x8xf32>
    %c0_64 = arith.constant 0 : index
    %c0_65 = arith.constant 0 : index
    %c1_66 = arith.constant 1 : index
    %c0_67 = arith.constant 0 : index
    %36 = vector.load %arg8[%c0_64, %c0_65, %c1_66, %c0_67] : memref<2x18x18x8xf32, #tpu.memory_space<vmem>>, vector<2x16x16x8xf32>
    %37 = vector.shape_cast %36 : vector<2x16x16x8xf32> to vector<512x8xf32>
    %c0_68 = arith.constant 0 : index
    %c0_69 = arith.constant 0 : index
    %c2_70 = arith.constant 2 : index
    %c0_71 = arith.constant 0 : index
    %38 = vector.load %arg8[%c0_68, %c0_69, %c2_70, %c0_71] : memref<2x18x18x8xf32, #tpu.memory_space<vmem>>, vector<2x16x16x8xf32>
    %39 = vector.shape_cast %38 : vector<2x16x16x8xf32> to vector<512x8xf32>
    %c0_72 = arith.constant 0 : index
    %c1_73 = arith.constant 1 : index
    %c0_74 = arith.constant 0 : index
    %c0_75 = arith.constant 0 : index
    %40 = vector.load %arg8[%c0_72, %c1_73, %c0_74, %c0_75] : memref<2x18x18x8xf32, #tpu.memory_space<vmem>>, vector<2x16x16x8xf32>
    %41 = vector.shape_cast %40 : vector<2x16x16x8xf32> to vector<512x8xf32>
    %c0_76 = arith.constant 0 : index
    %c1_77 = arith.constant 1 : index
    %c1_78 = arith.constant 1 : index
    %c0_79 = arith.constant 0 : index
    %42 = vector.load %arg8[%c0_76, %c1_77, %c1_78, %c0_79] : memref<2x18x18x8xf32, #tpu.memory_space<vmem>>, vector<2x16x16x8xf32>
    %43 = vector.shape_cast %42 : vector<2x16x16x8xf32> to vector<512x8xf32>
    %c0_80 = arith.constant 0 : index
    %c1_81 = arith.constant 1 : index
    %c2_82 = arith.constant 2 : index
    %c0_83 = arith.constant 0 : index
    %44 = vector.load %arg8[%c0_80, %c1_81, %c2_82, %c0_83] : memref<2x18x18x8xf32, #tpu.memory_space<vmem>>, vector<2x16x16x8xf32>
    %45 = vector.shape_cast %44 : vector<2x16x16x8xf32> to vector<512x8xf32>
    %c0_84 = arith.constant 0 : index
    %c2_85 = arith.constant 2 : index
    %c0_86 = arith.constant 0 : index
    %c0_87 = arith.constant 0 : index
    %46 = vector.load %arg8[%c0_84, %c2_85, %c0_86, %c0_87] : memref<2x18x18x8xf32, #tpu.memory_space<vmem>>, vector<2x16x16x8xf32>
    %47 = vector.shape_cast %46 : vector<2x16x16x8xf32> to vector<512x8xf32>
    %c0_88 = arith.constant 0 : index
    %c2_89 = arith.constant 2 : index
    %c1_90 = arith.constant 1 : index
    %c0_91 = arith.constant 0 : index
    %48 = vector.load %arg8[%c0_88, %c2_89, %c1_90, %c0_91] : memref<2x18x18x8xf32, #tpu.memory_space<vmem>>, vector<2x16x16x8xf32>
    %49 = vector.shape_cast %48 : vector<2x16x16x8xf32> to vector<512x8xf32>
    %c0_92 = arith.constant 0 : index
    %c2_93 = arith.constant 2 : index
    %c2_94 = arith.constant 2 : index
    %c0_95 = arith.constant 0 : index
    %50 = vector.load %arg8[%c0_92, %c2_93, %c2_94, %c0_95] : memref<2x18x18x8xf32, #tpu.memory_space<vmem>>, vector<2x16x16x8xf32>
    %51 = vector.shape_cast %50 : vector<2x16x16x8xf32> to vector<512x8xf32>
    %52 = tpu.concatenate %35, %37, %39, %41, %43, %45, %47, %49, %51 in 1 : vector<512x8xf32>, vector<512x8xf32>, vector<512x8xf32>, vector<512x8xf32>, vector<512x8xf32>, vector<512x8xf32>, vector<512x8xf32>, vector<512x8xf32>, vector<512x8xf32> -> vector<512x72xf32>
    %c0_96 = arith.constant 0 : index
    %c0_97 = arith.constant 0 : index
    %53 = vector.load %arg4[%c0_96, %c0_97] : memref<72x8xf32, #tpu.memory_space<vmem>>, vector<72x8xf32>
    %cst_98 = arith.constant dense<0.000000e+00> : vector<512x8xf32>
    %54 = tpu.matmul %52, %53, %cst_98 {dimension_numbers = #tpu.dot_dimension_numbers<[1], [0], [0], [1], [0, 0, 1, 1], [], []>} : vector<512x72xf32>, vector<72x8xf32>, vector<512x8xf32> -> vector<512x8xf32>
    %c0_99 = arith.constant 0 : index
    %c0_100 = arith.constant 0 : index
    %55 = vector.load %arg5[%c0_99, %c0_100] : memref<1x8xf32, #tpu.memory_space<vmem>>, vector<1x8xf32>
    %56 = vector.broadcast %55 : vector<1x8xf32> to vector<512x8xf32>
    %57 = arith.addf %54, %56 : vector<512x8xf32>
    %cst_101 = arith.constant 0.000000e+00 : f32
    %58 = vector.broadcast %cst_101 : f32 to vector<512x8xf32>
    %59 = arith.maximumf %57, %58 : vector<512x8xf32>
    %60 = vector.shape_cast %59 : vector<512x8xf32> to vector<2x16x16x8xf32>
    %61 = vector.shape_cast %60 : vector<2x16x16x8xf32> to vector<32x8x2x8xf32>
    %cst_102 = arith.constant dense<0xFF800000> : vector<32x8x8xf32>
    %62 = vector.multi_reduction <maximumf>, %61, %cst_102 [2] : vector<32x8x2x8xf32> to vector<32x8x8xf32>
    %63 = vector.shape_cast %62 : vector<32x8x8xf32> to vector<2x8x2x64xf32>
    %cst_103 = arith.constant dense<0xFF800000> : vector<2x8x64xf32>
    %64 = vector.multi_reduction <maximumf>, %63, %cst_103 [2] : vector<2x8x2x64xf32> to vector<2x8x64xf32>
    %c0_104 = arith.constant 0 : index
    %c0_105 = arith.constant 0 : index
    %c0_106 = arith.constant 0 : index
    %65 = vector.load %arg6[%c0_104, %c0_105, %c0_106] : memref<2x8x64xf32, #tpu.memory_space<vmem>>, vector<2x8x64xf32>
    tpu.vector_store %arg6[%c0_104, %c0_105, %c0_106], %64 {strides = array<i32>} : memref<2x8x64xf32, #tpu.memory_space<vmem>>, vector<2x8x64xf32>,
    return
  }
  func.func @transform_0(%arg0: i32) -> (i32, i32, i32, i32) {
    %c0_i32 = arith.constant 0 : i32
    %c0_i32_0 = arith.constant 0 : i32
    %c0_i32_1 = arith.constant 0 : i32
    %c0_i32_2 = arith.constant 0 : i32
    %c0_i32_3 = arith.constant 0 : i32
    return %c0_i32, %c0_i32_0, %c0_i32_1, %c0_i32_2 : i32, i32, i32, i32
  }
  func.func @transform_1(%arg0: i32) -> (i32, i32) {
    %c0_i32 = arith.constant 0 : i32
    %c0_i32_0 = arith.constant 0 : i32
    %c0_i32_1 = arith.constant 0 : i32
    return %c0_i32, %c0_i32_0 : i32, i32
  }
  func.func @transform_2(%arg0: i32) -> (i32, i32) {
    %c0_i32 = arith.constant 0 : i32
    %c0_i32_0 = arith.constant 0 : i32
    %c0_i32_1 = arith.constant 0 : i32
    return %c0_i32, %c0_i32_0 : i32, i32
  }
  func.func @transform_3(%arg0: i32) -> (i32, i32) {
    %c0_i32 = arith.constant 0 : i32
    %c0_i32_0 = arith.constant 0 : i32
    %c0_i32_1 = arith.constant 0 : i32
    return %c0_i32, %c0_i32_0 : i32, i32
  }
  func.func @transform_4(%arg0: i32) -> (i32, i32) {
    %c0_i32 = arith.constant 0 : i32
    %c0_i32_0 = arith.constant 0 : i32
    %c0_i32_1 = arith.constant 0 : i32
    return %c0_i32, %c0_i32_0 : i32, i32
  }
  func.func @transform_5(%arg0: i32) -> (i32, i32, i32) {
    %c0_i32 = arith.constant 0 : i32
    %c0_i32_0 = arith.constant 0 : i32
    %c0_i32_1 = arith.constant 0 : i32
    %c0_i32_2 = arith.constant 0 : i32
    return %c0_i32, %c0_i32_0, %c0_i32_1 : i32, i32, i32
  }
}

</mosaic_0001>

<llo_original>
// kernel: tpu_custom_call.1
$region0: #{tpu_custom_call.1}
  #allocation0 [shape = 'u32[]', space=smem, size = 0x4, offset = 0x4, fixed_abs, tag = 'smem constant byte address 0x4 - core index']
  #allocation1 [shape = 'u32[144,128]{1,0:T(1,128)}', space=vmem, size = 0x12000, scoped, tag = 'internal scratch']
  #allocation2 [shape = 'f32[2,18,18,4]{3,2,1,0:T(8,128)}', space=vmem, size = 0x6c000, scoped, tag = 'scratch operand']
  #allocation3 [shape = 'f32[2,18,18,8]{3,2,1,0:T(8,128)}', space=vmem, size = 0x6c000, scoped, tag = 'scratch operand']
  %s0 = inlined_call_operand.vmem [shape: f32[2,16,16,4], index: 0, kind: input, shape index: {}]
  %s1 = inlined_call_operand.vmem [shape: f32[36,8], index: 1, kind: input, shape index: {}]
  %s2 = inlined_call_operand.vmem [shape: f32[1,8], index: 2, kind: input, shape index: {}]
  %s3 = inlined_call_operand.vmem [shape: f32[72,8], index: 3, kind: input, shape index: {}]
  %s4 = inlined_call_operand.vmem [shape: f32[1,8], index: 4, kind: input, shape index: {}]
  %s5 = inlined_call_operand.hbm [shape: f32[2,8,64], index: 5, kind: output, shape index: {}]
  %s6 = sld [smem:[#allocation0]]
  $region30: #{tpu_custom_call.1} parent=0
    _
  %s8 = ssub.s32 1, %s6
  %s9 = scalar_select 0, %s8, %s6
  $region1: #{tpu_custom_call.1} parent=0
    #allocation4 [shape = 'u8[8192]{0}', space=vmem, size = 0x2000, scoped, tag = 'output window, operand 0, single buffered']
    #allocation5 [shape = 's32[1]{0}', space=sflag, size = 0x4, scoped, tag = 'scoped memory for tpu_custom_call.1']
    %10 = vsyncpa [#allocation5], 0
    // Predicated region
    $region2: #{tpu_custom_call.1} parent=1 // pred_check
      _
    $region3: #{tpu_custom_call.1} parent=1 // pred_check_branch
      %12 = sbr.rel (0) target = $region5
    $region4: #{tpu_custom_call.1} parent=1 // pred_region
      _
    $region5: #{tpu_custom_call.1} parent=1 // pred_fallthru
      _
    // Predicated region
    $region6: #{tpu_custom_call.1} parent=1 // pred_check
      _
    $region7: #{tpu_custom_call.1} parent=1 // pred_check_branch
      %14 = sbr.rel (0) target = $region9
    $region8: #{tpu_custom_call.1} parent=1 // pred_region
      _
    $region9: #{tpu_custom_call.1} parent=1 // pred_fallthru
      _
    // Predicated region
    $region10: #{tpu_custom_call.1} parent=1 // pred_check
      _
    $region11: #{tpu_custom_call.1} parent=1 // pred_check_branch
      %16 = sbr.rel (0) target = $region13
    $region12: #{tpu_custom_call.1} parent=1 // pred_region
      _
    $region13: #{tpu_custom_call.1} parent=1 // pred_fallthru
      _
    // Predicated region
    $region14: #{tpu_custom_call.1} parent=1 // pred_check
      _
    $region15: #{tpu_custom_call.1} parent=1 // pred_check_branch
      %18 = sbr.rel (0) target = $region17
    $region16: #{tpu_custom_call.1} parent=1 // pred_region
      _
    $region17: #{tpu_custom_call.1} parent=1 // pred_fallthru
      _
    // Predicated region
    $region18: #{tpu_custom_call.1} parent=1 // pred_check
      _
    $region19: #{tpu_custom_call.1} parent=1 // pred_check_branch
      %20 = sbr.rel (0) target = $region21
    $region20: #{tpu_custom_call.1} parent=1 // pred_region
      _
    $region21: #{tpu_custom_call.1} parent=1 // pred_fallthru
      _
    %vm21 = vcmask 31744
    %22 = vst.msk [vmem:[#allocation2] sm:$0xff] %vm21, 0.0
    %23 = vst.msk [vmem:[#allocation2 + $0x8] sm:$0xff] %vm21, 0.0
    %vm24 = vcmask 25600
    %25 = vst.msk [vmem:[#allocation2 + $0x10] sm:$0x3] %vm24, 0.0
    %26 = vst.msk [vmem:[#allocation2 + $0x18] sm:$0xff] %vm21, 0.0
    %27 = vst.msk [vmem:[#allocation2 + $0x20] sm:$0xff] %vm21, 0.0
    %28 = vst.msk [vmem:[#allocation2 + $0x28] sm:$0x3] %vm24, 0.0
    %29 = vst.msk [vmem:[#allocation2 + $0x30] sm:$0xff] %vm21, 0.0
    %30 = vst.msk [vmem:[#allocation2 + $0x38] sm:$0xff] %vm21, 0.0
    %31 = vst.msk [vmem:[#allocation2 + $0x40] sm:$0x3] %vm24, 0.0
    %32 = vst.msk [vmem:[#allocation2 + $0x48] sm:$0xff] %vm21, 0.0
    %33 = vst.msk [vmem:[#allocation2 + $0x50] sm:$0xff] %vm21, 0.0
    %34 = vst.msk [vmem:[#allocation2 + $0x58] sm:$0x3] %vm24, 0.0
    %35 = vst.msk [vmem:[#allocation2 + $0x60] sm:$0xff] %vm21, 0.0
    %36 = vst.msk [vmem:[#allocation2 + $0x68] sm:$0xff] %vm21, 0.0
    %37 = vst.msk [vmem:[#allocation2 + $0x70] sm:$0x3] %vm24, 0.0
    %38 = vst.msk [vmem:[#allocation2 + $0x78] sm:$0xff] %vm21, 0.0
    %39 = vst.msk [vmem:[#allocation2 + $0x80] sm:$0xff] %vm21, 0.0
    %40 = vst.msk [vmem:[#allocation2 + $0x88] sm:$0x3] %vm24, 0.0
    %41 = vst.msk [vmem:[#allocation2 + $0x90] sm:$0xff] %vm21, 0.0
    %42 = vst.msk [vmem:[#allocation2 + $0x98] sm:$0xff] %vm21, 0.0
    %43 = vst.msk [vmem:[#allocation2 + $0xa0] sm:$0x3] %vm24, 0.0
    %44 = vst.msk [vmem:[#allocation2 + $0xa8] sm:$0xff] %vm21, 0.0
    %45 = vst.msk [vmem:[#allocation2 + $0xb0] sm:$0xff] %vm21, 0.0
    %46 = vst.msk [vmem:[#allocation2 + $0xb8] sm:$0x3] %vm24, 0.0
    %47 = vst.msk [vmem:[#allocation2 + $0xc0] sm:$0xff] %vm21, 0.0
    %48 = vst.msk [vmem:[#allocation2 + $0xc8] sm:$0xff] %vm21, 0.0
    %49 = vst.msk [vmem:[#allocation2 + $0xd0] sm:$0x3] %vm24, 0.0
    %50 = vst.msk [vmem:[#allocation2 + $0xd8] sm:$0xff] %vm21, 0.0
    %51 = vst.msk [vmem:[#allocation2 + $0xe0] sm:$0xff] %vm21, 0.0
    %52 = vst.msk [vmem:[#allocation2 + $0xe8] sm:$0x3] %vm24, 0.0
    %53 = vst.msk [vmem:[#allocation2 + $0xf0] sm:$0xff] %vm21, 0.0
    %54 = vst.msk [vmem:[#allocation2 + $0xf8] sm:$0xff] %vm21, 0.0
    %55 = vst.msk [vmem:[#allocation2 + $0x100] sm:$0x3] %vm24, 0.0
    %56 = vst.msk [vmem:[#allocation2 + $0x108] sm:$0xff] %vm21, 0.0
    %57 = vst.msk [vmem:[#allocation2 + $0x110] sm:$0xff] %vm21, 0.0
    %58 = vst.msk [vmem:[#allocation2 + $0x118] sm:$0x3] %vm24, 0.0
    %59 = vst.msk [vmem:[#allocation2 + $0x120] sm:$0xff] %vm21, 0.0
    %60 = vst.msk [vmem:[#allocation2 + $0x128] sm:$0xff] %vm21, 0.0
    %61 = vst.msk [vmem:[#allocation2 + $0x130] sm:$0x3] %vm24, 0.0
    %62 = vst.msk [vmem:[#allocation2 + $0x138] sm:$0xff] %vm21, 0.0
    %63 = vst.msk [vmem:[#allocation2 + $0x140] sm:$0xff] %vm21, 0.0
    %64 = vst.msk [vmem:[#allocation2 + $0x148] sm:$0x3] %vm24, 0.0
    %65 = vst.msk [vmem:[#allocation2 + $0x150] sm:$0xff] %vm21, 0.0
    %66 = vst.msk [vmem:[#allocation2 + $0x158] sm:$0xff] %vm21, 0.0
    %67 = vst.msk [vmem:[#allocation2 + $0x160] sm:$0x3] %vm24, 0.0
    %68 = vst.msk [vmem:[#allocation2 + $0x168] sm:$0xff] %vm21, 0.0
    %69 = vst.msk [vmem:[#allocation2 + $0x170] sm:$0xff] %vm21, 0.0
    %70 = vst.msk [vmem:[#allocation2 + $0x178] sm:$0x3] %vm24, 0.0
    %71 = vst.msk [vmem:[#allocation2 + $0x180] sm:$0xff] %vm21, 0.0
    %72 = vst.msk [vmem:[#allocation2 + $0x188] sm:$0xff] %vm21, 0.0
    %73 = vst.msk [vmem:[#allocation2 + $0x190] sm:$0x3] %vm24, 0.0
    %74 = vst.msk [vmem:[#allocation2 + $0x198] sm:$0xff] %vm21, 0.0
    %75 = vst.msk [vmem:[#allocation2 + $0x1a0] sm:$0xff] %vm21, 0.0
    %76 = vst.msk [vmem:[#allocation2 + $0x1a8] sm:$0x3] %vm24, 0.0
    %77 = vst.msk [vmem:[#allocation2 + $0x1b0] sm:$0xff] %vm21, 0.0
    %78 = vst.msk [vmem:[#allocation2 + $0x1b8] sm:$0xff] %vm21, 0.0
    %79 = vst.msk [vmem:[#allocation2 + $0x1c0] sm:$0x3] %vm24, 0.0
    %80 = vst.msk [vmem:[#allocation2 + $0x1c8] sm:$0xff] %vm21, 0.0
    %81 = vst.msk [vmem:[#allocation2 + $0x1d0] sm:$0xff] %vm21, 0.0
    %82 = vst.msk [vmem:[#allocation2 + $0x1d8] sm:$0x3] %vm24, 0.0
    %83 = vst.msk [vmem:[#allocation2 + $0x1e0] sm:$0xff] %vm21, 0.0
    %84 = vst.msk [vmem:[#allocation2 + $0x1e8] sm:$0xff] %vm21, 0.0
    %85 = vst.msk [vmem:[#allocation2 + $0x1f0] sm:$0x3] %vm24, 0.0
    %86 = vst.msk [vmem:[#allocation2 + $0x1f8] sm:$0xff] %vm21, 0.0
    %87 = vst.msk [vmem:[#allocation2 + $0x200] sm:$0xff] %vm21, 0.0
    %88 = vst.msk [vmem:[#allocation2 + $0x208] sm:$0x3] %vm24, 0.0
    %89 = vst.msk [vmem:[#allocation2 + $0x210] sm:$0xff] %vm21, 0.0
    %90 = vst.msk [vmem:[#allocation2 + $0x218] sm:$0xff] %vm21, 0.0
    %91 = vst.msk [vmem:[#allocation2 + $0x220] sm:$0x3] %vm24, 0.0
    %92 = vst.msk [vmem:[#allocation2 + $0x228] sm:$0xff] %vm21, 0.0
    %93 = vst.msk [vmem:[#allocation2 + $0x230] sm:$0xff] %vm21, 0.0
    %94 = vst.msk [vmem:[#allocation2 + $0x238] sm:$0x3] %vm24, 0.0
    %95 = vst.msk [vmem:[#allocation2 + $0x240] sm:$0xff] %vm21, 0.0
    %96 = vst.msk [vmem:[#allocation2 + $0x248] sm:$0xff] %vm21, 0.0
    %97 = vst.msk [vmem:[#allocation2 + $0x250] sm:$0x3] %vm24, 0.0
    %98 = vst.msk [vmem:[#allocation2 + $0x258] sm:$0xff] %vm21, 0.0
    %99 = vst.msk [vmem:[#allocation2 + $0x260] sm:$0xff] %vm21, 0.0
    %100 = vst.msk [vmem:[#allocation2 + $0x268] sm:$0x3] %vm24, 0.0
    %101 = vst.msk [vmem:[#allocation2 + $0x270] sm:$0xff] %vm21, 0.0
    %102 = vst.msk [vmem:[#allocation2 + $0x278] sm:$0xff] %vm21, 0.0
    %103 = vst.msk [vmem:[#allocation2 + $0x280] sm:$0x3] %vm24, 0.0
    %104 = vst.msk [vmem:[#allocation2 + $0x288] sm:$0xff] %vm21, 0.0
    %105 = vst.msk [vmem:[#allocation2 + $0x290] sm:$0xff] %vm21, 0.0
    %106 = vst.msk [vmem:[#allocation2 + $0x298] sm:$0x3] %vm24, 0.0
    %107 = vst.msk [vmem:[#allocation2 + $0x2a0] sm:$0xff] %vm21, 0.0
    %108 = vst.msk [vmem:[#allocation2 + $0x2a8] sm:$0xff] %vm21, 0.0
    %109 = vst.msk [vmem:[#allocation2 + $0x2b0] sm:$0x3] %vm24, 0.0
    %110 = vst.msk [vmem:[#allocation2 + $0x2b8] sm:$0xff] %vm21, 0.0
    %111 = vst.msk [vmem:[#allocation2 + $0x2c0] sm:$0xff] %vm21, 0.0
    %112 = vst.msk [vmem:[#allocation2 + $0x2c8] sm:$0x3] %vm24, 0.0
    %113 = vst.msk [vmem:[#allocation2 + $0x2d0] sm:$0xff] %vm21, 0.0
    %114 = vst.msk [vmem:[#allocation2 + $0x2d8] sm:$0xff] %vm21, 0.0
    %115 = vst.msk [vmem:[#allocation2 + $0x2e0] sm:$0x3] %vm24, 0.0
    %116 = vst.msk [vmem:[#allocation2 + $0x2e8] sm:$0xff] %vm21, 0.0
    %117 = vst.msk [vmem:[#allocation2 + $0x2f0] sm:$0xff] %vm21, 0.0
    %118 = vst.msk [vmem:[#allocation2 + $0x2f8] sm:$0x3] %vm24, 0.0
    %119 = vst.msk [vmem:[#allocation2 + $0x300] sm:$0xff] %vm21, 0.0
    %120 = vst.msk [vmem:[#allocation2 + $0x308] sm:$0xff] %vm21, 0.0
    %121 = vst.msk [vmem:[#allocation2 + $0x310] sm:$0x3] %vm24, 0.0
    %122 = vst.msk [vmem:[#allocation2 + $0x318] sm:$0xff] %vm21, 0.0
    %123 = vst.msk [vmem:[#allocation2 + $0x320] sm:$0xff] %vm21, 0.0
    %124 = vst.msk [vmem:[#allocation2 + $0x328] sm:$0x3] %vm24, 0.0
    %125 = vst.msk [vmem:[#allocation2 + $0x330] sm:$0xff] %vm21, 0.0
    %126 = vst.msk [vmem:[#allocation2 + $0x338] sm:$0xff] %vm21, 0.0
    %127 = vst.msk [vmem:[#allocation2 + $0x340] sm:$0x3] %vm24, 0.0
    %128 = vst.msk [vmem:[#allocation2 + $0x348] sm:$0xff] %vm21, 0.0
    %129 = vst.msk [vmem:[#allocation2 + $0x350] sm:$0xff] %vm21, 0.0
    %130 = vst.msk [vmem:[#allocation2 + $0x358] sm:$0x3] %vm24, 0.0
    %vm131 = vcmask 64512
    %132 = vst.msk [vmem:[#allocation3] sm:$0xff] %vm131, 0.0
    %133 = vst.msk [vmem:[#allocation3 + $0x8] sm:$0xff] %vm131, 0.0
    %vm134 = vcmask 58368
    %135 = vst.msk [vmem:[#allocation3 + $0x10] sm:$0x3] %vm134, 0.0
    %136 = vst.msk [vmem:[#allocation3 + $0x18] sm:$0xff] %vm131, 0.0
    %137 = vst.msk [vmem:[#allocation3 + $0x20] sm:$0xff] %vm131, 0.0
    %138 = vst.msk [vmem:[#allocation3 + $0x28] sm:$0x3] %vm134, 0.0
    %139 = vst.msk [vmem:[#allocation3 + $0x30] sm:$0xff] %vm131, 0.0
    %140 = vst.msk [vmem:[#allocation3 + $0x38] sm:$0xff] %vm131, 0.0
    %141 = vst.msk [vmem:[#allocation3 + $0x40] sm:$0x3] %vm134, 0.0
    %142 = vst.msk [vmem:[#allocation3 + $0x48] sm:$0xff] %vm131, 0.0
    %143 = vst.msk [vmem:[#allocation3 + $0x50] sm:$0xff] %vm131, 0.0
    %144 = vst.msk [vmem:[#allocation3 + $0x58] sm:$0x3] %vm134, 0.0
    %145 = vst.msk [vmem:[#allocation3 + $0x60] sm:$0xff] %vm131, 0.0
    %146 = vst.msk [vmem:[#allocation3 + $0x68] sm:$0xff] %vm131, 0.0
    %147 = vst.msk [vmem:[#allocation3 + $0x70] sm:$0x3] %vm134, 0.0
    %148 = vst.msk [vmem:[#allocation3 + $0x78] sm:$0xff] %vm131, 0.0
    %149 = vst.msk [vmem:[#allocation3 + $0x80] sm:$0xff] %vm131, 0.0
    %150 = vst.msk [vmem:[#allocation3 + $0x88] sm:$0x3] %vm134, 0.0
    %151 = vst.msk [vmem:[#allocation3 + $0x90] sm:$0xff] %vm131, 0.0
    %152 = vst.msk [vmem:[#allocation3 + $0x98] sm:$0xff] %vm131, 0.0
    %153 = vst.msk [vmem:[#allocation3 + $0xa0] sm:$0x3] %vm134, 0.0
    %154 = vst.msk [vmem:[#allocation3 + $0xa8] sm:$0xff] %vm131, 0.0
    %155 = vst.msk [vmem:[#allocation3 + $0xb0] sm:$0xff] %vm131, 0.0
    %156 = vst.msk [vmem:[#allocation3 + $0xb8] sm:$0x3] %vm134, 0.0
    %157 = vst.msk [vmem:[#allocation3 + $0xc0] sm:$0xff] %vm131, 0.0
    %158 = vst.msk [vmem:[#allocation3 + $0xc8] sm:$0xff] %vm131, 0.0
    %159 = vst.msk [vmem:[#allocation3 + $0xd0] sm:$0x3] %vm134, 0.0
    %160 = vst.msk [vmem:[#allocation3 + $0xd8] sm:$0xff] %vm131, 0.0
    %161 = vst.msk [vmem:[#allocation3 + $0xe0] sm:$0xff] %vm131, 0.0
    %162 = vst.msk [vmem:[#allocation3 + $0xe8] sm:$0x3] %vm134, 0.0
    %163 = vst.msk [vmem:[#allocation3 + $0xf0] sm:$0xff] %vm131, 0.0
    %164 = vst.msk [vmem:[#allocation3 + $0xf8] sm:$0xff] %vm131, 0.0
    %165 = vst.msk [vmem:[#allocation3 + $0x100] sm:$0x3] %vm134, 0.0
    %166 = vst.msk [vmem:[#allocation3 + $0x108] sm:$0xff] %vm131, 0.0
    %167 = vst.msk [vmem:[#allocation3 + $0x110] sm:$0xff] %vm131, 0.0
    %168 = vst.msk [vmem:[#allocation3 + $0x118] sm:$0x3] %vm134, 0.0
    %169 = vst.msk [vmem:[#allocation3 + $0x120] sm:$0xff] %vm131, 0.0
    %170 = vst.msk [vmem:[#allocation3 + $0x128] sm:$0xff] %vm131, 0.0
    %171 = vst.msk [vmem:[#allocation3 + $0x130] sm:$0x3] %vm134, 0.0
    %172 = vst.msk [vmem:[#allocation3 + $0x138] sm:$0xff] %vm131, 0.0
    %173 = vst.msk [vmem:[#allocation3 + $0x140] sm:$0xff] %vm131, 0.0
    %174 = vst.msk [vmem:[#allocation3 + $0x148] sm:$0x3] %vm134, 0.0
    %175 = vst.msk [vmem:[#allocation3 + $0x150] sm:$0xff] %vm131, 0.0
    %176 = vst.msk [vmem:[#allocation3 + $0x158] sm:$0xff] %vm131, 0.0
    %177 = vst.msk [vmem:[#allocation3 + $0x160] sm:$0x3] %vm134, 0.0
    %178 = vst.msk [vmem:[#allocation3 + $0x168] sm:$0xff] %vm131, 0.0
    %179 = vst.msk [vmem:[#allocation3 + $0x170] sm:$0xff] %vm131, 0.0
    %180 = vst.msk [vmem:[#allocation3 + $0x178] sm:$0x3] %vm134, 0.0
    %181 = vst.msk [vmem:[#allocation3 + $0x180] sm:$0xff] %vm131, 0.0
    %182 = vst.msk [vmem:[#allocation3 + $0x188] sm:$0xff] %vm131, 0.0
    %183 = vst.msk [vmem:[#allocation3 + $0x190] sm:$0x3] %vm134, 0.0
    %184 = vst.msk [vmem:[#allocation3 + $0x198] sm:$0xff] %vm131, 0.0
    %185 = vst.msk [vmem:[#allocation3 + $0x1a0] sm:$0xff] %vm131, 0.0
    %186 = vst.msk [vmem:[#allocation3 + $0x1a8] sm:$0x3] %vm134, 0.0
    %187 = vst.msk [vmem:[#allocation3 + $0x1b0] sm:$0xff] %vm131, 0.0
    %188 = vst.msk [vmem:[#allocation3 + $0x1b8] sm:$0xff] %vm131, 0.0
    %189 = vst.msk [vmem:[#allocation3 + $0x1c0] sm:$0x3] %vm134, 0.0
    %190 = vst.msk [vmem:[#allocation3 + $0x1c8] sm:$0xff] %vm131, 0.0
    %191 = vst.msk [vmem:[#allocation3 + $0x1d0] sm:$0xff] %vm131, 0.0
    %192 = vst.msk [vmem:[#allocation3 + $0x1d8] sm:$0x3] %vm134, 0.0
    %193 = vst.msk [vmem:[#allocation3 + $0x1e0] sm:$0xff] %vm131, 0.0
    %194 = vst.msk [vmem:[#allocation3 + $0x1e8] sm:$0xff] %vm131, 0.0
    %195 = vst.msk [vmem:[#allocation3 + $0x1f0] sm:$0x3] %vm134, 0.0
    %196 = vst.msk [vmem:[#allocation3 + $0x1f8] sm:$0xff] %vm131, 0.0
    %197 = vst.msk [vmem:[#allocation3 + $0x200] sm:$0xff] %vm131, 0.0
    %198 = vst.msk [vmem:[#allocation3 + $0x208] sm:$0x3] %vm134, 0.0
    %199 = vst.msk [vmem:[#allocation3 + $0x210] sm:$0xff] %vm131, 0.0
    %200 = vst.msk [vmem:[#allocation3 + $0x218] sm:$0xff] %vm131, 0.0
    %201 = vst.msk [vmem:[#allocation3 + $0x220] sm:$0x3] %vm134, 0.0
    %202 = vst.msk [vmem:[#allocation3 + $0x228] sm:$0xff] %vm131, 0.0
    %203 = vst.msk [vmem:[#allocation3 + $0x230] sm:$0xff] %vm131, 0.0
    %204 = vst.msk [vmem:[#allocation3 + $0x238] sm:$0x3] %vm134, 0.0
    %205 = vst.msk [vmem:[#allocation3 + $0x240] sm:$0xff] %vm131, 0.0
    %206 = vst.msk [vmem:[#allocation3 + $0x248] sm:$0xff] %vm131, 0.0
    %207 = vst.msk [vmem:[#allocation3 + $0x250] sm:$0x3] %vm134, 0.0
    %208 = vst.msk [vmem:[#allocation3 + $0x258] sm:$0xff] %vm131, 0.0
    %209 = vst.msk [vmem:[#allocation3 + $0x260] sm:$0xff] %vm131, 0.0
    %210 = vst.msk [vmem:[#allocation3 + $0x268] sm:$0x3] %vm134, 0.0
    %211 = vst.msk [vmem:[#allocation3 + $0x270] sm:$0xff] %vm131, 0.0
    %212 = vst.msk [vmem:[#allocation3 + $0x278] sm:$0xff] %vm131, 0.0
    %213 = vst.msk [vmem:[#allocation3 + $0x280] sm:$0x3] %vm134, 0.0
    %214 = vst.msk [vmem:[#allocation3 + $0x288] sm:$0xff] %vm131, 0.0
    %215 = vst.msk [vmem:[#allocation3 + $0x290] sm:$0xff] %vm131, 0.0
    %216 = vst.msk [vmem:[#allocation3 + $0x298] sm:$0x3] %vm134, 0.0
    %217 = vst.msk [vmem:[#allocation3 + $0x2a0] sm:$0xff] %vm131, 0.0
    %218 = vst.msk [vmem:[#allocation3 + $0x2a8] sm:$0xff] %vm131, 0.0
    %219 = vst.msk [vmem:[#allocation3 + $0x2b0] sm:$0x3] %vm134, 0.0
    %220 = vst.msk [vmem:[#allocation3 + $0x2b8] sm:$0xff] %vm131, 0.0
    %221 = vst.msk [vmem:[#allocation3 + $0x2c0] sm:$0xff] %vm131, 0.0
    %222 = vst.msk [vmem:[#allocation3 + $0x2c8] sm:$0x3] %vm134, 0.0
    %223 = vst.msk [vmem:[#allocation3 + $0x2d0] sm:$0xff] %vm131, 0.0
    %224 = vst.msk [vmem:[#allocation3 + $0x2d8] sm:$0xff] %vm131, 0.0
    %225 = vst.msk [vmem:[#allocation3 + $0x2e0] sm:$0x3] %vm134, 0.0
    %226 = vst.msk [vmem:[#allocation3 + $0x2e8] sm:$0xff] %vm131, 0.0
    %227 = vst.msk [vmem:[#allocation3 + $0x2f0] sm:$0xff] %vm131, 0.0
    %228 = vst.msk [vmem:[#allocation3 + $0x2f8] sm:$0x3] %vm134, 0.0
    %229 = vst.msk [vmem:[#allocation3 + $0x300] sm:$0xff] %vm131, 0.0
    %230 = vst.msk [vmem:[#allocation3 + $0x308] sm:$0xff] %vm131, 0.0
    %231 = vst.msk [vmem:[#allocation3 + $0x310] sm:$0x3] %vm134, 0.0
    %232 = vst.msk [vmem:[#allocation3 + $0x318] sm:$0xff] %vm131, 0.0
    %233 = vst.msk [vmem:[#allocation3 + $0x320] sm:$0xff] %vm131, 0.0
    %234 = vst.msk [vmem:[#allocation3 + $0x328] sm:$0x3] %vm134, 0.0
    %235 = vst.msk [vmem:[#allocation3 + $0x330] sm:$0xff] %vm131, 0.0
    %236 = vst.msk [vmem:[#allocation3 + $0x338] sm:$0xff] %vm131, 0.0
    %237 = vst.msk [vmem:[#allocation3 + $0x340] sm:$0x3] %vm134, 0.0
    %238 = vst.msk [vmem:[#allocation3 + $0x348] sm:$0xff] %vm131, 0.0
    %239 = vst.msk [vmem:[#allocation3 + $0x350] sm:$0xff] %vm131, 0.0
    %240 = vst.msk [vmem:[#allocation3 + $0x358] sm:$0x3] %vm134, 0.0
    %v241 = vld [vmem:[%s0] sm:$0xff]
    %v242 = vld [vmem:[%s0 + $0x8] sm:$0xff]
    %v243 = vld [vmem:[%s0 + $0x10] sm:$0xff]
    %v244 = vld [vmem:[%s0 + $0x18] sm:$0xff]
    %v245 = vld [vmem:[%s0 + $0x20] sm:$0xff]
    %v246 = vld [vmem:[%s0 + $0x28] sm:$0xff]
    %v247 = vld [vmem:[%s0 + $0x30] sm:$0xff]
    %v248 = vld [vmem:[%s0 + $0x38] sm:$0xff]
    %v249 = vld [vmem:[%s0 + $0x40] sm:$0xff]
    %v250 = vld [vmem:[%s0 + $0x48] sm:$0xff]
    %v251 = vld [vmem:[%s0 + $0x50] sm:$0xff]
    %v252 = vld [vmem:[%s0 + $0x58] sm:$0xff]
    %v253 = vld [vmem:[%s0 + $0x60] sm:$0xff]
    %v254 = vld [vmem:[%s0 + $0x68] sm:$0xff]
    %v255 = vld [vmem:[%s0 + $0x70] sm:$0xff]
    %v256 = vld [vmem:[%s0 + $0x78] sm:$0xff]
    %v257 = vld [vmem:[%s0 + $0x80] sm:$0xff]
    %v258 = vld [vmem:[%s0 + $0x88] sm:$0xff]
    %v259 = vld [vmem:[%s0 + $0x90] sm:$0xff]
    %v260 = vld [vmem:[%s0 + $0x98] sm:$0xff]
    %v261 = vld [vmem:[%s0 + $0xa0] sm:$0xff]
    %v262 = vld [vmem:[%s0 + $0xa8] sm:$0xff]
    %v263 = vld [vmem:[%s0 + $0xb0] sm:$0xff]
    %v264 = vld [vmem:[%s0 + $0xb8] sm:$0xff]
    %v265 = vld [vmem:[%s0 + $0xc0] sm:$0xff]
    %v266 = vld [vmem:[%s0 + $0xc8] sm:$0xff]
    %v267 = vld [vmem:[%s0 + $0xd0] sm:$0xff]
    %v268 = vld [vmem:[%s0 + $0xd8] sm:$0xff]
    %v269 = vld [vmem:[%s0 + $0xe0] sm:$0xff]
    %v270 = vld [vmem:[%s0 + $0xe8] sm:$0xff]
    %v271 = vld [vmem:[%s0 + $0xf0] sm:$0xff]
    %v272 = vld [vmem:[%s0 + $0xf8] sm:$0xff]
    %v273 = vld [vmem:[%s0 + $0x100] sm:$0xff]
    %v274 = vld [vmem:[%s0 + $0x108] sm:$0xff]
    %v275 = vld [vmem:[%s0 + $0x110] sm:$0xff]
    %v276 = vld [vmem:[%s0 + $0x118] sm:$0xff]
    %v277 = vld [vmem:[%s0 + $0x120] sm:$0xff]
    %v278 = vld [vmem:[%s0 + $0x128] sm:$0xff]
    %v279 = vld [vmem:[%s0 + $0x130] sm:$0xff]
    %v280 = vld [vmem:[%s0 + $0x138] sm:$0xff]
    %v281 = vld [vmem:[%s0 + $0x140] sm:$0xff]
    %v282 = vld [vmem:[%s0 + $0x148] sm:$0xff]
    %v283 = vld [vmem:[%s0 + $0x150] sm:$0xff]
    %v284 = vld [vmem:[%s0 + $0x158] sm:$0xff]
    %v285 = vld [vmem:[%s0 + $0x160] sm:$0xff]
    %v286 = vld [vmem:[%s0 + $0x168] sm:$0xff]
    %v287 = vld [vmem:[%s0 + $0x170] sm:$0xff]
    %v288 = vld [vmem:[%s0 + $0x178] sm:$0xff]
    %v289 = vld [vmem:[%s0 + $0x180] sm:$0xff]
    %v290 = vld [vmem:[%s0 + $0x188] sm:$0xff]
    %v291 = vld [vmem:[%s0 + $0x190] sm:$0xff]
    %v292 = vld [vmem:[%s0 + $0x198] sm:$0xff]
    %v293 = vld [vmem:[%s0 + $0x1a0] sm:$0xff]
    %v294 = vld [vmem:[%s0 + $0x1a8] sm:$0xff]
    %v295 = vld [vmem:[%s0 + $0x1b0] sm:$0xff]
    %v296 = vld [vmem:[%s0 + $0x1b8] sm:$0xff]
    %v297 = vld [vmem:[%s0 + $0x1c0] sm:$0xff]
    %v298 = vld [vmem:[%s0 + $0x1c8] sm:$0xff]
    %v299 = vld [vmem:[%s0 + $0x1d0] sm:$0xff]
    %v300 = vld [vmem:[%s0 + $0x1d8] sm:$0xff]
    %v301 = vld [vmem:[%s0 + $0x1e0] sm:$0xff]
    %v302 = vld [vmem:[%s0 + $0x1e8] sm:$0xff]
    %v303 = vld [vmem:[%s0 + $0x1f0] sm:$0xff]
    %v304 = vld [vmem:[%s0 + $0x1f8] sm:$0xff]
    %s305 = scalar_lea.vmem [#allocation2], 24
    %306 = vst.msk [vmem:[%s305 + $0x1] sm:$0xff] %vm21, %v241
    %307 = vst.msk [vmem:[%s305 + $0x9] sm:$0xff] %vm21, %v242
    %308 = vst.msk [vmem:[%s305 + $0x19] sm:$0xff] %vm21, %v243
    %309 = vst.msk [vmem:[%s305 + $0x21] sm:$0xff] %vm21, %v244
    %310 = vst.msk [vmem:[%s305 + $0x31] sm:$0xff] %vm21, %v245
    %311 = vst.msk [vmem:[%s305 + $0x39] sm:$0xff] %vm21, %v246
    %312 = vst.msk [vmem:[%s305 + $0x49] sm:$0xff] %vm21, %v247
    %313 = vst.msk [vmem:[%s305 + $0x51] sm:$0xff] %vm21, %v248
    %314 = vst.msk [vmem:[%s305 + $0x61] sm:$0xff] %vm21, %v249
    %315 = vst.msk [vmem:[%s305 + $0x69] sm:$0xff] %vm21, %v250
    %316 = vst.msk [vmem:[%s305 + $0x79] sm:$0xff] %vm21, %v251
    %317 = vst.msk [vmem:[%s305 + $0x81] sm:$0xff] %vm21, %v252
    %318 = vst.msk [vmem:[%s305 + $0x91] sm:$0xff] %vm21, %v253
    %319 = vst.msk [vmem:[%s305 + $0x99] sm:$0xff] %vm21, %v254
    %320 = vst.msk [vmem:[%s305 + $0xa9] sm:$0xff] %vm21, %v255
    %321 = vst.msk [vmem:[%s305 + $0xb1] sm:$0xff] %vm21, %v256
    %322 = vst.msk [vmem:[%s305 + $0xc1] sm:$0xff] %vm21, %v257
    %323 = vst.msk [vmem:[%s305 + $0xc9] sm:$0xff] %vm21, %v258
    %324 = vst.msk [vmem:[%s305 + $0xd9] sm:$0xff] %vm21, %v259
    %325 = vst.msk [vmem:[%s305 + $0xe1] sm:$0xff] %vm21, %v260
    %326 = vst.msk [vmem:[%s305 + $0xf1] sm:$0xff] %vm21, %v261
    %327 = vst.msk [vmem:[%s305 + $0xf9] sm:$0xff] %vm21, %v262
    %328 = vst.msk [vmem:[%s305 + $0x109] sm:$0xff] %vm21, %v263
    %329 = vst.msk [vmem:[%s305 + $0x111] sm:$0xff] %vm21, %v264
    %330 = vst.msk [vmem:[%s305 + $0x121] sm:$0xff] %vm21, %v265
    %331 = vst.msk [vmem:[%s305 + $0x129] sm:$0xff] %vm21, %v266
    %332 = vst.msk [vmem:[%s305 + $0x139] sm:$0xff] %vm21, %v267
    %333 = vst.msk [vmem:[%s305 + $0x141] sm:$0xff] %vm21, %v268
    %334 = vst.msk [vmem:[%s305 + $0x151] sm:$0xff] %vm21, %v269
    %335 = vst.msk [vmem:[%s305 + $0x159] sm:$0xff] %vm21, %v270
    %336 = vst.msk [vmem:[%s305 + $0x169] sm:$0xff] %vm21, %v271
    %337 = vst.msk [vmem:[%s305 + $0x171] sm:$0xff] %vm21, %v272
    %338 = vst.msk [vmem:[%s305 + $0x1b1] sm:$0xff] %vm21, %v273
    %339 = vst.msk [vmem:[%s305 + $0x1b9] sm:$0xff] %vm21, %v274
    %340 = vst.msk [vmem:[%s305 + $0x1c9] sm:$0xff] %vm21, %v275
    %341 = vst.msk [vmem:[%s305 + $0x1d1] sm:$0xff] %vm21, %v276
    %342 = vst.msk [vmem:[%s305 + $0x1e1] sm:$0xff] %vm21, %v277
    %343 = vst.msk [vmem:[%s305 + $0x1e9] sm:$0xff] %vm21, %v278
    %344 = vst.msk [vmem:[%s305 + $0x1f9] sm:$0xff] %vm21, %v279
    %345 = vst.msk [vmem:[%s305 + $0x201] sm:$0xff] %vm21, %v280
    %346 = vst.msk [vmem:[%s305 + $0x211] sm:$0xff] %vm21, %v281
    %347 = vst.msk [vmem:[%s305 + $0x219] sm:$0xff] %vm21, %v282
    %348 = vst.msk [vmem:[%s305 + $0x229] sm:$0xff] %vm21, %v283
    %349 = vst.msk [vmem:[%s305 + $0x231] sm:$0xff] %vm21, %v284
    %350 = vst.msk [vmem:[%s305 + $0x241] sm:$0xff] %vm21, %v285
    %351 = vst.msk [vmem:[%s305 + $0x249] sm:$0xff] %vm21, %v286
    %352 = vst.msk [vmem:[%s305 + $0x259] sm:$0xff] %vm21, %v287
    %353 = vst.msk [vmem:[%s305 + $0x261] sm:$0xff] %vm21, %v288
    %354 = vst.msk [vmem:[%s305 + $0x271] sm:$0xff] %vm21, %v289
    %355 = vst.msk [vmem:[%s305 + $0x279] sm:$0xff] %vm21, %v290
    %356 = vst.msk [vmem:[%s305 + $0x289] sm:$0xff] %vm21, %v291
    %357 = vst.msk [vmem:[%s305 + $0x291] sm:$0xff] %vm21, %v292
    %358 = vst.msk [vmem:[%s305 + $0x2a1] sm:$0xff] %vm21, %v293
    %359 = vst.msk [vmem:[%s305 + $0x2a9] sm:$0xff] %vm21, %v294
    %360 = vst.msk [vmem:[%s305 + $0x2b9] sm:$0xff] %vm21, %v295
    %361 = vst.msk [vmem:[%s305 + $0x2c1] sm:$0xff] %vm21, %v296
    %362 = vst.msk [vmem:[%s305 + $0x2d1] sm:$0xff] %vm21, %v297
    %363 = vst.msk [vmem:[%s305 + $0x2d9] sm:$0xff] %vm21, %v298
    %364 = vst.msk [vmem:[%s305 + $0x2e9] sm:$0xff] %vm21, %v299
    %365 = vst.msk [vmem:[%s305 + $0x2f1] sm:$0xff] %vm21, %v300
    %366 = vst.msk [vmem:[%s305 + $0x301] sm:$0xff] %vm21, %v301
    %367 = vst.msk [vmem:[%s305 + $0x309] sm:$0xff] %vm21, %v302
    %368 = vst.msk [vmem:[%s305 + $0x319] sm:$0xff] %vm21, %v303
    %369 = vst.msk [vmem:[%s305 + $0x321] sm:$0xff] %vm21, %v304
    %v370 = vld [vmem:[#allocation2] sm:$0xff]
    %v371 = vld [vmem:[#allocation2 + $0x8] sm:$0xff]
    %v372 = vld [vmem:[#allocation2 + $0x18] sm:$0xff]
    %v373 = vld [vmem:[#allocation2 + $0x20] sm:$0xff]
    %v374 = vld [vmem:[#allocation2 + $0x30] sm:$0xff]
    %v375 = vld [vmem:[#allocation2 + $0x38] sm:$0xff]
    %v376 = vld [vmem:[#allocation2 + $0x48] sm:$0xff]
    %v377 = vld [vmem:[#allocation2 + $0x50] sm:$0xff]
    %v378 = vld [vmem:[#allocation2 + $0x60] sm:$0xff]
    %v379 = vld [vmem:[#allocation2 + $0x68] sm:$0xff]
    %v380 = vld [vmem:[#allocation2 + $0x78] sm:$0xff]
    %v381 = vld [vmem:[#allocation2 + $0x80] sm:$0xff]
    %v382 = vld [vmem:[#allocation2 + $0x90] sm:$0xff]
    %v383 = vld [vmem:[#allocation2 + $0x98] sm:$0xff]
    %v384 = vld [vmem:[#allocation2 + $0xa8] sm:$0xff]
    %v385 = vld [vmem:[#allocation2 + $0xb0] sm:$0xff]
    %v386 = vld [vmem:[#allocation2 + $0xc0] sm:$0xff]
    %v387 = vld [vmem:[#allocation2 + $0xc8] sm:$0xff]
    %v388 = vld [vmem:[#allocation2 + $0xd8] sm:$0xff]
    %v389 = vld [vmem:[#allocation2 + $0xe0] sm:$0xff]
    %v390 = vld [vmem:[#allocation2 + $0xf0] sm:$0xff]
    %v391 = vld [vmem:[#allocation2 + $0xf8] sm:$0xff]
    %v392 = vld [vmem:[#allocation2 + $0x108] sm:$0xff]
    %v393 = vld [vmem:[#allocation2 + $0x110] sm:$0xff]
    %v394 = vld [vmem:[#allocation2 + $0x120] sm:$0xff]
    %v395 = vld [vmem:[#allocation2 + $0x128] sm:$0xff]
    %v396 = vld [vmem:[#allocation2 + $0x138] sm:$0xff]
    %v397 = vld [vmem:[#allocation2 + $0x140] sm:$0xff]
    %v398 = vld [vmem:[#allocation2 + $0x150] sm:$0xff]
    %v399 = vld [vmem:[#allocation2 + $0x158] sm:$0xff]
    %v400 = vld [vmem:[#allocation2 + $0x168] sm:$0xff]
    %v401 = vld [vmem:[#allocation2 + $0x170] sm:$0xff]
    %v402 = vld [vmem:[#allocation2 + $0x1b0] sm:$0xff]
    %v403 = vld [vmem:[#allocation2 + $0x1b8] sm:$0xff]
    %v404 = vld [vmem:[#allocation2 + $0x1c8] sm:$0xff]
    %v405 = vld [vmem:[#allocation2 + $0x1d0] sm:$0xff]
    %v406 = vld [vmem:[#allocation2 + $0x1e0] sm:$0xff]
    %v407 = vld [vmem:[#allocation2 + $0x1e8] sm:$0xff]
    %v408 = vld [vmem:[#allocation2 + $0x1f8] sm:$0xff]
    %v409 = vld [vmem:[#allocation2 + $0x200] sm:$0xff]
    %v410 = vld [vmem:[#allocation2 + $0x210] sm:$0xff]
    %v411 = vld [vmem:[#allocation2 + $0x218] sm:$0xff]
    %v412 = vld [vmem:[#allocation2 + $0x228] sm:$0xff]
    %v413 = vld [vmem:[#allocation2 + $0x230] sm:$0xff]
    %v414 = vld [vmem:[#allocation2 + $0x240] sm:$0xff]
    %v415 = vld [vmem:[#allocation2 + $0x248] sm:$0xff]
    %v416 = vld [vmem:[#allocation2 + $0x258] sm:$0xff]
    %v417 = vld [vmem:[#allocation2 + $0x260] sm:$0xff]
    %v418 = vld [vmem:[#allocation2 + $0x270] sm:$0xff]
    %v419 = vld [vmem:[#allocation2 + $0x278] sm:$0xff]
    %v420 = vld [vmem:[#allocation2 + $0x288] sm:$0xff]
    %v421 = vld [vmem:[#allocation2 + $0x290] sm:$0xff]
    %v422 = vld [vmem:[#allocation2 + $0x2a0] sm:$0xff]
    %v423 = vld [vmem:[#allocation2 + $0x2a8] sm:$0xff]
    %v424 = vld [vmem:[#allocation2 + $0x2b8] sm:$0xff]
    %v425 = vld [vmem:[#allocation2 + $0x2c0] sm:$0xff]
    %v426 = vld [vmem:[#allocation2 + $0x2d0] sm:$0xff]
    %v427 = vld [vmem:[#allocation2 + $0x2d8] sm:$0xff]
    %v428 = vld [vmem:[#allocation2 + $0x2e8] sm:$0xff]
    %v429 = vld [vmem:[#allocation2 + $0x2f0] sm:$0xff]
    %v430 = vld [vmem:[#allocation2 + $0x300] sm:$0xff]
    %v431 = vld [vmem:[#allocation2 + $0x308] sm:$0xff]
    %v432 = vld [vmem:[#allocation2 + $0x318] sm:$0xff]
    %v433 = vld [vmem:[#allocation2 + $0x320] sm:$0xff]
    %v434 = vld [vmem:[#allocation2 + $0x1] sm:$0xff]
    %v435 = vld [vmem:[#allocation2 + $0x9] sm:$0xff]
    %v436 = vld [vmem:[#allocation2 + $0x19] sm:$0xff]
    %v437 = vld [vmem:[#allocation2 + $0x21] sm:$0xff]
    %v438 = vld [vmem:[#allocation2 + $0x31] sm:$0xff]
    %v439 = vld [vmem:[#allocation2 + $0x39] sm:$0xff]
    %v440 = vld [vmem:[#allocation2 + $0x49] sm:$0xff]
    %v441 = vld [vmem:[#allocation2 + $0x51] sm:$0xff]
    %v442 = vld [vmem:[#allocation2 + $0x61] sm:$0xff]
    %v443 = vld [vmem:[#allocation2 + $0x69] sm:$0xff]
    %v444 = vld [vmem:[#allocation2 + $0x79] sm:$0xff]
    %v445 = vld [vmem:[#allocation2 + $0x81] sm:$0xff]
    %v446 = vld [vmem:[#allocation2 + $0x91] sm:$0xff]
    %v447 = vld [vmem:[#allocation2 + $0x99] sm:$0xff]
    %v448 = vld [vmem:[#allocation2 + $0xa9] sm:$0xff]
    %v449 = vld [vmem:[#allocation2 + $0xb1] sm:$0xff]
    %v450 = vld [vmem:[#allocation2 + $0xc1] sm:$0xff]
    %v451 = vld [vmem:[#allocation2 + $0xc9] sm:$0xff]
    %v452 = vld [vmem:[#allocation2 + $0xd9] sm:$0xff]
    %v453 = vld [vmem:[#allocation2 + $0xe1] sm:$0xff]
    %v454 = vld [vmem:[#allocation2 + $0xf1] sm:$0xff]
    %v455 = vld [vmem:[#allocation2 + $0xf9] sm:$0xff]
    %v456 = vld [vmem:[#allocation2 + $0x109] sm:$0xff]
    %v457 = vld [vmem:[#allocation2 + $0x111] sm:$0xff]
    %v458 = vld [vmem:[#allocation2 + $0x121] sm:$0xff]
    %v459 = vld [vmem:[#allocation2 + $0x129] sm:$0xff]
    %v460 = vld [vmem:[#allocation2 + $0x139] sm:$0xff]
    %v461 = vld [vmem:[#allocation2 + $0x141] sm:$0xff]
    %v462 = vld [vmem:[#allocation2 + $0x151] sm:$0xff]
    %v463 = vld [vmem:[#allocation2 + $0x159] sm:$0xff]
    %v464 = vld [vmem:[#allocation2 + $0x169] sm:$0xff]
    %v465 = vld [vmem:[#allocation2 + $0x171] sm:$0xff]
    %v466 = vld [vmem:[#allocation2 + $0x1b1] sm:$0xff]
    %v467 = vld [vmem:[#allocation2 + $0x1b9] sm:$0xff]
    %v468 = vld [vmem:[#allocation2 + $0x1c9] sm:$0xff]
    %v469 = vld [vmem:[#allocation2 + $0x1d1] sm:$0xff]
    %v470 = vld [vmem:[#allocation2 + $0x1e1] sm:$0xff]
    %v471 = vld [vmem:[#allocation2 + $0x1e9] sm:$0xff]
    %v472 = vld [vmem:[#allocation2 + $0x1f9] sm:$0xff]
    %v473 = vld [vmem:[#allocation2 + $0x201] sm:$0xff]
    %v474 = vld [vmem:[#allocation2 + $0x211] sm:$0xff]
    %v475 = vld [vmem:[#allocation2 + $0x219] sm:$0xff]
    %v476 = vld [vmem:[#allocation2 + $0x229] sm:$0xff]
    %v477 = vld [vmem:[#allocation2 + $0x231] sm:$0xff]
    %v478 = vld [vmem:[#allocation2 + $0x241] sm:$0xff]
    %v479 = vld [vmem:[#allocation2 + $0x249] sm:$0xff]
    %v480 = vld [vmem:[#allocation2 + $0x259] sm:$0xff]
    %v481 = vld [vmem:[#allocation2 + $0x261] sm:$0xff]
    %v482 = vld [vmem:[#allocation2 + $0x271] sm:$0xff]
    %v483 = vld [vmem:[#allocation2 + $0x279] sm:$0xff]
    %v484 = vld [vmem:[#allocation2 + $0x289] sm:$0xff]
    %v485 = vld [vmem:[#allocation2 + $0x291] sm:$0xff]
    %v486 = vld [vmem:[#allocation2 + $0x2a1] sm:$0xff]
    %v487 = vld [vmem:[#allocation2 + $0x2a9] sm:$0xff]
    %v488 = vld [vmem:[#allocation2 + $0x2b9] sm:$0xff]
    %v489 = vld [vmem:[#allocation2 + $0x2c1] sm:$0xff]
    %v490 = vld [vmem:[#allocation2 + $0x2d1] sm:$0xff]
    %v491 = vld [vmem:[#allocation2 + $0x2d9] sm:$0xff]
    %v492 = vld [vmem:[#allocation2 + $0x2e9] sm:$0xff]
    %v493 = vld [vmem:[#allocation2 + $0x2f1] sm:$0xff]
    %v494 = vld [vmem:[#allocation2 + $0x301] sm:$0xff]
    %v495 = vld [vmem:[#allocation2 + $0x309] sm:$0xff]
    %v496 = vld [vmem:[#allocation2 + $0x319] sm:$0xff]
    %v497 = vld [vmem:[#allocation2 + $0x321] sm:$0xff]
    %v498 = vld [vmem:[#allocation2 + $0x2] sm:$0xff]
    %v499 = vld [vmem:[#allocation2 + $0xa] sm:$0xff]
    %v500 = vld [vmem:[#allocation2 + $0x1a] sm:$0xff]
    %v501 = vld [vmem:[#allocation2 + $0x22] sm:$0xff]
    %v502 = vld [vmem:[#allocation2 + $0x32] sm:$0xff]
    %v503 = vld [vmem:[#allocation2 + $0x3a] sm:$0xff]
    %v504 = vld [vmem:[#allocation2 + $0x4a] sm:$0xff]
    %v505 = vld [vmem:[#allocation2 + $0x52] sm:$0xff]
    %v506 = vld [vmem:[#allocation2 + $0x62] sm:$0xff]
    %v507 = vld [vmem:[#allocation2 + $0x6a] sm:$0xff]
    %v508 = vld [vmem:[#allocation2 + $0x7a] sm:$0xff]
    %v509 = vld [vmem:[#allocation2 + $0x82] sm:$0xff]
    %v510 = vld [vmem:[#allocation2 + $0x92] sm:$0xff]
    %v511 = vld [vmem:[#allocation2 + $0x9a] sm:$0xff]
    %v512 = vld [vmem:[#allocation2 + $0xaa] sm:$0xff]
    %v513 = vld [vmem:[#allocation2 + $0xb2] sm:$0xff]
    %v514 = vld [vmem:[#allocation2 + $0xc2] sm:$0xff]
    %v515 = vld [vmem:[#allocation2 + $0xca] sm:$0xff]
    %v516 = vld [vmem:[#allocation2 + $0xda] sm:$0xff]
    %v517 = vld [vmem:[#allocation2 + $0xe2] sm:$0xff]
    %v518 = vld [vmem:[#allocation2 + $0xf2] sm:$0xff]
    %v519 = vld [vmem:[#allocation2 + $0xfa] sm:$0xff]
    %v520 = vld [vmem:[#allocation2 + $0x10a] sm:$0xff]
    %v521 = vld [vmem:[#allocation2 + $0x112] sm:$0xff]
    %v522 = vld [vmem:[#allocation2 + $0x122] sm:$0xff]
    %v523 = vld [vmem:[#allocation2 + $0x12a] sm:$0xff]
    %v524 = vld [vmem:[#allocation2 + $0x13a] sm:$0xff]
    %v525 = vld [vmem:[#allocation2 + $0x142] sm:$0xff]
    %v526 = vld [vmem:[#allocation2 + $0x152] sm:$0xff]
    %v527 = vld [vmem:[#allocation2 + $0x15a] sm:$0xff]
    %v528 = vld [vmem:[#allocation2 + $0x16a] sm:$0xff]
    %v529 = vld [vmem:[#allocation2 + $0x172] sm:$0xff]
    %v530 = vld [vmem:[#allocation2 + $0x1b2] sm:$0xff]
    %v531 = vld [vmem:[#allocation2 + $0x1ba] sm:$0xff]
    %v532 = vld [vmem:[#allocation2 + $0x1ca] sm:$0xff]
    %v533 = vld [vmem:[#allocation2 + $0x1d2] sm:$0xff]
    %v534 = vld [vmem:[#allocation2 + $0x1e2] sm:$0xff]
    %v535 = vld [vmem:[#allocation2 + $0x1ea] sm:$0xff]
    %v536 = vld [vmem:[#allocation2 + $0x1fa] sm:$0xff]
    %v537 = vld [vmem:[#allocation2 + $0x202] sm:$0xff]
    %v538 = vld [vmem:[#allocation2 + $0x212] sm:$0xff]
    %v539 = vld [vmem:[#allocation2 + $0x21a] sm:$0xff]
    %v540 = vld [vmem:[#allocation2 + $0x22a] sm:$0xff]
    %v541 = vld [vmem:[#allocation2 + $0x232] sm:$0xff]
    %v542 = vld [vmem:[#allocation2 + $0x242] sm:$0xff]
    %v543 = vld [vmem:[#allocation2 + $0x24a] sm:$0xff]
    %v544 = vld [vmem:[#allocation2 + $0x25a] sm:$0xff]
    %v545 = vld [vmem:[#allocation2 + $0x262] sm:$0xff]
    %v546 = vld [vmem:[#allocation2 + $0x272] sm:$0xff]
    %v547 = vld [vmem:[#allocation2 + $0x27a] sm:$0xff]
    %v548 = vld [vmem:[#allocation2 + $0x28a] sm:$0xff]
    %v549 = vld [vmem:[#allocation2 + $0x292] sm:$0xff]
    %v550 = vld [vmem:[#allocation2 + $0x2a2] sm:$0xff]
    %v551 = vld [vmem:[#allocation2 + $0x2aa] sm:$0xff]
    %v552 = vld [vmem:[#allocation2 + $0x2ba] sm:$0xff]
    %v553 = vld [vmem:[#allocation2 + $0x2c2] sm:$0xff]
    %v554 = vld [vmem:[#allocation2 + $0x2d2] sm:$0xff]
    %v555 = vld [vmem:[#allocation2 + $0x2da] sm:$0xff]
    %v556 = vld [vmem:[#allocation2 + $0x2ea] sm:$0xff]
    %v557 = vld [vmem:[#allocation2 + $0x2f2] sm:$0xff]
    %v558 = vld [vmem:[#allocation2 + $0x302] sm:$0xff]
    %v559 = vld [vmem:[#allocation2 + $0x30a] sm:$0xff]
    %v560 = vld [vmem:[#allocation2 + $0x31a] sm:$0xff]
    %v561 = vld [vmem:[#allocation2 + $0x322] sm:$0xff]
    %v562 = vld [vmem:[%s305] sm:$0xff]
    %v563 = vld [vmem:[%s305 + $0x8] sm:$0xff]
    %v564 = vld [vmem:[%s305 + $0x18] sm:$0xff]
    %v565 = vld [vmem:[%s305 + $0x20] sm:$0xff]
    %v566 = vld [vmem:[%s305 + $0x30] sm:$0xff]
    %v567 = vld [vmem:[%s305 + $0x38] sm:$0xff]
    %v568 = vld [vmem:[%s305 + $0x48] sm:$0xff]
    %v569 = vld [vmem:[%s305 + $0x50] sm:$0xff]
    %v570 = vld [vmem:[%s305 + $0x60] sm:$0xff]
    %v571 = vld [vmem:[%s305 + $0x68] sm:$0xff]
    %v572 = vld [vmem:[%s305 + $0x78] sm:$0xff]
    %v573 = vld [vmem:[%s305 + $0x80] sm:$0xff]
    %v574 = vld [vmem:[%s305 + $0x90] sm:$0xff]
    %v575 = vld [vmem:[%s305 + $0x98] sm:$0xff]
    %v576 = vld [vmem:[%s305 + $0xa8] sm:$0xff]
    %v577 = vld [vmem:[%s305 + $0xb0] sm:$0xff]
    %v578 = vld [vmem:[%s305 + $0xc0] sm:$0xff]
    %v579 = vld [vmem:[%s305 + $0xc8] sm:$0xff]
    %v580 = vld [vmem:[%s305 + $0xd8] sm:$0xff]
    %v581 = vld [vmem:[%s305 + $0xe0] sm:$0xff]
    %v582 = vld [vmem:[%s305 + $0xf0] sm:$0xff]
    %v583 = vld [vmem:[%s305 + $0xf8] sm:$0xff]
    %v584 = vld [vmem:[%s305 + $0x108] sm:$0xff]
    %v585 = vld [vmem:[%s305 + $0x110] sm:$0xff]
    %v586 = vld [vmem:[%s305 + $0x120] sm:$0xff]
    %v587 = vld [vmem:[%s305 + $0x128] sm:$0xff]
    %v588 = vld [vmem:[%s305 + $0x138] sm:$0xff]
    %v589 = vld [vmem:[%s305 + $0x140] sm:$0xff]
    %v590 = vld [vmem:[%s305 + $0x150] sm:$0xff]
    %v591 = vld [vmem:[%s305 + $0x158] sm:$0xff]
    %v592 = vld [vmem:[%s305 + $0x168] sm:$0xff]
    %v593 = vld [vmem:[%s305 + $0x170] sm:$0xff]
    %v594 = vld [vmem:[%s305 + $0x1b0] sm:$0xff]
    %v595 = vld [vmem:[%s305 + $0x1b8] sm:$0xff]
    %v596 = vld [vmem:[%s305 + $0x1c8] sm:$0xff]
    %v597 = vld [vmem:[%s305 + $0x1d0] sm:$0xff]
    %v598 = vld [vmem:[%s305 + $0x1e0] sm:$0xff]
    %v599 = vld [vmem:[%s305 + $0x1e8] sm:$0xff]
    %v600 = vld [vmem:[%s305 + $0x1f8] sm:$0xff]
    %v601 = vld [vmem:[%s305 + $0x200] sm:$0xff]
    %v602 = vld [vmem:[%s305 + $0x210] sm:$0xff]
    %v603 = vld [vmem:[%s305 + $0x218] sm:$0xff]
    %v604 = vld [vmem:[%s305 + $0x228] sm:$0xff]
    %v605 = vld [vmem:[%s305 + $0x230] sm:$0xff]
    %v606 = vld [vmem:[%s305 + $0x240] sm:$0xff]
    %v607 = vld [vmem:[%s305 + $0x248] sm:$0xff]
    %v608 = vld [vmem:[%s305 + $0x258] sm:$0xff]
    %v609 = vld [vmem:[%s305 + $0x260] sm:$0xff]
    %v610 = vld [vmem:[%s305 + $0x270] sm:$0xff]
    %v611 = vld [vmem:[%s305 + $0x278] sm:$0xff]
    %v612 = vld [vmem:[%s305 + $0x288] sm:$0xff]
    %v613 = vld [vmem:[%s305 + $0x290] sm:$0xff]
    %v614 = vld [vmem:[%s305 + $0x2a0] sm:$0xff]
    %v615 = vld [vmem:[%s305 + $0x2a8] sm:$0xff]
    %v616 = vld [vmem:[%s305 + $0x2b8] sm:$0xff]
    %v617 = vld [vmem:[%s305 + $0x2c0] sm:$0xff]
    %v618 = vld [vmem:[%s305 + $0x2d0] sm:$0xff]
    %v619 = vld [vmem:[%s305 + $0x2d8] sm:$0xff]
    %v620 = vld [vmem:[%s305 + $0x2e8] sm:$0xff]
    %v621 = vld [vmem:[%s305 + $0x2f0] sm:$0xff]
    %v622 = vld [vmem:[%s305 + $0x300] sm:$0xff]
    %v623 = vld [vmem:[%s305 + $0x308] sm:$0xff]
    %v624 = vld [vmem:[%s305 + $0x318] sm:$0xff]
    %v625 = vld [vmem:[%s305 + $0x320] sm:$0xff]
    %v626 = vld [vmem:[%s305 + $0x1] sm:$0xff]
    %v627 = vld [vmem:[%s305 + $0x9] sm:$0xff]
    %v628 = vld [vmem:[%s305 + $0x19] sm:$0xff]
    %v629 = vld [vmem:[%s305 + $0x21] sm:$0xff]
    %v630 = vld [vmem:[%s305 + $0x31] sm:$0xff]
    %v631 = vld [vmem:[%s305 + $0x39] sm:$0xff]
    %v632 = vld [vmem:[%s305 + $0x49] sm:$0xff]
    %v633 = vld [vmem:[%s305 + $0x51] sm:$0xff]
    %v634 = vld [vmem:[%s305 + $0x61] sm:$0xff]
    %v635 = vld [vmem:[%s305 + $0x69] sm:$0xff]
    %v636 = vld [vmem:[%s305 + $0x79] sm:$0xff]
    %v637 = vld [vmem:[%s305 + $0x81] sm:$0xff]
    %v638 = vld [vmem:[%s305 + $0x91] sm:$0xff]
    %v639 = vld [vmem:[%s305 + $0x99] sm:$0xff]
    %v640 = vld [vmem:[%s305 + $0xa9] sm:$0xff]
    %v641 = vld [vmem:[%s305 + $0xb1] sm:$0xff]
    %v642 = vld [vmem:[%s305 + $0xc1] sm:$0xff]
    %v643 = vld [vmem:[%s305 + $0xc9] sm:$0xff]
    %v644 = vld [vmem:[%s305 + $0xd9] sm:$0xff]
    %v645 = vld [vmem:[%s305 + $0xe1] sm:$0xff]
    %v646 = vld [vmem:[%s305 + $0xf1] sm:$0xff]
    %v647 = vld [vmem:[%s305 + $0xf9] sm:$0xff]
    %v648 = vld [vmem:[%s305 + $0x109] sm:$0xff]
    %v649 = vld [vmem:[%s305 + $0x111] sm:$0xff]
    %v650 = vld [vmem:[%s305 + $0x121] sm:$0xff]
    %v651 = vld [vmem:[%s305 + $0x129] sm:$0xff]
    %v652 = vld [vmem:[%s305 + $0x139] sm:$0xff]
    %v653 = vld [vmem:[%s305 + $0x141] sm:$0xff]
    %v654 = vld [vmem:[%s305 + $0x151] sm:$0xff]
    %v655 = vld [vmem:[%s305 + $0x159] sm:$0xff]
    %v656 = vld [vmem:[%s305 + $0x169] sm:$0xff]
    %v657 = vld [vmem:[%s305 + $0x171] sm:$0xff]
    %v658 = vld [vmem:[%s305 + $0x1b1] sm:$0xff]
    %v659 = vld [vmem:[%s305 + $0x1b9] sm:$0xff]
    %v660 = vld [vmem:[%s305 + $0x1c9] sm:$0xff]
    %v661 = vld [vmem:[%s305 + $0x1d1] sm:$0xff]
    %v662 = vld [vmem:[%s305 + $0x1e1] sm:$0xff]
    %v663 = vld [vmem:[%s305 + $0x1e9] sm:$0xff]
    %v664 = vld [vmem:[%s305 + $0x1f9] sm:$0xff]
    %v665 = vld [vmem:[%s305 + $0x201] sm:$0xff]
    %v666 = vld [vmem:[%s305 + $0x211] sm:$0xff]
    %v667 = vld [vmem:[%s305 + $0x219] sm:$0xff]
    %v668 = vld [vmem:[%s305 + $0x229] sm:$0xff]
    %v669 = vld [vmem:[%s305 + $0x231] sm:$0xff]
    %v670 = vld [vmem:[%s305 + $0x241] sm:$0xff]
    %v671 = vld [vmem:[%s305 + $0x249] sm:$0xff]
    %v672 = vld [vmem:[%s305 + $0x259] sm:$0xff]
    %v673 = vld [vmem:[%s305 + $0x261] sm:$0xff]
    %v674 = vld [vmem:[%s305 + $0x271] sm:$0xff]
    %v675 = vld [vmem:[%s305 + $0x279] sm:$0xff]
    %v676 = vld [vmem:[%s305 + $0x289] sm:$0xff]
    %v677 = vld [vmem:[%s305 + $0x291] sm:$0xff]
    %v678 = vld [vmem:[%s305 + $0x2a1] sm:$0xff]
    %v679 = vld [vmem:[%s305 + $0x2a9] sm:$0xff]
    %v680 = vld [vmem:[%s305 + $0x2b9] sm:$0xff]
    %v681 = vld [vmem:[%s305 + $0x2c1] sm:$0xff]
    %v682 = vld [vmem:[%s305 + $0x2d1] sm:$0xff]
    %v683 = vld [vmem:[%s305 + $0x2d9] sm:$0xff]
    %v684 = vld [vmem:[%s305 + $0x2e9] sm:$0xff]
    %v685 = vld [vmem:[%s305 + $0x2f1] sm:$0xff]
    %v686 = vld [vmem:[%s305 + $0x301] sm:$0xff]
    %v687 = vld [vmem:[%s305 + $0x309] sm:$0xff]
    %v688 = vld [vmem:[%s305 + $0x319] sm:$0xff]
    %v689 = vld [vmem:[%s305 + $0x321] sm:$0xff]
    %v690 = vld [vmem:[%s305 + $0x2] sm:$0xff]
    %v691 = vld [vmem:[%s305 + $0xa] sm:$0xff]
    %v692 = vld [vmem:[%s305 + $0x1a] sm:$0xff]
    %v693 = vld [vmem:[%s305 + $0x22] sm:$0xff]
    %v694 = vld [vmem:[%s305 + $0x32] sm:$0xff]
    %v695 = vld [vmem:[%s305 + $0x3a] sm:$0xff]
    %v696 = vld [vmem:[%s305 + $0x4a] sm:$0xff]
    %v697 = vld [vmem:[%s305 + $0x52] sm:$0xff]
    %v698 = vld [vmem:[%s305 + $0x62] sm:$0xff]
    %v699 = vld [vmem:[%s305 + $0x6a] sm:$0xff]
    %v700 = vld [vmem:[%s305 + $0x7a] sm:$0xff]
    %v701 = vld [vmem:[%s305 + $0x82] sm:$0xff]
    %v702 = vld [vmem:[%s305 + $0x92] sm:$0xff]
    %v703 = vld [vmem:[%s305 + $0x9a] sm:$0xff]
    %v704 = vld [vmem:[%s305 + $0xaa] sm:$0xff]
    %v705 = vld [vmem:[%s305 + $0xb2] sm:$0xff]
    %v706 = vld [vmem:[%s305 + $0xc2] sm:$0xff]
    %v707 = vld [vmem:[%s305 + $0xca] sm:$0xff]
    %v708 = vld [vmem:[%s305 + $0xda] sm:$0xff]
    %v709 = vld [vmem:[%s305 + $0xe2] sm:$0xff]
    %v710 = vld [vmem:[%s305 + $0xf2] sm:$0xff]
    %v711 = vld [vmem:[%s305 + $0xfa] sm:$0xff]
    %v712 = vld [vmem:[%s305 + $0x10a] sm:$0xff]
    %v713 = vld [vmem:[%s305 + $0x112] sm:$0xff]
    %v714 = vld [vmem:[%s305 + $0x122] sm:$0xff]
    %v715 = vld [vmem:[%s305 + $0x12a] sm:$0xff]
    %v716 = vld [vmem:[%s305 + $0x13a] sm:$0xff]
    %v717 = vld [vmem:[%s305 + $0x142] sm:$0xff]
    %v718 = vld [vmem:[%s305 + $0x152] sm:$0xff]
    %v719 = vld [vmem:[%s305 + $0x15a] sm:$0xff]
    %v720 = vld [vmem:[%s305 + $0x16a] sm:$0xff]
    %v721 = vld [vmem:[%s305 + $0x172] sm:$0xff]
    %v722 = vld [vmem:[%s305 + $0x1b2] sm:$0xff]
    %v723 = vld [vmem:[%s305 + $0x1ba] sm:$0xff]
    %v724 = vld [vmem:[%s305 + $0x1ca] sm:$0xff]
    %v725 = vld [vmem:[%s305 + $0x1d2] sm:$0xff]
    %v726 = vld [vmem:[%s305 + $0x1e2] sm:$0xff]
    %v727 = vld [vmem:[%s305 + $0x1ea] sm:$0xff]
    %v728 = vld [vmem:[%s305 + $0x1fa] sm:$0xff]
    %v729 = vld [vmem:[%s305 + $0x202] sm:$0xff]
    %v730 = vld [vmem:[%s305 + $0x212] sm:$0xff]
    %v731 = vld [vmem:[%s305 + $0x21a] sm:$0xff]
    %v732 = vld [vmem:[%s305 + $0x22a] sm:$0xff]
    %v733 = vld [vmem:[%s305 + $0x232] sm:$0xff]
    %v734 = vld [vmem:[%s305 + $0x242] sm:$0xff]
    %v735 = vld [vmem:[%s305 + $0x24a] sm:$0xff]
    %v736 = vld [vmem:[%s305 + $0x25a] sm:$0xff]
    %v737 = vld [vmem:[%s305 + $0x262] sm:$0xff]
    %v738 = vld [vmem:[%s305 + $0x272] sm:$0xff]
    %v739 = vld [vmem:[%s305 + $0x27a] sm:$0xff]
    %v740 = vld [vmem:[%s305 + $0x28a] sm:$0xff]
    %v741 = vld [vmem:[%s305 + $0x292] sm:$0xff]
    %v742 = vld [vmem:[%s305 + $0x2a2] sm:$0xff]
    %v743 = vld [vmem:[%s305 + $0x2aa] sm:$0xff]
    %v744 = vld [vmem:[%s305 + $0x2ba] sm:$0xff]
    %v745 = vld [vmem:[%s305 + $0x2c2] sm:$0xff]
    %v746 = vld [vmem:[%s305 + $0x2d2] sm:$0xff]
    %v747 = vld [vmem:[%s305 + $0x2da] sm:$0xff]
    %v748 = vld [vmem:[%s305 + $0x2ea] sm:$0xff]
    %v749 = vld [vmem:[%s305 + $0x2f2] sm:$0xff]
    %v750 = vld [vmem:[%s305 + $0x302] sm:$0xff]
    %v751 = vld [vmem:[%s305 + $0x30a] sm:$0xff]
    %v752 = vld [vmem:[%s305 + $0x31a] sm:$0xff]
    %v753 = vld [vmem:[%s305 + $0x322] sm:$0xff]
    %s754 = scalar_lea.vmem [#allocation2], 48
    %v755 = vld [vmem:[%s754] sm:$0xff]
    %v756 = vld [vmem:[%s754 + $0x8] sm:$0xff]
    %v757 = vld [vmem:[%s754 + $0x18] sm:$0xff]
    %v758 = vld [vmem:[%s754 + $0x20] sm:$0xff]
    %v759 = vld [vmem:[%s754 + $0x30] sm:$0xff]
    %v760 = vld [vmem:[%s754 + $0x38] sm:$0xff]
    %v761 = vld [vmem:[%s754 + $0x48] sm:$0xff]
    %v762 = vld [vmem:[%s754 + $0x50] sm:$0xff]
    %v763 = vld [vmem:[%s754 + $0x60] sm:$0xff]
    %v764 = vld [vmem:[%s754 + $0x68] sm:$0xff]
    %v765 = vld [vmem:[%s754 + $0x78] sm:$0xff]
    %v766 = vld [vmem:[%s754 + $0x80] sm:$0xff]
    %v767 = vld [vmem:[%s754 + $0x90] sm:$0xff]
    %v768 = vld [vmem:[%s754 + $0x98] sm:$0xff]
    %v769 = vld [vmem:[%s754 + $0xa8] sm:$0xff]
    %v770 = vld [vmem:[%s754 + $0xb0] sm:$0xff]
    %v771 = vld [vmem:[%s754 + $0xc0] sm:$0xff]
    %v772 = vld [vmem:[%s754 + $0xc8] sm:$0xff]
    %v773 = vld [vmem:[%s754 + $0xd8] sm:$0xff]
    %v774 = vld [vmem:[%s754 + $0xe0] sm:$0xff]
    %v775 = vld [vmem:[%s754 + $0xf0] sm:$0xff]
    %v776 = vld [vmem:[%s754 + $0xf8] sm:$0xff]
    %v777 = vld [vmem:[%s754 + $0x108] sm:$0xff]
    %v778 = vld [vmem:[%s754 + $0x110] sm:$0xff]
    %v779 = vld [vmem:[%s754 + $0x120] sm:$0xff]
    %v780 = vld [vmem:[%s754 + $0x128] sm:$0xff]
    %v781 = vld [vmem:[%s754 + $0x138] sm:$0xff]
    %v782 = vld [vmem:[%s754 + $0x140] sm:$0xff]
    %v783 = vld [vmem:[%s754 + $0x150] sm:$0xff]
    %v784 = vld [vmem:[%s754 + $0x158] sm:$0xff]
    %v785 = vld [vmem:[%s754 + $0x168] sm:$0xff]
    %v786 = vld [vmem:[%s754 + $0x170] sm:$0xff]
    %v787 = vld [vmem:[%s754 + $0x1b0] sm:$0xff]
    %v788 = vld [vmem:[%s754 + $0x1b8] sm:$0xff]
    %v789 = vld [vmem:[%s754 + $0x1c8] sm:$0xff]
    %v790 = vld [vmem:[%s754 + $0x1d0] sm:$0xff]
    %v791 = vld [vmem:[%s754 + $0x1e0] sm:$0xff]
    %v792 = vld [vmem:[%s754 + $0x1e8] sm:$0xff]
    %v793 = vld [vmem:[%s754 + $0x1f8] sm:$0xff]
    %v794 = vld [vmem:[%s754 + $0x200] sm:$0xff]
    %v795 = vld [vmem:[%s754 + $0x210] sm:$0xff]
    %v796 = vld [vmem:[%s754 + $0x218] sm:$0xff]
    %v797 = vld [vmem:[%s754 + $0x228] sm:$0xff]
    %v798 = vld [vmem:[%s754 + $0x230] sm:$0xff]
    %v799 = vld [vmem:[%s754 + $0x240] sm:$0xff]
    %v800 = vld [vmem:[%s754 + $0x248] sm:$0xff]
    %v801 = vld [vmem:[%s754 + $0x258] sm:$0xff]
    %v802 = vld [vmem:[%s754 + $0x260] sm:$0xff]
    %v803 = vld [vmem:[%s754 + $0x270] sm:$0xff]
    %v804 = vld [vmem:[%s754 + $0x278] sm:$0xff]
    %v805 = vld [vmem:[%s754 + $0x288] sm:$0xff]
    %v806 = vld [vmem:[%s754 + $0x290] sm:$0xff]
    %v807 = vld [vmem:[%s754 + $0x2a0] sm:$0xff]
    %v808 = vld [vmem:[%s754 + $0x2a8] sm:$0xff]
    %v809 = vld [vmem:[%s754 + $0x2b8] sm:$0xff]
    %v810 = vld [vmem:[%s754 + $0x2c0] sm:$0xff]
    %v811 = vld [vmem:[%s754 + $0x2d0] sm:$0xff]
    %v812 = vld [vmem:[%s754 + $0x2d8] sm:$0xff]
    %v813 = vld [vmem:[%s754 + $0x2e8] sm:$0xff]
    %v814 = vld [vmem:[%s754 + $0x2f0] sm:$0xff]
    %v815 = vld [vmem:[%s754 + $0x300] sm:$0xff]
    %v816 = vld [vmem:[%s754 + $0x308] sm:$0xff]
    %v817 = vld [vmem:[%s754 + $0x318] sm:$0xff]
    %v818 = vld [vmem:[%s754 + $0x320] sm:$0xff]
    %v819 = vld [vmem:[%s754 + $0x1] sm:$0xff]
    %v820 = vld [vmem:[%s754 + $0x9] sm:$0xff]
    %v821 = vld [vmem:[%s754 + $0x19] sm:$0xff]
    %v822 = vld [vmem:[%s754 + $0x21] sm:$0xff]
    %v823 = vld [vmem:[%s754 + $0x31] sm:$0xff]
    %v824 = vld [vmem:[%s754 + $0x39] sm:$0xff]
    %v825 = vld [vmem:[%s754 + $0x49] sm:$0xff]
    %v826 = vld [vmem:[%s754 + $0x51] sm:$0xff]
    %v827 = vld [vmem:[%s754 + $0x61] sm:$0xff]
    %v828 = vld [vmem:[%s754 + $0x69] sm:$0xff]
    %v829 = vld [vmem:[%s754 + $0x79] sm:$0xff]
    %v830 = vld [vmem:[%s754 + $0x81] sm:$0xff]
    %v831 = vld [vmem:[%s754 + $0x91] sm:$0xff]
    %v832 = vld [vmem:[%s754 + $0x99] sm:$0xff]
    %v833 = vld [vmem:[%s754 + $0xa9] sm:$0xff]
    %v834 = vld [vmem:[%s754 + $0xb1] sm:$0xff]
    %v835 = vld [vmem:[%s754 + $0xc1] sm:$0xff]
    %v836 = vld [vmem:[%s754 + $0xc9] sm:$0xff]
    %v837 = vld [vmem:[%s754 + $0xd9] sm:$0xff]
    %v838 = vld [vmem:[%s754 + $0xe1] sm:$0xff]
    %v839 = vld [vmem:[%s754 + $0xf1] sm:$0xff]
    %v840 = vld [vmem:[%s754 + $0xf9] sm:$0xff]
    %v841 = vld [vmem:[%s754 + $0x109] sm:$0xff]
    %v842 = vld [vmem:[%s754 + $0x111] sm:$0xff]
    %v843 = vld [vmem:[%s754 + $0x121] sm:$0xff]
    %v844 = vld [vmem:[%s754 + $0x129] sm:$0xff]
    %v845 = vld [vmem:[%s754 + $0x139] sm:$0xff]
    %v846 = vld [vmem:[%s754 + $0x141] sm:$0xff]
    %v847 = vld [vmem:[%s754 + $0x151] sm:$0xff]
    %v848 = vld [vmem:[%s754 + $0x159] sm:$0xff]
    %v849 = vld [vmem:[%s754 + $0x169] sm:$0xff]
    %v850 = vld [vmem:[%s754 + $0x171] sm:$0xff]
    %v851 = vld [vmem:[%s754 + $0x1b1] sm:$0xff]
    %v852 = vld [vmem:[%s754 + $0x1b9] sm:$0xff]
    %v853 = vld [vmem:[%s754 + $0x1c9] sm:$0xff]
    %v854 = vld [vmem:[%s754 + $0x1d1] sm:$0xff]
    %v855 = vld [vmem:[%s754 + $0x1e1] sm:$0xff]
    %v856 = vld [vmem:[%s754 + $0x1e9] sm:$0xff]
    %v857 = vld [vmem:[%s754 + $0x1f9] sm:$0xff]
    %v858 = vld [vmem:[%s754 + $0x201] sm:$0xff]
    %v859 = vld [vmem:[%s754 + $0x211] sm:$0xff]
    %v860 = vld [vmem:[%s754 + $0x219] sm:$0xff]
    %v861 = vld [vmem:[%s754 + $0x229] sm:$0xff]
    %v862 = vld [vmem:[%s754 + $0x231] sm:$0xff]
    %v863 = vld [vmem:[%s754 + $0x241] sm:$0xff]
    %v864 = vld [vmem:[%s754 + $0x249] sm:$0xff]
    %v865 = vld [vmem:[%s754 + $0x259] sm:$0xff]
    %v866 = vld [vmem:[%s754 + $0x261] sm:$0xff]
    %v867 = vld [vmem:[%s754 + $0x271] sm:$0xff]
    %v868 = vld [vmem:[%s754 + $0x279] sm:$0xff]
    %v869 = vld [vmem:[%s754 + $0x289] sm:$0xff]
    %v870 = vld [vmem:[%s754 + $0x291] sm:$0xff]
    %v871 = vld [vmem:[%s754 + $0x2a1] sm:$0xff]
    %v872 = vld [vmem:[%s754 + $0x2a9] sm:$0xff]
    %v873 = vld [vmem:[%s754 + $0x2b9] sm:$0xff]
    %v874 = vld [vmem:[%s754 + $0x2c1] sm:$0xff]
    %v875 = vld [vmem:[%s754 + $0x2d1] sm:$0xff]
    %v876 = vld [vmem:[%s754 + $0x2d9] sm:$0xff]
    %v877 = vld [vmem:[%s754 + $0x2e9] sm:$0xff]
    %v878 = vld [vmem:[%s754 + $0x2f1] sm:$0xff]
    %v879 = vld [vmem:[%s754 + $0x301] sm:$0xff]
    %v880 = vld [vmem:[%s754 + $0x309] sm:$0xff]
    %v881 = vld [vmem:[%s754 + $0x319] sm:$0xff]
    %v882 = vld [vmem:[%s754 + $0x321] sm:$0xff]
    %v883 = vld [vmem:[%s754 + $0x2] sm:$0xff]
    %v884 = vld [vmem:[%s754 + $0xa] sm:$0xff]
    %v885 = vld [vmem:[%s754 + $0x1a] sm:$0xff]
    %v886 = vld [vmem:[%s754 + $0x22] sm:$0xff]
    %v887 = vld [vmem:[%s754 + $0x32] sm:$0xff]
    %v888 = vld [vmem:[%s754 + $0x3a] sm:$0xff]
    %v889 = vld [vmem:[%s754 + $0x4a] sm:$0xff]
    %v890 = vld [vmem:[%s754 + $0x52] sm:$0xff]
    %v891 = vld [vmem:[%s754 + $0x62] sm:$0xff]
    %v892 = vld [vmem:[%s754 + $0x6a] sm:$0xff]
    %v893 = vld [vmem:[%s754 + $0x7a] sm:$0xff]
    %v894 = vld [vmem:[%s754 + $0x82] sm:$0xff]
    %v895 = vld [vmem:[%s754 + $0x92] sm:$0xff]
    %v896 = vld [vmem:[%s754 + $0x9a] sm:$0xff]
    %v897 = vld [vmem:[%s754 + $0xaa] sm:$0xff]
    %v898 = vld [vmem:[%s754 + $0xb2] sm:$0xff]
    %v899 = vld [vmem:[%s754 + $0xc2] sm:$0xff]
    %v900 = vld [vmem:[%s754 + $0xca] sm:$0xff]
    %v901 = vld [vmem:[%s754 + $0xda] sm:$0xff]
    %v902 = vld [vmem:[%s754 + $0xe2] sm:$0xff]
    %v903 = vld [vmem:[%s754 + $0xf2] sm:$0xff]
    %v904 = vld [vmem:[%s754 + $0xfa] sm:$0xff]
    %v905 = vld [vmem:[%s754 + $0x10a] sm:$0xff]
    %v906 = vld [vmem:[%s754 + $0x112] sm:$0xff]
    %v907 = vld [vmem:[%s754 + $0x122] sm:$0xff]
    %v908 = vld [vmem:[%s754 + $0x12a] sm:$0xff]
    %v909 = vld [vmem:[%s754 + $0x13a] sm:$0xff]
    %v910 = vld [vmem:[%s754 + $0x142] sm:$0xff]
    %v911 = vld [vmem:[%s754 + $0x152] sm:$0xff]
    %v912 = vld [vmem:[%s754 + $0x15a] sm:$0xff]
    %v913 = vld [vmem:[%s754 + $0x16a] sm:$0xff]
    %v914 = vld [vmem:[%s754 + $0x172] sm:$0xff]
    %v915 = vld [vmem:[%s754 + $0x1b2] sm:$0xff]
    %v916 = vld [vmem:[%s754 + $0x1ba] sm:$0xff]
    %v917 = vld [vmem:[%s754 + $0x1ca] sm:$0xff]
    %v918 = vld [vmem:[%s754 + $0x1d2] sm:$0xff]
    %v919 = vld [vmem:[%s754 + $0x1e2] sm:$0xff]
    %v920 = vld [vmem:[%s754 + $0x1ea] sm:$0xff]
    %v921 = vld [vmem:[%s754 + $0x1fa] sm:$0xff]
    %v922 = vld [vmem:[%s754 + $0x202] sm:$0xff]
    %v923 = vld [vmem:[%s754 + $0x212] sm:$0xff]
    %v924 = vld [vmem:[%s754 + $0x21a] sm:$0xff]
    %v925 = vld [vmem:[%s754 + $0x22a] sm:$0xff]
    %v926 = vld [vmem:[%s754 + $0x232] sm:$0xff]
    %v927 = vld [vmem:[%s754 + $0x242] sm:$0xff]
    %v928 = vld [vmem:[%s754 + $0x24a] sm:$0xff]
    %v929 = vld [vmem:[%s754 + $0x25a] sm:$0xff]
    %v930 = vld [vmem:[%s754 + $0x262] sm:$0xff]
    %v931 = vld [vmem:[%s754 + $0x272] sm:$0xff]
    %v932 = vld [vmem:[%s754 + $0x27a] sm:$0xff]
    %v933 = vld [vmem:[%s754 + $0x28a] sm:$0xff]
    %v934 = vld [vmem:[%s754 + $0x292] sm:$0xff]
    %v935 = vld [vmem:[%s754 + $0x2a2] sm:$0xff]
    %v936 = vld [vmem:[%s754 + $0x2aa] sm:$0xff]
    %v937 = vld [vmem:[%s754 + $0x2ba] sm:$0xff]
    %v938 = vld [vmem:[%s754 + $0x2c2] sm:$0xff]
    %v939 = vld [vmem:[%s754 + $0x2d2] sm:$0xff]
    %v940 = vld [vmem:[%s754 + $0x2da] sm:$0xff]
    %v941 = vld [vmem:[%s754 + $0x2ea] sm:$0xff]
    %v942 = vld [vmem:[%s754 + $0x2f2] sm:$0xff]
    %v943 = vld [vmem:[%s754 + $0x302] sm:$0xff]
    %v944 = vld [vmem:[%s754 + $0x30a] sm:$0xff]
    %v945 = vld [vmem:[%s754 + $0x31a] sm:$0xff]
    %v946 = vld [vmem:[%s754 + $0x322] sm:$0xff]
    %1011 = vrot.lane.b32.xlu0 %v434, 4
    %v1012 = vpop.permute.xlu0 %1011
    %1013 = vrot.lane.b32.xlu0 %v435, 4
    %v1014 = vpop.permute.xlu0 %1013
    %1015 = vrot.lane.b32.xlu0 %v436, 4
    %v1016 = vpop.permute.xlu0 %1015
    %1017 = vrot.lane.b32.xlu0 %v437, 4
    %v1018 = vpop.permute.xlu0 %1017
    %1019 = vrot.lane.b32.xlu0 %v438, 4
    %v1020 = vpop.permute.xlu0 %1019
    %1021 = vrot.lane.b32.xlu0 %v439, 4
    %v1022 = vpop.permute.xlu0 %1021
    %1023 = vrot.lane.b32.xlu0 %v440, 4
    %v1024 = vpop.permute.xlu0 %1023
    %1025 = vrot.lane.b32.xlu0 %v441, 4
    %v1026 = vpop.permute.xlu0 %1025
    %1027 = vrot.lane.b32.xlu0 %v442, 4
    %v1028 = vpop.permute.xlu0 %1027
    %1029 = vrot.lane.b32.xlu0 %v443, 4
    %v1030 = vpop.permute.xlu0 %1029
    %1031 = vrot.lane.b32.xlu0 %v444, 4
    %v1032 = vpop.permute.xlu0 %1031
    %1033 = vrot.lane.b32.xlu0 %v445, 4
    %v1034 = vpop.permute.xlu0 %1033
    %1035 = vrot.lane.b32.xlu0 %v446, 4
    %v1036 = vpop.permute.xlu0 %1035
    %1037 = vrot.lane.b32.xlu0 %v447, 4
    %v1038 = vpop.permute.xlu0 %1037
    %1039 = vrot.lane.b32.xlu0 %v448, 4
    %v1040 = vpop.permute.xlu0 %1039
    %1041 = vrot.lane.b32.xlu0 %v449, 4
    %v1042 = vpop.permute.xlu0 %1041
    %1043 = vrot.lane.b32.xlu0 %v450, 4
    %v1044 = vpop.permute.xlu0 %1043
    %1045 = vrot.lane.b32.xlu0 %v451, 4
    %v1046 = vpop.permute.xlu0 %1045
    %1047 = vrot.lane.b32.xlu0 %v452, 4
    %v1048 = vpop.permute.xlu0 %1047
    %1049 = vrot.lane.b32.xlu0 %v453, 4
    %v1050 = vpop.permute.xlu0 %1049
    %1051 = vrot.lane.b32.xlu0 %v454, 4
    %v1052 = vpop.permute.xlu0 %1051
    %1053 = vrot.lane.b32.xlu0 %v455, 4
    %v1054 = vpop.permute.xlu0 %1053
    %1055 = vrot.lane.b32.xlu0 %v456, 4
    %v1056 = vpop.permute.xlu0 %1055
    %1057 = vrot.lane.b32.xlu0 %v457, 4
    %v1058 = vpop.permute.xlu0 %1057
    %1059 = vrot.lane.b32.xlu0 %v458, 4
    %v1060 = vpop.permute.xlu0 %1059
    %1061 = vrot.lane.b32.xlu0 %v459, 4
    %v1062 = vpop.permute.xlu0 %1061
    %1063 = vrot.lane.b32.xlu0 %v460, 4
    %v1064 = vpop.permute.xlu0 %1063
    %1065 = vrot.lane.b32.xlu0 %v461, 4
    %v1066 = vpop.permute.xlu0 %1065
    %1067 = vrot.lane.b32.xlu0 %v462, 4
    %v1068 = vpop.permute.xlu0 %1067
    %1069 = vrot.lane.b32.xlu0 %v463, 4
    %v1070 = vpop.permute.xlu0 %1069
    %1071 = vrot.lane.b32.xlu0 %v464, 4
    %v1072 = vpop.permute.xlu0 %1071
    %1073 = vrot.lane.b32.xlu0 %v465, 4
    %v1074 = vpop.permute.xlu0 %1073
    %1075 = vrot.lane.b32.xlu0 %v466, 4
    %v1076 = vpop.permute.xlu0 %1075
    %1077 = vrot.lane.b32.xlu0 %v467, 4
    %v1078 = vpop.permute.xlu0 %1077
    %1079 = vrot.lane.b32.xlu0 %v468, 4
    %v1080 = vpop.permute.xlu0 %1079
    %1081 = vrot.lane.b32.xlu0 %v469, 4
    %v1082 = vpop.permute.xlu0 %1081
    %1083 = vrot.lane.b32.xlu0 %v470, 4
    %v1084 = vpop.permute.xlu0 %1083
    %1085 = vrot.lane.b32.xlu0 %v471, 4
    %v1086 = vpop.permute.xlu0 %1085
    %1087 = vrot.lane.b32.xlu0 %v472, 4
    %v1088 = vpop.permute.xlu0 %1087
    %1089 = vrot.lane.b32.xlu0 %v473, 4
    %v1090 = vpop.permute.xlu0 %1089
    %1091 = vrot.lane.b32.xlu0 %v474, 4
    %v1092 = vpop.permute.xlu0 %1091
    %1093 = vrot.lane.b32.xlu0 %v475, 4
    %v1094 = vpop.permute.xlu0 %1093
    %1095 = vrot.lane.b32.xlu0 %v476, 4
    %v1096 = vpop.permute.xlu0 %1095
    %1097 = vrot.lane.b32.xlu0 %v477, 4
    %v1098 = vpop.permute.xlu0 %1097
    %1099 = vrot.lane.b32.xlu0 %v478, 4
    %v1100 = vpop.permute.xlu0 %1099
    %1101 = vrot.lane.b32.xlu0 %v479, 4
    %v1102 = vpop.permute.xlu0 %1101
    %1103 = vrot.lane.b32.xlu0 %v480, 4
    %v1104 = vpop.permute.xlu0 %1103
    %1105 = vrot.lane.b32.xlu0 %v481, 4
    %v1106 = vpop.permute.xlu0 %1105
    %1107 = vrot.lane.b32.xlu0 %v482, 4
    %v1108 = vpop.permute.xlu0 %1107
    %1109 = vrot.lane.b32.xlu0 %v483, 4
    %v1110 = vpop.permute.xlu0 %1109
    %1111 = vrot.lane.b32.xlu0 %v484, 4
    %v1112 = vpop.permute.xlu0 %1111
    %1113 = vrot.lane.b32.xlu0 %v485, 4
    %v1114 = vpop.permute.xlu0 %1113
    %1115 = vrot.lane.b32.xlu0 %v486, 4
    %v1116 = vpop.permute.xlu0 %1115
    %1117 = vrot.lane.b32.xlu0 %v487, 4
    %v1118 = vpop.permute.xlu0 %1117
    %1119 = vrot.lane.b32.xlu0 %v488, 4
    %v1120 = vpop.permute.xlu0 %1119
    %1121 = vrot.lane.b32.xlu0 %v489, 4
    %v1122 = vpop.permute.xlu0 %1121
    %1123 = vrot.lane.b32.xlu0 %v490, 4
    %v1124 = vpop.permute.xlu0 %1123
    %1125 = vrot.lane.b32.xlu0 %v491, 4
    %v1126 = vpop.permute.xlu0 %1125
    %1127 = vrot.lane.b32.xlu0 %v492, 4
    %v1128 = vpop.permute.xlu0 %1127
    %1129 = vrot.lane.b32.xlu0 %v493, 4
    %v1130 = vpop.permute.xlu0 %1129
    %1131 = vrot.lane.b32.xlu0 %v494, 4
    %v1132 = vpop.permute.xlu0 %1131
    %1133 = vrot.lane.b32.xlu0 %v495, 4
    %v1134 = vpop.permute.xlu0 %1133
    %1135 = vrot.lane.b32.xlu0 %v496, 4
    %v1136 = vpop.permute.xlu0 %1135
    %1137 = vrot.lane.b32.xlu0 %v497, 4
    %v1138 = vpop.permute.xlu0 %1137
    %1267 = vrot.lane.b32.xlu0 %v498, 8
    %v1268 = vpop.permute.xlu0 %1267
    %1269 = vrot.lane.b32.xlu0 %v499, 8
    %v1270 = vpop.permute.xlu0 %1269
    %1271 = vrot.lane.b32.xlu0 %v500, 8
    %v1272 = vpop.permute.xlu0 %1271
    %1273 = vrot.lane.b32.xlu0 %v501, 8
    %v1274 = vpop.permute.xlu0 %1273
    %1275 = vrot.lane.b32.xlu0 %v502, 8
    %v1276 = vpop.permute.xlu0 %1275
    %1277 = vrot.lane.b32.xlu0 %v503, 8
    %v1278 = vpop.permute.xlu0 %1277
    %1279 = vrot.lane.b32.xlu0 %v504, 8
    %v1280 = vpop.permute.xlu0 %1279
    %1281 = vrot.lane.b32.xlu0 %v505, 8
    %v1282 = vpop.permute.xlu0 %1281
    %1283 = vrot.lane.b32.xlu0 %v506, 8
    %v1284 = vpop.permute.xlu0 %1283
    %1285 = vrot.lane.b32.xlu0 %v507, 8
    %v1286 = vpop.permute.xlu0 %1285
    %1287 = vrot.lane.b32.xlu0 %v508, 8
    %v1288 = vpop.permute.xlu0 %1287
    %1289 = vrot.lane.b32.xlu0 %v509, 8
    %v1290 = vpop.permute.xlu0 %1289
    %1291 = vrot.lane.b32.xlu0 %v510, 8
    %v1292 = vpop.permute.xlu0 %1291
    %1293 = vrot.lane.b32.xlu0 %v511, 8
    %v1294 = vpop.permute.xlu0 %1293
    %1295 = vrot.lane.b32.xlu0 %v512, 8
    %v1296 = vpop.permute.xlu0 %1295
    %1297 = vrot.lane.b32.xlu0 %v513, 8
    %v1298 = vpop.permute.xlu0 %1297
    %1299 = vrot.lane.b32.xlu0 %v514, 8
    %v1300 = vpop.permute.xlu0 %1299
    %1301 = vrot.lane.b32.xlu0 %v515, 8
    %v1302 = vpop.permute.xlu0 %1301
    %1303 = vrot.lane.b32.xlu0 %v516, 8
    %v1304 = vpop.permute.xlu0 %1303
    %1305 = vrot.lane.b32.xlu0 %v517, 8
    %v1306 = vpop.permute.xlu0 %1305
    %1307 = vrot.lane.b32.xlu0 %v518, 8
    %v1308 = vpop.permute.xlu0 %1307
    %1309 = vrot.lane.b32.xlu0 %v519, 8
    %v1310 = vpop.permute.xlu0 %1309
    %1311 = vrot.lane.b32.xlu0 %v520, 8
    %v1312 = vpop.permute.xlu0 %1311
    %1313 = vrot.lane.b32.xlu0 %v521, 8
    %v1314 = vpop.permute.xlu0 %1313
    %1315 = vrot.lane.b32.xlu0 %v522, 8
    %v1316 = vpop.permute.xlu0 %1315
    %1317 = vrot.lane.b32.xlu0 %v523, 8
    %v1318 = vpop.permute.xlu0 %1317
    %1319 = vrot.lane.b32.xlu0 %v524, 8
    %v1320 = vpop.permute.xlu0 %1319
    %1321 = vrot.lane.b32.xlu0 %v525, 8
    %v1322 = vpop.permute.xlu0 %1321
    %1323 = vrot.lane.b32.xlu0 %v526, 8
    %v1324 = vpop.permute.xlu0 %1323
    %1325 = vrot.lane.b32.xlu0 %v527, 8
    %v1326 = vpop.permute.xlu0 %1325
    %1327 = vrot.lane.b32.xlu0 %v528, 8
    %v1328 = vpop.permute.xlu0 %1327
    %1329 = vrot.lane.b32.xlu0 %v529, 8
    %v1330 = vpop.permute.xlu0 %1329
    %1331 = vrot.lane.b32.xlu0 %v530, 8
    %v1332 = vpop.permute.xlu0 %1331
    %1333 = vrot.lane.b32.xlu0 %v531, 8
    %v1334 = vpop.permute.xlu0 %1333
    %1335 = vrot.lane.b32.xlu0 %v532, 8
    %v1336 = vpop.permute.xlu0 %1335
    %1337 = vrot.lane.b32.xlu0 %v533, 8
    %v1338 = vpop.permute.xlu0 %1337
    %1339 = vrot.lane.b32.xlu0 %v534, 8
    %v1340 = vpop.permute.xlu0 %1339
    %1341 = vrot.lane.b32.xlu0 %v535, 8
    %v1342 = vpop.permute.xlu0 %1341
    %1343 = vrot.lane.b32.xlu0 %v536, 8
    %v1344 = vpop.permute.xlu0 %1343
    %1345 = vrot.lane.b32.xlu0 %v537, 8
    %v1346 = vpop.permute.xlu0 %1345
    %1347 = vrot.lane.b32.xlu0 %v538, 8
    %v1348 = vpop.permute.xlu0 %1347
    %1349 = vrot.lane.b32.xlu0 %v539, 8
    %v1350 = vpop.permute.xlu0 %1349
    %1351 = vrot.lane.b32.xlu0 %v540, 8
    %v1352 = vpop.permute.xlu0 %1351
    %1353 = vrot.lane.b32.xlu0 %v541, 8
    %v1354 = vpop.permute.xlu0 %1353
    %1355 = vrot.lane.b32.xlu0 %v542, 8
    %v1356 = vpop.permute.xlu0 %1355
    %1357 = vrot.lane.b32.xlu0 %v543, 8
    %v1358 = vpop.permute.xlu0 %1357
    %1359 = vrot.lane.b32.xlu0 %v544, 8
    %v1360 = vpop.permute.xlu0 %1359
    %1361 = vrot.lane.b32.xlu0 %v545, 8
    %v1362 = vpop.permute.xlu0 %1361
    %1363 = vrot.lane.b32.xlu0 %v546, 8
    %v1364 = vpop.permute.xlu0 %1363
    %1365 = vrot.lane.b32.xlu0 %v547, 8
    %v1366 = vpop.permute.xlu0 %1365
    %1367 = vrot.lane.b32.xlu0 %v548, 8
    %v1368 = vpop.permute.xlu0 %1367
    %1369 = vrot.lane.b32.xlu0 %v549, 8
    %v1370 = vpop.permute.xlu0 %1369
    %1371 = vrot.lane.b32.xlu0 %v550, 8
    %v1372 = vpop.permute.xlu0 %1371
    %1373 = vrot.lane.b32.xlu0 %v551, 8
    %v1374 = vpop.permute.xlu0 %1373
    %1375 = vrot.lane.b32.xlu0 %v552, 8
    %v1376 = vpop.permute.xlu0 %1375
    %1377 = vrot.lane.b32.xlu0 %v553, 8
    %v1378 = vpop.permute.xlu0 %1377
    %1379 = vrot.lane.b32.xlu0 %v554, 8
    %v1380 = vpop.permute.xlu0 %1379
    %1381 = vrot.lane.b32.xlu0 %v555, 8
    %v1382 = vpop.permute.xlu0 %1381
    %1383 = vrot.lane.b32.xlu0 %v556, 8
    %v1384 = vpop.permute.xlu0 %1383
    %1385 = vrot.lane.b32.xlu0 %v557, 8
    %v1386 = vpop.permute.xlu0 %1385
    %1387 = vrot.lane.b32.xlu0 %v558, 8
    %v1388 = vpop.permute.xlu0 %1387
    %1389 = vrot.lane.b32.xlu0 %v559, 8
    %v1390 = vpop.permute.xlu0 %1389
    %1391 = vrot.lane.b32.xlu0 %v560, 8
    %v1392 = vpop.permute.xlu0 %1391
    %1393 = vrot.lane.b32.xlu0 %v561, 8
    %v1394 = vpop.permute.xlu0 %1393
    %1523 = vrot.lane.b32.xlu0 %v562, 12
    %v1524 = vpop.permute.xlu0 %1523
    %1525 = vrot.lane.b32.xlu0 %v563, 12
    %v1526 = vpop.permute.xlu0 %1525
    %1527 = vrot.lane.b32.xlu0 %v564, 12
    %v1528 = vpop.permute.xlu0 %1527
    %1529 = vrot.lane.b32.xlu0 %v565, 12
    %v1530 = vpop.permute.xlu0 %1529
    %1531 = vrot.lane.b32.xlu0 %v566, 12
    %v1532 = vpop.permute.xlu0 %1531
    %1533 = vrot.lane.b32.xlu0 %v567, 12
    %v1534 = vpop.permute.xlu0 %1533
    %1535 = vrot.lane.b32.xlu0 %v568, 12
    %v1536 = vpop.permute.xlu0 %1535
    %1537 = vrot.lane.b32.xlu0 %v569, 12
    %v1538 = vpop.permute.xlu0 %1537
    %1539 = vrot.lane.b32.xlu0 %v570, 12
    %v1540 = vpop.permute.xlu0 %1539
    %1541 = vrot.lane.b32.xlu0 %v571, 12
    %v1542 = vpop.permute.xlu0 %1541
    %1543 = vrot.lane.b32.xlu0 %v572, 12
    %v1544 = vpop.permute.xlu0 %1543
    %1545 = vrot.lane.b32.xlu0 %v573, 12
    %v1546 = vpop.permute.xlu0 %1545
    %1547 = vrot.lane.b32.xlu0 %v574, 12
    %v1548 = vpop.permute.xlu0 %1547
    %1549 = vrot.lane.b32.xlu0 %v575, 12
    %v1550 = vpop.permute.xlu0 %1549
    %1551 = vrot.lane.b32.xlu0 %v576, 12
    %v1552 = vpop.permute.xlu0 %1551
    %1553 = vrot.lane.b32.xlu0 %v577, 12
    %v1554 = vpop.permute.xlu0 %1553
    %1555 = vrot.lane.b32.xlu0 %v578, 12
    %v1556 = vpop.permute.xlu0 %1555
    %1557 = vrot.lane.b32.xlu0 %v579, 12
    %v1558 = vpop.permute.xlu0 %1557
    %1559 = vrot.lane.b32.xlu0 %v580, 12
    %v1560 = vpop.permute.xlu0 %1559
    %1561 = vrot.lane.b32.xlu0 %v581, 12
    %v1562 = vpop.permute.xlu0 %1561
    %1563 = vrot.lane.b32.xlu0 %v582, 12
    %v1564 = vpop.permute.xlu0 %1563
    %1565 = vrot.lane.b32.xlu0 %v583, 12
    %v1566 = vpop.permute.xlu0 %1565
    %1567 = vrot.lane.b32.xlu0 %v584, 12
    %v1568 = vpop.permute.xlu0 %1567
    %1569 = vrot.lane.b32.xlu0 %v585, 12
    %v1570 = vpop.permute.xlu0 %1569
    %1571 = vrot.lane.b32.xlu0 %v586, 12
    %v1572 = vpop.permute.xlu0 %1571
    %1573 = vrot.lane.b32.xlu0 %v587, 12
    %v1574 = vpop.permute.xlu0 %1573
    %1575 = vrot.lane.b32.xlu0 %v588, 12
    %v1576 = vpop.permute.xlu0 %1575
    %1577 = vrot.lane.b32.xlu0 %v589, 12
    %v1578 = vpop.permute.xlu0 %1577
    %1579 = vrot.lane.b32.xlu0 %v590, 12
    %v1580 = vpop.permute.xlu0 %1579
    %1581 = vrot.lane.b32.xlu0 %v591, 12
    %v1582 = vpop.permute.xlu0 %1581
    %1583 = vrot.lane.b32.xlu0 %v592, 12
    %v1584 = vpop.permute.xlu0 %1583
    %1585 = vrot.lane.b32.xlu0 %v593, 12
    %v1586 = vpop.permute.xlu0 %1585
    %1587 = vrot.lane.b32.xlu0 %v594, 12
    %v1588 = vpop.permute.xlu0 %1587
    %1589 = vrot.lane.b32.xlu0 %v595, 12
    %v1590 = vpop.permute.xlu0 %1589
    %1591 = vrot.lane.b32.xlu0 %v596, 12
    %v1592 = vpop.permute.xlu0 %1591
    %1593 = vrot.lane.b32.xlu0 %v597, 12
    %v1594 = vpop.permute.xlu0 %1593
    %1595 = vrot.lane.b32.xlu0 %v598, 12
    %v1596 = vpop.permute.xlu0 %1595
    %1597 = vrot.lane.b32.xlu0 %v599, 12
    %v1598 = vpop.permute.xlu0 %1597
    %1599 = vrot.lane.b32.xlu0 %v600, 12
    %v1600 = vpop.permute.xlu0 %1599
    %1601 = vrot.lane.b32.xlu0 %v601, 12
    %v1602 = vpop.permute.xlu0 %1601
    %1603 = vrot.lane.b32.xlu0 %v602, 12
    %v1604 = vpop.permute.xlu0 %1603
    %1605 = vrot.lane.b32.xlu0 %v603, 12
    %v1606 = vpop.permute.xlu0 %1605
    %1607 = vrot.lane.b32.xlu0 %v604, 12
    %v1608 = vpop.permute.xlu0 %1607
    %1609 = vrot.lane.b32.xlu0 %v605, 12
    %v1610 = vpop.permute.xlu0 %1609
    %1611 = vrot.lane.b32.xlu0 %v606, 12
    %v1612 = vpop.permute.xlu0 %1611
    %1613 = vrot.lane.b32.xlu0 %v607, 12
    %v1614 = vpop.permute.xlu0 %1613
    %1615 = vrot.lane.b32.xlu0 %v608, 12
    %v1616 = vpop.permute.xlu0 %1615
    %1617 = vrot.lane.b32.xlu0 %v609, 12
    %v1618 = vpop.permute.xlu0 %1617
    %1619 = vrot.lane.b32.xlu0 %v610, 12
    %v1620 = vpop.permute.xlu0 %1619
    %1621 = vrot.lane.b32.xlu0 %v611, 12
    %v1622 = vpop.permute.xlu0 %1621
    %1623 = vrot.lane.b32.xlu0 %v612, 12
    %v1624 = vpop.permute.xlu0 %1623
    %1625 = vrot.lane.b32.xlu0 %v613, 12
    %v1626 = vpop.permute.xlu0 %1625
    %1627 = vrot.lane.b32.xlu0 %v614, 12
    %v1628 = vpop.permute.xlu0 %1627
    %1629 = vrot.lane.b32.xlu0 %v615, 12
    %v1630 = vpop.permute.xlu0 %1629
    %1631 = vrot.lane.b32.xlu0 %v616, 12
    %v1632 = vpop.permute.xlu0 %1631
    %1633 = vrot.lane.b32.xlu0 %v617, 12
    %v1634 = vpop.permute.xlu0 %1633
    %1635 = vrot.lane.b32.xlu0 %v618, 12
    %v1636 = vpop.permute.xlu0 %1635
    %1637 = vrot.lane.b32.xlu0 %v619, 12
    %v1638 = vpop.permute.xlu0 %1637
    %1639 = vrot.lane.b32.xlu0 %v620, 12
    %v1640 = vpop.permute.xlu0 %1639
    %1641 = vrot.lane.b32.xlu0 %v621, 12
    %v1642 = vpop.permute.xlu0 %1641
    %1643 = vrot.lane.b32.xlu0 %v622, 12
    %v1644 = vpop.permute.xlu0 %1643
    %1645 = vrot.lane.b32.xlu0 %v623, 12
    %v1646 = vpop.permute.xlu0 %1645
    %1647 = vrot.lane.b32.xlu0 %v624, 12
    %v1648 = vpop.permute.xlu0 %1647
    %1649 = vrot.lane.b32.xlu0 %v625, 12
    %v1650 = vpop.permute.xlu0 %1649
    %1779 = vrot.lane.b32.xlu0 %v626, 16
    %v1780 = vpop.permute.xlu0 %1779
    %1781 = vrot.lane.b32.xlu0 %v627, 16
    %v1782 = vpop.permute.xlu0 %1781
    %1783 = vrot.lane.b32.xlu0 %v628, 16
    %v1784 = vpop.permute.xlu0 %1783
    %1785 = vrot.lane.b32.xlu0 %v629, 16
    %v1786 = vpop.permute.xlu0 %1785
    %1787 = vrot.lane.b32.xlu0 %v630, 16
    %v1788 = vpop.permute.xlu0 %1787
    %1789 = vrot.lane.b32.xlu0 %v631, 16
    %v1790 = vpop.permute.xlu0 %1789
    %1791 = vrot.lane.b32.xlu0 %v632, 16
    %v1792 = vpop.permute.xlu0 %1791
    %1793 = vrot.lane.b32.xlu0 %v633, 16
    %v1794 = vpop.permute.xlu0 %1793
    %1795 = vrot.lane.b32.xlu0 %v634, 16
    %v1796 = vpop.permute.xlu0 %1795
    %1797 = vrot.lane.b32.xlu0 %v635, 16
    %v1798 = vpop.permute.xlu0 %1797
    %1799 = vrot.lane.b32.xlu0 %v636, 16
    %v1800 = vpop.permute.xlu0 %1799
    %1801 = vrot.lane.b32.xlu0 %v637, 16
    %v1802 = vpop.permute.xlu0 %1801
    %1803 = vrot.lane.b32.xlu0 %v638, 16
    %v1804 = vpop.permute.xlu0 %1803
    %1805 = vrot.lane.b32.xlu0 %v639, 16
    %v1806 = vpop.permute.xlu0 %1805
    %1807 = vrot.lane.b32.xlu0 %v640, 16
    %v1808 = vpop.permute.xlu0 %1807
    %1809 = vrot.lane.b32.xlu0 %v641, 16
    %v1810 = vpop.permute.xlu0 %1809
    %1811 = vrot.lane.b32.xlu0 %v642, 16
    %v1812 = vpop.permute.xlu0 %1811
    %1813 = vrot.lane.b32.xlu0 %v643, 16
    %v1814 = vpop.permute.xlu0 %1813
    %1815 = vrot.lane.b32.xlu0 %v644, 16
    %v1816 = vpop.permute.xlu0 %1815
    %1817 = vrot.lane.b32.xlu0 %v645, 16
    %v1818 = vpop.permute.xlu0 %1817
    %1819 = vrot.lane.b32.xlu0 %v646, 16
    %v1820 = vpop.permute.xlu0 %1819
    %1821 = vrot.lane.b32.xlu0 %v647, 16
    %v1822 = vpop.permute.xlu0 %1821
    %1823 = vrot.lane.b32.xlu0 %v648, 16
    %v1824 = vpop.permute.xlu0 %1823
    %1825 = vrot.lane.b32.xlu0 %v649, 16
    %v1826 = vpop.permute.xlu0 %1825
    %1827 = vrot.lane.b32.xlu0 %v650, 16
    %v1828 = vpop.permute.xlu0 %1827
    %1829 = vrot.lane.b32.xlu0 %v651, 16
    %v1830 = vpop.permute.xlu0 %1829
    %1831 = vrot.lane.b32.xlu0 %v652, 16
    %v1832 = vpop.permute.xlu0 %1831
    %1833 = vrot.lane.b32.xlu0 %v653, 16
    %v1834 = vpop.permute.xlu0 %1833
    %1835 = vrot.lane.b32.xlu0 %v654, 16
    %v1836 = vpop.permute.xlu0 %1835
    %1837 = vrot.lane.b32.xlu0 %v655, 16
    %v1838 = vpop.permute.xlu0 %1837
    %1839 = vrot.lane.b32.xlu0 %v656, 16
    %v1840 = vpop.permute.xlu0 %1839
    %1841 = vrot.lane.b32.xlu0 %v657, 16
    %v1842 = vpop.permute.xlu0 %1841
    %1843 = vrot.lane.b32.xlu0 %v658, 16
    %v1844 = vpop.permute.xlu0 %1843
    %1845 = vrot.lane.b32.xlu0 %v659, 16
    %v1846 = vpop.permute.xlu0 %1845
    %1847 = vrot.lane.b32.xlu0 %v660, 16
    %v1848 = vpop.permute.xlu0 %1847
    %1849 = vrot.lane.b32.xlu0 %v661, 16
    %v1850 = vpop.permute.xlu0 %1849
    %1851 = vrot.lane.b32.xlu0 %v662, 16
    %v1852 = vpop.permute.xlu0 %1851
    %1853 = vrot.lane.b32.xlu0 %v663, 16
    %v1854 = vpop.permute.xlu0 %1853
    %1855 = vrot.lane.b32.xlu0 %v664, 16
    %v1856 = vpop.permute.xlu0 %1855
    %1857 = vrot.lane.b32.xlu0 %v665, 16
    %v1858 = vpop.permute.xlu0 %1857
    %1859 = vrot.lane.b32.xlu0 %v666, 16
    %v1860 = vpop.permute.xlu0 %1859
    %1861 = vrot.lane.b32.xlu0 %v667, 16
    %v1862 = vpop.permute.xlu0 %1861
    %1863 = vrot.lane.b32.xlu0 %v668, 16
    %v1864 = vpop.permute.xlu0 %1863
    %1865 = vrot.lane.b32.xlu0 %v669, 16
    %v1866 = vpop.permute.xlu0 %1865
    %1867 = vrot.lane.b32.xlu0 %v670, 16
    %v1868 = vpop.permute.xlu0 %1867
    %1869 = vrot.lane.b32.xlu0 %v671, 16
    %v1870 = vpop.permute.xlu0 %1869
    %1871 = vrot.lane.b32.xlu0 %v672, 16
    %v1872 = vpop.permute.xlu0 %1871
    %1873 = vrot.lane.b32.xlu0 %v673, 16
    %v1874 = vpop.permute.xlu0 %1873
    %1875 = vrot.lane.b32.xlu0 %v674, 16
    %v1876 = vpop.permute.xlu0 %1875
    %1877 = vrot.lane.b32.xlu0 %v675, 16
    %v1878 = vpop.permute.xlu0 %1877
    %1879 = vrot.lane.b32.xlu0 %v676, 16
    %v1880 = vpop.permute.xlu0 %1879
    %1881 = vrot.lane.b32.xlu0 %v677, 16
    %v1882 = vpop.permute.xlu0 %1881
    %1883 = vrot.lane.b32.xlu0 %v678, 16
    %v1884 = vpop.permute.xlu0 %1883
    %1885 = vrot.lane.b32.xlu0 %v679, 16
    %v1886 = vpop.permute.xlu0 %1885
    %1887 = vrot.lane.b32.xlu0 %v680, 16
    %v1888 = vpop.permute.xlu0 %1887
    %1889 = vrot.lane.b32.xlu0 %v681, 16
    %v1890 = vpop.permute.xlu0 %1889
    %1891 = vrot.lane.b32.xlu0 %v682, 16
    %v1892 = vpop.permute.xlu0 %1891
    %1893 = vrot.lane.b32.xlu0 %v683, 16
    %v1894 = vpop.permute.xlu0 %1893
    %1895 = vrot.lane.b32.xlu0 %v684, 16
    %v1896 = vpop.permute.xlu0 %1895
    %1897 = vrot.lane.b32.xlu0 %v685, 16
    %v1898 = vpop.permute.xlu0 %1897
    %1899 = vrot.lane.b32.xlu0 %v686, 16
    %v1900 = vpop.permute.xlu0 %1899
    %1901 = vrot.lane.b32.xlu0 %v687, 16
    %v1902 = vpop.permute.xlu0 %1901
    %1903 = vrot.lane.b32.xlu0 %v688, 16
    %v1904 = vpop.permute.xlu0 %1903
    %1905 = vrot.lane.b32.xlu0 %v689, 16
    %v1906 = vpop.permute.xlu0 %1905
    %2035 = vrot.lane.b32.xlu0 %v690, 20
    %v2036 = vpop.permute.xlu0 %2035
    %2037 = vrot.lane.b32.xlu0 %v691, 20
    %v2038 = vpop.permute.xlu0 %2037
    %2039 = vrot.lane.b32.xlu0 %v692, 20
    %v2040 = vpop.permute.xlu0 %2039
    %2041 = vrot.lane.b32.xlu0 %v693, 20
    %v2042 = vpop.permute.xlu0 %2041
    %2043 = vrot.lane.b32.xlu0 %v694, 20
    %v2044 = vpop.permute.xlu0 %2043
    %2045 = vrot.lane.b32.xlu0 %v695, 20
    %v2046 = vpop.permute.xlu0 %2045
    %2047 = vrot.lane.b32.xlu0 %v696, 20
    %v2048 = vpop.permute.xlu0 %2047
    %2049 = vrot.lane.b32.xlu0 %v697, 20
    %v2050 = vpop.permute.xlu0 %2049
    %2051 = vrot.lane.b32.xlu0 %v698, 20
    %v2052 = vpop.permute.xlu0 %2051
    %2053 = vrot.lane.b32.xlu0 %v699, 20
    %v2054 = vpop.permute.xlu0 %2053
    %2055 = vrot.lane.b32.xlu0 %v700, 20
    %v2056 = vpop.permute.xlu0 %2055
    %2057 = vrot.lane.b32.xlu0 %v701, 20
    %v2058 = vpop.permute.xlu0 %2057
    %2059 = vrot.lane.b32.xlu0 %v702, 20
    %v2060 = vpop.permute.xlu0 %2059
    %2061 = vrot.lane.b32.xlu0 %v703, 20
    %v2062 = vpop.permute.xlu0 %2061
    %2063 = vrot.lane.b32.xlu0 %v704, 20
    %v2064 = vpop.permute.xlu0 %2063
    %2065 = vrot.lane.b32.xlu0 %v705, 20
    %v2066 = vpop.permute.xlu0 %2065
    %2067 = vrot.lane.b32.xlu0 %v706, 20
    %v2068 = vpop.permute.xlu0 %2067
    %2069 = vrot.lane.b32.xlu0 %v707, 20
    %v2070 = vpop.permute.xlu0 %2069
    %2071 = vrot.lane.b32.xlu0 %v708, 20
    %v2072 = vpop.permute.xlu0 %2071
    %2073 = vrot.lane.b32.xlu0 %v709, 20
    %v2074 = vpop.permute.xlu0 %2073
    %2075 = vrot.lane.b32.xlu0 %v710, 20
    %v2076 = vpop.permute.xlu0 %2075
    %2077 = vrot.lane.b32.xlu0 %v711, 20
    %v2078 = vpop.permute.xlu0 %2077
    %2079 = vrot.lane.b32.xlu0 %v712, 20
    %v2080 = vpop.permute.xlu0 %2079
    %2081 = vrot.lane.b32.xlu0 %v713, 20
    %v2082 = vpop.permute.xlu0 %2081
    %2083 = vrot.lane.b32.xlu0 %v714, 20
    %v2084 = vpop.permute.xlu0 %2083
    %2085 = vrot.lane.b32.xlu0 %v715, 20
    %v2086 = vpop.permute.xlu0 %2085
    %2087 = vrot.lane.b32.xlu0 %v716, 20
    %v2088 = vpop.permute.xlu0 %2087
    %2089 = vrot.lane.b32.xlu0 %v717, 20
    %v2090 = vpop.permute.xlu0 %2089
    %2091 = vrot.lane.b32.xlu0 %v718, 20
    %v2092 = vpop.permute.xlu0 %2091
    %2093 = vrot.lane.b32.xlu0 %v719, 20
    %v2094 = vpop.permute.xlu0 %2093
    %2095 = vrot.lane.b32.xlu0 %v720, 20
    %v2096 = vpop.permute.xlu0 %2095
    %2097 = vrot.lane.b32.xlu0 %v721, 20
    %v2098 = vpop.permute.xlu0 %2097
    %2099 = vrot.lane.b32.xlu0 %v722, 20
    %v2100 = vpop.permute.xlu0 %2099
    %2101 = vrot.lane.b32.xlu0 %v723, 20
    %v2102 = vpop.permute.xlu0 %2101
    %2103 = vrot.lane.b32.xlu0 %v724, 20
    %v2104 = vpop.permute.xlu0 %2103
    %2105 = vrot.lane.b32.xlu0 %v725, 20
    %v2106 = vpop.permute.xlu0 %2105
    %2107 = vrot.lane.b32.xlu0 %v726, 20
    %v2108 = vpop.permute.xlu0 %2107
    %2109 = vrot.lane.b32.xlu0 %v727, 20
    %v2110 = vpop.permute.xlu0 %2109
    %2111 = vrot.lane.b32.xlu0 %v728, 20
    %v2112 = vpop.permute.xlu0 %2111
    %2113 = vrot.lane.b32.xlu0 %v729, 20
    %v2114 = vpop.permute.xlu0 %2113
    %2115 = vrot.lane.b32.xlu0 %v730, 20
    %v2116 = vpop.permute.xlu0 %2115
    %2117 = vrot.lane.b32.xlu0 %v731, 20
    %v2118 = vpop.permute.xlu0 %2117
    %2119 = vrot.lane.b32.xlu0 %v732, 20
    %v2120 = vpop.permute.xlu0 %2119
    %2121 = vrot.lane.b32.xlu0 %v733, 20
    %v2122 = vpop.permute.xlu0 %2121
    %2123 = vrot.lane.b32.xlu0 %v734, 20
    %v2124 = vpop.permute.xlu0 %2123
    %2125 = vrot.lane.b32.xlu0 %v735, 20
    %v2126 = vpop.permute.xlu0 %2125
    %2127 = vrot.lane.b32.xlu0 %v736, 20
    %v2128 = vpop.permute.xlu0 %2127
    %2129 = vrot.lane.b32.xlu0 %v737, 20
    %v2130 = vpop.permute.xlu0 %2129
    %2131 = vrot.lane.b32.xlu0 %v738, 20
    %v2132 = vpop.permute.xlu0 %2131
    %2133 = vrot.lane.b32.xlu0 %v739, 20
    %v2134 = vpop.permute.xlu0 %2133
    %2135 = vrot.lane.b32.xlu0 %v740, 20
    %v2136 = vpop.permute.xlu0 %2135
    %2137 = vrot.lane.b32.xlu0 %v741, 20
    %v2138 = vpop.permute.xlu0 %2137
    %2139 = vrot.lane.b32.xlu0 %v742, 20
    %v2140 = vpop.permute.xlu0 %2139
    %2141 = vrot.lane.b32.xlu0 %v743, 20
    %v2142 = vpop.permute.xlu0 %2141
    %2143 = vrot.lane.b32.xlu0 %v744, 20
    %v2144 = vpop.permute.xlu0 %2143
    %2145 = vrot.lane.b32.xlu0 %v745, 20
    %v2146 = vpop.permute.xlu0 %2145
    %2147 = vrot.lane.b32.xlu0 %v746, 20
    %v2148 = vpop.permute.xlu0 %2147
    %2149 = vrot.lane.b32.xlu0 %v747, 20
    %v2150 = vpop.permute.xlu0 %2149
    %2151 = vrot.lane.b32.xlu0 %v748, 20
    %v2152 = vpop.permute.xlu0 %2151
    %2153 = vrot.lane.b32.xlu0 %v749, 20
    %v2154 = vpop.permute.xlu0 %2153
    %2155 = vrot.lane.b32.xlu0 %v750, 20
    %v2156 = vpop.permute.xlu0 %2155
    %2157 = vrot.lane.b32.xlu0 %v751, 20
    %v2158 = vpop.permute.xlu0 %2157
    %2159 = vrot.lane.b32.xlu0 %v752, 20
    %v2160 = vpop.permute.xlu0 %2159
    %2161 = vrot.lane.b32.xlu0 %v753, 20
    %v2162 = vpop.permute.xlu0 %2161
    %2291 = vrot.lane.b32.xlu0 %v755, 24
    %v2292 = vpop.permute.xlu0 %2291
    %2293 = vrot.lane.b32.xlu0 %v756, 24
    %v2294 = vpop.permute.xlu0 %2293
    %2295 = vrot.lane.b32.xlu0 %v757, 24
    %v2296 = vpop.permute.xlu0 %2295
    %2297 = vrot.lane.b32.xlu0 %v758, 24
    %v2298 = vpop.permute.xlu0 %2297
    %2299 = vrot.lane.b32.xlu0 %v759, 24
    %v2300 = vpop.permute.xlu0 %2299
    %2301 = vrot.lane.b32.xlu0 %v760, 24
    %v2302 = vpop.permute.xlu0 %2301
    %2303 = vrot.lane.b32.xlu0 %v761, 24
    %v2304 = vpop.permute.xlu0 %2303
    %2305 = vrot.lane.b32.xlu0 %v762, 24
    %v2306 = vpop.permute.xlu0 %2305
    %2307 = vrot.lane.b32.xlu0 %v763, 24
    %v2308 = vpop.permute.xlu0 %2307
    %2309 = vrot.lane.b32.xlu0 %v764, 24
    %v2310 = vpop.permute.xlu0 %2309
    %2311 = vrot.lane.b32.xlu0 %v765, 24
    %v2312 = vpop.permute.xlu0 %2311
    %2313 = vrot.lane.b32.xlu0 %v766, 24
    %v2314 = vpop.permute.xlu0 %2313
    %2315 = vrot.lane.b32.xlu0 %v767, 24
    %v2316 = vpop.permute.xlu0 %2315
    %2317 = vrot.lane.b32.xlu0 %v768, 24
    %v2318 = vpop.permute.xlu0 %2317
    %2319 = vrot.lane.b32.xlu0 %v769, 24
    %v2320 = vpop.permute.xlu0 %2319
    %2321 = vrot.lane.b32.xlu0 %v770, 24
    %v2322 = vpop.permute.xlu0 %2321
    %2323 = vrot.lane.b32.xlu0 %v771, 24
    %v2324 = vpop.permute.xlu0 %2323
    %2325 = vrot.lane.b32.xlu0 %v772, 24
    %v2326 = vpop.permute.xlu0 %2325
    %2327 = vrot.lane.b32.xlu0 %v773, 24
    %v2328 = vpop.permute.xlu0 %2327
    %2329 = vrot.lane.b32.xlu0 %v774, 24
    %v2330 = vpop.permute.xlu0 %2329
    %2331 = vrot.lane.b32.xlu0 %v775, 24
    %v2332 = vpop.permute.xlu0 %2331
    %2333 = vrot.lane.b32.xlu0 %v776, 24
    %v2334 = vpop.permute.xlu0 %2333
    %2335 = vrot.lane.b32.xlu0 %v777, 24
    %v2336 = vpop.permute.xlu0 %2335
    %2337 = vrot.lane.b32.xlu0 %v778, 24
    %v2338 = vpop.permute.xlu0 %2337
    %2339 = vrot.lane.b32.xlu0 %v779, 24
    %v2340 = vpop.permute.xlu0 %2339
    %2341 = vrot.lane.b32.xlu0 %v780, 24
    %v2342 = vpop.permute.xlu0 %2341
    %2343 = vrot.lane.b32.xlu0 %v781, 24
    %v2344 = vpop.permute.xlu0 %2343
    %2345 = vrot.lane.b32.xlu0 %v782, 24
    %v2346 = vpop.permute.xlu0 %2345
    %2347 = vrot.lane.b32.xlu0 %v783, 24
    %v2348 = vpop.permute.xlu0 %2347
    %2349 = vrot.lane.b32.xlu0 %v784, 24
    %v2350 = vpop.permute.xlu0 %2349
    %2351 = vrot.lane.b32.xlu0 %v785, 24
    %v2352 = vpop.permute.xlu0 %2351
    %2353 = vrot.lane.b32.xlu0 %v786, 24
    %v2354 = vpop.permute.xlu0 %2353
    %2355 = vrot.lane.b32.xlu0 %v787, 24
    %v2356 = vpop.permute.xlu0 %2355
    %2357 = vrot.lane.b32.xlu0 %v788, 24
    %v2358 = vpop.permute.xlu0 %2357
    %2359 = vrot.lane.b32.xlu0 %v789, 24
    %v2360 = vpop.permute.xlu0 %2359
    %2361 = vrot.lane.b32.xlu0 %v790, 24
    %v2362 = vpop.permute.xlu0 %2361
    %2363 = vrot.lane.b32.xlu0 %v791, 24
    %v2364 = vpop.permute.xlu0 %2363
    %2365 = vrot.lane.b32.xlu0 %v792, 24
    %v2366 = vpop.permute.xlu0 %2365
    %2367 = vrot.lane.b32.xlu0 %v793, 24
    %v2368 = vpop.permute.xlu0 %2367
    %2369 = vrot.lane.b32.xlu0 %v794, 24
    %v2370 = vpop.permute.xlu0 %2369
    %2371 = vrot.lane.b32.xlu0 %v795, 24
    %v2372 = vpop.permute.xlu0 %2371
    %2373 = vrot.lane.b32.xlu0 %v796, 24
    %v2374 = vpop.permute.xlu0 %2373
    %2375 = vrot.lane.b32.xlu0 %v797, 24
    %v2376 = vpop.permute.xlu0 %2375
    %2377 = vrot.lane.b32.xlu0 %v798, 24
    %v2378 = vpop.permute.xlu0 %2377
    %2379 = vrot.lane.b32.xlu0 %v799, 24
    %v2380 = vpop.permute.xlu0 %2379
    %2381 = vrot.lane.b32.xlu0 %v800, 24
    %v2382 = vpop.permute.xlu0 %2381
    %2383 = vrot.lane.b32.xlu0 %v801, 24
    %v2384 = vpop.permute.xlu0 %2383
    %2385 = vrot.lane.b32.xlu0 %v802, 24
    %v2386 = vpop.permute.xlu0 %2385
    %2387 = vrot.lane.b32.xlu0 %v803, 24
    %v2388 = vpop.permute.xlu0 %2387
    %2389 = vrot.lane.b32.xlu0 %v804, 24
    %v2390 = vpop.permute.xlu0 %2389
    %2391 = vrot.lane.b32.xlu0 %v805, 24
    %v2392 = vpop.permute.xlu0 %2391
    %2393 = vrot.lane.b32.xlu0 %v806, 24
    %v2394 = vpop.permute.xlu0 %2393
    %2395 = vrot.lane.b32.xlu0 %v807, 24
    %v2396 = vpop.permute.xlu0 %2395
    %2397 = vrot.lane.b32.xlu0 %v808, 24
    %v2398 = vpop.permute.xlu0 %2397
    %2399 = vrot.lane.b32.xlu0 %v809, 24
    %v2400 = vpop.permute.xlu0 %2399
    %2401 = vrot.lane.b32.xlu0 %v810, 24
    %v2402 = vpop.permute.xlu0 %2401
    %2403 = vrot.lane.b32.xlu0 %v811, 24
    %v2404 = vpop.permute.xlu0 %2403
    %2405 = vrot.lane.b32.xlu0 %v812, 24
    %v2406 = vpop.permute.xlu0 %2405
    %2407 = vrot.lane.b32.xlu0 %v813, 24
    %v2408 = vpop.permute.xlu0 %2407
    %2409 = vrot.lane.b32.xlu0 %v814, 24
    %v2410 = vpop.permute.xlu0 %2409
    %2411 = vrot.lane.b32.xlu0 %v815, 24
    %v2412 = vpop.permute.xlu0 %2411
    %2413 = vrot.lane.b32.xlu0 %v816, 24
    %v2414 = vpop.permute.xlu0 %2413
    %2415 = vrot.lane.b32.xlu0 %v817, 24
    %v2416 = vpop.permute.xlu0 %2415
    %2417 = vrot.lane.b32.xlu0 %v818, 24
    %v2418 = vpop.permute.xlu0 %2417
    %2547 = vrot.lane.b32.xlu0 %v819, 28
    %v2548 = vpop.permute.xlu0 %2547
    %2549 = vrot.lane.b32.xlu0 %v820, 28
    %v2550 = vpop.permute.xlu0 %2549
    %2551 = vrot.lane.b32.xlu0 %v821, 28
    %v2552 = vpop.permute.xlu0 %2551
    %2553 = vrot.lane.b32.xlu0 %v822, 28
    %v2554 = vpop.permute.xlu0 %2553
    %2555 = vrot.lane.b32.xlu0 %v823, 28
    %v2556 = vpop.permute.xlu0 %2555
    %2557 = vrot.lane.b32.xlu0 %v824, 28
    %v2558 = vpop.permute.xlu0 %2557
    %2559 = vrot.lane.b32.xlu0 %v825, 28
    %v2560 = vpop.permute.xlu0 %2559
    %2561 = vrot.lane.b32.xlu0 %v826, 28
    %v2562 = vpop.permute.xlu0 %2561
    %2563 = vrot.lane.b32.xlu0 %v827, 28
    %v2564 = vpop.permute.xlu0 %2563
    %2565 = vrot.lane.b32.xlu0 %v828, 28
    %v2566 = vpop.permute.xlu0 %2565
    %2567 = vrot.lane.b32.xlu0 %v829, 28
    %v2568 = vpop.permute.xlu0 %2567
    %2569 = vrot.lane.b32.xlu0 %v830, 28
    %v2570 = vpop.permute.xlu0 %2569
    %2571 = vrot.lane.b32.xlu0 %v831, 28
    %v2572 = vpop.permute.xlu0 %2571
    %2573 = vrot.lane.b32.xlu0 %v832, 28
    %v2574 = vpop.permute.xlu0 %2573
    %2575 = vrot.lane.b32.xlu0 %v833, 28
    %v2576 = vpop.permute.xlu0 %2575
    %2577 = vrot.lane.b32.xlu0 %v834, 28
    %v2578 = vpop.permute.xlu0 %2577
    %2579 = vrot.lane.b32.xlu0 %v835, 28
    %v2580 = vpop.permute.xlu0 %2579
    %2581 = vrot.lane.b32.xlu0 %v836, 28
    %v2582 = vpop.permute.xlu0 %2581
    %2583 = vrot.lane.b32.xlu0 %v837, 28
    %v2584 = vpop.permute.xlu0 %2583
    %2585 = vrot.lane.b32.xlu0 %v838, 28
    %v2586 = vpop.permute.xlu0 %2585
    %2587 = vrot.lane.b32.xlu0 %v839, 28
    %v2588 = vpop.permute.xlu0 %2587
    %2589 = vrot.lane.b32.xlu0 %v840, 28
    %v2590 = vpop.permute.xlu0 %2589
    %2591 = vrot.lane.b32.xlu0 %v841, 28
    %v2592 = vpop.permute.xlu0 %2591
    %2593 = vrot.lane.b32.xlu0 %v842, 28
    %v2594 = vpop.permute.xlu0 %2593
    %2595 = vrot.lane.b32.xlu0 %v843, 28
    %v2596 = vpop.permute.xlu0 %2595
    %2597 = vrot.lane.b32.xlu0 %v844, 28
    %v2598 = vpop.permute.xlu0 %2597
    %2599 = vrot.lane.b32.xlu0 %v845, 28
    %v2600 = vpop.permute.xlu0 %2599
    %2601 = vrot.lane.b32.xlu0 %v846, 28
    %v2602 = vpop.permute.xlu0 %2601
    %2603 = vrot.lane.b32.xlu0 %v847, 28
    %v2604 = vpop.permute.xlu0 %2603
    %2605 = vrot.lane.b32.xlu0 %v848, 28
    %v2606 = vpop.permute.xlu0 %2605
    %2607 = vrot.lane.b32.xlu0 %v849, 28
    %v2608 = vpop.permute.xlu0 %2607
    %2609 = vrot.lane.b32.xlu0 %v850, 28
    %v2610 = vpop.permute.xlu0 %2609
    %2611 = vrot.lane.b32.xlu0 %v851, 28
    %v2612 = vpop.permute.xlu0 %2611
    %2613 = vrot.lane.b32.xlu0 %v852, 28
    %v2614 = vpop.permute.xlu0 %2613
    %2615 = vrot.lane.b32.xlu0 %v853, 28
    %v2616 = vpop.permute.xlu0 %2615
    %2617 = vrot.lane.b32.xlu0 %v854, 28
    %v2618 = vpop.permute.xlu0 %2617
    %2619 = vrot.lane.b32.xlu0 %v855, 28
    %v2620 = vpop.permute.xlu0 %2619
    %2621 = vrot.lane.b32.xlu0 %v856, 28
    %v2622 = vpop.permute.xlu0 %2621
    %2623 = vrot.lane.b32.xlu0 %v857, 28
    %v2624 = vpop.permute.xlu0 %2623
    %2625 = vrot.lane.b32.xlu0 %v858, 28
    %v2626 = vpop.permute.xlu0 %2625
    %2627 = vrot.lane.b32.xlu0 %v859, 28
    %v2628 = vpop.permute.xlu0 %2627
    %2629 = vrot.lane.b32.xlu0 %v860, 28
    %v2630 = vpop.permute.xlu0 %2629
    %2631 = vrot.lane.b32.xlu0 %v861, 28
    %v2632 = vpop.permute.xlu0 %2631
    %2633 = vrot.lane.b32.xlu0 %v862, 28
    %v2634 = vpop.permute.xlu0 %2633
    %2635 = vrot.lane.b32.xlu0 %v863, 28
    %v2636 = vpop.permute.xlu0 %2635
    %2637 = vrot.lane.b32.xlu0 %v864, 28
    %v2638 = vpop.permute.xlu0 %2637
    %2639 = vrot.lane.b32.xlu0 %v865, 28
    %v2640 = vpop.permute.xlu0 %2639
    %2641 = vrot.lane.b32.xlu0 %v866, 28
    %v2642 = vpop.permute.xlu0 %2641
    %2643 = vrot.lane.b32.xlu0 %v867, 28
    %v2644 = vpop.permute.xlu0 %2643
    %2645 = vrot.lane.b32.xlu0 %v868, 28
    %v2646 = vpop.permute.xlu0 %2645
    %2647 = vrot.lane.b32.xlu0 %v869, 28
    %v2648 = vpop.permute.xlu0 %2647
    %2649 = vrot.lane.b32.xlu0 %v870, 28
    %v2650 = vpop.permute.xlu0 %2649
    %2651 = vrot.lane.b32.xlu0 %v871, 28
    %v2652 = vpop.permute.xlu0 %2651
    %2653 = vrot.lane.b32.xlu0 %v872, 28
    %v2654 = vpop.permute.xlu0 %2653
    %2655 = vrot.lane.b32.xlu0 %v873, 28
    %v2656 = vpop.permute.xlu0 %2655
    %2657 = vrot.lane.b32.xlu0 %v874, 28
    %v2658 = vpop.permute.xlu0 %2657
    %2659 = vrot.lane.b32.xlu0 %v875, 28
    %v2660 = vpop.permute.xlu0 %2659
    %2661 = vrot.lane.b32.xlu0 %v876, 28
    %v2662 = vpop.permute.xlu0 %2661
    %2663 = vrot.lane.b32.xlu0 %v877, 28
    %v2664 = vpop.permute.xlu0 %2663
    %2665 = vrot.lane.b32.xlu0 %v878, 28
    %v2666 = vpop.permute.xlu0 %2665
    %2667 = vrot.lane.b32.xlu0 %v879, 28
    %v2668 = vpop.permute.xlu0 %2667
    %2669 = vrot.lane.b32.xlu0 %v880, 28
    %v2670 = vpop.permute.xlu0 %2669
    %2671 = vrot.lane.b32.xlu0 %v881, 28
    %v2672 = vpop.permute.xlu0 %2671
    %2673 = vrot.lane.b32.xlu0 %v882, 28
    %v2674 = vpop.permute.xlu0 %2673
    %2803 = vrot.lane.b32.xlu0 %v883, 32
    %v2804 = vpop.permute.xlu0 %2803
    %2805 = vrot.lane.b32.xlu0 %v884, 32
    %v2806 = vpop.permute.xlu0 %2805
    %2807 = vrot.lane.b32.xlu0 %v885, 32
    %v2808 = vpop.permute.xlu0 %2807
    %2809 = vrot.lane.b32.xlu0 %v886, 32
    %v2810 = vpop.permute.xlu0 %2809
    %2811 = vrot.lane.b32.xlu0 %v887, 32
    %v2812 = vpop.permute.xlu0 %2811
    %2813 = vrot.lane.b32.xlu0 %v888, 32
    %v2814 = vpop.permute.xlu0 %2813
    %2815 = vrot.lane.b32.xlu0 %v889, 32
    %v2816 = vpop.permute.xlu0 %2815
    %2817 = vrot.lane.b32.xlu0 %v890, 32
    %v2818 = vpop.permute.xlu0 %2817
    %2819 = vrot.lane.b32.xlu0 %v891, 32
    %v2820 = vpop.permute.xlu0 %2819
    %2821 = vrot.lane.b32.xlu0 %v892, 32
    %v2822 = vpop.permute.xlu0 %2821
    %2823 = vrot.lane.b32.xlu0 %v893, 32
    %v2824 = vpop.permute.xlu0 %2823
    %2825 = vrot.lane.b32.xlu0 %v894, 32
    %v2826 = vpop.permute.xlu0 %2825
    %2827 = vrot.lane.b32.xlu0 %v895, 32
    %v2828 = vpop.permute.xlu0 %2827
    %2829 = vrot.lane.b32.xlu0 %v896, 32
    %v2830 = vpop.permute.xlu0 %2829
    %2831 = vrot.lane.b32.xlu0 %v897, 32
    %v2832 = vpop.permute.xlu0 %2831
    %2833 = vrot.lane.b32.xlu0 %v898, 32
    %v2834 = vpop.permute.xlu0 %2833
    %2835 = vrot.lane.b32.xlu0 %v899, 32
    %v2836 = vpop.permute.xlu0 %2835
    %2837 = vrot.lane.b32.xlu0 %v900, 32
    %v2838 = vpop.permute.xlu0 %2837
    %2839 = vrot.lane.b32.xlu0 %v901, 32
    %v2840 = vpop.permute.xlu0 %2839
    %2841 = vrot.lane.b32.xlu0 %v902, 32
    %v2842 = vpop.permute.xlu0 %2841
    %2843 = vrot.lane.b32.xlu0 %v903, 32
    %v2844 = vpop.permute.xlu0 %2843
    %2845 = vrot.lane.b32.xlu0 %v904, 32
    %v2846 = vpop.permute.xlu0 %2845
    %2847 = vrot.lane.b32.xlu0 %v905, 32
    %v2848 = vpop.permute.xlu0 %2847
    %2849 = vrot.lane.b32.xlu0 %v906, 32
    %v2850 = vpop.permute.xlu0 %2849
    %2851 = vrot.lane.b32.xlu0 %v907, 32
    %v2852 = vpop.permute.xlu0 %2851
    %2853 = vrot.lane.b32.xlu0 %v908, 32
    %v2854 = vpop.permute.xlu0 %2853
    %2855 = vrot.lane.b32.xlu0 %v909, 32
    %v2856 = vpop.permute.xlu0 %2855
    %2857 = vrot.lane.b32.xlu0 %v910, 32
    %v2858 = vpop.permute.xlu0 %2857
    %2859 = vrot.lane.b32.xlu0 %v911, 32
    %v2860 = vpop.permute.xlu0 %2859
    %2861 = vrot.lane.b32.xlu0 %v912, 32
    %v2862 = vpop.permute.xlu0 %2861
    %2863 = vrot.lane.b32.xlu0 %v913, 32
    %v2864 = vpop.permute.xlu0 %2863
    %2865 = vrot.lane.b32.xlu0 %v914, 32
    %v2866 = vpop.permute.xlu0 %2865
    %2867 = vrot.lane.b32.xlu0 %v915, 32
    %v2868 = vpop.permute.xlu0 %2867
    %2869 = vrot.lane.b32.xlu0 %v916, 32
    %v2870 = vpop.permute.xlu0 %2869
    %2871 = vrot.lane.b32.xlu0 %v917, 32
    %v2872 = vpop.permute.xlu0 %2871
    %2873 = vrot.lane.b32.xlu0 %v918, 32
    %v2874 = vpop.permute.xlu0 %2873
    %2875 = vrot.lane.b32.xlu0 %v919, 32
    %v2876 = vpop.permute.xlu0 %2875
    %2877 = vrot.lane.b32.xlu0 %v920, 32
    %v2878 = vpop.permute.xlu0 %2877
    %2879 = vrot.lane.b32.xlu0 %v921, 32
    %v2880 = vpop.permute.xlu0 %2879
    %2881 = vrot.lane.b32.xlu0 %v922, 32
    %v2882 = vpop.permute.xlu0 %2881
    %2883 = vrot.lane.b32.xlu0 %v923, 32
    %v2884 = vpop.permute.xlu0 %2883
    %2885 = vrot.lane.b32.xlu0 %v924, 32
    %v2886 = vpop.permute.xlu0 %2885
    %2887 = vrot.lane.b32.xlu0 %v925, 32
    %v2888 = vpop.permute.xlu0 %2887
    %2889 = vrot.lane.b32.xlu0 %v926, 32
    %v2890 = vpop.permute.xlu0 %2889
    %2891 = vrot.lane.b32.xlu0 %v927, 32
    %v2892 = vpop.permute.xlu0 %2891
    %2893 = vrot.lane.b32.xlu0 %v928, 32
    %v2894 = vpop.permute.xlu0 %2893
    %2895 = vrot.lane.b32.xlu0 %v929, 32
    %v2896 = vpop.permute.xlu0 %2895
    %2897 = vrot.lane.b32.xlu0 %v930, 32
    %v2898 = vpop.permute.xlu0 %2897
    %2899 = vrot.lane.b32.xlu0 %v931, 32
    %v2900 = vpop.permute.xlu0 %2899
    %2901 = vrot.lane.b32.xlu0 %v932, 32
    %v2902 = vpop.permute.xlu0 %2901
    %2903 = vrot.lane.b32.xlu0 %v933, 32
    %v2904 = vpop.permute.xlu0 %2903
    %2905 = vrot.lane.b32.xlu0 %v934, 32
    %v2906 = vpop.permute.xlu0 %2905
    %2907 = vrot.lane.b32.xlu0 %v935, 32
    %v2908 = vpop.permute.xlu0 %2907
    %2909 = vrot.lane.b32.xlu0 %v936, 32
    %v2910 = vpop.permute.xlu0 %2909
    %2911 = vrot.lane.b32.xlu0 %v937, 32
    %v2912 = vpop.permute.xlu0 %2911
    %2913 = vrot.lane.b32.xlu0 %v938, 32
    %v2914 = vpop.permute.xlu0 %2913
    %2915 = vrot.lane.b32.xlu0 %v939, 32
    %v2916 = vpop.permute.xlu0 %2915
    %2917 = vrot.lane.b32.xlu0 %v940, 32
    %v2918 = vpop.permute.xlu0 %2917
    %2919 = vrot.lane.b32.xlu0 %v941, 32
    %v2920 = vpop.permute.xlu0 %2919
    %2921 = vrot.lane.b32.xlu0 %v942, 32
    %v2922 = vpop.permute.xlu0 %2921
    %2923 = vrot.lane.b32.xlu0 %v943, 32
    %v2924 = vpop.permute.xlu0 %2923
    %2925 = vrot.lane.b32.xlu0 %v944, 32
    %v2926 = vpop.permute.xlu0 %2925
    %2927 = vrot.lane.b32.xlu0 %v945, 32
    %v2928 = vpop.permute.xlu0 %2927
    %2929 = vrot.lane.b32.xlu0 %v946, 32
    %v2930 = vpop.permute.xlu0 %2929
    %v2995 = vsel %vm21, %v370, %v1012
    %v2996 = vsel %vm21, %v371, %v1014
    %v2997 = vsel %vm21, %v372, %v1016
    %v2998 = vsel %vm21, %v373, %v1018
    %v2999 = vsel %vm21, %v374, %v1020
    %v3000 = vsel %vm21, %v375, %v1022
    %v3001 = vsel %vm21, %v376, %v1024
    %v3002 = vsel %vm21, %v377, %v1026
    %v3003 = vsel %vm21, %v378, %v1028
    %v3004 = vsel %vm21, %v379, %v1030
    %v3005 = vsel %vm21, %v380, %v1032
    %v3006 = vsel %vm21, %v381, %v1034
    %v3007 = vsel %vm21, %v382, %v1036
    %v3008 = vsel %vm21, %v383, %v1038
    %v3009 = vsel %vm21, %v384, %v1040
    %v3010 = vsel %vm21, %v385, %v1042
    %v3011 = vsel %vm21, %v386, %v1044
    %v3012 = vsel %vm21, %v387, %v1046
    %v3013 = vsel %vm21, %v388, %v1048
    %v3014 = vsel %vm21, %v389, %v1050
    %v3015 = vsel %vm21, %v390, %v1052
    %v3016 = vsel %vm21, %v391, %v1054
    %v3017 = vsel %vm21, %v392, %v1056
    %v3018 = vsel %vm21, %v393, %v1058
    %v3019 = vsel %vm21, %v394, %v1060
    %v3020 = vsel %vm21, %v395, %v1062
    %v3021 = vsel %vm21, %v396, %v1064
    %v3022 = vsel %vm21, %v397, %v1066
    %v3023 = vsel %vm21, %v398, %v1068
    %v3024 = vsel %vm21, %v399, %v1070
    %v3025 = vsel %vm21, %v400, %v1072
    %v3026 = vsel %vm21, %v401, %v1074
    %v3027 = vsel %vm21, %v402, %v1076
    %v3028 = vsel %vm21, %v403, %v1078
    %v3029 = vsel %vm21, %v404, %v1080
    %v3030 = vsel %vm21, %v405, %v1082
    %v3031 = vsel %vm21, %v406, %v1084
    %v3032 = vsel %vm21, %v407, %v1086
    %v3033 = vsel %vm21, %v408, %v1088
    %v3034 = vsel %vm21, %v409, %v1090
    %v3035 = vsel %vm21, %v410, %v1092
    %v3036 = vsel %vm21, %v411, %v1094
    %v3037 = vsel %vm21, %v412, %v1096
    %v3038 = vsel %vm21, %v413, %v1098
    %v3039 = vsel %vm21, %v414, %v1100
    %v3040 = vsel %vm21, %v415, %v1102
    %v3041 = vsel %vm21, %v416, %v1104
    %v3042 = vsel %vm21, %v417, %v1106
    %v3043 = vsel %vm21, %v418, %v1108
    %v3044 = vsel %vm21, %v419, %v1110
    %v3045 = vsel %vm21, %v420, %v1112
    %v3046 = vsel %vm21, %v421, %v1114
    %v3047 = vsel %vm21, %v422, %v1116
    %v3048 = vsel %vm21, %v423, %v1118
    %v3049 = vsel %vm21, %v424, %v1120
    %v3050 = vsel %vm21, %v425, %v1122
    %v3051 = vsel %vm21, %v426, %v1124
    %v3052 = vsel %vm21, %v427, %v1126
    %v3053 = vsel %vm21, %v428, %v1128
    %v3054 = vsel %vm21, %v429, %v1130
    %v3055 = vsel %vm21, %v430, %v1132
    %v3056 = vsel %vm21, %v431, %v1134
    %v3057 = vsel %vm21, %v432, %v1136
    %v3058 = vsel %vm21, %v433, %v1138
    %v3059 = vsel %vm131, %v2995, %v1268
    %v3060 = vsel %vm131, %v2996, %v1270
    %v3061 = vsel %vm131, %v2997, %v1272
    %v3062 = vsel %vm131, %v2998, %v1274
    %v3063 = vsel %vm131, %v2999, %v1276
    %v3064 = vsel %vm131, %v3000, %v1278
    %v3065 = vsel %vm131, %v3001, %v1280
    %v3066 = vsel %vm131, %v3002, %v1282
    %v3067 = vsel %vm131, %v3003, %v1284
    %v3068 = vsel %vm131, %v3004, %v1286
    %v3069 = vsel %vm131, %v3005, %v1288
    %v3070 = vsel %vm131, %v3006, %v1290
    %v3071 = vsel %vm131, %v3007, %v1292
    %v3072 = vsel %vm131, %v3008, %v1294
    %v3073 = vsel %vm131, %v3009, %v1296
    %v3074 = vsel %vm131, %v3010, %v1298
    %v3075 = vsel %vm131, %v3011, %v1300
    %v3076 = vsel %vm131, %v3012, %v1302
    %v3077 = vsel %vm131, %v3013, %v1304
    %v3078 = vsel %vm131, %v3014, %v1306
    %v3079 = vsel %vm131, %v3015, %v1308
    %v3080 = vsel %vm131, %v3016, %v1310
    %v3081 = vsel %vm131, %v3017, %v1312
    %v3082 = vsel %vm131, %v3018, %v1314
    %v3083 = vsel %vm131, %v3019, %v1316
    %v3084 = vsel %vm131, %v3020, %v1318
    %v3085 = vsel %vm131, %v3021, %v1320
    %v3086 = vsel %vm131, %v3022, %v1322
    %v3087 = vsel %vm131, %v3023, %v1324
    %v3088 = vsel %vm131, %v3024, %v1326
    %v3089 = vsel %vm131, %v3025, %v1328
    %v3090 = vsel %vm131, %v3026, %v1330
    %v3091 = vsel %vm131, %v3027, %v1332
    %v3092 = vsel %vm131, %v3028, %v1334
    %v3093 = vsel %vm131, %v3029, %v1336
    %v3094 = vsel %vm131, %v3030, %v1338
    %v3095 = vsel %vm131, %v3031, %v1340
    %v3096 = vsel %vm131, %v3032, %v1342
    %v3097 = vsel %vm131, %v3033, %v1344
    %v3098 = vsel %vm131, %v3034, %v1346
    %v3099 = vsel %vm131, %v3035, %v1348
    %v3100 = vsel %vm131, %v3036, %v1350
    %v3101 = vsel %vm131, %v3037, %v1352
    %v3102 = vsel %vm131, %v3038, %v1354
    %v3103 = vsel %vm131, %v3039, %v1356
    %v3104 = vsel %vm131, %v3040, %v1358
    %v3105 = vsel %vm131, %v3041, %v1360
    %v3106 = vsel %vm131, %v3042, %v1362
    %v3107 = vsel %vm131, %v3043, %v1364
    %v3108 = vsel %vm131, %v3044, %v1366
    %v3109 = vsel %vm131, %v3045, %v1368
    %v3110 = vsel %vm131, %v3046, %v1370
    %v3111 = vsel %vm131, %v3047, %v1372
    %v3112 = vsel %vm131, %v3048, %v1374
    %v3113 = vsel %vm131, %v3049, %v1376
    %v3114 = vsel %vm131, %v3050, %v1378
    %v3115 = vsel %vm131, %v3051, %v1380
    %v3116 = vsel %vm131, %v3052, %v1382
    %v3117 = vsel %vm131, %v3053, %v1384
    %v3118 = vsel %vm131, %v3054, %v1386
    %v3119 = vsel %vm131, %v3055, %v1388
    %v3120 = vsel %vm131, %v3056, %v1390
    %v3121 = vsel %vm131, %v3057, %v1392
    %v3122 = vsel %vm131, %v3058, %v1394
    %vm3123 = vcmask 97280
    %v3124 = vsel %vm3123, %v3059, %v1524
    %v3125 = vsel %vm3123, %v3060, %v1526
    %v3126 = vsel %vm3123, %v3061, %v1528
    %v3127 = vsel %vm3123, %v3062, %v1530
    %v3128 = vsel %vm3123, %v3063, %v1532
    %v3129 = vsel %vm3123, %v3064, %v1534
    %v3130 = vsel %vm3123, %v3065, %v1536
    %v3131 = vsel %vm3123, %v3066, %v1538
    %v3132 = vsel %vm3123, %v3067, %v1540
    %v3133 = vsel %vm3123, %v3068, %v1542
    %v3134 = vsel %vm3123, %v3069, %v1544
    %v3135 = vsel %vm3123, %v3070, %v1546
    %v3136 = vsel %vm3123, %v3071, %v1548
    %v3137 = vsel %vm3123, %v3072, %v1550
    %v3138 = vsel %vm3123, %v3073, %v1552
    %v3139 = vsel %vm3123, %v3074, %v1554
    %v3140 = vsel %vm3123, %v3075, %v1556
    %v3141 = vsel %vm3123, %v3076, %v1558
    %v3142 = vsel %vm3123, %v3077, %v1560
    %v3143 = vsel %vm3123, %v3078, %v1562
    %v3144 = vsel %vm3123, %v3079, %v1564
    %v3145 = vsel %vm3123, %v3080, %v1566
    %v3146 = vsel %vm3123, %v3081, %v1568
    %v3147 = vsel %vm3123, %v3082, %v1570
    %v3148 = vsel %vm3123, %v3083, %v1572
    %v3149 = vsel %vm3123, %v3084, %v1574
    %v3150 = vsel %vm3123, %v3085, %v1576
    %v3151 = vsel %vm3123, %v3086, %v1578
    %v3152 = vsel %vm3123, %v3087, %v1580
    %v3153 = vsel %vm3123, %v3088, %v1582
    %v3154 = vsel %vm3123, %v3089, %v1584
    %v3155 = vsel %vm3123, %v3090, %v1586
    %v3156 = vsel %vm3123, %v3091, %v1588
    %v3157 = vsel %vm3123, %v3092, %v1590
    %v3158 = vsel %vm3123, %v3093, %v1592
    %v3159 = vsel %vm3123, %v3094, %v1594
    %v3160 = vsel %vm3123, %v3095, %v1596
    %v3161 = vsel %vm3123, %v3096, %v1598
    %v3162 = vsel %vm3123, %v3097, %v1600
    %v3163 = vsel %vm3123, %v3098, %v1602
    %v3164 = vsel %vm3123, %v3099, %v1604
    %v3165 = vsel %vm3123, %v3100, %v1606
    %v3166 = vsel %vm3123, %v3101, %v1608
    %v3167 = vsel %vm3123, %v3102, %v1610
    %v3168 = vsel %vm3123, %v3103, %v1612
    %v3169 = vsel %vm3123, %v3104, %v1614
    %v3170 = vsel %vm3123, %v3105, %v1616
    %v3171 = vsel %vm3123, %v3106, %v1618
    %v3172 = vsel %vm3123, %v3107, %v1620
    %v3173 = vsel %vm3123, %v3108, %v1622
    %v3174 = vsel %vm3123, %v3109, %v1624
    %v3175 = vsel %vm3123, %v3110, %v1626
    %v3176 = vsel %vm3123, %v3111, %v1628
    %v3177 = vsel %vm3123, %v3112, %v1630
    %v3178 = vsel %vm3123, %v3113, %v1632
    %v3179 = vsel %vm3123, %v3114, %v1634
    %v3180 = vsel %vm3123, %v3115, %v1636
    %v3181 = vsel %vm3123, %v3116, %v1638
    %v3182 = vsel %vm3123, %v3117, %v1640
    %v3183 = vsel %vm3123, %v3118, %v1642
    %v3184 = vsel %vm3123, %v3119, %v1644
    %v3185 = vsel %vm3123, %v3120, %v1646
    %v3186 = vsel %vm3123, %v3121, %v1648
    %v3187 = vsel %vm3123, %v3122, %v1650
    %vm3188 = vcmask 130048
    %v3189 = vsel %vm3188, %v3124, %v1780
    %v3190 = vsel %vm3188, %v3125, %v1782
    %v3191 = vsel %vm3188, %v3126, %v1784
    %v3192 = vsel %vm3188, %v3127, %v1786
    %v3193 = vsel %vm3188, %v3128, %v1788
    %v3194 = vsel %vm3188, %v3129, %v1790
    %v3195 = vsel %vm3188, %v3130, %v1792
    %v3196 = vsel %vm3188, %v3131, %v1794
    %v3197 = vsel %vm3188, %v3132, %v1796
    %v3198 = vsel %vm3188, %v3133, %v1798
    %v3199 = vsel %vm3188, %v3134, %v1800
    %v3200 = vsel %vm3188, %v3135, %v1802
    %v3201 = vsel %vm3188, %v3136, %v1804
    %v3202 = vsel %vm3188, %v3137, %v1806
    %v3203 = vsel %vm3188, %v3138, %v1808
    %v3204 = vsel %vm3188, %v3139, %v1810
    %v3205 = vsel %vm3188, %v3140, %v1812
    %v3206 = vsel %vm3188, %v3141, %v1814
    %v3207 = vsel %vm3188, %v3142, %v1816
    %v3208 = vsel %vm3188, %v3143, %v1818
    %v3209 = vsel %vm3188, %v3144, %v1820
    %v3210 = vsel %vm3188, %v3145, %v1822
    %v3211 = vsel %vm3188, %v3146, %v1824
    %v3212 = vsel %vm3188, %v3147, %v1826
    %v3213 = vsel %vm3188, %v3148, %v1828
    %v3214 = vsel %vm3188, %v3149, %v1830
    %v3215 = vsel %vm3188, %v3150, %v1832
    %v3216 = vsel %vm3188, %v3151, %v1834
    %v3217 = vsel %vm3188, %v3152, %v1836
    %v3218 = vsel %vm3188, %v3153, %v1838
    %v3219 = vsel %vm3188, %v3154, %v1840
    %v3220 = vsel %vm3188, %v3155, %v1842
    %v3221 = vsel %vm3188, %v3156, %v1844
    %v3222 = vsel %vm3188, %v3157, %v1846
    %v3223 = vsel %vm3188, %v3158, %v1848
    %v3224 = vsel %vm3188, %v3159, %v1850
    %v3225 = vsel %vm3188, %v3160, %v1852
    %v3226 = vsel %vm3188, %v3161, %v1854
    %v3227 = vsel %vm3188, %v3162, %v1856
    %v3228 = vsel %vm3188, %v3163, %v1858
    %v3229 = vsel %vm3188, %v3164, %v1860
    %v3230 = vsel %vm3188, %v3165, %v1862
    %v3231 = vsel %vm3188, %v3166, %v1864
    %v3232 = vsel %vm3188, %v3167, %v1866
    %v3233 = vsel %vm3188, %v3168, %v1868
    %v3234 = vsel %vm3188, %v3169, %v1870
    %v3235 = vsel %vm3188, %v3170, %v1872
    %v3236 = vsel %vm3188, %v3171, %v1874
    %v3237 = vsel %vm3188, %v3172, %v1876
    %v3238 = vsel %vm3188, %v3173, %v1878
    %v3239 = vsel %vm3188, %v3174, %v1880
    %v3240 = vsel %vm3188, %v3175, %v1882
    %v3241 = vsel %vm3188, %v3176, %v1884
    %v3242 = vsel %vm3188, %v3177, %v1886
    %v3243 = vsel %vm3188, %v3178, %v1888
    %v3244 = vsel %vm3188, %v3179, %v1890
    %v3245 = vsel %vm3188, %v3180, %v1892
    %v3246 = vsel %vm3188, %v3181, %v1894
    %v3247 = vsel %vm3188, %v3182, %v1896
    %v3248 = vsel %vm3188, %v3183, %v1898
    %v3249 = vsel %vm3188, %v3184, %v1900
    %v3250 = vsel %vm3188, %v3185, %v1902
    %v3251 = vsel %vm3188, %v3186, %v1904
    %v3252 = vsel %vm3188, %v3187, %v1906
    %vm3253 = vcmask 162816
    %v3254 = vsel %vm3253, %v3189, %v2036
    %v3255 = vsel %vm3253, %v3190, %v2038
    %v3256 = vsel %vm3253, %v3191, %v2040
    %v3257 = vsel %vm3253, %v3192, %v2042
    %v3258 = vsel %vm3253, %v3193, %v2044
    %v3259 = vsel %vm3253, %v3194, %v2046
    %v3260 = vsel %vm3253, %v3195, %v2048
    %v3261 = vsel %vm3253, %v3196, %v2050
    %v3262 = vsel %vm3253, %v3197, %v2052
    %v3263 = vsel %vm3253, %v3198, %v2054
    %v3264 = vsel %vm3253, %v3199, %v2056
    %v3265 = vsel %vm3253, %v3200, %v2058
    %v3266 = vsel %vm3253, %v3201, %v2060
    %v3267 = vsel %vm3253, %v3202, %v2062
    %v3268 = vsel %vm3253, %v3203, %v2064
    %v3269 = vsel %vm3253, %v3204, %v2066
    %v3270 = vsel %vm3253, %v3205, %v2068
    %v3271 = vsel %vm3253, %v3206, %v2070
    %v3272 = vsel %vm3253, %v3207, %v2072
    %v3273 = vsel %vm3253, %v3208, %v2074
    %v3274 = vsel %vm3253, %v3209, %v2076
    %v3275 = vsel %vm3253, %v3210, %v2078
    %v3276 = vsel %vm3253, %v3211, %v2080
    %v3277 = vsel %vm3253, %v3212, %v2082
    %v3278 = vsel %vm3253, %v3213, %v2084
    %v3279 = vsel %vm3253, %v3214, %v2086
    %v3280 = vsel %vm3253, %v3215, %v2088
    %v3281 = vsel %vm3253, %v3216, %v2090
    %v3282 = vsel %vm3253, %v3217, %v2092
    %v3283 = vsel %vm3253, %v3218, %v2094
    %v3284 = vsel %vm3253, %v3219, %v2096
    %v3285 = vsel %vm3253, %v3220, %v2098
    %v3286 = vsel %vm3253, %v3221, %v2100
    %v3287 = vsel %vm3253, %v3222, %v2102
    %v3288 = vsel %vm3253, %v3223, %v2104
    %v3289 = vsel %vm3253, %v3224, %v2106
    %v3290 = vsel %vm3253, %v3225, %v2108
    %v3291 = vsel %vm3253, %v3226, %v2110
    %v3292 = vsel %vm3253, %v3227, %v2112
    %v3293 = vsel %vm3253, %v3228, %v2114
    %v3294 = vsel %vm3253, %v3229, %v2116
    %v3295 = vsel %vm3253, %v3230, %v2118
    %v3296 = vsel %vm3253, %v3231, %v2120
    %v3297 = vsel %vm3253, %v3232, %v2122
    %v3298 = vsel %vm3253, %v3233, %v2124
    %v3299 = vsel %vm3253, %v3234, %v2126
    %v3300 = vsel %vm3253, %v3235, %v2128
    %v3301 = vsel %vm3253, %v3236, %v2130
    %v3302 = vsel %vm3253, %v3237, %v2132
    %v3303 = vsel %vm3253, %v3238, %v2134
    %v3304 = vsel %vm3253, %v3239, %v2136
    %v3305 = vsel %vm3253, %v3240, %v2138
    %v3306 = vsel %vm3253, %v3241, %v2140
    %v3307 = vsel %vm3253, %v3242, %v2142
    %v3308 = vsel %vm3253, %v3243, %v2144
    %v3309 = vsel %vm3253, %v3244, %v2146
    %v3310 = vsel %vm3253, %v3245, %v2148
    %v3311 = vsel %vm3253, %v3246, %v2150
    %v3312 = vsel %vm3253, %v3247, %v2152
    %v3313 = vsel %vm3253, %v3248, %v2154
    %v3314 = vsel %vm3253, %v3249, %v2156
    %v3315 = vsel %vm3253, %v3250, %v2158
    %v3316 = vsel %vm3253, %v3251, %v2160
    %v3317 = vsel %vm3253, %v3252, %v2162
    %vm3318 = vcmask 195584
    %v3319 = vsel %vm3318, %v3254, %v2292
    %v3320 = vsel %vm3318, %v3255, %v2294
    %v3321 = vsel %vm3318, %v3256, %v2296
    %v3322 = vsel %vm3318, %v3257, %v2298
    %v3323 = vsel %vm3318, %v3258, %v2300
    %v3324 = vsel %vm3318, %v3259, %v2302
    %v3325 = vsel %vm3318, %v3260, %v2304
    %v3326 = vsel %vm3318, %v3261, %v2306
    %v3327 = vsel %vm3318, %v3262, %v2308
    %v3328 = vsel %vm3318, %v3263, %v2310
    %v3329 = vsel %vm3318, %v3264, %v2312
    %v3330 = vsel %vm3318, %v3265, %v2314
    %v3331 = vsel %vm3318, %v3266, %v2316
    %v3332 = vsel %vm3318, %v3267, %v2318
    %v3333 = vsel %vm3318, %v3268, %v2320
    %v3334 = vsel %vm3318, %v3269, %v2322
    %v3335 = vsel %vm3318, %v3270, %v2324
    %v3336 = vsel %vm3318, %v3271, %v2326
    %v3337 = vsel %vm3318, %v3272, %v2328
    %v3338 = vsel %vm3318, %v3273, %v2330
    %v3339 = vsel %vm3318, %v3274, %v2332
    %v3340 = vsel %vm3318, %v3275, %v2334
    %v3341 = vsel %vm3318, %v3276, %v2336
    %v3342 = vsel %vm3318, %v3277, %v2338
    %v3343 = vsel %vm3318, %v3278, %v2340
    %v3344 = vsel %vm3318, %v3279, %v2342
    %v3345 = vsel %vm3318, %v3280, %v2344
    %v3346 = vsel %vm3318, %v3281, %v2346
    %v3347 = vsel %vm3318, %v3282, %v2348
    %v3348 = vsel %vm3318, %v3283, %v2350
    %v3349 = vsel %vm3318, %v3284, %v2352
    %v3350 = vsel %vm3318, %v3285, %v2354
    %v3351 = vsel %vm3318, %v3286, %v2356
    %v3352 = vsel %vm3318, %v3287, %v2358
    %v3353 = vsel %vm3318, %v3288, %v2360
    %v3354 = vsel %vm3318, %v3289, %v2362
    %v3355 = vsel %vm3318, %v3290, %v2364
    %v3356 = vsel %vm3318, %v3291, %v2366
    %v3357 = vsel %vm3318, %v3292, %v2368
    %v3358 = vsel %vm3318, %v3293, %v2370
    %v3359 = vsel %vm3318, %v3294, %v2372
    %v3360 = vsel %vm3318, %v3295, %v2374
    %v3361 = vsel %vm3318, %v3296, %v2376
    %v3362 = vsel %vm3318, %v3297, %v2378
    %v3363 = vsel %vm3318, %v3298, %v2380
    %v3364 = vsel %vm3318, %v3299, %v2382
    %v3365 = vsel %vm3318, %v3300, %v2384
    %v3366 = vsel %vm3318, %v3301, %v2386
    %v3367 = vsel %vm3318, %v3302, %v2388
    %v3368 = vsel %vm3318, %v3303, %v2390
    %v3369 = vsel %vm3318, %v3304, %v2392
    %v3370 = vsel %vm3318, %v3305, %v2394
    %v3371 = vsel %vm3318, %v3306, %v2396
    %v3372 = vsel %vm3318, %v3307, %v2398
    %v3373 = vsel %vm3318, %v3308, %v2400
    %v3374 = vsel %vm3318, %v3309, %v2402
    %v3375 = vsel %vm3318, %v3310, %v2404
    %v3376 = vsel %vm3318, %v3311, %v2406
    %v3377 = vsel %vm3318, %v3312, %v2408
    %v3378 = vsel %vm3318, %v3313, %v2410
    %v3379 = vsel %vm3318, %v3314, %v2412
    %v3380 = vsel %vm3318, %v3315, %v2414
    %v3381 = vsel %vm3318, %v3316, %v2416
    %v3382 = vsel %vm3318, %v3317, %v2418
    %vm3383 = vcmask 228352
    %v3384 = vsel %vm3383, %v3319, %v2548
    %v3385 = vsel %vm3383, %v3320, %v2550
    %v3386 = vsel %vm3383, %v3321, %v2552
    %v3387 = vsel %vm3383, %v3322, %v2554
    %v3388 = vsel %vm3383, %v3323, %v2556
    %v3389 = vsel %vm3383, %v3324, %v2558
    %v3390 = vsel %vm3383, %v3325, %v2560
    %v3391 = vsel %vm3383, %v3326, %v2562
    %v3392 = vsel %vm3383, %v3327, %v2564
    %v3393 = vsel %vm3383, %v3328, %v2566
    %v3394 = vsel %vm3383, %v3329, %v2568
    %v3395 = vsel %vm3383, %v3330, %v2570
    %v3396 = vsel %vm3383, %v3331, %v2572
    %v3397 = vsel %vm3383, %v3332, %v2574
    %v3398 = vsel %vm3383, %v3333, %v2576
    %v3399 = vsel %vm3383, %v3334, %v2578
    %v3400 = vsel %vm3383, %v3335, %v2580
    %v3401 = vsel %vm3383, %v3336, %v2582
    %v3402 = vsel %vm3383, %v3337, %v2584
    %v3403 = vsel %vm3383, %v3338, %v2586
    %v3404 = vsel %vm3383, %v3339, %v2588
    %v3405 = vsel %vm3383, %v3340, %v2590
    %v3406 = vsel %vm3383, %v3341, %v2592
    %v3407 = vsel %vm3383, %v3342, %v2594
    %v3408 = vsel %vm3383, %v3343, %v2596
    %v3409 = vsel %vm3383, %v3344, %v2598
    %v3410 = vsel %vm3383, %v3345, %v2600
    %v3411 = vsel %vm3383, %v3346, %v2602
    %v3412 = vsel %vm3383, %v3347, %v2604
    %v3413 = vsel %vm3383, %v3348, %v2606
    %v3414 = vsel %vm3383, %v3349, %v2608
    %v3415 = vsel %vm3383, %v3350, %v2610
    %v3416 = vsel %vm3383, %v3351, %v2612
    %v3417 = vsel %vm3383, %v3352, %v2614
    %v3418 = vsel %vm3383, %v3353, %v2616
    %v3419 = vsel %vm3383, %v3354, %v2618
    %v3420 = vsel %vm3383, %v3355, %v2620
    %v3421 = vsel %vm3383, %v3356, %v2622
    %v3422 = vsel %vm3383, %v3357, %v2624
    %v3423 = vsel %vm3383, %v3358, %v2626
    %v3424 = vsel %vm3383, %v3359, %v2628
    %v3425 = vsel %vm3383, %v3360, %v2630
    %v3426 = vsel %vm3383, %v3361, %v2632
    %v3427 = vsel %vm3383, %v3362, %v2634
    %v3428 = vsel %vm3383, %v3363, %v2636
    %v3429 = vsel %vm3383, %v3364, %v2638
    %v3430 = vsel %vm3383, %v3365, %v2640
    %v3431 = vsel %vm3383, %v3366, %v2642
    %v3432 = vsel %vm3383, %v3367, %v2644
    %v3433 = vsel %vm3383, %v3368, %v2646
    %v3434 = vsel %vm3383, %v3369, %v2648
    %v3435 = vsel %vm3383, %v3370, %v2650
    %v3436 = vsel %vm3383, %v3371, %v2652
    %v3437 = vsel %vm3383, %v3372, %v2654
    %v3438 = vsel %vm3383, %v3373, %v2656
    %v3439 = vsel %vm3383, %v3374, %v2658
    %v3440 = vsel %vm3383, %v3375, %v2660
    %v3441 = vsel %vm3383, %v3376, %v2662
    %v3442 = vsel %vm3383, %v3377, %v2664
    %v3443 = vsel %vm3383, %v3378, %v2666
    %v3444 = vsel %vm3383, %v3379, %v2668
    %v3445 = vsel %vm3383, %v3380, %v2670
    %v3446 = vsel %vm3383, %v3381, %v2672
    %v3447 = vsel %vm3383, %v3382, %v2674
    %vm3448 = vcmask 261120
    %v3449 = vsel %vm3448, %v3384, %v2804
    %v3450 = vsel %vm3448, %v3385, %v2806
    %v3451 = vsel %vm3448, %v3386, %v2808
    %v3452 = vsel %vm3448, %v3387, %v2810
    %v3453 = vsel %vm3448, %v3388, %v2812
    %v3454 = vsel %vm3448, %v3389, %v2814
    %v3455 = vsel %vm3448, %v3390, %v2816
    %v3456 = vsel %vm3448, %v3391, %v2818
    %v3457 = vsel %vm3448, %v3392, %v2820
    %v3458 = vsel %vm3448, %v3393, %v2822
    %v3459 = vsel %vm3448, %v3394, %v2824
    %v3460 = vsel %vm3448, %v3395, %v2826
    %v3461 = vsel %vm3448, %v3396, %v2828
    %v3462 = vsel %vm3448, %v3397, %v2830
    %v3463 = vsel %vm3448, %v3398, %v2832
    %v3464 = vsel %vm3448, %v3399, %v2834
    %v3465 = vsel %vm3448, %v3400, %v2836
    %v3466 = vsel %vm3448, %v3401, %v2838
    %v3467 = vsel %vm3448, %v3402, %v2840
    %v3468 = vsel %vm3448, %v3403, %v2842
    %v3469 = vsel %vm3448, %v3404, %v2844
    %v3470 = vsel %vm3448, %v3405, %v2846
    %v3471 = vsel %vm3448, %v3406, %v2848
    %v3472 = vsel %vm3448, %v3407, %v2850
    %v3473 = vsel %vm3448, %v3408, %v2852
    %v3474 = vsel %vm3448, %v3409, %v2854
    %v3475 = vsel %vm3448, %v3410, %v2856
    %v3476 = vsel %vm3448, %v3411, %v2858
    %v3477 = vsel %vm3448, %v3412, %v2860
    %v3478 = vsel %vm3448, %v3413, %v2862
    %v3479 = vsel %vm3448, %v3414, %v2864
    %v3480 = vsel %vm3448, %v3415, %v2866
    %v3481 = vsel %vm3448, %v3416, %v2868
    %v3482 = vsel %vm3448, %v3417, %v2870
    %v3483 = vsel %vm3448, %v3418, %v2872
    %v3484 = vsel %vm3448, %v3419, %v2874
    %v3485 = vsel %vm3448, %v3420, %v2876
    %v3486 = vsel %vm3448, %v3421, %v2878
    %v3487 = vsel %vm3448, %v3422, %v2880
    %v3488 = vsel %vm3448, %v3423, %v2882
    %v3489 = vsel %vm3448, %v3424, %v2884
    %v3490 = vsel %vm3448, %v3425, %v2886
    %v3491 = vsel %vm3448, %v3426, %v2888
    %v3492 = vsel %vm3448, %v3427, %v2890
    %v3493 = vsel %vm3448, %v3428, %v2892
    %v3494 = vsel %vm3448, %v3429, %v2894
    %v3495 = vsel %vm3448, %v3430, %v2896
    %v3496 = vsel %vm3448, %v3431, %v2898
    %v3497 = vsel %vm3448, %v3432, %v2900
    %v3498 = vsel %vm3448, %v3433, %v2902
    %v3499 = vsel %vm3448, %v3434, %v2904
    %v3500 = vsel %vm3448, %v3435, %v2906
    %v3501 = vsel %vm3448, %v3436, %v2908
    %v3502 = vsel %vm3448, %v3437, %v2910
    %v3503 = vsel %vm3448, %v3438, %v2912
    %v3504 = vsel %vm3448, %v3439, %v2914
    %v3505 = vsel %vm3448, %v3440, %v2916
    %v3506 = vsel %vm3448, %v3441, %v2918
    %v3507 = vsel %vm3448, %v3442, %v2920
    %v3508 = vsel %vm3448, %v3443, %v2922
    %v3509 = vsel %vm3448, %v3444, %v2924
    %v3510 = vsel %vm3448, %v3445, %v2926
    %v3511 = vsel %vm3448, %v3446, %v2928
    %v3512 = vsel %vm3448, %v3447, %v2930
    %v3513 = vld [vmem:[%s1] sm:$0xff]
    %v3514 = vld [vmem:[%s1 + $0x8] sm:$0xff]
    %v3515 = vld [vmem:[%s1 + $0x10] sm:$0xff]
    %v3516 = vld [vmem:[%s1 + $0x18] sm:$0xff]
    %v3517 = vld [vmem:[%s1 + $0x20] sm:$0xf]
    %v3518 = vld [vmem:[%s2] sm:$0x1]
    %v3520 = vlaneseq
    %v3521 = vshrl.u32 %v3520, 7
    %v3522 = vsub.s32 0, %v3521
    %v3523 = vrot.slane %v3518, %v3522
    %vm3525 = vcmask 293888
    %v3527 = vsel %vm3525, %v3449, 0
    %v3530 = vsel %vm3525, %v3450, 0
    %v3533 = vsel %vm3525, %v3451, 0
    %v3536 = vsel %vm3525, %v3452, 0
    %v3539 = vsel %vm3525, %v3453, 0
    %v3542 = vsel %vm3525, %v3454, 0
    %v3545 = vsel %vm3525, %v3455, 0
    %v3548 = vsel %vm3525, %v3456, 0
    %v3551 = vsel %vm3525, %v3457, 0
    %v3554 = vsel %vm3525, %v3458, 0
    %v3557 = vsel %vm3525, %v3459, 0
    %v3560 = vsel %vm3525, %v3460, 0
    %v3563 = vsel %vm3525, %v3461, 0
    %v3566 = vsel %vm3525, %v3462, 0
    %v3569 = vsel %vm3525, %v3463, 0
    %v3572 = vsel %vm3525, %v3464, 0
    %v3575 = vsel %vm3525, %v3465, 0
    %v3578 = vsel %vm3525, %v3466, 0
    %v3581 = vsel %vm3525, %v3467, 0
    %v3584 = vsel %vm3525, %v3468, 0
    %v3587 = vsel %vm3525, %v3469, 0
    %v3590 = vsel %vm3525, %v3470, 0
    %v3593 = vsel %vm3525, %v3471, 0
    %v3596 = vsel %vm3525, %v3472, 0
    %v3599 = vsel %vm3525, %v3473, 0
    %v3602 = vsel %vm3525, %v3474, 0
    %v3605 = vsel %vm3525, %v3475, 0
    %v3608 = vsel %vm3525, %v3476, 0
    %v3611 = vsel %vm3525, %v3477, 0
    %v3614 = vsel %vm3525, %v3478, 0
    %v3617 = vsel %vm3525, %v3479, 0
    %v3620 = vsel %vm3525, %v3480, 0
    %v3623 = vsel %vm3525, %v3481, 0
    %v3626 = vsel %vm3525, %v3482, 0
    %v3629 = vsel %vm3525, %v3483, 0
    %v3632 = vsel %vm3525, %v3484, 0
    %v3635 = vsel %vm3525, %v3485, 0
    %v3638 = vsel %vm3525, %v3486, 0
    %v3641 = vsel %vm3525, %v3487, 0
    %v3644 = vsel %vm3525, %v3488, 0
    %v3647 = vsel %vm3525, %v3489, 0
    %v3650 = vsel %vm3525, %v3490, 0
    %v3653 = vsel %vm3525, %v3491, 0
    %v3656 = vsel %vm3525, %v3492, 0
    %v3659 = vsel %vm3525, %v3493, 0
    %v3662 = vsel %vm3525, %v3494, 0
    %v3665 = vsel %vm3525, %v3495, 0
    %v3668 = vsel %vm3525, %v3496, 0
    %v3671 = vsel %vm3525, %v3497, 0
    %v3674 = vsel %vm3525, %v3498, 0
    %v3677 = vsel %vm3525, %v3499, 0
    %v3680 = vsel %vm3525, %v3500, 0
    %v3683 = vsel %vm3525, %v3501, 0
    %v3686 = vsel %vm3525, %v3502, 0
    %v3689 = vsel %vm3525, %v3503, 0
    %v3692 = vsel %vm3525, %v3504, 0
    %v3695 = vsel %vm3525, %v3505, 0
    %v3698 = vsel %vm3525, %v3506, 0
    %v3701 = vsel %vm3525, %v3507, 0
    %v3704 = vsel %vm3525, %v3508, 0
    %v3707 = vsel %vm3525, %v3509, 0
    %v3710 = vsel %vm3525, %v3510, 0
    %v3713 = vsel %vm3525, %v3511, 0
    %v3716 = vsel %vm3525, %v3512, 0
    %vm3718 = vcmask 1043456
    %v3720 = vsel %vm3718, %v3517, 0
    %3722 = vmatprep.subr.mxu0 0.0
    %3723 = vmatpush1.msra.mxu0 0.0
    %3724 = vmatprep.subr.mxu0 0.0
    %3725 = vmatpush1.msra.mxu0 0.0
    %3726 = vmatprep.subr.mxu0 0.0
    %3727 = vmatpush1.msra.mxu0 0.0
    %3728 = vmatprep.subr.mxu0 0.0
    %3729 = vmatpush1.msra.mxu0 0.0
    %3730 = vmatprep.subr.mxu0 0.0
    %3731 = vmatpush1.msra.mxu0 0.0
    %3732 = vmatprep.subr.mxu0 0.0
    %3733 = vmatpush1.msra.mxu0 0.0
    %3734 = vmatprep.subr.mxu0 0.0
    %3735 = vmatpush1.msra.mxu0 0.0
    %3736 = vmatprep.subr.mxu0 0.0
    %3737 = vmatpush1.msra.mxu0 0.0
    %3738 = vmatprep.subr.mxu0 0.0
    %3739 = vmatpush1.msra.mxu0 0.0
    %3740 = vmatprep.subr.mxu0 0.0
    %3741 = vmatpush1.msra.mxu0 0.0
    %3742 = vmatprep.subr.mxu0 0.0
    %3743 = vmatpush1.msra.mxu0 0.0
    %3744 = vmatprep.subr.mxu0 0.0
    %3745 = vmatpush1.msra.mxu0 %v3720
    %3746 = vmatprep.subr.mxu0 0.0
    %3747 = vmatpush1.msra.mxu0 %v3516
    %3748 = vmatprep.subr.mxu0 0.0
    %3749 = vmatpush1.msra.mxu0 %v3515
    %3750 = vmatprep.subr.mxu0 0.0
    %3751 = vmatpush1.msra.mxu0 %v3514
    %3752 = vmatprep.subr.mxu0 0.0
    %3753 = vmatpush1.msra.mxu0 %v3513
    %3754 = vmatprep.subr.mxu0 0.0
    %3755 = vmatpush2.msra.mxu0 0.0
    %3756 = vmatprep.subr.mxu0 0.0
    %3757 = vmatpush2.msra.mxu0 0.0
    %3758 = vmatprep.subr.mxu0 0.0
    %3759 = vmatpush2.msra.mxu0 0.0
    %3760 = vmatprep.subr.mxu0 0.0
    %3761 = vmatpush2.msra.mxu0 0.0
    %3762 = vmatprep.subr.mxu0 0.0
    %3763 = vmatpush2.msra.mxu0 0.0
    %3764 = vmatprep.subr.mxu0 0.0
    %3765 = vmatpush2.msra.mxu0 0.0
    %3766 = vmatprep.subr.mxu0 0.0
    %3767 = vmatpush2.msra.mxu0 0.0
    %3768 = vmatprep.subr.mxu0 0.0
    %3769 = vmatpush2.msra.mxu0 0.0
    %3770 = vmatprep.subr.mxu0 0.0
    %3771 = vmatpush2.msra.mxu0 0.0
    %3772 = vmatprep.subr.mxu0 0.0
    %3773 = vmatpush2.msra.mxu0 0.0
    %3774 = vmatprep.subr.mxu0 0.0
    %3775 = vmatpush2.msra.mxu0 0.0
    %3776 = vmatprep.subr.mxu0 0.0
    %3777 = vmatpush2.msra.mxu0 0.0
    %3778 = vmatprep.subr.mxu0 0.0
    %3779 = vmatpush2.msra.mxu0 0.0
    %3780 = vmatprep.subr.mxu0 0.0
    %3781 = vmatpush2.msra.mxu0 0.0
    %3782 = vmatprep.subr.mxu0 0.0
    %3783 = vmatpush2.msra.mxu0 0.0
    %3784 = vmatprep.subr.mxu0 0.0
    %3785 = vmatpush2.msra.mxu0 0.0
    %3786 = vmatprep.mubr.f32.mxu0 0.0
    %3787 = vmatmul.mubr.f32.gmra.mxu0 %v3527
    %v3788 = vpop.f32.mrf.mxu0
    %v3789 = vadd.f32 %v3523, %v3788
    %v3790 = vpop.f32.mrf.mxu0
    %3791 = vmatprep.mubr.f32.mxu0 0.0
    %3792 = vmatmul.mubr.f32.gmra.mxu0 %v3530
    %v3793 = vpop.f32.mrf.mxu0
    %v3794 = vadd.f32 %v3523, %v3793
    %v3795 = vpop.f32.mrf.mxu0
    %3796 = vmatprep.mubr.f32.mxu0 0.0
    %3797 = vmatmul.mubr.f32.gmra.mxu0 %v3533
    %v3798 = vpop.f32.mrf.mxu0
    %v3799 = vadd.f32 %v3523, %v3798
    %v3800 = vpop.f32.mrf.mxu0
    %3801 = vmatprep.mubr.f32.mxu0 0.0
    %3802 = vmatmul.mubr.f32.gmra.mxu0 %v3536
    %v3803 = vpop.f32.mrf.mxu0
    %v3804 = vadd.f32 %v3523, %v3803
    %v3805 = vpop.f32.mrf.mxu0
    %3806 = vmatprep.mubr.f32.mxu0 0.0
    %3807 = vmatmul.mubr.f32.gmra.mxu0 %v3539
    %v3808 = vpop.f32.mrf.mxu0
    %v3809 = vadd.f32 %v3523, %v3808
    %v3810 = vpop.f32.mrf.mxu0
    %3811 = vmatprep.mubr.f32.mxu0 0.0
    %3812 = vmatmul.mubr.f32.gmra.mxu0 %v3542
    %v3813 = vpop.f32.mrf.mxu0
    %v3814 = vadd.f32 %v3523, %v3813
    %v3815 = vpop.f32.mrf.mxu0
    %3816 = vmatprep.mubr.f32.mxu0 0.0
    %3817 = vmatmul.mubr.f32.gmra.mxu0 %v3545
    %v3818 = vpop.f32.mrf.mxu0
    %v3819 = vadd.f32 %v3523, %v3818
    %v3820 = vpop.f32.mrf.mxu0
    %3821 = vmatprep.mubr.f32.mxu0 0.0
    %3822 = vmatmul.mubr.f32.gmra.mxu0 %v3548
    %v3823 = vpop.f32.mrf.mxu0
    %v3824 = vadd.f32 %v3523, %v3823
    %v3825 = vpop.f32.mrf.mxu0
    %3826 = vmatprep.mubr.f32.mxu0 0.0
    %3827 = vmatmul.mubr.f32.gmra.mxu0 %v3551
    %v3828 = vpop.f32.mrf.mxu0
    %v3829 = vadd.f32 %v3523, %v3828
    %v3830 = vpop.f32.mrf.mxu0
    %3831 = vmatprep.mubr.f32.mxu0 0.0
    %3832 = vmatmul.mubr.f32.gmra.mxu0 %v3554
    %v3833 = vpop.f32.mrf.mxu0
    %v3834 = vadd.f32 %v3523, %v3833
    %v3835 = vpop.f32.mrf.mxu0
    %3836 = vmatprep.mubr.f32.mxu0 0.0
    %3837 = vmatmul.mubr.f32.gmra.mxu0 %v3557
    %v3838 = vpop.f32.mrf.mxu0
    %v3839 = vadd.f32 %v3523, %v3838
    %v3840 = vpop.f32.mrf.mxu0
    %3841 = vmatprep.mubr.f32.mxu0 0.0
    %3842 = vmatmul.mubr.f32.gmra.mxu0 %v3560
    %v3843 = vpop.f32.mrf.mxu0
    %v3844 = vadd.f32 %v3523, %v3843
    %v3845 = vpop.f32.mrf.mxu0
    %3846 = vmatprep.mubr.f32.mxu0 0.0
    %3847 = vmatmul.mubr.f32.gmra.mxu0 %v3563
    %v3848 = vpop.f32.mrf.mxu0
    %v3849 = vadd.f32 %v3523, %v3848
    %v3850 = vpop.f32.mrf.mxu0
    %3851 = vmatprep.mubr.f32.mxu0 0.0
    %3852 = vmatmul.mubr.f32.gmra.mxu0 %v3566
    %v3853 = vpop.f32.mrf.mxu0
    %v3854 = vadd.f32 %v3523, %v3853
    %v3855 = vpop.f32.mrf.mxu0
    %3856 = vmatprep.mubr.f32.mxu0 0.0
    %3857 = vmatmul.mubr.f32.gmra.mxu0 %v3569
    %v3858 = vpop.f32.mrf.mxu0
    %v3859 = vadd.f32 %v3523, %v3858
    %v3860 = vpop.f32.mrf.mxu0
    %3861 = vmatprep.mubr.f32.mxu0 0.0
    %3862 = vmatmul.mubr.f32.gmra.mxu0 %v3572
    %v3863 = vpop.f32.mrf.mxu0
    %v3864 = vadd.f32 %v3523, %v3863
    %v3865 = vpop.f32.mrf.mxu0
    %3866 = vmatprep.mubr.f32.mxu0 0.0
    %3867 = vmatmul.mubr.f32.gmra.mxu0 %v3575
    %v3868 = vpop.f32.mrf.mxu0
    %v3869 = vadd.f32 %v3523, %v3868
    %v3870 = vpop.f32.mrf.mxu0
    %3871 = vmatprep.mubr.f32.mxu0 0.0
    %3872 = vmatmul.mubr.f32.gmra.mxu0 %v3578
    %v3873 = vpop.f32.mrf.mxu0
    %v3874 = vadd.f32 %v3523, %v3873
    %v3875 = vpop.f32.mrf.mxu0
    %3876 = vmatprep.mubr.f32.mxu0 0.0
    %3877 = vmatmul.mubr.f32.gmra.mxu0 %v3581
    %v3878 = vpop.f32.mrf.mxu0
    %v3879 = vadd.f32 %v3523, %v3878
    %v3880 = vpop.f32.mrf.mxu0
    %3881 = vmatprep.mubr.f32.mxu0 0.0
    %3882 = vmatmul.mubr.f32.gmra.mxu0 %v3584
    %v3883 = vpop.f32.mrf.mxu0
    %v3884 = vadd.f32 %v3523, %v3883
    %v3885 = vpop.f32.mrf.mxu0
    %3886 = vmatprep.mubr.f32.mxu0 0.0
    %3887 = vmatmul.mubr.f32.gmra.mxu0 %v3587
    %v3888 = vpop.f32.mrf.mxu0
    %v3889 = vadd.f32 %v3523, %v3888
    %v3890 = vpop.f32.mrf.mxu0
    %3891 = vmatprep.mubr.f32.mxu0 0.0
    %3892 = vmatmul.mubr.f32.gmra.mxu0 %v3590
    %v3893 = vpop.f32.mrf.mxu0
    %v3894 = vadd.f32 %v3523, %v3893
    %v3895 = vpop.f32.mrf.mxu0
    %3896 = vmatprep.mubr.f32.mxu0 0.0
    %3897 = vmatmul.mubr.f32.gmra.mxu0 %v3593
    %v3898 = vpop.f32.mrf.mxu0
    %v3899 = vadd.f32 %v3523, %v3898
    %v3900 = vpop.f32.mrf.mxu0
    %3901 = vmatprep.mubr.f32.mxu0 0.0
    %3902 = vmatmul.mubr.f32.gmra.mxu0 %v3596
    %v3903 = vpop.f32.mrf.mxu0
    %v3904 = vadd.f32 %v3523, %v3903
    %v3905 = vpop.f32.mrf.mxu0
    %3906 = vmatprep.mubr.f32.mxu0 0.0
    %3907 = vmatmul.mubr.f32.gmra.mxu0 %v3599
    %v3908 = vpop.f32.mrf.mxu0
    %v3909 = vadd.f32 %v3523, %v3908
    %v3910 = vpop.f32.mrf.mxu0
    %3911 = vmatprep.mubr.f32.mxu0 0.0
    %3912 = vmatmul.mubr.f32.gmra.mxu0 %v3602
    %v3913 = vpop.f32.mrf.mxu0
    %v3914 = vadd.f32 %v3523, %v3913
    %v3915 = vpop.f32.mrf.mxu0
    %3916 = vmatprep.mubr.f32.mxu0 0.0
    %3917 = vmatmul.mubr.f32.gmra.mxu0 %v3605
    %v3918 = vpop.f32.mrf.mxu0
    %v3919 = vadd.f32 %v3523, %v3918
    %v3920 = vpop.f32.mrf.mxu0
    %3921 = vmatprep.mubr.f32.mxu0 0.0
    %3922 = vmatmul.mubr.f32.gmra.mxu0 %v3608
    %v3923 = vpop.f32.mrf.mxu0
    %v3924 = vadd.f32 %v3523, %v3923
    %v3925 = vpop.f32.mrf.mxu0
    %3926 = vmatprep.mubr.f32.mxu0 0.0
    %3927 = vmatmul.mubr.f32.gmra.mxu0 %v3611
    %v3928 = vpop.f32.mrf.mxu0
    %v3929 = vadd.f32 %v3523, %v3928
    %v3930 = vpop.f32.mrf.mxu0
    %3931 = vmatprep.mubr.f32.mxu0 0.0
    %3932 = vmatmul.mubr.f32.gmra.mxu0 %v3614
    %v3933 = vpop.f32.mrf.mxu0
    %v3934 = vadd.f32 %v3523, %v3933
    %v3935 = vpop.f32.mrf.mxu0
    %3936 = vmatprep.mubr.f32.mxu0 0.0
    %3937 = vmatmul.mubr.f32.gmra.mxu0 %v3617
    %v3938 = vpop.f32.mrf.mxu0
    %v3939 = vadd.f32 %v3523, %v3938
    %v3940 = vpop.f32.mrf.mxu0
    %3941 = vmatprep.mubr.f32.mxu0 0.0
    %3942 = vmatmul.mubr.f32.gmra.mxu0 %v3620
    %v3943 = vpop.f32.mrf.mxu0
    %v3944 = vadd.f32 %v3523, %v3943
    %v3945 = vpop.f32.mrf.mxu0
    %3946 = vmatprep.mubr.f32.mxu0 0.0
    %3947 = vmatmul.mubr.f32.gmra.mxu0 %v3623
    %v3948 = vpop.f32.mrf.mxu0
    %v3949 = vadd.f32 %v3523, %v3948
    %v3950 = vpop.f32.mrf.mxu0
    %3951 = vmatprep.mubr.f32.mxu0 0.0
    %3952 = vmatmul.mubr.f32.gmra.mxu0 %v3626
    %v3953 = vpop.f32.mrf.mxu0
    %v3954 = vadd.f32 %v3523, %v3953
    %v3955 = vpop.f32.mrf.mxu0
    %3956 = vmatprep.mubr.f32.mxu0 0.0
    %3957 = vmatmul.mubr.f32.gmra.mxu0 %v3629
    %v3958 = vpop.f32.mrf.mxu0
    %v3959 = vadd.f32 %v3523, %v3958
    %v3960 = vpop.f32.mrf.mxu0
    %3961 = vmatprep.mubr.f32.mxu0 0.0
    %3962 = vmatmul.mubr.f32.gmra.mxu0 %v3632
    %v3963 = vpop.f32.mrf.mxu0
    %v3964 = vadd.f32 %v3523, %v3963
    %v3965 = vpop.f32.mrf.mxu0
    %3966 = vmatprep.mubr.f32.mxu0 0.0
    %3967 = vmatmul.mubr.f32.gmra.mxu0 %v3635
    %v3968 = vpop.f32.mrf.mxu0
    %v3969 = vadd.f32 %v3523, %v3968
    %v3970 = vpop.f32.mrf.mxu0
    %3971 = vmatprep.mubr.f32.mxu0 0.0
    %3972 = vmatmul.mubr.f32.gmra.mxu0 %v3638
    %v3973 = vpop.f32.mrf.mxu0
    %v3974 = vadd.f32 %v3523, %v3973
    %v3975 = vpop.f32.mrf.mxu0
    %3976 = vmatprep.mubr.f32.mxu0 0.0
    %3977 = vmatmul.mubr.f32.gmra.mxu0 %v3641
    %v3978 = vpop.f32.mrf.mxu0
    %v3979 = vadd.f32 %v3523, %v3978
    %v3980 = vpop.f32.mrf.mxu0
    %3981 = vmatprep.mubr.f32.mxu0 0.0
    %3982 = vmatmul.mubr.f32.gmra.mxu0 %v3644
    %v3983 = vpop.f32.mrf.mxu0
    %v3984 = vadd.f32 %v3523, %v3983
    %v3985 = vpop.f32.mrf.mxu0
    %3986 = vmatprep.mubr.f32.mxu0 0.0
    %3987 = vmatmul.mubr.f32.gmra.mxu0 %v3647
    %v3988 = vpop.f32.mrf.mxu0
    %v3989 = vadd.f32 %v3523, %v3988
    %v3990 = vpop.f32.mrf.mxu0
    %3991 = vmatprep.mubr.f32.mxu0 0.0
    %3992 = vmatmul.mubr.f32.gmra.mxu0 %v3650
    %v3993 = vpop.f32.mrf.mxu0
    %v3994 = vadd.f32 %v3523, %v3993
    %v3995 = vpop.f32.mrf.mxu0
    %3996 = vmatprep.mubr.f32.mxu0 0.0
    %3997 = vmatmul.mubr.f32.gmra.mxu0 %v3653
    %v3998 = vpop.f32.mrf.mxu0
    %v3999 = vadd.f32 %v3523, %v3998
    %v4000 = vpop.f32.mrf.mxu0
    %4001 = vmatprep.mubr.f32.mxu0 0.0
    %4002 = vmatmul.mubr.f32.gmra.mxu0 %v3656
    %v4003 = vpop.f32.mrf.mxu0
    %v4004 = vadd.f32 %v3523, %v4003
    %v4005 = vpop.f32.mrf.mxu0
    %4006 = vmatprep.mubr.f32.mxu0 0.0
    %4007 = vmatmul.mubr.f32.gmra.mxu0 %v3659
    %v4008 = vpop.f32.mrf.mxu0
    %v4009 = vadd.f32 %v3523, %v4008
    %v4010 = vpop.f32.mrf.mxu0
    %4011 = vmatprep.mubr.f32.mxu0 0.0
    %4012 = vmatmul.mubr.f32.gmra.mxu0 %v3662
    %v4013 = vpop.f32.mrf.mxu0
    %v4014 = vadd.f32 %v3523, %v4013
    %v4015 = vpop.f32.mrf.mxu0
    %4016 = vmatprep.mubr.f32.mxu0 0.0
    %4017 = vmatmul.mubr.f32.gmra.mxu0 %v3665
    %v4018 = vpop.f32.mrf.mxu0
    %v4019 = vadd.f32 %v3523, %v4018
    %v4020 = vpop.f32.mrf.mxu0
    %4021 = vmatprep.mubr.f32.mxu0 0.0
    %4022 = vmatmul.mubr.f32.gmra.mxu0 %v3668
    %v4023 = vpop.f32.mrf.mxu0
    %v4024 = vadd.f32 %v3523, %v4023
    %v4025 = vpop.f32.mrf.mxu0
    %4026 = vmatprep.mubr.f32.mxu0 0.0
    %4027 = vmatmul.mubr.f32.gmra.mxu0 %v3671
    %v4028 = vpop.f32.mrf.mxu0
    %v4029 = vadd.f32 %v3523, %v4028
    %v4030 = vpop.f32.mrf.mxu0
    %4031 = vmatprep.mubr.f32.mxu0 0.0
    %4032 = vmatmul.mubr.f32.gmra.mxu0 %v3674
    %v4033 = vpop.f32.mrf.mxu0
    %v4034 = vadd.f32 %v3523, %v4033
    %v4035 = vpop.f32.mrf.mxu0
    %4036 = vmatprep.mubr.f32.mxu0 0.0
    %4037 = vmatmul.mubr.f32.gmra.mxu0 %v3677
    %v4038 = vpop.f32.mrf.mxu0
    %v4039 = vadd.f32 %v3523, %v4038
    %v4040 = vpop.f32.mrf.mxu0
    %4041 = vmatprep.mubr.f32.mxu0 0.0
    %4042 = vmatmul.mubr.f32.gmra.mxu0 %v3680
    %v4043 = vpop.f32.mrf.mxu0
    %v4044 = vadd.f32 %v3523, %v4043
    %v4045 = vpop.f32.mrf.mxu0
    %4046 = vmatprep.mubr.f32.mxu0 0.0
    %4047 = vmatmul.mubr.f32.gmra.mxu0 %v3683
    %v4048 = vpop.f32.mrf.mxu0
    %v4049 = vadd.f32 %v3523, %v4048
    %v4050 = vpop.f32.mrf.mxu0
    %4051 = vmatprep.mubr.f32.mxu0 0.0
    %4052 = vmatmul.mubr.f32.gmra.mxu0 %v3686
    %v4053 = vpop.f32.mrf.mxu0
    %v4054 = vadd.f32 %v3523, %v4053
    %v4055 = vpop.f32.mrf.mxu0
    %4056 = vmatprep.mubr.f32.mxu0 0.0
    %4057 = vmatmul.mubr.f32.gmra.mxu0 %v3689
    %v4058 = vpop.f32.mrf.mxu0
    %v4059 = vadd.f32 %v3523, %v4058
    %v4060 = vpop.f32.mrf.mxu0
    %4061 = vmatprep.mubr.f32.mxu0 0.0
    %4062 = vmatmul.mubr.f32.gmra.mxu0 %v3692
    %v4063 = vpop.f32.mrf.mxu0
    %v4064 = vadd.f32 %v3523, %v4063
    %v4065 = vpop.f32.mrf.mxu0
    %4066 = vmatprep.mubr.f32.mxu0 0.0
    %4067 = vmatmul.mubr.f32.gmra.mxu0 %v3695
    %v4068 = vpop.f32.mrf.mxu0
    %v4069 = vadd.f32 %v3523, %v4068
    %v4070 = vpop.f32.mrf.mxu0
    %4071 = vmatprep.mubr.f32.mxu0 0.0
    %4072 = vmatmul.mubr.f32.gmra.mxu0 %v3698
    %v4073 = vpop.f32.mrf.mxu0
    %v4074 = vadd.f32 %v3523, %v4073
    %v4075 = vpop.f32.mrf.mxu0
    %4076 = vmatprep.mubr.f32.mxu0 0.0
    %4077 = vmatmul.mubr.f32.gmra.mxu0 %v3701
    %v4078 = vpop.f32.mrf.mxu0
    %v4079 = vadd.f32 %v3523, %v4078
    %v4080 = vpop.f32.mrf.mxu0
    %4081 = vmatprep.mubr.f32.mxu0 0.0
    %4082 = vmatmul.mubr.f32.gmra.mxu0 %v3704
    %v4083 = vpop.f32.mrf.mxu0
    %v4084 = vadd.f32 %v3523, %v4083
    %v4085 = vpop.f32.mrf.mxu0
    %4086 = vmatprep.mubr.f32.mxu0 0.0
    %4087 = vmatmul.mubr.f32.gmra.mxu0 %v3707
    %v4088 = vpop.f32.mrf.mxu0
    %v4089 = vadd.f32 %v3523, %v4088
    %v4090 = vpop.f32.mrf.mxu0
    %4091 = vmatprep.mubr.f32.mxu0 0.0
    %4092 = vmatmul.mubr.f32.gmra.mxu0 %v3710
    %v4093 = vpop.f32.mrf.mxu0
    %v4094 = vadd.f32 %v3523, %v4093
    %v4095 = vpop.f32.mrf.mxu0
    %4096 = vmatprep.mubr.f32.mxu0 0.0
    %4097 = vmatmul.mubr.f32.gmra.mxu0 %v3713
    %v4098 = vpop.f32.mrf.mxu0
    %v4099 = vadd.f32 %v3523, %v4098
    %v4100 = vpop.f32.mrf.mxu0
    %4101 = vmatprep.mubr.f32.mxu0 0.0
    %4102 = vmatmul.mubr.f32.gmra.mxu0 %v3716
    %v4103 = vpop.f32.mrf.mxu0
    %v4104 = vadd.f32 %v3523, %v4103
    %v4105 = vpop.f32.mrf.mxu0
    %4106 = vdwg.mxu0
    %v4107 = vmax.f32 %v3789, 0.0
    %v4108 = vmax.f32 %v3794, 0.0
    %v4109 = vmax.f32 %v3799, 0.0
    %v4110 = vmax.f32 %v3804, 0.0
    %v4111 = vmax.f32 %v3809, 0.0
    %v4112 = vmax.f32 %v3814, 0.0
    %v4113 = vmax.f32 %v3819, 0.0
    %v4114 = vmax.f32 %v3824, 0.0
    %v4115 = vmax.f32 %v3829, 0.0
    %v4116 = vmax.f32 %v3834, 0.0
    %v4117 = vmax.f32 %v3839, 0.0
    %v4118 = vmax.f32 %v3844, 0.0
    %v4119 = vmax.f32 %v3849, 0.0
    %v4120 = vmax.f32 %v3854, 0.0
    %v4121 = vmax.f32 %v3859, 0.0
    %v4122 = vmax.f32 %v3864, 0.0
    %v4123 = vmax.f32 %v3869, 0.0
    %v4124 = vmax.f32 %v3874, 0.0
    %v4125 = vmax.f32 %v3879, 0.0
    %v4126 = vmax.f32 %v3884, 0.0
    %v4127 = vmax.f32 %v3889, 0.0
    %v4128 = vmax.f32 %v3894, 0.0
    %v4129 = vmax.f32 %v3899, 0.0
    %v4130 = vmax.f32 %v3904, 0.0
    %v4131 = vmax.f32 %v3909, 0.0
    %v4132 = vmax.f32 %v3914, 0.0
    %v4133 = vmax.f32 %v3919, 0.0
    %v4134 = vmax.f32 %v3924, 0.0
    %v4135 = vmax.f32 %v3929, 0.0
    %v4136 = vmax.f32 %v3934, 0.0
    %v4137 = vmax.f32 %v3939, 0.0
    %v4138 = vmax.f32 %v3944, 0.0
    %v4139 = vmax.f32 %v3949, 0.0
    %v4140 = vmax.f32 %v3954, 0.0
    %v4141 = vmax.f32 %v3959, 0.0
    %v4142 = vmax.f32 %v3964, 0.0
    %v4143 = vmax.f32 %v3969, 0.0
    %v4144 = vmax.f32 %v3974, 0.0
    %v4145 = vmax.f32 %v3979, 0.0
    %v4146 = vmax.f32 %v3984, 0.0
    %v4147 = vmax.f32 %v3989, 0.0
    %v4148 = vmax.f32 %v3994, 0.0
    %v4149 = vmax.f32 %v3999, 0.0
    %v4150 = vmax.f32 %v4004, 0.0
    %v4151 = vmax.f32 %v4009, 0.0
    %v4152 = vmax.f32 %v4014, 0.0
    %v4153 = vmax.f32 %v4019, 0.0
    %v4154 = vmax.f32 %v4024, 0.0
    %v4155 = vmax.f32 %v4029, 0.0
    %v4156 = vmax.f32 %v4034, 0.0
    %v4157 = vmax.f32 %v4039, 0.0
    %v4158 = vmax.f32 %v4044, 0.0
    %v4159 = vmax.f32 %v4049, 0.0
    %v4160 = vmax.f32 %v4054, 0.0
    %v4161 = vmax.f32 %v4059, 0.0
    %v4162 = vmax.f32 %v4064, 0.0
    %v4163 = vmax.f32 %v4069, 0.0
    %v4164 = vmax.f32 %v4074, 0.0
    %v4165 = vmax.f32 %v4079, 0.0
    %v4166 = vmax.f32 %v4084, 0.0
    %v4167 = vmax.f32 %v4089, 0.0
    %v4168 = vmax.f32 %v4094, 0.0
    %v4169 = vmax.f32 %v4099, 0.0
    %v4170 = vmax.f32 %v4104, 0.0
    %s4171 = scalar_lea.vmem [#allocation3], 24
    %4172 = vst.msk [vmem:[%s4171 + $0x1] sm:$0xff] %vm131, %v4107
    %4173 = vst.msk [vmem:[%s4171 + $0x9] sm:$0xff] %vm131, %v4108
    %4174 = vst.msk [vmem:[%s4171 + $0x19] sm:$0xff] %vm131, %v4109
    %4175 = vst.msk [vmem:[%s4171 + $0x21] sm:$0xff] %vm131, %v4110
    %4176 = vst.msk [vmem:[%s4171 + $0x31] sm:$0xff] %vm131, %v4111
    %4177 = vst.msk [vmem:[%s4171 + $0x39] sm:$0xff] %vm131, %v4112
    %4178 = vst.msk [vmem:[%s4171 + $0x49] sm:$0xff] %vm131, %v4113
    %4179 = vst.msk [vmem:[%s4171 + $0x51] sm:$0xff] %vm131, %v4114
    %4180 = vst.msk [vmem:[%s4171 + $0x61] sm:$0xff] %vm131, %v4115
    %4181 = vst.msk [vmem:[%s4171 + $0x69] sm:$0xff] %vm131, %v4116
    %4182 = vst.msk [vmem:[%s4171 + $0x79] sm:$0xff] %vm131, %v4117
    %4183 = vst.msk [vmem:[%s4171 + $0x81] sm:$0xff] %vm131, %v4118
    %4184 = vst.msk [vmem:[%s4171 + $0x91] sm:$0xff] %vm131, %v4119
    %4185 = vst.msk [vmem:[%s4171 + $0x99] sm:$0xff] %vm131, %v4120
    %4186 = vst.msk [vmem:[%s4171 + $0xa9] sm:$0xff] %vm131, %v4121
    %4187 = vst.msk [vmem:[%s4171 + $0xb1] sm:$0xff] %vm131, %v4122
    %4188 = vst.msk [vmem:[%s4171 + $0xc1] sm:$0xff] %vm131, %v4123
    %4189 = vst.msk [vmem:[%s4171 + $0xc9] sm:$0xff] %vm131, %v4124
    %4190 = vst.msk [vmem:[%s4171 + $0xd9] sm:$0xff] %vm131, %v4125
    %4191 = vst.msk [vmem:[%s4171 + $0xe1] sm:$0xff] %vm131, %v4126
    %4192 = vst.msk [vmem:[%s4171 + $0xf1] sm:$0xff] %vm131, %v4127
    %4193 = vst.msk [vmem:[%s4171 + $0xf9] sm:$0xff] %vm131, %v4128
    %4194 = vst.msk [vmem:[%s4171 + $0x109] sm:$0xff] %vm131, %v4129
    %4195 = vst.msk [vmem:[%s4171 + $0x111] sm:$0xff] %vm131, %v4130
    %4196 = vst.msk [vmem:[%s4171 + $0x121] sm:$0xff] %vm131, %v4131
    %4197 = vst.msk [vmem:[%s4171 + $0x129] sm:$0xff] %vm131, %v4132
    %4198 = vst.msk [vmem:[%s4171 + $0x139] sm:$0xff] %vm131, %v4133
    %4199 = vst.msk [vmem:[%s4171 + $0x141] sm:$0xff] %vm131, %v4134
    %4200 = vst.msk [vmem:[%s4171 + $0x151] sm:$0xff] %vm131, %v4135
    %4201 = vst.msk [vmem:[%s4171 + $0x159] sm:$0xff] %vm131, %v4136
    %4202 = vst.msk [vmem:[%s4171 + $0x169] sm:$0xff] %vm131, %v4137
    %4203 = vst.msk [vmem:[%s4171 + $0x171] sm:$0xff] %vm131, %v4138
    %4204 = vst.msk [vmem:[%s4171 + $0x1b1] sm:$0xff] %vm131, %v4139
    %4205 = vst.msk [vmem:[%s4171 + $0x1b9] sm:$0xff] %vm131, %v4140
    %4206 = vst.msk [vmem:[%s4171 + $0x1c9] sm:$0xff] %vm131, %v4141
    %4207 = vst.msk [vmem:[%s4171 + $0x1d1] sm:$0xff] %vm131, %v4142
    %4208 = vst.msk [vmem:[%s4171 + $0x1e1] sm:$0xff] %vm131, %v4143
    %4209 = vst.msk [vmem:[%s4171 + $0x1e9] sm:$0xff] %vm131, %v4144
    %4210 = vst.msk [vmem:[%s4171 + $0x1f9] sm:$0xff] %vm131, %v4145
    %4211 = vst.msk [vmem:[%s4171 + $0x201] sm:$0xff] %vm131, %v4146
    %4212 = vst.msk [vmem:[%s4171 + $0x211] sm:$0xff] %vm131, %v4147
    %4213 = vst.msk [vmem:[%s4171 + $0x219] sm:$0xff] %vm131, %v4148
    %4214 = vst.msk [vmem:[%s4171 + $0x229] sm:$0xff] %vm131, %v4149
    %4215 = vst.msk [vmem:[%s4171 + $0x231] sm:$0xff] %vm131, %v4150
    %4216 = vst.msk [vmem:[%s4171 + $0x241] sm:$0xff] %vm131, %v4151
    %4217 = vst.msk [vmem:[%s4171 + $0x249] sm:$0xff] %vm131, %v4152
    %4218 = vst.msk [vmem:[%s4171 + $0x259] sm:$0xff] %vm131, %v4153
    %4219 = vst.msk [vmem:[%s4171 + $0x261] sm:$0xff] %vm131, %v4154
    %4220 = vst.msk [vmem:[%s4171 + $0x271] sm:$0xff] %vm131, %v4155
    %4221 = vst.msk [vmem:[%s4171 + $0x279] sm:$0xff] %vm131, %v4156
    %4222 = vst.msk [vmem:[%s4171 + $0x289] sm:$0xff] %vm131, %v4157
    %4223 = vst.msk [vmem:[%s4171 + $0x291] sm:$0xff] %vm131, %v4158
    %4224 = vst.msk [vmem:[%s4171 + $0x2a1] sm:$0xff] %vm131, %v4159
    %4225 = vst.msk [vmem:[%s4171 + $0x2a9] sm:$0xff] %vm131, %v4160
    %4226 = vst.msk [vmem:[%s4171 + $0x2b9] sm:$0xff] %vm131, %v4161
    %4227 = vst.msk [vmem:[%s4171 + $0x2c1] sm:$0xff] %vm131, %v4162
    %4228 = vst.msk [vmem:[%s4171 + $0x2d1] sm:$0xff] %vm131, %v4163
    %4229 = vst.msk [vmem:[%s4171 + $0x2d9] sm:$0xff] %vm131, %v4164
    %4230 = vst.msk [vmem:[%s4171 + $0x2e9] sm:$0xff] %vm131, %v4165
    %4231 = vst.msk [vmem:[%s4171 + $0x2f1] sm:$0xff] %vm131, %v4166
    %4232 = vst.msk [vmem:[%s4171 + $0x301] sm:$0xff] %vm131, %v4167
    %4233 = vst.msk [vmem:[%s4171 + $0x309] sm:$0xff] %vm131, %v4168
    %4234 = vst.msk [vmem:[%s4171 + $0x319] sm:$0xff] %vm131, %v4169
    %4235 = vst.msk [vmem:[%s4171 + $0x321] sm:$0xff] %vm131, %v4170
    %v4236 = vld [vmem:[#allocation3] sm:$0xff]
    %v4237 = vld [vmem:[#allocation3 + $0x8] sm:$0xff]
    %v4238 = vld [vmem:[#allocation3 + $0x18] sm:$0xff]
    %v4239 = vld [vmem:[#allocation3 + $0x20] sm:$0xff]
    %v4240 = vld [vmem:[#allocation3 + $0x30] sm:$0xff]
    %v4241 = vld [vmem:[#allocation3 + $0x38] sm:$0xff]
    %v4242 = vld [vmem:[#allocation3 + $0x48] sm:$0xff]
    %v4243 = vld [vmem:[#allocation3 + $0x50] sm:$0xff]
    %v4244 = vld [vmem:[#allocation3 + $0x60] sm:$0xff]
    %v4245 = vld [vmem:[#allocation3 + $0x68] sm:$0xff]
    %v4246 = vld [vmem:[#allocation3 + $0x78] sm:$0xff]
    %v4247 = vld [vmem:[#allocation3 + $0x80] sm:$0xff]
    %v4248 = vld [vmem:[#allocation3 + $0x90] sm:$0xff]
    %v4249 = vld [vmem:[#allocation3 + $0x98] sm:$0xff]
    %v4250 = vld [vmem:[#allocation3 + $0xa8] sm:$0xff]
    %v4251 = vld [vmem:[#allocation3 + $0xb0] sm:$0xff]
    %v4252 = vld [vmem:[#allocation3 + $0xc0] sm:$0xff]
    %v4253 = vld [vmem:[#allocation3 + $0xc8] sm:$0xff]
    %v4254 = vld [vmem:[#allocation3 + $0xd8] sm:$0xff]
    %v4255 = vld [vmem:[#allocation3 + $0xe0] sm:$0xff]
    %v4256 = vld [vmem:[#allocation3 + $0xf0] sm:$0xff]
    %v4257 = vld [vmem:[#allocation3 + $0xf8] sm:$0xff]
    %v4258 = vld [vmem:[#allocation3 + $0x108] sm:$0xff]
    %v4259 = vld [vmem:[#allocation3 + $0x110] sm:$0xff]
    %v4260 = vld [vmem:[#allocation3 + $0x120] sm:$0xff]
    %v4261 = vld [vmem:[#allocation3 + $0x128] sm:$0xff]
    %v4262 = vld [vmem:[#allocation3 + $0x138] sm:$0xff]
    %v4263 = vld [vmem:[#allocation3 + $0x140] sm:$0xff]
    %v4264 = vld [vmem:[#allocation3 + $0x150] sm:$0xff]
    %v4265 = vld [vmem:[#allocation3 + $0x158] sm:$0xff]
    %v4266 = vld [vmem:[#allocation3 + $0x168] sm:$0xff]
    %v4267 = vld [vmem:[#allocation3 + $0x170] sm:$0xff]
    %v4268 = vld [vmem:[#allocation3 + $0x1b0] sm:$0xff]
    %v4269 = vld [vmem:[#allocation3 + $0x1b8] sm:$0xff]
    %v4270 = vld [vmem:[#allocation3 + $0x1c8] sm:$0xff]
    %v4271 = vld [vmem:[#allocation3 + $0x1d0] sm:$0xff]
    %v4272 = vld [vmem:[#allocation3 + $0x1e0] sm:$0xff]
    %v4273 = vld [vmem:[#allocation3 + $0x1e8] sm:$0xff]
    %v4274 = vld [vmem:[#allocation3 + $0x1f8] sm:$0xff]
    %v4275 = vld [vmem:[#allocation3 + $0x200] sm:$0xff]
    %v4276 = vld [vmem:[#allocation3 + $0x210] sm:$0xff]
    %v4277 = vld [vmem:[#allocation3 + $0x218] sm:$0xff]
    %v4278 = vld [vmem:[#allocation3 + $0x228] sm:$0xff]
    %v4279 = vld [vmem:[#allocation3 + $0x230] sm:$0xff]
    %v4280 = vld [vmem:[#allocation3 + $0x240] sm:$0xff]
    %v4281 = vld [vmem:[#allocation3 + $0x248] sm:$0xff]
    %v4282 = vld [vmem:[#allocation3 + $0x258] sm:$0xff]
    %v4283 = vld [vmem:[#allocation3 + $0x260] sm:$0xff]
    %v4284 = vld [vmem:[#allocation3 + $0x270] sm:$0xff]
    %v4285 = vld [vmem:[#allocation3 + $0x278] sm:$0xff]
    %v4286 = vld [vmem:[#allocation3 + $0x288] sm:$0xff]
    %v4287 = vld [vmem:[#allocation3 + $0x290] sm:$0xff]
    %v4288 = vld [vmem:[#allocation3 + $0x2a0] sm:$0xff]
    %v4289 = vld [vmem:[#allocation3 + $0x2a8] sm:$0xff]
    %v4290 = vld [vmem:[#allocation3 + $0x2b8] sm:$0xff]
    %v4291 = vld [vmem:[#allocation3 + $0x2c0] sm:$0xff]
    %v4292 = vld [vmem:[#allocation3 + $0x2d0] sm:$0xff]
    %v4293 = vld [vmem:[#allocation3 + $0x2d8] sm:$0xff]
    %v4294 = vld [vmem:[#allocation3 + $0x2e8] sm:$0xff]
    %v4295 = vld [vmem:[#allocation3 + $0x2f0] sm:$0xff]
    %v4296 = vld [vmem:[#allocation3 + $0x300] sm:$0xff]
    %v4297 = vld [vmem:[#allocation3 + $0x308] sm:$0xff]
    %v4298 = vld [vmem:[#allocation3 + $0x318] sm:$0xff]
    %v4299 = vld [vmem:[#allocation3 + $0x320] sm:$0xff]
    %v4300 = vld [vmem:[#allocation3 + $0x1] sm:$0xff]
    %v4301 = vld [vmem:[#allocation3 + $0x9] sm:$0xff]
    %v4302 = vld [vmem:[#allocation3 + $0x19] sm:$0xff]
    %v4303 = vld [vmem:[#allocation3 + $0x21] sm:$0xff]
    %v4304 = vld [vmem:[#allocation3 + $0x31] sm:$0xff]
    %v4305 = vld [vmem:[#allocation3 + $0x39] sm:$0xff]
    %v4306 = vld [vmem:[#allocation3 + $0x49] sm:$0xff]
    %v4307 = vld [vmem:[#allocation3 + $0x51] sm:$0xff]
    %v4308 = vld [vmem:[#allocation3 + $0x61] sm:$0xff]
    %v4309 = vld [vmem:[#allocation3 + $0x69] sm:$0xff]
    %v4310 = vld [vmem:[#allocation3 + $0x79] sm:$0xff]
    %v4311 = vld [vmem:[#allocation3 + $0x81] sm:$0xff]
    %v4312 = vld [vmem:[#allocation3 + $0x91] sm:$0xff]
    %v4313 = vld [vmem:[#allocation3 + $0x99] sm:$0xff]
    %v4314 = vld [vmem:[#allocation3 + $0xa9] sm:$0xff]
    %v4315 = vld [vmem:[#allocation3 + $0xb1] sm:$0xff]
    %v4316 = vld [vmem:[#allocation3 + $0xc1] sm:$0xff]
    %v4317 = vld [vmem:[#allocation3 + $0xc9] sm:$0xff]
    %v4318 = vld [vmem:[#allocation3 + $0xd9] sm:$0xff]
    %v4319 = vld [vmem:[#allocation3 + $0xe1] sm:$0xff]
    %v4320 = vld [vmem:[#allocation3 + $0xf1] sm:$0xff]
    %v4321 = vld [vmem:[#allocation3 + $0xf9] sm:$0xff]
    %v4322 = vld [vmem:[#allocation3 + $0x109] sm:$0xff]
    %v4323 = vld [vmem:[#allocation3 + $0x111] sm:$0xff]
    %v4324 = vld [vmem:[#allocation3 + $0x121] sm:$0xff]
    %v4325 = vld [vmem:[#allocation3 + $0x129] sm:$0xff]
    %v4326 = vld [vmem:[#allocation3 + $0x139] sm:$0xff]
    %v4327 = vld [vmem:[#allocation3 + $0x141] sm:$0xff]
    %v4328 = vld [vmem:[#allocation3 + $0x151] sm:$0xff]
    %v4329 = vld [vmem:[#allocation3 + $0x159] sm:$0xff]
    %v4330 = vld [vmem:[#allocation3 + $0x169] sm:$0xff]
    %v4331 = vld [vmem:[#allocation3 + $0x171] sm:$0xff]
    %v4332 = vld [vmem:[#allocation3 + $0x1b1] sm:$0xff]
    %v4333 = vld [vmem:[#allocation3 + $0x1b9] sm:$0xff]
    %v4334 = vld [vmem:[#allocation3 + $0x1c9] sm:$0xff]
    %v4335 = vld [vmem:[#allocation3 + $0x1d1] sm:$0xff]
    %v4336 = vld [vmem:[#allocation3 + $0x1e1] sm:$0xff]
    %v4337 = vld [vmem:[#allocation3 + $0x1e9] sm:$0xff]
    %v4338 = vld [vmem:[#allocation3 + $0x1f9] sm:$0xff]
    %v4339 = vld [vmem:[#allocation3 + $0x201] sm:$0xff]
    %v4340 = vld [vmem:[#allocation3 + $0x211] sm:$0xff]
    %v4341 = vld [vmem:[#allocation3 + $0x219] sm:$0xff]
    %v4342 = vld [vmem:[#allocation3 + $0x229] sm:$0xff]
    %v4343 = vld [vmem:[#allocation3 + $0x231] sm:$0xff]
    %v4344 = vld [vmem:[#allocation3 + $0x241] sm:$0xff]
    %v4345 = vld [vmem:[#allocation3 + $0x249] sm:$0xff]
    %v4346 = vld [vmem:[#allocation3 + $0x259] sm:$0xff]
    %v4347 = vld [vmem:[#allocation3 + $0x261] sm:$0xff]
    %v4348 = vld [vmem:[#allocation3 + $0x271] sm:$0xff]
    %v4349 = vld [vmem:[#allocation3 + $0x279] sm:$0xff]
    %v4350 = vld [vmem:[#allocation3 + $0x289] sm:$0xff]
    %v4351 = vld [vmem:[#allocation3 + $0x291] sm:$0xff]
    %v4352 = vld [vmem:[#allocation3 + $0x2a1] sm:$0xff]
    %v4353 = vld [vmem:[#allocation3 + $0x2a9] sm:$0xff]
    %v4354 = vld [vmem:[#allocation3 + $0x2b9] sm:$0xff]
    %v4355 = vld [vmem:[#allocation3 + $0x2c1] sm:$0xff]
    %v4356 = vld [vmem:[#allocation3 + $0x2d1] sm:$0xff]
    %v4357 = vld [vmem:[#allocation3 + $0x2d9] sm:$0xff]
    %v4358 = vld [vmem:[#allocation3 + $0x2e9] sm:$0xff]
    %v4359 = vld [vmem:[#allocation3 + $0x2f1] sm:$0xff]
    %v4360 = vld [vmem:[#allocation3 + $0x301] sm:$0xff]
    %v4361 = vld [vmem:[#allocation3 + $0x309] sm:$0xff]
    %v4362 = vld [vmem:[#allocation3 + $0x319] sm:$0xff]
    %v4363 = vld [vmem:[#allocation3 + $0x321] sm:$0xff]
    %v4364 = vld [vmem:[#allocation3 + $0x2] sm:$0xff]
    %v4365 = vld [vmem:[#allocation3 + $0xa] sm:$0xff]
    %v4366 = vld [vmem:[#allocation3 + $0x1a] sm:$0xff]
    %v4367 = vld [vmem:[#allocation3 + $0x22] sm:$0xff]
    %v4368 = vld [vmem:[#allocation3 + $0x32] sm:$0xff]
    %v4369 = vld [vmem:[#allocation3 + $0x3a] sm:$0xff]
    %v4370 = vld [vmem:[#allocation3 + $0x4a] sm:$0xff]
    %v4371 = vld [vmem:[#allocation3 + $0x52] sm:$0xff]
    %v4372 = vld [vmem:[#allocation3 + $0x62] sm:$0xff]
    %v4373 = vld [vmem:[#allocation3 + $0x6a] sm:$0xff]
    %v4374 = vld [vmem:[#allocation3 + $0x7a] sm:$0xff]
    %v4375 = vld [vmem:[#allocation3 + $0x82] sm:$0xff]
    %v4376 = vld [vmem:[#allocation3 + $0x92] sm:$0xff]
    %v4377 = vld [vmem:[#allocation3 + $0x9a] sm:$0xff]
    %v4378 = vld [vmem:[#allocation3 + $0xaa] sm:$0xff]
    %v4379 = vld [vmem:[#allocation3 + $0xb2] sm:$0xff]
    %v4380 = vld [vmem:[#allocation3 + $0xc2] sm:$0xff]
    %v4381 = vld [vmem:[#allocation3 + $0xca] sm:$0xff]
    %v4382 = vld [vmem:[#allocation3 + $0xda] sm:$0xff]
    %v4383 = vld [vmem:[#allocation3 + $0xe2] sm:$0xff]
    %v4384 = vld [vmem:[#allocation3 + $0xf2] sm:$0xff]
    %v4385 = vld [vmem:[#allocation3 + $0xfa] sm:$0xff]
    %v4386 = vld [vmem:[#allocation3 + $0x10a] sm:$0xff]
    %v4387 = vld [vmem:[#allocation3 + $0x112] sm:$0xff]
    %v4388 = vld [vmem:[#allocation3 + $0x122] sm:$0xff]
    %v4389 = vld [vmem:[#allocation3 + $0x12a] sm:$0xff]
    %v4390 = vld [vmem:[#allocation3 + $0x13a] sm:$0xff]
    %v4391 = vld [vmem:[#allocation3 + $0x142] sm:$0xff]
    %v4392 = vld [vmem:[#allocation3 + $0x152] sm:$0xff]
    %v4393 = vld [vmem:[#allocation3 + $0x15a] sm:$0xff]
    %v4394 = vld [vmem:[#allocation3 + $0x16a] sm:$0xff]
    %v4395 = vld [vmem:[#allocation3 + $0x172] sm:$0xff]
    %v4396 = vld [vmem:[#allocation3 + $0x1b2] sm:$0xff]
    %v4397 = vld [vmem:[#allocation3 + $0x1ba] sm:$0xff]
    %v4398 = vld [vmem:[#allocation3 + $0x1ca] sm:$0xff]
    %v4399 = vld [vmem:[#allocation3 + $0x1d2] sm:$0xff]
    %v4400 = vld [vmem:[#allocation3 + $0x1e2] sm:$0xff]
    %v4401 = vld [vmem:[#allocation3 + $0x1ea] sm:$0xff]
    %v4402 = vld [vmem:[#allocation3 + $0x1fa] sm:$0xff]
    %v4403 = vld [vmem:[#allocation3 + $0x202] sm:$0xff]
    %v4404 = vld [vmem:[#allocation3 + $0x212] sm:$0xff]
    %v4405 = vld [vmem:[#allocation3 + $0x21a] sm:$0xff]
    %v4406 = vld [vmem:[#allocation3 + $0x22a] sm:$0xff]
    %v4407 = vld [vmem:[#allocation3 + $0x232] sm:$0xff]
    %v4408 = vld [vmem:[#allocation3 + $0x242] sm:$0xff]
    %v4409 = vld [vmem:[#allocation3 + $0x24a] sm:$0xff]
    %v4410 = vld [vmem:[#allocation3 + $0x25a] sm:$0xff]
    %v4411 = vld [vmem:[#allocation3 + $0x262] sm:$0xff]
    %v4412 = vld [vmem:[#allocation3 + $0x272] sm:$0xff]
    %v4413 = vld [vmem:[#allocation3 + $0x27a] sm:$0xff]
    %v4414 = vld [vmem:[#allocation3 + $0x28a] sm:$0xff]
    %v4415 = vld [vmem:[#allocation3 + $0x292] sm:$0xff]
    %v4416 = vld [vmem:[#allocation3 + $0x2a2] sm:$0xff]
    %v4417 = vld [vmem:[#allocation3 + $0x2aa] sm:$0xff]
    %v4418 = vld [vmem:[#allocation3 + $0x2ba] sm:$0xff]
    %v4419 = vld [vmem:[#allocation3 + $0x2c2] sm:$0xff]
    %v4420 = vld [vmem:[#allocation3 + $0x2d2] sm:$0xff]
    %v4421 = vld [vmem:[#allocation3 + $0x2da] sm:$0xff]
    %v4422 = vld [vmem:[#allocation3 + $0x2ea] sm:$0xff]
    %v4423 = vld [vmem:[#allocation3 + $0x2f2] sm:$0xff]
    %v4424 = vld [vmem:[#allocation3 + $0x302] sm:$0xff]
    %v4425 = vld [vmem:[#allocation3 + $0x30a] sm:$0xff]
    %v4426 = vld [vmem:[#allocation3 + $0x31a] sm:$0xff]
    %v4427 = vld [vmem:[#allocation3 + $0x322] sm:$0xff]
    %v4428 = vld [vmem:[%s4171] sm:$0xff]
    %v4429 = vld [vmem:[%s4171 + $0x8] sm:$0xff]
    %v4430 = vld [vmem:[%s4171 + $0x18] sm:$0xff]
    %v4431 = vld [vmem:[%s4171 + $0x20] sm:$0xff]
    %v4432 = vld [vmem:[%s4171 + $0x30] sm:$0xff]
    %v4433 = vld [vmem:[%s4171 + $0x38] sm:$0xff]
    %v4434 = vld [vmem:[%s4171 + $0x48] sm:$0xff]
    %v4435 = vld [vmem:[%s4171 + $0x50] sm:$0xff]
    %v4436 = vld [vmem:[%s4171 + $0x60] sm:$0xff]
    %v4437 = vld [vmem:[%s4171 + $0x68] sm:$0xff]
    %v4438 = vld [vmem:[%s4171 + $0x78] sm:$0xff]
    %v4439 = vld [vmem:[%s4171 + $0x80] sm:$0xff]
    %v4440 = vld [vmem:[%s4171 + $0x90] sm:$0xff]
    %v4441 = vld [vmem:[%s4171 + $0x98] sm:$0xff]
    %v4442 = vld [vmem:[%s4171 + $0xa8] sm:$0xff]
    %v4443 = vld [vmem:[%s4171 + $0xb0] sm:$0xff]
    %v4444 = vld [vmem:[%s4171 + $0xc0] sm:$0xff]
    %v4445 = vld [vmem:[%s4171 + $0xc8] sm:$0xff]
    %v4446 = vld [vmem:[%s4171 + $0xd8] sm:$0xff]
    %v4447 = vld [vmem:[%s4171 + $0xe0] sm:$0xff]
    %v4448 = vld [vmem:[%s4171 + $0xf0] sm:$0xff]
    %v4449 = vld [vmem:[%s4171 + $0xf8] sm:$0xff]
    %v4450 = vld [vmem:[%s4171 + $0x108] sm:$0xff]
    %v4451 = vld [vmem:[%s4171 + $0x110] sm:$0xff]
    %v4452 = vld [vmem:[%s4171 + $0x120] sm:$0xff]
    %v4453 = vld [vmem:[%s4171 + $0x128] sm:$0xff]
    %v4454 = vld [vmem:[%s4171 + $0x138] sm:$0xff]
    %v4455 = vld [vmem:[%s4171 + $0x140] sm:$0xff]
    %v4456 = vld [vmem:[%s4171 + $0x150] sm:$0xff]
    %v4457 = vld [vmem:[%s4171 + $0x158] sm:$0xff]
    %v4458 = vld [vmem:[%s4171 + $0x168] sm:$0xff]
    %v4459 = vld [vmem:[%s4171 + $0x170] sm:$0xff]
    %v4460 = vld [vmem:[%s4171 + $0x1b0] sm:$0xff]
    %v4461 = vld [vmem:[%s4171 + $0x1b8] sm:$0xff]
    %v4462 = vld [vmem:[%s4171 + $0x1c8] sm:$0xff]
    %v4463 = vld [vmem:[%s4171 + $0x1d0] sm:$0xff]
    %v4464 = vld [vmem:[%s4171 + $0x1e0] sm:$0xff]
    %v4465 = vld [vmem:[%s4171 + $0x1e8] sm:$0xff]
    %v4466 = vld [vmem:[%s4171 + $0x1f8] sm:$0xff]
    %v4467 = vld [vmem:[%s4171 + $0x200] sm:$0xff]
    %v4468 = vld [vmem:[%s4171 + $0x210] sm:$0xff]
    %v4469 = vld [vmem:[%s4171 + $0x218] sm:$0xff]
    %v4470 = vld [vmem:[%s4171 + $0x228] sm:$0xff]
    %v4471 = vld [vmem:[%s4171 + $0x230] sm:$0xff]
    %v4472 = vld [vmem:[%s4171 + $0x240] sm:$0xff]
    %v4473 = vld [vmem:[%s4171 + $0x248] sm:$0xff]
    %v4474 = vld [vmem:[%s4171 + $0x258] sm:$0xff]
    %v4475 = vld [vmem:[%s4171 + $0x260] sm:$0xff]
    %v4476 = vld [vmem:[%s4171 + $0x270] sm:$0xff]
    %v4477 = vld [vmem:[%s4171 + $0x278] sm:$0xff]
    %v4478 = vld [vmem:[%s4171 + $0x288] sm:$0xff]
    %v4479 = vld [vmem:[%s4171 + $0x290] sm:$0xff]
    %v4480 = vld [vmem:[%s4171 + $0x2a0] sm:$0xff]
    %v4481 = vld [vmem:[%s4171 + $0x2a8] sm:$0xff]
    %v4482 = vld [vmem:[%s4171 + $0x2b8] sm:$0xff]
    %v4483 = vld [vmem:[%s4171 + $0x2c0] sm:$0xff]
    %v4484 = vld [vmem:[%s4171 + $0x2d0] sm:$0xff]
    %v4485 = vld [vmem:[%s4171 + $0x2d8] sm:$0xff]
    %v4486 = vld [vmem:[%s4171 + $0x2e8] sm:$0xff]
    %v4487 = vld [vmem:[%s4171 + $0x2f0] sm:$0xff]
    %v4488 = vld [vmem:[%s4171 + $0x300] sm:$0xff]
    %v4489 = vld [vmem:[%s4171 + $0x308] sm:$0xff]
    %v4490 = vld [vmem:[%s4171 + $0x318] sm:$0xff]
    %v4491 = vld [vmem:[%s4171 + $0x320] sm:$0xff]
    %v4492 = vld [vmem:[%s4171 + $0x1] sm:$0xff]
    %v4493 = vld [vmem:[%s4171 + $0x9] sm:$0xff]
    %v4494 = vld [vmem:[%s4171 + $0x19] sm:$0xff]
    %v4495 = vld [vmem:[%s4171 + $0x21] sm:$0xff]
    %v4496 = vld [vmem:[%s4171 + $0x31] sm:$0xff]
    %v4497 = vld [vmem:[%s4171 + $0x39] sm:$0xff]
    %v4498 = vld [vmem:[%s4171 + $0x49] sm:$0xff]
    %v4499 = vld [vmem:[%s4171 + $0x51] sm:$0xff]
    %v4500 = vld [vmem:[%s4171 + $0x61] sm:$0xff]
    %v4501 = vld [vmem:[%s4171 + $0x69] sm:$0xff]
    %v4502 = vld [vmem:[%s4171 + $0x79] sm:$0xff]
    %v4503 = vld [vmem:[%s4171 + $0x81] sm:$0xff]
    %v4504 = vld [vmem:[%s4171 + $0x91] sm:$0xff]
    %v4505 = vld [vmem:[%s4171 + $0x99] sm:$0xff]
    %v4506 = vld [vmem:[%s4171 + $0xa9] sm:$0xff]
    %v4507 = vld [vmem:[%s4171 + $0xb1] sm:$0xff]
    %v4508 = vld [vmem:[%s4171 + $0xc1] sm:$0xff]
    %v4509 = vld [vmem:[%s4171 + $0xc9] sm:$0xff]
    %v4510 = vld [vmem:[%s4171 + $0xd9] sm:$0xff]
    %v4511 = vld [vmem:[%s4171 + $0xe1] sm:$0xff]
    %v4512 = vld [vmem:[%s4171 + $0xf1] sm:$0xff]
    %v4513 = vld [vmem:[%s4171 + $0xf9] sm:$0xff]
    %v4514 = vld [vmem:[%s4171 + $0x109] sm:$0xff]
    %v4515 = vld [vmem:[%s4171 + $0x111] sm:$0xff]
    %v4516 = vld [vmem:[%s4171 + $0x121] sm:$0xff]
    %v4517 = vld [vmem:[%s4171 + $0x129] sm:$0xff]
    %v4518 = vld [vmem:[%s4171 + $0x139] sm:$0xff]
    %v4519 = vld [vmem:[%s4171 + $0x141] sm:$0xff]
    %v4520 = vld [vmem:[%s4171 + $0x151] sm:$0xff]
    %v4521 = vld [vmem:[%s4171 + $0x159] sm:$0xff]
    %v4522 = vld [vmem:[%s4171 + $0x169] sm:$0xff]
    %v4523 = vld [vmem:[%s4171 + $0x171] sm:$0xff]
    %v4524 = vld [vmem:[%s4171 + $0x1b1] sm:$0xff]
    %v4525 = vld [vmem:[%s4171 + $0x1b9] sm:$0xff]
    %v4526 = vld [vmem:[%s4171 + $0x1c9] sm:$0xff]
    %v4527 = vld [vmem:[%s4171 + $0x1d1] sm:$0xff]
    %v4528 = vld [vmem:[%s4171 + $0x1e1] sm:$0xff]
    %v4529 = vld [vmem:[%s4171 + $0x1e9] sm:$0xff]
    %v4530 = vld [vmem:[%s4171 + $0x1f9] sm:$0xff]
    %v4531 = vld [vmem:[%s4171 + $0x201] sm:$0xff]
    %v4532 = vld [vmem:[%s4171 + $0x211] sm:$0xff]
    %v4533 = vld [vmem:[%s4171 + $0x219] sm:$0xff]
    %v4534 = vld [vmem:[%s4171 + $0x229] sm:$0xff]
    %v4535 = vld [vmem:[%s4171 + $0x231] sm:$0xff]
    %v4536 = vld [vmem:[%s4171 + $0x241] sm:$0xff]
    %v4537 = vld [vmem:[%s4171 + $0x249] sm:$0xff]
    %v4538 = vld [vmem:[%s4171 + $0x259] sm:$0xff]
    %v4539 = vld [vmem:[%s4171 + $0x261] sm:$0xff]
    %v4540 = vld [vmem:[%s4171 + $0x271] sm:$0xff]
    %v4541 = vld [vmem:[%s4171 + $0x279] sm:$0xff]
    %v4542 = vld [vmem:[%s4171 + $0x289] sm:$0xff]
    %v4543 = vld [vmem:[%s4171 + $0x291] sm:$0xff]
    %v4544 = vld [vmem:[%s4171 + $0x2a1] sm:$0xff]
    %v4545 = vld [vmem:[%s4171 + $0x2a9] sm:$0xff]
    %v4546 = vld [vmem:[%s4171 + $0x2b9] sm:$0xff]
    %v4547 = vld [vmem:[%s4171 + $0x2c1] sm:$0xff]
    %v4548 = vld [vmem:[%s4171 + $0x2d1] sm:$0xff]
    %v4549 = vld [vmem:[%s4171 + $0x2d9] sm:$0xff]
    %v4550 = vld [vmem:[%s4171 + $0x2e9] sm:$0xff]
    %v4551 = vld [vmem:[%s4171 + $0x2f1] sm:$0xff]
    %v4552 = vld [vmem:[%s4171 + $0x301] sm:$0xff]
    %v4553 = vld [vmem:[%s4171 + $0x309] sm:$0xff]
    %v4554 = vld [vmem:[%s4171 + $0x319] sm:$0xff]
    %v4555 = vld [vmem:[%s4171 + $0x321] sm:$0xff]
    %v4556 = vld [vmem:[%s4171 + $0x2] sm:$0xff]
    %v4557 = vld [vmem:[%s4171 + $0xa] sm:$0xff]
    %v4558 = vld [vmem:[%s4171 + $0x1a] sm:$0xff]
    %v4559 = vld [vmem:[%s4171 + $0x22] sm:$0xff]
    %v4560 = vld [vmem:[%s4171 + $0x32] sm:$0xff]
    %v4561 = vld [vmem:[%s4171 + $0x3a] sm:$0xff]
    %v4562 = vld [vmem:[%s4171 + $0x4a] sm:$0xff]
    %v4563 = vld [vmem:[%s4171 + $0x52] sm:$0xff]
    %v4564 = vld [vmem:[%s4171 + $0x62] sm:$0xff]
    %v4565 = vld [vmem:[%s4171 + $0x6a] sm:$0xff]
    %v4566 = vld [vmem:[%s4171 + $0x7a] sm:$0xff]
    %v4567 = vld [vmem:[%s4171 + $0x82] sm:$0xff]
    %v4568 = vld [vmem:[%s4171 + $0x92] sm:$0xff]
    %v4569 = vld [vmem:[%s4171 + $0x9a] sm:$0xff]
    %v4570 = vld [vmem:[%s4171 + $0xaa] sm:$0xff]
    %v4571 = vld [vmem:[%s4171 + $0xb2] sm:$0xff]
    %v4572 = vld [vmem:[%s4171 + $0xc2] sm:$0xff]
    %v4573 = vld [vmem:[%s4171 + $0xca] sm:$0xff]
    %v4574 = vld [vmem:[%s4171 + $0xda] sm:$0xff]
    %v4575 = vld [vmem:[%s4171 + $0xe2] sm:$0xff]
    %v4576 = vld [vmem:[%s4171 + $0xf2] sm:$0xff]
    %v4577 = vld [vmem:[%s4171 + $0xfa] sm:$0xff]
    %v4578 = vld [vmem:[%s4171 + $0x10a] sm:$0xff]
    %v4579 = vld [vmem:[%s4171 + $0x112] sm:$0xff]
    %v4580 = vld [vmem:[%s4171 + $0x122] sm:$0xff]
    %v4581 = vld [vmem:[%s4171 + $0x12a] sm:$0xff]
    %v4582 = vld [vmem:[%s4171 + $0x13a] sm:$0xff]
    %v4583 = vld [vmem:[%s4171 + $0x142] sm:$0xff]
    %v4584 = vld [vmem:[%s4171 + $0x152] sm:$0xff]
    %v4585 = vld [vmem:[%s4171 + $0x15a] sm:$0xff]
    %v4586 = vld [vmem:[%s4171 + $0x16a] sm:$0xff]
    %v4587 = vld [vmem:[%s4171 + $0x172] sm:$0xff]
    %v4588 = vld [vmem:[%s4171 + $0x1b2] sm:$0xff]
    %v4589 = vld [vmem:[%s4171 + $0x1ba] sm:$0xff]
    %v4590 = vld [vmem:[%s4171 + $0x1ca] sm:$0xff]
    %v4591 = vld [vmem:[%s4171 + $0x1d2] sm:$0xff]
    %v4592 = vld [vmem:[%s4171 + $0x1e2] sm:$0xff]
    %v4593 = vld [vmem:[%s4171 + $0x1ea] sm:$0xff]
    %v4594 = vld [vmem:[%s4171 + $0x1fa] sm:$0xff]
    %v4595 = vld [vmem:[%s4171 + $0x202] sm:$0xff]
    %v4596 = vld [vmem:[%s4171 + $0x212] sm:$0xff]
    %v4597 = vld [vmem:[%s4171 + $0x21a] sm:$0xff]
    %v4598 = vld [vmem:[%s4171 + $0x22a] sm:$0xff]
    %v4599 = vld [vmem:[%s4171 + $0x232] sm:$0xff]
    %v4600 = vld [vmem:[%s4171 + $0x242] sm:$0xff]
    %v4601 = vld [vmem:[%s4171 + $0x24a] sm:$0xff]
    %v4602 = vld [vmem:[%s4171 + $0x25a] sm:$0xff]
    %v4603 = vld [vmem:[%s4171 + $0x262] sm:$0xff]
    %v4604 = vld [vmem:[%s4171 + $0x272] sm:$0xff]
    %v4605 = vld [vmem:[%s4171 + $0x27a] sm:$0xff]
    %v4606 = vld [vmem:[%s4171 + $0x28a] sm:$0xff]
    %v4607 = vld [vmem:[%s4171 + $0x292] sm:$0xff]
    %v4608 = vld [vmem:[%s4171 + $0x2a2] sm:$0xff]
    %v4609 = vld [vmem:[%s4171 + $0x2aa] sm:$0xff]
    %v4610 = vld [vmem:[%s4171 + $0x2ba] sm:$0xff]
    %v4611 = vld [vmem:[%s4171 + $0x2c2] sm:$0xff]
    %v4612 = vld [vmem:[%s4171 + $0x2d2] sm:$0xff]
    %v4613 = vld [vmem:[%s4171 + $0x2da] sm:$0xff]
    %v4614 = vld [vmem:[%s4171 + $0x2ea] sm:$0xff]
    %v4615 = vld [vmem:[%s4171 + $0x2f2] sm:$0xff]
    %v4616 = vld [vmem:[%s4171 + $0x302] sm:$0xff]
    %v4617 = vld [vmem:[%s4171 + $0x30a] sm:$0xff]
    %v4618 = vld [vmem:[%s4171 + $0x31a] sm:$0xff]
    %v4619 = vld [vmem:[%s4171 + $0x322] sm:$0xff]
    %s4620 = scalar_lea.vmem [#allocation3], 48
    %v4621 = vld [vmem:[%s4620] sm:$0xff]
    %v4622 = vld [vmem:[%s4620 + $0x8] sm:$0xff]
    %v4623 = vld [vmem:[%s4620 + $0x18] sm:$0xff]
    %v4624 = vld [vmem:[%s4620 + $0x20] sm:$0xff]
    %v4625 = vld [vmem:[%s4620 + $0x30] sm:$0xff]
    %v4626 = vld [vmem:[%s4620 + $0x38] sm:$0xff]
    %v4627 = vld [vmem:[%s4620 + $0x48] sm:$0xff]
    %v4628 = vld [vmem:[%s4620 + $0x50] sm:$0xff]
    %v4629 = vld [vmem:[%s4620 + $0x60] sm:$0xff]
    %v4630 = vld [vmem:[%s4620 + $0x68] sm:$0xff]
    %v4631 = vld [vmem:[%s4620 + $0x78] sm:$0xff]
    %v4632 = vld [vmem:[%s4620 + $0x80] sm:$0xff]
    %v4633 = vld [vmem:[%s4620 + $0x90] sm:$0xff]
    %v4634 = vld [vmem:[%s4620 + $0x98] sm:$0xff]
    %v4635 = vld [vmem:[%s4620 + $0xa8] sm:$0xff]
    %v4636 = vld [vmem:[%s4620 + $0xb0] sm:$0xff]
    %v4637 = vld [vmem:[%s4620 + $0xc0] sm:$0xff]
    %v4638 = vld [vmem:[%s4620 + $0xc8] sm:$0xff]
    %v4639 = vld [vmem:[%s4620 + $0xd8] sm:$0xff]
    %v4640 = vld [vmem:[%s4620 + $0xe0] sm:$0xff]
    %v4641 = vld [vmem:[%s4620 + $0xf0] sm:$0xff]
    %v4642 = vld [vmem:[%s4620 + $0xf8] sm:$0xff]
    %v4643 = vld [vmem:[%s4620 + $0x108] sm:$0xff]
    %v4644 = vld [vmem:[%s4620 + $0x110] sm:$0xff]
    %v4645 = vld [vmem:[%s4620 + $0x120] sm:$0xff]
    %v4646 = vld [vmem:[%s4620 + $0x128] sm:$0xff]
    %v4647 = vld [vmem:[%s4620 + $0x138] sm:$0xff]
    %v4648 = vld [vmem:[%s4620 + $0x140] sm:$0xff]
    %v4649 = vld [vmem:[%s4620 + $0x150] sm:$0xff]
    %v4650 = vld [vmem:[%s4620 + $0x158] sm:$0xff]
    %v4651 = vld [vmem:[%s4620 + $0x168] sm:$0xff]
    %v4652 = vld [vmem:[%s4620 + $0x170] sm:$0xff]
    %v4653 = vld [vmem:[%s4620 + $0x1b0] sm:$0xff]
    %v4654 = vld [vmem:[%s4620 + $0x1b8] sm:$0xff]
    %v4655 = vld [vmem:[%s4620 + $0x1c8] sm:$0xff]
    %v4656 = vld [vmem:[%s4620 + $0x1d0] sm:$0xff]
    %v4657 = vld [vmem:[%s4620 + $0x1e0] sm:$0xff]
    %v4658 = vld [vmem:[%s4620 + $0x1e8] sm:$0xff]
    %v4659 = vld [vmem:[%s4620 + $0x1f8] sm:$0xff]
    %v4660 = vld [vmem:[%s4620 + $0x200] sm:$0xff]
    %v4661 = vld [vmem:[%s4620 + $0x210] sm:$0xff]
    %v4662 = vld [vmem:[%s4620 + $0x218] sm:$0xff]
    %v4663 = vld [vmem:[%s4620 + $0x228] sm:$0xff]
    %v4664 = vld [vmem:[%s4620 + $0x230] sm:$0xff]
    %v4665 = vld [vmem:[%s4620 + $0x240] sm:$0xff]
    %v4666 = vld [vmem:[%s4620 + $0x248] sm:$0xff]
    %v4667 = vld [vmem:[%s4620 + $0x258] sm:$0xff]
    %v4668 = vld [vmem:[%s4620 + $0x260] sm:$0xff]
    %v4669 = vld [vmem:[%s4620 + $0x270] sm:$0xff]
    %v4670 = vld [vmem:[%s4620 + $0x278] sm:$0xff]
    %v4671 = vld [vmem:[%s4620 + $0x288] sm:$0xff]
    %v4672 = vld [vmem:[%s4620 + $0x290] sm:$0xff]
    %v4673 = vld [vmem:[%s4620 + $0x2a0] sm:$0xff]
    %v4674 = vld [vmem:[%s4620 + $0x2a8] sm:$0xff]
    %v4675 = vld [vmem:[%s4620 + $0x2b8] sm:$0xff]
    %v4676 = vld [vmem:[%s4620 + $0x2c0] sm:$0xff]
    %v4677 = vld [vmem:[%s4620 + $0x2d0] sm:$0xff]
    %v4678 = vld [vmem:[%s4620 + $0x2d8] sm:$0xff]
    %v4679 = vld [vmem:[%s4620 + $0x2e8] sm:$0xff]
    %v4680 = vld [vmem:[%s4620 + $0x2f0] sm:$0xff]
    %v4681 = vld [vmem:[%s4620 + $0x300] sm:$0xff]
    %v4682 = vld [vmem:[%s4620 + $0x308] sm:$0xff]
    %v4683 = vld [vmem:[%s4620 + $0x318] sm:$0xff]
    %v4684 = vld [vmem:[%s4620 + $0x320] sm:$0xff]
    %v4685 = vld [vmem:[%s4620 + $0x1] sm:$0xff]
    %v4686 = vld [vmem:[%s4620 + $0x9] sm:$0xff]
    %v4687 = vld [vmem:[%s4620 + $0x19] sm:$0xff]
    %v4688 = vld [vmem:[%s4620 + $0x21] sm:$0xff]
    %v4689 = vld [vmem:[%s4620 + $0x31] sm:$0xff]
    %v4690 = vld [vmem:[%s4620 + $0x39] sm:$0xff]
    %v4691 = vld [vmem:[%s4620 + $0x49] sm:$0xff]
    %v4692 = vld [vmem:[%s4620 + $0x51] sm:$0xff]
    %v4693 = vld [vmem:[%s4620 + $0x61] sm:$0xff]
    %v4694 = vld [vmem:[%s4620 + $0x69] sm:$0xff]
    %v4695 = vld [vmem:[%s4620 + $0x79] sm:$0xff]
    %v4696 = vld [vmem:[%s4620 + $0x81] sm:$0xff]
    %v4697 = vld [vmem:[%s4620 + $0x91] sm:$0xff]
    %v4698 = vld [vmem:[%s4620 + $0x99] sm:$0xff]
    %v4699 = vld [vmem:[%s4620 + $0xa9] sm:$0xff]
    %v4700 = vld [vmem:[%s4620 + $0xb1] sm:$0xff]
    %v4701 = vld [vmem:[%s4620 + $0xc1] sm:$0xff]
    %v4702 = vld [vmem:[%s4620 + $0xc9] sm:$0xff]
    %v4703 = vld [vmem:[%s4620 + $0xd9] sm:$0xff]
    %v4704 = vld [vmem:[%s4620 + $0xe1] sm:$0xff]
    %v4705 = vld [vmem:[%s4620 + $0xf1] sm:$0xff]
    %v4706 = vld [vmem:[%s4620 + $0xf9] sm:$0xff]
    %v4707 = vld [vmem:[%s4620 + $0x109] sm:$0xff]
    %v4708 = vld [vmem:[%s4620 + $0x111] sm:$0xff]
    %v4709 = vld [vmem:[%s4620 + $0x121] sm:$0xff]
    %v4710 = vld [vmem:[%s4620 + $0x129] sm:$0xff]
    %v4711 = vld [vmem:[%s4620 + $0x139] sm:$0xff]
    %v4712 = vld [vmem:[%s4620 + $0x141] sm:$0xff]
    %v4713 = vld [vmem:[%s4620 + $0x151] sm:$0xff]
    %v4714 = vld [vmem:[%s4620 + $0x159] sm:$0xff]
    %v4715 = vld [vmem:[%s4620 + $0x169] sm:$0xff]
    %v4716 = vld [vmem:[%s4620 + $0x171] sm:$0xff]
    %v4717 = vld [vmem:[%s4620 + $0x1b1] sm:$0xff]
    %v4718 = vld [vmem:[%s4620 + $0x1b9] sm:$0xff]
    %v4719 = vld [vmem:[%s4620 + $0x1c9] sm:$0xff]
    %v4720 = vld [vmem:[%s4620 + $0x1d1] sm:$0xff]
    %v4721 = vld [vmem:[%s4620 + $0x1e1] sm:$0xff]
    %v4722 = vld [vmem:[%s4620 + $0x1e9] sm:$0xff]
    %v4723 = vld [vmem:[%s4620 + $0x1f9] sm:$0xff]
    %v4724 = vld [vmem:[%s4620 + $0x201] sm:$0xff]
    %v4725 = vld [vmem:[%s4620 + $0x211] sm:$0xff]
    %v4726 = vld [vmem:[%s4620 + $0x219] sm:$0xff]
    %v4727 = vld [vmem:[%s4620 + $0x229] sm:$0xff]
    %v4728 = vld [vmem:[%s4620 + $0x231] sm:$0xff]
    %v4729 = vld [vmem:[%s4620 + $0x241] sm:$0xff]
    %v4730 = vld [vmem:[%s4620 + $0x249] sm:$0xff]
    %v4731 = vld [vmem:[%s4620 + $0x259] sm:$0xff]
    %v4732 = vld [vmem:[%s4620 + $0x261] sm:$0xff]
    %v4733 = vld [vmem:[%s4620 + $0x271] sm:$0xff]
    %v4734 = vld [vmem:[%s4620 + $0x279] sm:$0xff]
    %v4735 = vld [vmem:[%s4620 + $0x289] sm:$0xff]
    %v4736 = vld [vmem:[%s4620 + $0x291] sm:$0xff]
    %v4737 = vld [vmem:[%s4620 + $0x2a1] sm:$0xff]
    %v4738 = vld [vmem:[%s4620 + $0x2a9] sm:$0xff]
    %v4739 = vld [vmem:[%s4620 + $0x2b9] sm:$0xff]
    %v4740 = vld [vmem:[%s4620 + $0x2c1] sm:$0xff]
    %v4741 = vld [vmem:[%s4620 + $0x2d1] sm:$0xff]
    %v4742 = vld [vmem:[%s4620 + $0x2d9] sm:$0xff]
    %v4743 = vld [vmem:[%s4620 + $0x2e9] sm:$0xff]
    %v4744 = vld [vmem:[%s4620 + $0x2f1] sm:$0xff]
    %v4745 = vld [vmem:[%s4620 + $0x301] sm:$0xff]
    %v4746 = vld [vmem:[%s4620 + $0x309] sm:$0xff]
    %v4747 = vld [vmem:[%s4620 + $0x319] sm:$0xff]
    %v4748 = vld [vmem:[%s4620 + $0x321] sm:$0xff]
    %v4749 = vld [vmem:[%s4620 + $0x2] sm:$0xff]
    %v4750 = vld [vmem:[%s4620 + $0xa] sm:$0xff]
    %v4751 = vld [vmem:[%s4620 + $0x1a] sm:$0xff]
    %v4752 = vld [vmem:[%s4620 + $0x22] sm:$0xff]
    %v4753 = vld [vmem:[%s4620 + $0x32] sm:$0xff]
    %v4754 = vld [vmem:[%s4620 + $0x3a] sm:$0xff]
    %v4755 = vld [vmem:[%s4620 + $0x4a] sm:$0xff]
    %v4756 = vld [vmem:[%s4620 + $0x52] sm:$0xff]
    %v4757 = vld [vmem:[%s4620 + $0x62] sm:$0xff]
    %v4758 = vld [vmem:[%s4620 + $0x6a] sm:$0xff]
    %v4759 = vld [vmem:[%s4620 + $0x7a] sm:$0xff]
    %v4760 = vld [vmem:[%s4620 + $0x82] sm:$0xff]
    %v4761 = vld [vmem:[%s4620 + $0x92] sm:$0xff]
    %v4762 = vld [vmem:[%s4620 + $0x9a] sm:$0xff]
    %v4763 = vld [vmem:[%s4620 + $0xaa] sm:$0xff]
    %v4764 = vld [vmem:[%s4620 + $0xb2] sm:$0xff]
    %v4765 = vld [vmem:[%s4620 + $0xc2] sm:$0xff]
    %v4766 = vld [vmem:[%s4620 + $0xca] sm:$0xff]
    %v4767 = vld [vmem:[%s4620 + $0xda] sm:$0xff]
    %v4768 = vld [vmem:[%s4620 + $0xe2] sm:$0xff]
    %v4769 = vld [vmem:[%s4620 + $0xf2] sm:$0xff]
    %v4770 = vld [vmem:[%s4620 + $0xfa] sm:$0xff]
    %v4771 = vld [vmem:[%s4620 + $0x10a] sm:$0xff]
    %v4772 = vld [vmem:[%s4620 + $0x112] sm:$0xff]
    %v4773 = vld [vmem:[%s4620 + $0x122] sm:$0xff]
    %v4774 = vld [vmem:[%s4620 + $0x12a] sm:$0xff]
    %v4775 = vld [vmem:[%s4620 + $0x13a] sm:$0xff]
    %v4776 = vld [vmem:[%s4620 + $0x142] sm:$0xff]
    %v4777 = vld [vmem:[%s4620 + $0x152] sm:$0xff]
    %v4778 = vld [vmem:[%s4620 + $0x15a] sm:$0xff]
    %v4779 = vld [vmem:[%s4620 + $0x16a] sm:$0xff]
    %v4780 = vld [vmem:[%s4620 + $0x172] sm:$0xff]
    %v4781 = vld [vmem:[%s4620 + $0x1b2] sm:$0xff]
    %v4782 = vld [vmem:[%s4620 + $0x1ba] sm:$0xff]
    %v4783 = vld [vmem:[%s4620 + $0x1ca] sm:$0xff]
    %v4784 = vld [vmem:[%s4620 + $0x1d2] sm:$0xff]
    %v4785 = vld [vmem:[%s4620 + $0x1e2] sm:$0xff]
    %v4786 = vld [vmem:[%s4620 + $0x1ea] sm:$0xff]
    %v4787 = vld [vmem:[%s4620 + $0x1fa] sm:$0xff]
    %v4788 = vld [vmem:[%s4620 + $0x202] sm:$0xff]
    %v4789 = vld [vmem:[%s4620 + $0x212] sm:$0xff]
    %v4790 = vld [vmem:[%s4620 + $0x21a] sm:$0xff]
    %v4791 = vld [vmem:[%s4620 + $0x22a] sm:$0xff]
    %v4792 = vld [vmem:[%s4620 + $0x232] sm:$0xff]
    %v4793 = vld [vmem:[%s4620 + $0x242] sm:$0xff]
    %v4794 = vld [vmem:[%s4620 + $0x24a] sm:$0xff]
    %v4795 = vld [vmem:[%s4620 + $0x25a] sm:$0xff]
    %v4796 = vld [vmem:[%s4620 + $0x262] sm:$0xff]
    %v4797 = vld [vmem:[%s4620 + $0x272] sm:$0xff]
    %v4798 = vld [vmem:[%s4620 + $0x27a] sm:$0xff]
    %v4799 = vld [vmem:[%s4620 + $0x28a] sm:$0xff]
    %v4800 = vld [vmem:[%s4620 + $0x292] sm:$0xff]
    %v4801 = vld [vmem:[%s4620 + $0x2a2] sm:$0xff]
    %v4802 = vld [vmem:[%s4620 + $0x2aa] sm:$0xff]
    %v4803 = vld [vmem:[%s4620 + $0x2ba] sm:$0xff]
    %v4804 = vld [vmem:[%s4620 + $0x2c2] sm:$0xff]
    %v4805 = vld [vmem:[%s4620 + $0x2d2] sm:$0xff]
    %v4806 = vld [vmem:[%s4620 + $0x2da] sm:$0xff]
    %v4807 = vld [vmem:[%s4620 + $0x2ea] sm:$0xff]
    %v4808 = vld [vmem:[%s4620 + $0x2f2] sm:$0xff]
    %v4809 = vld [vmem:[%s4620 + $0x302] sm:$0xff]
    %v4810 = vld [vmem:[%s4620 + $0x30a] sm:$0xff]
    %v4811 = vld [vmem:[%s4620 + $0x31a] sm:$0xff]
    %v4812 = vld [vmem:[%s4620 + $0x322] sm:$0xff]
    %4877 = vrot.lane.b32.xlu0 %v4300, 8
    %v4878 = vpop.permute.xlu0 %4877
    %4879 = vrot.lane.b32.xlu0 %v4301, 8
    %v4880 = vpop.permute.xlu0 %4879
    %4881 = vrot.lane.b32.xlu0 %v4302, 8
    %v4882 = vpop.permute.xlu0 %4881
    %4883 = vrot.lane.b32.xlu0 %v4303, 8
    %v4884 = vpop.permute.xlu0 %4883
    %4885 = vrot.lane.b32.xlu0 %v4304, 8
    %v4886 = vpop.permute.xlu0 %4885
    %4887 = vrot.lane.b32.xlu0 %v4305, 8
    %v4888 = vpop.permute.xlu0 %4887
    %4889 = vrot.lane.b32.xlu0 %v4306, 8
    %v4890 = vpop.permute.xlu0 %4889
    %4891 = vrot.lane.b32.xlu0 %v4307, 8
    %v4892 = vpop.permute.xlu0 %4891
    %4893 = vrot.lane.b32.xlu0 %v4308, 8
    %v4894 = vpop.permute.xlu0 %4893
    %4895 = vrot.lane.b32.xlu0 %v4309, 8
    %v4896 = vpop.permute.xlu0 %4895
    %4897 = vrot.lane.b32.xlu0 %v4310, 8
    %v4898 = vpop.permute.xlu0 %4897
    %4899 = vrot.lane.b32.xlu0 %v4311, 8
    %v4900 = vpop.permute.xlu0 %4899
    %4901 = vrot.lane.b32.xlu0 %v4312, 8
    %v4902 = vpop.permute.xlu0 %4901
    %4903 = vrot.lane.b32.xlu0 %v4313, 8
    %v4904 = vpop.permute.xlu0 %4903
    %4905 = vrot.lane.b32.xlu0 %v4314, 8
    %v4906 = vpop.permute.xlu0 %4905
    %4907 = vrot.lane.b32.xlu0 %v4315, 8
    %v4908 = vpop.permute.xlu0 %4907
    %4909 = vrot.lane.b32.xlu0 %v4316, 8
    %v4910 = vpop.permute.xlu0 %4909
    %4911 = vrot.lane.b32.xlu0 %v4317, 8
    %v4912 = vpop.permute.xlu0 %4911
    %4913 = vrot.lane.b32.xlu0 %v4318, 8
    %v4914 = vpop.permute.xlu0 %4913
    %4915 = vrot.lane.b32.xlu0 %v4319, 8
    %v4916 = vpop.permute.xlu0 %4915
    %4917 = vrot.lane.b32.xlu0 %v4320, 8
    %v4918 = vpop.permute.xlu0 %4917
    %4919 = vrot.lane.b32.xlu0 %v4321, 8
    %v4920 = vpop.permute.xlu0 %4919
    %4921 = vrot.lane.b32.xlu0 %v4322, 8
    %v4922 = vpop.permute.xlu0 %4921
    %4923 = vrot.lane.b32.xlu0 %v4323, 8
    %v4924 = vpop.permute.xlu0 %4923
    %4925 = vrot.lane.b32.xlu0 %v4324, 8
    %v4926 = vpop.permute.xlu0 %4925
    %4927 = vrot.lane.b32.xlu0 %v4325, 8
    %v4928 = vpop.permute.xlu0 %4927
    %4929 = vrot.lane.b32.xlu0 %v4326, 8
    %v4930 = vpop.permute.xlu0 %4929
    %4931 = vrot.lane.b32.xlu0 %v4327, 8
    %v4932 = vpop.permute.xlu0 %4931
    %4933 = vrot.lane.b32.xlu0 %v4328, 8
    %v4934 = vpop.permute.xlu0 %4933
    %4935 = vrot.lane.b32.xlu0 %v4329, 8
    %v4936 = vpop.permute.xlu0 %4935
    %4937 = vrot.lane.b32.xlu0 %v4330, 8
    %v4938 = vpop.permute.xlu0 %4937
    %4939 = vrot.lane.b32.xlu0 %v4331, 8
    %v4940 = vpop.permute.xlu0 %4939
    %4941 = vrot.lane.b32.xlu0 %v4332, 8
    %v4942 = vpop.permute.xlu0 %4941
    %4943 = vrot.lane.b32.xlu0 %v4333, 8
    %v4944 = vpop.permute.xlu0 %4943
    %4945 = vrot.lane.b32.xlu0 %v4334, 8
    %v4946 = vpop.permute.xlu0 %4945
    %4947 = vrot.lane.b32.xlu0 %v4335, 8
    %v4948 = vpop.permute.xlu0 %4947
    %4949 = vrot.lane.b32.xlu0 %v4336, 8
    %v4950 = vpop.permute.xlu0 %4949
    %4951 = vrot.lane.b32.xlu0 %v4337, 8
    %v4952 = vpop.permute.xlu0 %4951
    %4953 = vrot.lane.b32.xlu0 %v4338, 8
    %v4954 = vpop.permute.xlu0 %4953
    %4955 = vrot.lane.b32.xlu0 %v4339, 8
    %v4956 = vpop.permute.xlu0 %4955
    %4957 = vrot.lane.b32.xlu0 %v4340, 8
    %v4958 = vpop.permute.xlu0 %4957
    %4959 = vrot.lane.b32.xlu0 %v4341, 8
    %v4960 = vpop.permute.xlu0 %4959
    %4961 = vrot.lane.b32.xlu0 %v4342, 8
    %v4962 = vpop.permute.xlu0 %4961
    %4963 = vrot.lane.b32.xlu0 %v4343, 8
    %v4964 = vpop.permute.xlu0 %4963
    %4965 = vrot.lane.b32.xlu0 %v4344, 8
    %v4966 = vpop.permute.xlu0 %4965
    %4967 = vrot.lane.b32.xlu0 %v4345, 8
    %v4968 = vpop.permute.xlu0 %4967
    %4969 = vrot.lane.b32.xlu0 %v4346, 8
    %v4970 = vpop.permute.xlu0 %4969
    %4971 = vrot.lane.b32.xlu0 %v4347, 8
    %v4972 = vpop.permute.xlu0 %4971
    %4973 = vrot.lane.b32.xlu0 %v4348, 8
    %v4974 = vpop.permute.xlu0 %4973
    %4975 = vrot.lane.b32.xlu0 %v4349, 8
    %v4976 = vpop.permute.xlu0 %4975
    %4977 = vrot.lane.b32.xlu0 %v4350, 8
    %v4978 = vpop.permute.xlu0 %4977
    %4979 = vrot.lane.b32.xlu0 %v4351, 8
    %v4980 = vpop.permute.xlu0 %4979
    %4981 = vrot.lane.b32.xlu0 %v4352, 8
    %v4982 = vpop.permute.xlu0 %4981
    %4983 = vrot.lane.b32.xlu0 %v4353, 8
    %v4984 = vpop.permute.xlu0 %4983
    %4985 = vrot.lane.b32.xlu0 %v4354, 8
    %v4986 = vpop.permute.xlu0 %4985
    %4987 = vrot.lane.b32.xlu0 %v4355, 8
    %v4988 = vpop.permute.xlu0 %4987
    %4989 = vrot.lane.b32.xlu0 %v4356, 8
    %v4990 = vpop.permute.xlu0 %4989
    %4991 = vrot.lane.b32.xlu0 %v4357, 8
    %v4992 = vpop.permute.xlu0 %4991
    %4993 = vrot.lane.b32.xlu0 %v4358, 8
    %v4994 = vpop.permute.xlu0 %4993
    %4995 = vrot.lane.b32.xlu0 %v4359, 8
    %v4996 = vpop.permute.xlu0 %4995
    %4997 = vrot.lane.b32.xlu0 %v4360, 8
    %v4998 = vpop.permute.xlu0 %4997
    %4999 = vrot.lane.b32.xlu0 %v4361, 8
    %v5000 = vpop.permute.xlu0 %4999
    %5001 = vrot.lane.b32.xlu0 %v4362, 8
    %v5002 = vpop.permute.xlu0 %5001
    %5003 = vrot.lane.b32.xlu0 %v4363, 8
    %v5004 = vpop.permute.xlu0 %5003
    %5133 = vrot.lane.b32.xlu0 %v4364, 16
    %v5134 = vpop.permute.xlu0 %5133
    %5135 = vrot.lane.b32.xlu0 %v4365, 16
    %v5136 = vpop.permute.xlu0 %5135
    %5137 = vrot.lane.b32.xlu0 %v4366, 16
    %v5138 = vpop.permute.xlu0 %5137
    %5139 = vrot.lane.b32.xlu0 %v4367, 16
    %v5140 = vpop.permute.xlu0 %5139
    %5141 = vrot.lane.b32.xlu0 %v4368, 16
    %v5142 = vpop.permute.xlu0 %5141
    %5143 = vrot.lane.b32.xlu0 %v4369, 16
    %v5144 = vpop.permute.xlu0 %5143
    %5145 = vrot.lane.b32.xlu0 %v4370, 16
    %v5146 = vpop.permute.xlu0 %5145
    %5147 = vrot.lane.b32.xlu0 %v4371, 16
    %v5148 = vpop.permute.xlu0 %5147
    %5149 = vrot.lane.b32.xlu0 %v4372, 16
    %v5150 = vpop.permute.xlu0 %5149
    %5151 = vrot.lane.b32.xlu0 %v4373, 16
    %v5152 = vpop.permute.xlu0 %5151
    %5153 = vrot.lane.b32.xlu0 %v4374, 16
    %v5154 = vpop.permute.xlu0 %5153
    %5155 = vrot.lane.b32.xlu0 %v4375, 16
    %v5156 = vpop.permute.xlu0 %5155
    %5157 = vrot.lane.b32.xlu0 %v4376, 16
    %v5158 = vpop.permute.xlu0 %5157
    %5159 = vrot.lane.b32.xlu0 %v4377, 16
    %v5160 = vpop.permute.xlu0 %5159
    %5161 = vrot.lane.b32.xlu0 %v4378, 16
    %v5162 = vpop.permute.xlu0 %5161
    %5163 = vrot.lane.b32.xlu0 %v4379, 16
    %v5164 = vpop.permute.xlu0 %5163
    %5165 = vrot.lane.b32.xlu0 %v4380, 16
    %v5166 = vpop.permute.xlu0 %5165
    %5167 = vrot.lane.b32.xlu0 %v4381, 16
    %v5168 = vpop.permute.xlu0 %5167
    %5169 = vrot.lane.b32.xlu0 %v4382, 16
    %v5170 = vpop.permute.xlu0 %5169
    %5171 = vrot.lane.b32.xlu0 %v4383, 16
    %v5172 = vpop.permute.xlu0 %5171
    %5173 = vrot.lane.b32.xlu0 %v4384, 16
    %v5174 = vpop.permute.xlu0 %5173
    %5175 = vrot.lane.b32.xlu0 %v4385, 16
    %v5176 = vpop.permute.xlu0 %5175
    %5177 = vrot.lane.b32.xlu0 %v4386, 16
    %v5178 = vpop.permute.xlu0 %5177
    %5179 = vrot.lane.b32.xlu0 %v4387, 16
    %v5180 = vpop.permute.xlu0 %5179
    %5181 = vrot.lane.b32.xlu0 %v4388, 16
    %v5182 = vpop.permute.xlu0 %5181
    %5183 = vrot.lane.b32.xlu0 %v4389, 16
    %v5184 = vpop.permute.xlu0 %5183
    %5185 = vrot.lane.b32.xlu0 %v4390, 16
    %v5186 = vpop.permute.xlu0 %5185
    %5187 = vrot.lane.b32.xlu0 %v4391, 16
    %v5188 = vpop.permute.xlu0 %5187
    %5189 = vrot.lane.b32.xlu0 %v4392, 16
    %v5190 = vpop.permute.xlu0 %5189
    %5191 = vrot.lane.b32.xlu0 %v4393, 16
    %v5192 = vpop.permute.xlu0 %5191
    %5193 = vrot.lane.b32.xlu0 %v4394, 16
    %v5194 = vpop.permute.xlu0 %5193
    %5195 = vrot.lane.b32.xlu0 %v4395, 16
    %v5196 = vpop.permute.xlu0 %5195
    %5197 = vrot.lane.b32.xlu0 %v4396, 16
    %v5198 = vpop.permute.xlu0 %5197
    %5199 = vrot.lane.b32.xlu0 %v4397, 16
    %v5200 = vpop.permute.xlu0 %5199
    %5201 = vrot.lane.b32.xlu0 %v4398, 16
    %v5202 = vpop.permute.xlu0 %5201
    %5203 = vrot.lane.b32.xlu0 %v4399, 16
    %v5204 = vpop.permute.xlu0 %5203
    %5205 = vrot.lane.b32.xlu0 %v4400, 16
    %v5206 = vpop.permute.xlu0 %5205
    %5207 = vrot.lane.b32.xlu0 %v4401, 16
    %v5208 = vpop.permute.xlu0 %5207
    %5209 = vrot.lane.b32.xlu0 %v4402, 16
    %v5210 = vpop.permute.xlu0 %5209
    %5211 = vrot.lane.b32.xlu0 %v4403, 16
    %v5212 = vpop.permute.xlu0 %5211
    %5213 = vrot.lane.b32.xlu0 %v4404, 16
    %v5214 = vpop.permute.xlu0 %5213
    %5215 = vrot.lane.b32.xlu0 %v4405, 16
    %v5216 = vpop.permute.xlu0 %5215
    %5217 = vrot.lane.b32.xlu0 %v4406, 16
    %v5218 = vpop.permute.xlu0 %5217
    %5219 = vrot.lane.b32.xlu0 %v4407, 16
    %v5220 = vpop.permute.xlu0 %5219
    %5221 = vrot.lane.b32.xlu0 %v4408, 16
    %v5222 = vpop.permute.xlu0 %5221
    %5223 = vrot.lane.b32.xlu0 %v4409, 16
    %v5224 = vpop.permute.xlu0 %5223
    %5225 = vrot.lane.b32.xlu0 %v4410, 16
    %v5226 = vpop.permute.xlu0 %5225
    %5227 = vrot.lane.b32.xlu0 %v4411, 16
    %v5228 = vpop.permute.xlu0 %5227
    %5229 = vrot.lane.b32.xlu0 %v4412, 16
    %v5230 = vpop.permute.xlu0 %5229
    %5231 = vrot.lane.b32.xlu0 %v4413, 16
    %v5232 = vpop.permute.xlu0 %5231
    %5233 = vrot.lane.b32.xlu0 %v4414, 16
    %v5234 = vpop.permute.xlu0 %5233
    %5235 = vrot.lane.b32.xlu0 %v4415, 16
    %v5236 = vpop.permute.xlu0 %5235
    %5237 = vrot.lane.b32.xlu0 %v4416, 16
    %v5238 = vpop.permute.xlu0 %5237
    %5239 = vrot.lane.b32.xlu0 %v4417, 16
    %v5240 = vpop.permute.xlu0 %5239
    %5241 = vrot.lane.b32.xlu0 %v4418, 16
    %v5242 = vpop.permute.xlu0 %5241
    %5243 = vrot.lane.b32.xlu0 %v4419, 16
    %v5244 = vpop.permute.xlu0 %5243
    %5245 = vrot.lane.b32.xlu0 %v4420, 16
    %v5246 = vpop.permute.xlu0 %5245
    %5247 = vrot.lane.b32.xlu0 %v4421, 16
    %v5248 = vpop.permute.xlu0 %5247
    %5249 = vrot.lane.b32.xlu0 %v4422, 16
    %v5250 = vpop.permute.xlu0 %5249
    %5251 = vrot.lane.b32.xlu0 %v4423, 16
    %v5252 = vpop.permute.xlu0 %5251
    %5253 = vrot.lane.b32.xlu0 %v4424, 16
    %v5254 = vpop.permute.xlu0 %5253
    %5255 = vrot.lane.b32.xlu0 %v4425, 16
    %v5256 = vpop.permute.xlu0 %5255
    %5257 = vrot.lane.b32.xlu0 %v4426, 16
    %v5258 = vpop.permute.xlu0 %5257
    %5259 = vrot.lane.b32.xlu0 %v4427, 16
    %v5260 = vpop.permute.xlu0 %5259
    %5389 = vrot.lane.b32.xlu0 %v4428, 24
    %v5390 = vpop.permute.xlu0 %5389
    %5391 = vrot.lane.b32.xlu0 %v4429, 24
    %v5392 = vpop.permute.xlu0 %5391
    %5393 = vrot.lane.b32.xlu0 %v4430, 24
    %v5394 = vpop.permute.xlu0 %5393
    %5395 = vrot.lane.b32.xlu0 %v4431, 24
    %v5396 = vpop.permute.xlu0 %5395
    %5397 = vrot.lane.b32.xlu0 %v4432, 24
    %v5398 = vpop.permute.xlu0 %5397
    %5399 = vrot.lane.b32.xlu0 %v4433, 24
    %v5400 = vpop.permute.xlu0 %5399
    %5401 = vrot.lane.b32.xlu0 %v4434, 24
    %v5402 = vpop.permute.xlu0 %5401
    %5403 = vrot.lane.b32.xlu0 %v4435, 24
    %v5404 = vpop.permute.xlu0 %5403
    %5405 = vrot.lane.b32.xlu0 %v4436, 24
    %v5406 = vpop.permute.xlu0 %5405
    %5407 = vrot.lane.b32.xlu0 %v4437, 24
    %v5408 = vpop.permute.xlu0 %5407
    %5409 = vrot.lane.b32.xlu0 %v4438, 24
    %v5410 = vpop.permute.xlu0 %5409
    %5411 = vrot.lane.b32.xlu0 %v4439, 24
    %v5412 = vpop.permute.xlu0 %5411
    %5413 = vrot.lane.b32.xlu0 %v4440, 24
    %v5414 = vpop.permute.xlu0 %5413
    %5415 = vrot.lane.b32.xlu0 %v4441, 24
    %v5416 = vpop.permute.xlu0 %5415
    %5417 = vrot.lane.b32.xlu0 %v4442, 24
    %v5418 = vpop.permute.xlu0 %5417
    %5419 = vrot.lane.b32.xlu0 %v4443, 24
    %v5420 = vpop.permute.xlu0 %5419
    %5421 = vrot.lane.b32.xlu0 %v4444, 24
    %v5422 = vpop.permute.xlu0 %5421
    %5423 = vrot.lane.b32.xlu0 %v4445, 24
    %v5424 = vpop.permute.xlu0 %5423
    %5425 = vrot.lane.b32.xlu0 %v4446, 24
    %v5426 = vpop.permute.xlu0 %5425
    %5427 = vrot.lane.b32.xlu0 %v4447, 24
    %v5428 = vpop.permute.xlu0 %5427
    %5429 = vrot.lane.b32.xlu0 %v4448, 24
    %v5430 = vpop.permute.xlu0 %5429
    %5431 = vrot.lane.b32.xlu0 %v4449, 24
    %v5432 = vpop.permute.xlu0 %5431
    %5433 = vrot.lane.b32.xlu0 %v4450, 24
    %v5434 = vpop.permute.xlu0 %5433
    %5435 = vrot.lane.b32.xlu0 %v4451, 24
    %v5436 = vpop.permute.xlu0 %5435
    %5437 = vrot.lane.b32.xlu0 %v4452, 24
    %v5438 = vpop.permute.xlu0 %5437
    %5439 = vrot.lane.b32.xlu0 %v4453, 24
    %v5440 = vpop.permute.xlu0 %5439
    %5441 = vrot.lane.b32.xlu0 %v4454, 24
    %v5442 = vpop.permute.xlu0 %5441
    %5443 = vrot.lane.b32.xlu0 %v4455, 24
    %v5444 = vpop.permute.xlu0 %5443
    %5445 = vrot.lane.b32.xlu0 %v4456, 24
    %v5446 = vpop.permute.xlu0 %5445
    %5447 = vrot.lane.b32.xlu0 %v4457, 24
    %v5448 = vpop.permute.xlu0 %5447
    %5449 = vrot.lane.b32.xlu0 %v4458, 24
    %v5450 = vpop.permute.xlu0 %5449
    %5451 = vrot.lane.b32.xlu0 %v4459, 24
    %v5452 = vpop.permute.xlu0 %5451
    %5453 = vrot.lane.b32.xlu0 %v4460, 24
    %v5454 = vpop.permute.xlu0 %5453
    %5455 = vrot.lane.b32.xlu0 %v4461, 24
    %v5456 = vpop.permute.xlu0 %5455
    %5457 = vrot.lane.b32.xlu0 %v4462, 24
    %v5458 = vpop.permute.xlu0 %5457
    %5459 = vrot.lane.b32.xlu0 %v4463, 24
    %v5460 = vpop.permute.xlu0 %5459
    %5461 = vrot.lane.b32.xlu0 %v4464, 24
    %v5462 = vpop.permute.xlu0 %5461
    %5463 = vrot.lane.b32.xlu0 %v4465, 24
    %v5464 = vpop.permute.xlu0 %5463
    %5465 = vrot.lane.b32.xlu0 %v4466, 24
    %v5466 = vpop.permute.xlu0 %5465
    %5467 = vrot.lane.b32.xlu0 %v4467, 24
    %v5468 = vpop.permute.xlu0 %5467
    %5469 = vrot.lane.b32.xlu0 %v4468, 24
    %v5470 = vpop.permute.xlu0 %5469
    %5471 = vrot.lane.b32.xlu0 %v4469, 24
    %v5472 = vpop.permute.xlu0 %5471
    %5473 = vrot.lane.b32.xlu0 %v4470, 24
    %v5474 = vpop.permute.xlu0 %5473
    %5475 = vrot.lane.b32.xlu0 %v4471, 24
    %v5476 = vpop.permute.xlu0 %5475
    %5477 = vrot.lane.b32.xlu0 %v4472, 24
    %v5478 = vpop.permute.xlu0 %5477
    %5479 = vrot.lane.b32.xlu0 %v4473, 24
    %v5480 = vpop.permute.xlu0 %5479
    %5481 = vrot.lane.b32.xlu0 %v4474, 24
    %v5482 = vpop.permute.xlu0 %5481
    %5483 = vrot.lane.b32.xlu0 %v4475, 24
    %v5484 = vpop.permute.xlu0 %5483
    %5485 = vrot.lane.b32.xlu0 %v4476, 24
    %v5486 = vpop.permute.xlu0 %5485
    %5487 = vrot.lane.b32.xlu0 %v4477, 24
    %v5488 = vpop.permute.xlu0 %5487
    %5489 = vrot.lane.b32.xlu0 %v4478, 24
    %v5490 = vpop.permute.xlu0 %5489
    %5491 = vrot.lane.b32.xlu0 %v4479, 24
    %v5492 = vpop.permute.xlu0 %5491
    %5493 = vrot.lane.b32.xlu0 %v4480, 24
    %v5494 = vpop.permute.xlu0 %5493
    %5495 = vrot.lane.b32.xlu0 %v4481, 24
    %v5496 = vpop.permute.xlu0 %5495
    %5497 = vrot.lane.b32.xlu0 %v4482, 24
    %v5498 = vpop.permute.xlu0 %5497
    %5499 = vrot.lane.b32.xlu0 %v4483, 24
    %v5500 = vpop.permute.xlu0 %5499
    %5501 = vrot.lane.b32.xlu0 %v4484, 24
    %v5502 = vpop.permute.xlu0 %5501
    %5503 = vrot.lane.b32.xlu0 %v4485, 24
    %v5504 = vpop.permute.xlu0 %5503
    %5505 = vrot.lane.b32.xlu0 %v4486, 24
    %v5506 = vpop.permute.xlu0 %5505
    %5507 = vrot.lane.b32.xlu0 %v4487, 24
    %v5508 = vpop.permute.xlu0 %5507
    %5509 = vrot.lane.b32.xlu0 %v4488, 24
    %v5510 = vpop.permute.xlu0 %5509
    %5511 = vrot.lane.b32.xlu0 %v4489, 24
    %v5512 = vpop.permute.xlu0 %5511
    %5513 = vrot.lane.b32.xlu0 %v4490, 24
    %v5514 = vpop.permute.xlu0 %5513
    %5515 = vrot.lane.b32.xlu0 %v4491, 24
    %v5516 = vpop.permute.xlu0 %5515
    %5645 = vrot.lane.b32.xlu0 %v4492, 32
    %v5646 = vpop.permute.xlu0 %5645
    %5647 = vrot.lane.b32.xlu0 %v4493, 32
    %v5648 = vpop.permute.xlu0 %5647
    %5649 = vrot.lane.b32.xlu0 %v4494, 32
    %v5650 = vpop.permute.xlu0 %5649
    %5651 = vrot.lane.b32.xlu0 %v4495, 32
    %v5652 = vpop.permute.xlu0 %5651
    %5653 = vrot.lane.b32.xlu0 %v4496, 32
    %v5654 = vpop.permute.xlu0 %5653
    %5655 = vrot.lane.b32.xlu0 %v4497, 32
    %v5656 = vpop.permute.xlu0 %5655
    %5657 = vrot.lane.b32.xlu0 %v4498, 32
    %v5658 = vpop.permute.xlu0 %5657
    %5659 = vrot.lane.b32.xlu0 %v4499, 32
    %v5660 = vpop.permute.xlu0 %5659
    %5661 = vrot.lane.b32.xlu0 %v4500, 32
    %v5662 = vpop.permute.xlu0 %5661
    %5663 = vrot.lane.b32.xlu0 %v4501, 32
    %v5664 = vpop.permute.xlu0 %5663
    %5665 = vrot.lane.b32.xlu0 %v4502, 32
    %v5666 = vpop.permute.xlu0 %5665
    %5667 = vrot.lane.b32.xlu0 %v4503, 32
    %v5668 = vpop.permute.xlu0 %5667
    %5669 = vrot.lane.b32.xlu0 %v4504, 32
    %v5670 = vpop.permute.xlu0 %5669
    %5671 = vrot.lane.b32.xlu0 %v4505, 32
    %v5672 = vpop.permute.xlu0 %5671
    %5673 = vrot.lane.b32.xlu0 %v4506, 32
    %v5674 = vpop.permute.xlu0 %5673
    %5675 = vrot.lane.b32.xlu0 %v4507, 32
    %v5676 = vpop.permute.xlu0 %5675
    %5677 = vrot.lane.b32.xlu0 %v4508, 32
    %v5678 = vpop.permute.xlu0 %5677
    %5679 = vrot.lane.b32.xlu0 %v4509, 32
    %v5680 = vpop.permute.xlu0 %5679
    %5681 = vrot.lane.b32.xlu0 %v4510, 32
    %v5682 = vpop.permute.xlu0 %5681
    %5683 = vrot.lane.b32.xlu0 %v4511, 32
    %v5684 = vpop.permute.xlu0 %5683
    %5685 = vrot.lane.b32.xlu0 %v4512, 32
    %v5686 = vpop.permute.xlu0 %5685
    %5687 = vrot.lane.b32.xlu0 %v4513, 32
    %v5688 = vpop.permute.xlu0 %5687
    %5689 = vrot.lane.b32.xlu0 %v4514, 32
    %v5690 = vpop.permute.xlu0 %5689
    %5691 = vrot.lane.b32.xlu0 %v4515, 32
    %v5692 = vpop.permute.xlu0 %5691
    %5693 = vrot.lane.b32.xlu0 %v4516, 32
    %v5694 = vpop.permute.xlu0 %5693
    %5695 = vrot.lane.b32.xlu0 %v4517, 32
    %v5696 = vpop.permute.xlu0 %5695
    %5697 = vrot.lane.b32.xlu0 %v4518, 32
    %v5698 = vpop.permute.xlu0 %5697
    %5699 = vrot.lane.b32.xlu0 %v4519, 32
    %v5700 = vpop.permute.xlu0 %5699
    %5701 = vrot.lane.b32.xlu0 %v4520, 32
    %v5702 = vpop.permute.xlu0 %5701
    %5703 = vrot.lane.b32.xlu0 %v4521, 32
    %v5704 = vpop.permute.xlu0 %5703
    %5705 = vrot.lane.b32.xlu0 %v4522, 32
    %v5706 = vpop.permute.xlu0 %5705
    %5707 = vrot.lane.b32.xlu0 %v4523, 32
    %v5708 = vpop.permute.xlu0 %5707
    %5709 = vrot.lane.b32.xlu0 %v4524, 32
    %v5710 = vpop.permute.xlu0 %5709
    %5711 = vrot.lane.b32.xlu0 %v4525, 32
    %v5712 = vpop.permute.xlu0 %5711
    %5713 = vrot.lane.b32.xlu0 %v4526, 32
    %v5714 = vpop.permute.xlu0 %5713
    %5715 = vrot.lane.b32.xlu0 %v4527, 32
    %v5716 = vpop.permute.xlu0 %5715
    %5717 = vrot.lane.b32.xlu0 %v4528, 32
    %v5718 = vpop.permute.xlu0 %5717
    %5719 = vrot.lane.b32.xlu0 %v4529, 32
    %v5720 = vpop.permute.xlu0 %5719
    %5721 = vrot.lane.b32.xlu0 %v4530, 32
    %v5722 = vpop.permute.xlu0 %5721
    %5723 = vrot.lane.b32.xlu0 %v4531, 32
    %v5724 = vpop.permute.xlu0 %5723
    %5725 = vrot.lane.b32.xlu0 %v4532, 32
    %v5726 = vpop.permute.xlu0 %5725
    %5727 = vrot.lane.b32.xlu0 %v4533, 32
    %v5728 = vpop.permute.xlu0 %5727
    %5729 = vrot.lane.b32.xlu0 %v4534, 32
    %v5730 = vpop.permute.xlu0 %5729
    %5731 = vrot.lane.b32.xlu0 %v4535, 32
    %v5732 = vpop.permute.xlu0 %5731
    %5733 = vrot.lane.b32.xlu0 %v4536, 32
    %v5734 = vpop.permute.xlu0 %5733
    %5735 = vrot.lane.b32.xlu0 %v4537, 32
    %v5736 = vpop.permute.xlu0 %5735
    %5737 = vrot.lane.b32.xlu0 %v4538, 32
    %v5738 = vpop.permute.xlu0 %5737
    %5739 = vrot.lane.b32.xlu0 %v4539, 32
    %v5740 = vpop.permute.xlu0 %5739
    %5741 = vrot.lane.b32.xlu0 %v4540, 32
    %v5742 = vpop.permute.xlu0 %5741
    %5743 = vrot.lane.b32.xlu0 %v4541, 32
    %v5744 = vpop.permute.xlu0 %5743
    %5745 = vrot.lane.b32.xlu0 %v4542, 32
    %v5746 = vpop.permute.xlu0 %5745
    %5747 = vrot.lane.b32.xlu0 %v4543, 32
    %v5748 = vpop.permute.xlu0 %5747
    %5749 = vrot.lane.b32.xlu0 %v4544, 32
    %v5750 = vpop.permute.xlu0 %5749
    %5751 = vrot.lane.b32.xlu0 %v4545, 32
    %v5752 = vpop.permute.xlu0 %5751
    %5753 = vrot.lane.b32.xlu0 %v4546, 32
    %v5754 = vpop.permute.xlu0 %5753
    %5755 = vrot.lane.b32.xlu0 %v4547, 32
    %v5756 = vpop.permute.xlu0 %5755
    %5757 = vrot.lane.b32.xlu0 %v4548, 32
    %v5758 = vpop.permute.xlu0 %5757
    %5759 = vrot.lane.b32.xlu0 %v4549, 32
    %v5760 = vpop.permute.xlu0 %5759
    %5761 = vrot.lane.b32.xlu0 %v4550, 32
    %v5762 = vpop.permute.xlu0 %5761
    %5763 = vrot.lane.b32.xlu0 %v4551, 32
    %v5764 = vpop.permute.xlu0 %5763
    %5765 = vrot.lane.b32.xlu0 %v4552, 32
    %v5766 = vpop.permute.xlu0 %5765
    %5767 = vrot.lane.b32.xlu0 %v4553, 32
    %v5768 = vpop.permute.xlu0 %5767
    %5769 = vrot.lane.b32.xlu0 %v4554, 32
    %v5770 = vpop.permute.xlu0 %5769
    %5771 = vrot.lane.b32.xlu0 %v4555, 32
    %v5772 = vpop.permute.xlu0 %5771
    %5901 = vrot.lane.b32.xlu0 %v4556, 40
    %v5902 = vpop.permute.xlu0 %5901
    %5903 = vrot.lane.b32.xlu0 %v4557, 40
    %v5904 = vpop.permute.xlu0 %5903
    %5905 = vrot.lane.b32.xlu0 %v4558, 40
    %v5906 = vpop.permute.xlu0 %5905
    %5907 = vrot.lane.b32.xlu0 %v4559, 40
    %v5908 = vpop.permute.xlu0 %5907
    %5909 = vrot.lane.b32.xlu0 %v4560, 40
    %v5910 = vpop.permute.xlu0 %5909
    %5911 = vrot.lane.b32.xlu0 %v4561, 40
    %v5912 = vpop.permute.xlu0 %5911
    %5913 = vrot.lane.b32.xlu0 %v4562, 40
    %v5914 = vpop.permute.xlu0 %5913
    %5915 = vrot.lane.b32.xlu0 %v4563, 40
    %v5916 = vpop.permute.xlu0 %5915
    %5917 = vrot.lane.b32.xlu0 %v4564, 40
    %v5918 = vpop.permute.xlu0 %5917
    %5919 = vrot.lane.b32.xlu0 %v4565, 40
    %v5920 = vpop.permute.xlu0 %5919
    %5921 = vrot.lane.b32.xlu0 %v4566, 40
    %v5922 = vpop.permute.xlu0 %5921
    %5923 = vrot.lane.b32.xlu0 %v4567, 40
    %v5924 = vpop.permute.xlu0 %5923
    %5925 = vrot.lane.b32.xlu0 %v4568, 40
    %v5926 = vpop.permute.xlu0 %5925
    %5927 = vrot.lane.b32.xlu0 %v4569, 40
    %v5928 = vpop.permute.xlu0 %5927
    %5929 = vrot.lane.b32.xlu0 %v4570, 40
    %v5930 = vpop.permute.xlu0 %5929
    %5931 = vrot.lane.b32.xlu0 %v4571, 40
    %v5932 = vpop.permute.xlu0 %5931
    %5933 = vrot.lane.b32.xlu0 %v4572, 40
    %v5934 = vpop.permute.xlu0 %5933
    %5935 = vrot.lane.b32.xlu0 %v4573, 40
    %v5936 = vpop.permute.xlu0 %5935
    %5937 = vrot.lane.b32.xlu0 %v4574, 40
    %v5938 = vpop.permute.xlu0 %5937
    %5939 = vrot.lane.b32.xlu0 %v4575, 40
    %v5940 = vpop.permute.xlu0 %5939
    %5941 = vrot.lane.b32.xlu0 %v4576, 40
    %v5942 = vpop.permute.xlu0 %5941
    %5943 = vrot.lane.b32.xlu0 %v4577, 40
    %v5944 = vpop.permute.xlu0 %5943
    %5945 = vrot.lane.b32.xlu0 %v4578, 40
    %v5946 = vpop.permute.xlu0 %5945
    %5947 = vrot.lane.b32.xlu0 %v4579, 40
    %v5948 = vpop.permute.xlu0 %5947
    %5949 = vrot.lane.b32.xlu0 %v4580, 40
    %v5950 = vpop.permute.xlu0 %5949
    %5951 = vrot.lane.b32.xlu0 %v4581, 40
    %v5952 = vpop.permute.xlu0 %5951
    %5953 = vrot.lane.b32.xlu0 %v4582, 40
    %v5954 = vpop.permute.xlu0 %5953
    %5955 = vrot.lane.b32.xlu0 %v4583, 40
    %v5956 = vpop.permute.xlu0 %5955
    %5957 = vrot.lane.b32.xlu0 %v4584, 40
    %v5958 = vpop.permute.xlu0 %5957
    %5959 = vrot.lane.b32.xlu0 %v4585, 40
    %v5960 = vpop.permute.xlu0 %5959
    %5961 = vrot.lane.b32.xlu0 %v4586, 40
    %v5962 = vpop.permute.xlu0 %5961
    %5963 = vrot.lane.b32.xlu0 %v4587, 40
    %v5964 = vpop.permute.xlu0 %5963
    %5965 = vrot.lane.b32.xlu0 %v4588, 40
    %v5966 = vpop.permute.xlu0 %5965
    %5967 = vrot.lane.b32.xlu0 %v4589, 40
    %v5968 = vpop.permute.xlu0 %5967
    %5969 = vrot.lane.b32.xlu0 %v4590, 40
    %v5970 = vpop.permute.xlu0 %5969
    %5971 = vrot.lane.b32.xlu0 %v4591, 40
    %v5972 = vpop.permute.xlu0 %5971
    %5973 = vrot.lane.b32.xlu0 %v4592, 40
    %v5974 = vpop.permute.xlu0 %5973
    %5975 = vrot.lane.b32.xlu0 %v4593, 40
    %v5976 = vpop.permute.xlu0 %5975
    %5977 = vrot.lane.b32.xlu0 %v4594, 40
    %v5978 = vpop.permute.xlu0 %5977
    %5979 = vrot.lane.b32.xlu0 %v4595, 40
    %v5980 = vpop.permute.xlu0 %5979
    %5981 = vrot.lane.b32.xlu0 %v4596, 40
    %v5982 = vpop.permute.xlu0 %5981
    %5983 = vrot.lane.b32.xlu0 %v4597, 40
    %v5984 = vpop.permute.xlu0 %5983
    %5985 = vrot.lane.b32.xlu0 %v4598, 40
    %v5986 = vpop.permute.xlu0 %5985
    %5987 = vrot.lane.b32.xlu0 %v4599, 40
    %v5988 = vpop.permute.xlu0 %5987
    %5989 = vrot.lane.b32.xlu0 %v4600, 40
    %v5990 = vpop.permute.xlu0 %5989
    %5991 = vrot.lane.b32.xlu0 %v4601, 40
    %v5992 = vpop.permute.xlu0 %5991
    %5993 = vrot.lane.b32.xlu0 %v4602, 40
    %v5994 = vpop.permute.xlu0 %5993
    %5995 = vrot.lane.b32.xlu0 %v4603, 40
    %v5996 = vpop.permute.xlu0 %5995
    %5997 = vrot.lane.b32.xlu0 %v4604, 40
    %v5998 = vpop.permute.xlu0 %5997
    %5999 = vrot.lane.b32.xlu0 %v4605, 40
    %v6000 = vpop.permute.xlu0 %5999
    %6001 = vrot.lane.b32.xlu0 %v4606, 40
    %v6002 = vpop.permute.xlu0 %6001
    %6003 = vrot.lane.b32.xlu0 %v4607, 40
    %v6004 = vpop.permute.xlu0 %6003
    %6005 = vrot.lane.b32.xlu0 %v4608, 40
    %v6006 = vpop.permute.xlu0 %6005
    %6007 = vrot.lane.b32.xlu0 %v4609, 40
    %v6008 = vpop.permute.xlu0 %6007
    %6009 = vrot.lane.b32.xlu0 %v4610, 40
    %v6010 = vpop.permute.xlu0 %6009
    %6011 = vrot.lane.b32.xlu0 %v4611, 40
    %v6012 = vpop.permute.xlu0 %6011
    %6013 = vrot.lane.b32.xlu0 %v4612, 40
    %v6014 = vpop.permute.xlu0 %6013
    %6015 = vrot.lane.b32.xlu0 %v4613, 40
    %v6016 = vpop.permute.xlu0 %6015
    %6017 = vrot.lane.b32.xlu0 %v4614, 40
    %v6018 = vpop.permute.xlu0 %6017
    %6019 = vrot.lane.b32.xlu0 %v4615, 40
    %v6020 = vpop.permute.xlu0 %6019
    %6021 = vrot.lane.b32.xlu0 %v4616, 40
    %v6022 = vpop.permute.xlu0 %6021
    %6023 = vrot.lane.b32.xlu0 %v4617, 40
    %v6024 = vpop.permute.xlu0 %6023
    %6025 = vrot.lane.b32.xlu0 %v4618, 40
    %v6026 = vpop.permute.xlu0 %6025
    %6027 = vrot.lane.b32.xlu0 %v4619, 40
    %v6028 = vpop.permute.xlu0 %6027
    %6157 = vrot.lane.b32.xlu0 %v4621, 48
    %v6158 = vpop.permute.xlu0 %6157
    %6159 = vrot.lane.b32.xlu0 %v4622, 48
    %v6160 = vpop.permute.xlu0 %6159
    %6161 = vrot.lane.b32.xlu0 %v4623, 48
    %v6162 = vpop.permute.xlu0 %6161
    %6163 = vrot.lane.b32.xlu0 %v4624, 48
    %v6164 = vpop.permute.xlu0 %6163
    %6165 = vrot.lane.b32.xlu0 %v4625, 48
    %v6166 = vpop.permute.xlu0 %6165
    %6167 = vrot.lane.b32.xlu0 %v4626, 48
    %v6168 = vpop.permute.xlu0 %6167
    %6169 = vrot.lane.b32.xlu0 %v4627, 48
    %v6170 = vpop.permute.xlu0 %6169
    %6171 = vrot.lane.b32.xlu0 %v4628, 48
    %v6172 = vpop.permute.xlu0 %6171
    %6173 = vrot.lane.b32.xlu0 %v4629, 48
    %v6174 = vpop.permute.xlu0 %6173
    %6175 = vrot.lane.b32.xlu0 %v4630, 48
    %v6176 = vpop.permute.xlu0 %6175
    %6177 = vrot.lane.b32.xlu0 %v4631, 48
    %v6178 = vpop.permute.xlu0 %6177
    %6179 = vrot.lane.b32.xlu0 %v4632, 48
    %v6180 = vpop.permute.xlu0 %6179
    %6181 = vrot.lane.b32.xlu0 %v4633, 48
    %v6182 = vpop.permute.xlu0 %6181
    %6183 = vrot.lane.b32.xlu0 %v4634, 48
    %v6184 = vpop.permute.xlu0 %6183
    %6185 = vrot.lane.b32.xlu0 %v4635, 48
    %v6186 = vpop.permute.xlu0 %6185
    %6187 = vrot.lane.b32.xlu0 %v4636, 48
    %v6188 = vpop.permute.xlu0 %6187
    %6189 = vrot.lane.b32.xlu0 %v4637, 48
    %v6190 = vpop.permute.xlu0 %6189
    %6191 = vrot.lane.b32.xlu0 %v4638, 48
    %v6192 = vpop.permute.xlu0 %6191
    %6193 = vrot.lane.b32.xlu0 %v4639, 48
    %v6194 = vpop.permute.xlu0 %6193
    %6195 = vrot.lane.b32.xlu0 %v4640, 48
    %v6196 = vpop.permute.xlu0 %6195
    %6197 = vrot.lane.b32.xlu0 %v4641, 48
    %v6198 = vpop.permute.xlu0 %6197
    %6199 = vrot.lane.b32.xlu0 %v4642, 48
    %v6200 = vpop.permute.xlu0 %6199
    %6201 = vrot.lane.b32.xlu0 %v4643, 48
    %v6202 = vpop.permute.xlu0 %6201
    %6203 = vrot.lane.b32.xlu0 %v4644, 48
    %v6204 = vpop.permute.xlu0 %6203
    %6205 = vrot.lane.b32.xlu0 %v4645, 48
    %v6206 = vpop.permute.xlu0 %6205
    %6207 = vrot.lane.b32.xlu0 %v4646, 48
    %v6208 = vpop.permute.xlu0 %6207
    %6209 = vrot.lane.b32.xlu0 %v4647, 48
    %v6210 = vpop.permute.xlu0 %6209
    %6211 = vrot.lane.b32.xlu0 %v4648, 48
    %v6212 = vpop.permute.xlu0 %6211
    %6213 = vrot.lane.b32.xlu0 %v4649, 48
    %v6214 = vpop.permute.xlu0 %6213
    %6215 = vrot.lane.b32.xlu0 %v4650, 48
    %v6216 = vpop.permute.xlu0 %6215
    %6217 = vrot.lane.b32.xlu0 %v4651, 48
    %v6218 = vpop.permute.xlu0 %6217
    %6219 = vrot.lane.b32.xlu0 %v4652, 48
    %v6220 = vpop.permute.xlu0 %6219
    %6221 = vrot.lane.b32.xlu0 %v4653, 48
    %v6222 = vpop.permute.xlu0 %6221
    %6223 = vrot.lane.b32.xlu0 %v4654, 48
    %v6224 = vpop.permute.xlu0 %6223
    %6225 = vrot.lane.b32.xlu0 %v4655, 48
    %v6226 = vpop.permute.xlu0 %6225
    %6227 = vrot.lane.b32.xlu0 %v4656, 48
    %v6228 = vpop.permute.xlu0 %6227
    %6229 = vrot.lane.b32.xlu0 %v4657, 48
    %v6230 = vpop.permute.xlu0 %6229
    %6231 = vrot.lane.b32.xlu0 %v4658, 48
    %v6232 = vpop.permute.xlu0 %6231
    %6233 = vrot.lane.b32.xlu0 %v4659, 48
    %v6234 = vpop.permute.xlu0 %6233
    %6235 = vrot.lane.b32.xlu0 %v4660, 48
    %v6236 = vpop.permute.xlu0 %6235
    %6237 = vrot.lane.b32.xlu0 %v4661, 48
    %v6238 = vpop.permute.xlu0 %6237
    %6239 = vrot.lane.b32.xlu0 %v4662, 48
    %v6240 = vpop.permute.xlu0 %6239
    %6241 = vrot.lane.b32.xlu0 %v4663, 48
    %v6242 = vpop.permute.xlu0 %6241
    %6243 = vrot.lane.b32.xlu0 %v4664, 48
    %v6244 = vpop.permute.xlu0 %6243
    %6245 = vrot.lane.b32.xlu0 %v4665, 48
    %v6246 = vpop.permute.xlu0 %6245
    %6247 = vrot.lane.b32.xlu0 %v4666, 48
    %v6248 = vpop.permute.xlu0 %6247
    %6249 = vrot.lane.b32.xlu0 %v4667, 48
    %v6250 = vpop.permute.xlu0 %6249
    %6251 = vrot.lane.b32.xlu0 %v4668, 48
    %v6252 = vpop.permute.xlu0 %6251
    %6253 = vrot.lane.b32.xlu0 %v4669, 48
    %v6254 = vpop.permute.xlu0 %6253
    %6255 = vrot.lane.b32.xlu0 %v4670, 48
    %v6256 = vpop.permute.xlu0 %6255
    %6257 = vrot.lane.b32.xlu0 %v4671, 48
    %v6258 = vpop.permute.xlu0 %6257
    %6259 = vrot.lane.b32.xlu0 %v4672, 48
    %v6260 = vpop.permute.xlu0 %6259
    %6261 = vrot.lane.b32.xlu0 %v4673, 48
    %v6262 = vpop.permute.xlu0 %6261
    %6263 = vrot.lane.b32.xlu0 %v4674, 48
    %v6264 = vpop.permute.xlu0 %6263
    %6265 = vrot.lane.b32.xlu0 %v4675, 48
    %v6266 = vpop.permute.xlu0 %6265
    %6267 = vrot.lane.b32.xlu0 %v4676, 48
    %v6268 = vpop.permute.xlu0 %6267
    %6269 = vrot.lane.b32.xlu0 %v4677, 48
    %v6270 = vpop.permute.xlu0 %6269
    %6271 = vrot.lane.b32.xlu0 %v4678, 48
    %v6272 = vpop.permute.xlu0 %6271
    %6273 = vrot.lane.b32.xlu0 %v4679, 48
    %v6274 = vpop.permute.xlu0 %6273
    %6275 = vrot.lane.b32.xlu0 %v4680, 48
    %v6276 = vpop.permute.xlu0 %6275
    %6277 = vrot.lane.b32.xlu0 %v4681, 48
    %v6278 = vpop.permute.xlu0 %6277
    %6279 = vrot.lane.b32.xlu0 %v4682, 48
    %v6280 = vpop.permute.xlu0 %6279
    %6281 = vrot.lane.b32.xlu0 %v4683, 48
    %v6282 = vpop.permute.xlu0 %6281
    %6283 = vrot.lane.b32.xlu0 %v4684, 48
    %v6284 = vpop.permute.xlu0 %6283
    %6413 = vrot.lane.b32.xlu0 %v4685, 56
    %v6414 = vpop.permute.xlu0 %6413
    %6415 = vrot.lane.b32.xlu0 %v4686, 56
    %v6416 = vpop.permute.xlu0 %6415
    %6417 = vrot.lane.b32.xlu0 %v4687, 56
    %v6418 = vpop.permute.xlu0 %6417
    %6419 = vrot.lane.b32.xlu0 %v4688, 56
    %v6420 = vpop.permute.xlu0 %6419
    %6421 = vrot.lane.b32.xlu0 %v4689, 56
    %v6422 = vpop.permute.xlu0 %6421
    %6423 = vrot.lane.b32.xlu0 %v4690, 56
    %v6424 = vpop.permute.xlu0 %6423
    %6425 = vrot.lane.b32.xlu0 %v4691, 56
    %v6426 = vpop.permute.xlu0 %6425
    %6427 = vrot.lane.b32.xlu0 %v4692, 56
    %v6428 = vpop.permute.xlu0 %6427
    %6429 = vrot.lane.b32.xlu0 %v4693, 56
    %v6430 = vpop.permute.xlu0 %6429
    %6431 = vrot.lane.b32.xlu0 %v4694, 56
    %v6432 = vpop.permute.xlu0 %6431
    %6433 = vrot.lane.b32.xlu0 %v4695, 56
    %v6434 = vpop.permute.xlu0 %6433
    %6435 = vrot.lane.b32.xlu0 %v4696, 56
    %v6436 = vpop.permute.xlu0 %6435
    %6437 = vrot.lane.b32.xlu0 %v4697, 56
    %v6438 = vpop.permute.xlu0 %6437
    %6439 = vrot.lane.b32.xlu0 %v4698, 56
    %v6440 = vpop.permute.xlu0 %6439
    %6441 = vrot.lane.b32.xlu0 %v4699, 56
    %v6442 = vpop.permute.xlu0 %6441
    %6443 = vrot.lane.b32.xlu0 %v4700, 56
    %v6444 = vpop.permute.xlu0 %6443
    %6445 = vrot.lane.b32.xlu0 %v4701, 56
    %v6446 = vpop.permute.xlu0 %6445
    %6447 = vrot.lane.b32.xlu0 %v4702, 56
    %v6448 = vpop.permute.xlu0 %6447
    %6449 = vrot.lane.b32.xlu0 %v4703, 56
    %v6450 = vpop.permute.xlu0 %6449
    %6451 = vrot.lane.b32.xlu0 %v4704, 56
    %v6452 = vpop.permute.xlu0 %6451
    %6453 = vrot.lane.b32.xlu0 %v4705, 56
    %v6454 = vpop.permute.xlu0 %6453
    %6455 = vrot.lane.b32.xlu0 %v4706, 56
    %v6456 = vpop.permute.xlu0 %6455
    %6457 = vrot.lane.b32.xlu0 %v4707, 56
    %v6458 = vpop.permute.xlu0 %6457
    %6459 = vrot.lane.b32.xlu0 %v4708, 56
    %v6460 = vpop.permute.xlu0 %6459
    %6461 = vrot.lane.b32.xlu0 %v4709, 56
    %v6462 = vpop.permute.xlu0 %6461
    %6463 = vrot.lane.b32.xlu0 %v4710, 56
    %v6464 = vpop.permute.xlu0 %6463
    %6465 = vrot.lane.b32.xlu0 %v4711, 56
    %v6466 = vpop.permute.xlu0 %6465
    %6467 = vrot.lane.b32.xlu0 %v4712, 56
    %v6468 = vpop.permute.xlu0 %6467
    %6469 = vrot.lane.b32.xlu0 %v4713, 56
    %v6470 = vpop.permute.xlu0 %6469
    %6471 = vrot.lane.b32.xlu0 %v4714, 56
    %v6472 = vpop.permute.xlu0 %6471
    %6473 = vrot.lane.b32.xlu0 %v4715, 56
    %v6474 = vpop.permute.xlu0 %6473
    %6475 = vrot.lane.b32.xlu0 %v4716, 56
    %v6476 = vpop.permute.xlu0 %6475
    %6477 = vrot.lane.b32.xlu0 %v4717, 56
    %v6478 = vpop.permute.xlu0 %6477
    %6479 = vrot.lane.b32.xlu0 %v4718, 56
    %v6480 = vpop.permute.xlu0 %6479
    %6481 = vrot.lane.b32.xlu0 %v4719, 56
    %v6482 = vpop.permute.xlu0 %6481
    %6483 = vrot.lane.b32.xlu0 %v4720, 56
    %v6484 = vpop.permute.xlu0 %6483
    %6485 = vrot.lane.b32.xlu0 %v4721, 56
    %v6486 = vpop.permute.xlu0 %6485
    %6487 = vrot.lane.b32.xlu0 %v4722, 56
    %v6488 = vpop.permute.xlu0 %6487
    %6489 = vrot.lane.b32.xlu0 %v4723, 56
    %v6490 = vpop.permute.xlu0 %6489
    %6491 = vrot.lane.b32.xlu0 %v4724, 56
    %v6492 = vpop.permute.xlu0 %6491
    %6493 = vrot.lane.b32.xlu0 %v4725, 56
    %v6494 = vpop.permute.xlu0 %6493
    %6495 = vrot.lane.b32.xlu0 %v4726, 56
    %v6496 = vpop.permute.xlu0 %6495
    %6497 = vrot.lane.b32.xlu0 %v4727, 56
    %v6498 = vpop.permute.xlu0 %6497
    %6499 = vrot.lane.b32.xlu0 %v4728, 56
    %v6500 = vpop.permute.xlu0 %6499
    %6501 = vrot.lane.b32.xlu0 %v4729, 56
    %v6502 = vpop.permute.xlu0 %6501
    %6503 = vrot.lane.b32.xlu0 %v4730, 56
    %v6504 = vpop.permute.xlu0 %6503
    %6505 = vrot.lane.b32.xlu0 %v4731, 56
    %v6506 = vpop.permute.xlu0 %6505
    %6507 = vrot.lane.b32.xlu0 %v4732, 56
    %v6508 = vpop.permute.xlu0 %6507
    %6509 = vrot.lane.b32.xlu0 %v4733, 56
    %v6510 = vpop.permute.xlu0 %6509
    %6511 = vrot.lane.b32.xlu0 %v4734, 56
    %v6512 = vpop.permute.xlu0 %6511
    %6513 = vrot.lane.b32.xlu0 %v4735, 56
    %v6514 = vpop.permute.xlu0 %6513
    %6515 = vrot.lane.b32.xlu0 %v4736, 56
    %v6516 = vpop.permute.xlu0 %6515
    %6517 = vrot.lane.b32.xlu0 %v4737, 56
    %v6518 = vpop.permute.xlu0 %6517
    %6519 = vrot.lane.b32.xlu0 %v4738, 56
    %v6520 = vpop.permute.xlu0 %6519
    %6521 = vrot.lane.b32.xlu0 %v4739, 56
    %v6522 = vpop.permute.xlu0 %6521
    %6523 = vrot.lane.b32.xlu0 %v4740, 56
    %v6524 = vpop.permute.xlu0 %6523
    %6525 = vrot.lane.b32.xlu0 %v4741, 56
    %v6526 = vpop.permute.xlu0 %6525
    %6527 = vrot.lane.b32.xlu0 %v4742, 56
    %v6528 = vpop.permute.xlu0 %6527
    %6529 = vrot.lane.b32.xlu0 %v4743, 56
    %v6530 = vpop.permute.xlu0 %6529
    %6531 = vrot.lane.b32.xlu0 %v4744, 56
    %v6532 = vpop.permute.xlu0 %6531
    %6533 = vrot.lane.b32.xlu0 %v4745, 56
    %v6534 = vpop.permute.xlu0 %6533
    %6535 = vrot.lane.b32.xlu0 %v4746, 56
    %v6536 = vpop.permute.xlu0 %6535
    %6537 = vrot.lane.b32.xlu0 %v4747, 56
    %v6538 = vpop.permute.xlu0 %6537
    %6539 = vrot.lane.b32.xlu0 %v4748, 56
    %v6540 = vpop.permute.xlu0 %6539
    %6669 = vrot.lane.b32.xlu0 %v4749, 64
    %v6670 = vpop.permute.xlu0 %6669
    %6671 = vrot.lane.b32.xlu0 %v4750, 64
    %v6672 = vpop.permute.xlu0 %6671
    %6673 = vrot.lane.b32.xlu0 %v4751, 64
    %v6674 = vpop.permute.xlu0 %6673
    %6675 = vrot.lane.b32.xlu0 %v4752, 64
    %v6676 = vpop.permute.xlu0 %6675
    %6677 = vrot.lane.b32.xlu0 %v4753, 64
    %v6678 = vpop.permute.xlu0 %6677
    %6679 = vrot.lane.b32.xlu0 %v4754, 64
    %v6680 = vpop.permute.xlu0 %6679
    %6681 = vrot.lane.b32.xlu0 %v4755, 64
    %v6682 = vpop.permute.xlu0 %6681
    %6683 = vrot.lane.b32.xlu0 %v4756, 64
    %v6684 = vpop.permute.xlu0 %6683
    %6685 = vrot.lane.b32.xlu0 %v4757, 64
    %v6686 = vpop.permute.xlu0 %6685
    %6687 = vrot.lane.b32.xlu0 %v4758, 64
    %v6688 = vpop.permute.xlu0 %6687
    %6689 = vrot.lane.b32.xlu0 %v4759, 64
    %v6690 = vpop.permute.xlu0 %6689
    %6691 = vrot.lane.b32.xlu0 %v4760, 64
    %v6692 = vpop.permute.xlu0 %6691
    %6693 = vrot.lane.b32.xlu0 %v4761, 64
    %v6694 = vpop.permute.xlu0 %6693
    %6695 = vrot.lane.b32.xlu0 %v4762, 64
    %v6696 = vpop.permute.xlu0 %6695
    %6697 = vrot.lane.b32.xlu0 %v4763, 64
    %v6698 = vpop.permute.xlu0 %6697
    %6699 = vrot.lane.b32.xlu0 %v4764, 64
    %v6700 = vpop.permute.xlu0 %6699
    %6701 = vrot.lane.b32.xlu0 %v4765, 64
    %v6702 = vpop.permute.xlu0 %6701
    %6703 = vrot.lane.b32.xlu0 %v4766, 64
    %v6704 = vpop.permute.xlu0 %6703
    %6705 = vrot.lane.b32.xlu0 %v4767, 64
    %v6706 = vpop.permute.xlu0 %6705
    %6707 = vrot.lane.b32.xlu0 %v4768, 64
    %v6708 = vpop.permute.xlu0 %6707
    %6709 = vrot.lane.b32.xlu0 %v4769, 64
    %v6710 = vpop.permute.xlu0 %6709
    %6711 = vrot.lane.b32.xlu0 %v4770, 64
    %v6712 = vpop.permute.xlu0 %6711
    %6713 = vrot.lane.b32.xlu0 %v4771, 64
    %v6714 = vpop.permute.xlu0 %6713
    %6715 = vrot.lane.b32.xlu0 %v4772, 64
    %v6716 = vpop.permute.xlu0 %6715
    %6717 = vrot.lane.b32.xlu0 %v4773, 64
    %v6718 = vpop.permute.xlu0 %6717
    %6719 = vrot.lane.b32.xlu0 %v4774, 64
    %v6720 = vpop.permute.xlu0 %6719
    %6721 = vrot.lane.b32.xlu0 %v4775, 64
    %v6722 = vpop.permute.xlu0 %6721
    %6723 = vrot.lane.b32.xlu0 %v4776, 64
    %v6724 = vpop.permute.xlu0 %6723
    %6725 = vrot.lane.b32.xlu0 %v4777, 64
    %v6726 = vpop.permute.xlu0 %6725
    %6727 = vrot.lane.b32.xlu0 %v4778, 64
    %v6728 = vpop.permute.xlu0 %6727
    %6729 = vrot.lane.b32.xlu0 %v4779, 64
    %v6730 = vpop.permute.xlu0 %6729
    %6731 = vrot.lane.b32.xlu0 %v4780, 64
    %v6732 = vpop.permute.xlu0 %6731
    %6733 = vrot.lane.b32.xlu0 %v4781, 64
    %v6734 = vpop.permute.xlu0 %6733
    %6735 = vrot.lane.b32.xlu0 %v4782, 64
    %v6736 = vpop.permute.xlu0 %6735
    %6737 = vrot.lane.b32.xlu0 %v4783, 64
    %v6738 = vpop.permute.xlu0 %6737
    %6739 = vrot.lane.b32.xlu0 %v4784, 64
    %v6740 = vpop.permute.xlu0 %6739
    %6741 = vrot.lane.b32.xlu0 %v4785, 64
    %v6742 = vpop.permute.xlu0 %6741
    %6743 = vrot.lane.b32.xlu0 %v4786, 64
    %v6744 = vpop.permute.xlu0 %6743
    %6745 = vrot.lane.b32.xlu0 %v4787, 64
    %v6746 = vpop.permute.xlu0 %6745
    %6747 = vrot.lane.b32.xlu0 %v4788, 64
    %v6748 = vpop.permute.xlu0 %6747
    %6749 = vrot.lane.b32.xlu0 %v4789, 64
    %v6750 = vpop.permute.xlu0 %6749
    %6751 = vrot.lane.b32.xlu0 %v4790, 64
    %v6752 = vpop.permute.xlu0 %6751
    %6753 = vrot.lane.b32.xlu0 %v4791, 64
    %v6754 = vpop.permute.xlu0 %6753
    %6755 = vrot.lane.b32.xlu0 %v4792, 64
    %v6756 = vpop.permute.xlu0 %6755
    %6757 = vrot.lane.b32.xlu0 %v4793, 64
    %v6758 = vpop.permute.xlu0 %6757
    %6759 = vrot.lane.b32.xlu0 %v4794, 64
    %v6760 = vpop.permute.xlu0 %6759
    %6761 = vrot.lane.b32.xlu0 %v4795, 64
    %v6762 = vpop.permute.xlu0 %6761
    %6763 = vrot.lane.b32.xlu0 %v4796, 64
    %v6764 = vpop.permute.xlu0 %6763
    %6765 = vrot.lane.b32.xlu0 %v4797, 64
    %v6766 = vpop.permute.xlu0 %6765
    %6767 = vrot.lane.b32.xlu0 %v4798, 64
    %v6768 = vpop.permute.xlu0 %6767
    %6769 = vrot.lane.b32.xlu0 %v4799, 64
    %v6770 = vpop.permute.xlu0 %6769
    %6771 = vrot.lane.b32.xlu0 %v4800, 64
    %v6772 = vpop.permute.xlu0 %6771
    %6773 = vrot.lane.b32.xlu0 %v4801, 64
    %v6774 = vpop.permute.xlu0 %6773
    %6775 = vrot.lane.b32.xlu0 %v4802, 64
    %v6776 = vpop.permute.xlu0 %6775
    %6777 = vrot.lane.b32.xlu0 %v4803, 64
    %v6778 = vpop.permute.xlu0 %6777
    %6779 = vrot.lane.b32.xlu0 %v4804, 64
    %v6780 = vpop.permute.xlu0 %6779
    %6781 = vrot.lane.b32.xlu0 %v4805, 64
    %v6782 = vpop.permute.xlu0 %6781
    %6783 = vrot.lane.b32.xlu0 %v4806, 64
    %v6784 = vpop.permute.xlu0 %6783
    %6785 = vrot.lane.b32.xlu0 %v4807, 64
    %v6786 = vpop.permute.xlu0 %6785
    %6787 = vrot.lane.b32.xlu0 %v4808, 64
    %v6788 = vpop.permute.xlu0 %6787
    %6789 = vrot.lane.b32.xlu0 %v4809, 64
    %v6790 = vpop.permute.xlu0 %6789
    %6791 = vrot.lane.b32.xlu0 %v4810, 64
    %v6792 = vpop.permute.xlu0 %6791
    %6793 = vrot.lane.b32.xlu0 %v4811, 64
    %v6794 = vpop.permute.xlu0 %6793
    %6795 = vrot.lane.b32.xlu0 %v4812, 64
    %v6796 = vpop.permute.xlu0 %6795
    %v6861 = vsel %vm131, %v4236, %v4878
    %v6862 = vsel %vm131, %v4237, %v4880
    %v6863 = vsel %vm131, %v4238, %v4882
    %v6864 = vsel %vm131, %v4239, %v4884
    %v6865 = vsel %vm131, %v4240, %v4886
    %v6866 = vsel %vm131, %v4241, %v4888
    %v6867 = vsel %vm131, %v4242, %v4890
    %v6868 = vsel %vm131, %v4243, %v4892
    %v6869 = vsel %vm131, %v4244, %v4894
    %v6870 = vsel %vm131, %v4245, %v4896
    %v6871 = vsel %vm131, %v4246, %v4898
    %v6872 = vsel %vm131, %v4247, %v4900
    %v6873 = vsel %vm131, %v4248, %v4902
    %v6874 = vsel %vm131, %v4249, %v4904
    %v6875 = vsel %vm131, %v4250, %v4906
    %v6876 = vsel %vm131, %v4251, %v4908
    %v6877 = vsel %vm131, %v4252, %v4910
    %v6878 = vsel %vm131, %v4253, %v4912
    %v6879 = vsel %vm131, %v4254, %v4914
    %v6880 = vsel %vm131, %v4255, %v4916
    %v6881 = vsel %vm131, %v4256, %v4918
    %v6882 = vsel %vm131, %v4257, %v4920
    %v6883 = vsel %vm131, %v4258, %v4922
    %v6884 = vsel %vm131, %v4259, %v4924
    %v6885 = vsel %vm131, %v4260, %v4926
    %v6886 = vsel %vm131, %v4261, %v4928
    %v6887 = vsel %vm131, %v4262, %v4930
    %v6888 = vsel %vm131, %v4263, %v4932
    %v6889 = vsel %vm131, %v4264, %v4934
    %v6890 = vsel %vm131, %v4265, %v4936
    %v6891 = vsel %vm131, %v4266, %v4938
    %v6892 = vsel %vm131, %v4267, %v4940
    %v6893 = vsel %vm131, %v4268, %v4942
    %v6894 = vsel %vm131, %v4269, %v4944
    %v6895 = vsel %vm131, %v4270, %v4946
    %v6896 = vsel %vm131, %v4271, %v4948
    %v6897 = vsel %vm131, %v4272, %v4950
    %v6898 = vsel %vm131, %v4273, %v4952
    %v6899 = vsel %vm131, %v4274, %v4954
    %v6900 = vsel %vm131, %v4275, %v4956
    %v6901 = vsel %vm131, %v4276, %v4958
    %v6902 = vsel %vm131, %v4277, %v4960
    %v6903 = vsel %vm131, %v4278, %v4962
    %v6904 = vsel %vm131, %v4279, %v4964
    %v6905 = vsel %vm131, %v4280, %v4966
    %v6906 = vsel %vm131, %v4281, %v4968
    %v6907 = vsel %vm131, %v4282, %v4970
    %v6908 = vsel %vm131, %v4283, %v4972
    %v6909 = vsel %vm131, %v4284, %v4974
    %v6910 = vsel %vm131, %v4285, %v4976
    %v6911 = vsel %vm131, %v4286, %v4978
    %v6912 = vsel %vm131, %v4287, %v4980
    %v6913 = vsel %vm131, %v4288, %v4982
    %v6914 = vsel %vm131, %v4289, %v4984
    %v6915 = vsel %vm131, %v4290, %v4986
    %v6916 = vsel %vm131, %v4291, %v4988
    %v6917 = vsel %vm131, %v4292, %v4990
    %v6918 = vsel %vm131, %v4293, %v4992
    %v6919 = vsel %vm131, %v4294, %v4994
    %v6920 = vsel %vm131, %v4295, %v4996
    %v6921 = vsel %vm131, %v4296, %v4998
    %v6922 = vsel %vm131, %v4297, %v5000
    %v6923 = vsel %vm131, %v4298, %v5002
    %v6924 = vsel %vm131, %v4299, %v5004
    %v6925 = vsel %vm3188, %v6861, %v5134
    %v6926 = vsel %vm3188, %v6862, %v5136
    %v6927 = vsel %vm3188, %v6863, %v5138
    %v6928 = vsel %vm3188, %v6864, %v5140
    %v6929 = vsel %vm3188, %v6865, %v5142
    %v6930 = vsel %vm3188, %v6866, %v5144
    %v6931 = vsel %vm3188, %v6867, %v5146
    %v6932 = vsel %vm3188, %v6868, %v5148
    %v6933 = vsel %vm3188, %v6869, %v5150
    %v6934 = vsel %vm3188, %v6870, %v5152
    %v6935 = vsel %vm3188, %v6871, %v5154
    %v6936 = vsel %vm3188, %v6872, %v5156
    %v6937 = vsel %vm3188, %v6873, %v5158
    %v6938 = vsel %vm3188, %v6874, %v5160
    %v6939 = vsel %vm3188, %v6875, %v5162
    %v6940 = vsel %vm3188, %v6876, %v5164
    %v6941 = vsel %vm3188, %v6877, %v5166
    %v6942 = vsel %vm3188, %v6878, %v5168
    %v6943 = vsel %vm3188, %v6879, %v5170
    %v6944 = vsel %vm3188, %v6880, %v5172
    %v6945 = vsel %vm3188, %v6881, %v5174
    %v6946 = vsel %vm3188, %v6882, %v5176
    %v6947 = vsel %vm3188, %v6883, %v5178
    %v6948 = vsel %vm3188, %v6884, %v5180
    %v6949 = vsel %vm3188, %v6885, %v5182
    %v6950 = vsel %vm3188, %v6886, %v5184
    %v6951 = vsel %vm3188, %v6887, %v5186
    %v6952 = vsel %vm3188, %v6888, %v5188
    %v6953 = vsel %vm3188, %v6889, %v5190
    %v6954 = vsel %vm3188, %v6890, %v5192
    %v6955 = vsel %vm3188, %v6891, %v5194
    %v6956 = vsel %vm3188, %v6892, %v5196
    %v6957 = vsel %vm3188, %v6893, %v5198
    %v6958 = vsel %vm3188, %v6894, %v5200
    %v6959 = vsel %vm3188, %v6895, %v5202
    %v6960 = vsel %vm3188, %v6896, %v5204
    %v6961 = vsel %vm3188, %v6897, %v5206
    %v6962 = vsel %vm3188, %v6898, %v5208
    %v6963 = vsel %vm3188, %v6899, %v5210
    %v6964 = vsel %vm3188, %v6900, %v5212
    %v6965 = vsel %vm3188, %v6901, %v5214
    %v6966 = vsel %vm3188, %v6902, %v5216
    %v6967 = vsel %vm3188, %v6903, %v5218
    %v6968 = vsel %vm3188, %v6904, %v5220
    %v6969 = vsel %vm3188, %v6905, %v5222
    %v6970 = vsel %vm3188, %v6906, %v5224
    %v6971 = vsel %vm3188, %v6907, %v5226
    %v6972 = vsel %vm3188, %v6908, %v5228
    %v6973 = vsel %vm3188, %v6909, %v5230
    %v6974 = vsel %vm3188, %v6910, %v5232
    %v6975 = vsel %vm3188, %v6911, %v5234
    %v6976 = vsel %vm3188, %v6912, %v5236
    %v6977 = vsel %vm3188, %v6913, %v5238
    %v6978 = vsel %vm3188, %v6914, %v5240
    %v6979 = vsel %vm3188, %v6915, %v5242
    %v6980 = vsel %vm3188, %v6916, %v5244
    %v6981 = vsel %vm3188, %v6917, %v5246
    %v6982 = vsel %vm3188, %v6918, %v5248
    %v6983 = vsel %vm3188, %v6919, %v5250
    %v6984 = vsel %vm3188, %v6920, %v5252
    %v6985 = vsel %vm3188, %v6921, %v5254
    %v6986 = vsel %vm3188, %v6922, %v5256
    %v6987 = vsel %vm3188, %v6923, %v5258
    %v6988 = vsel %vm3188, %v6924, %v5260
    %v6989 = vsel %vm3318, %v6925, %v5390
    %v6990 = vsel %vm3318, %v6926, %v5392
    %v6991 = vsel %vm3318, %v6927, %v5394
    %v6992 = vsel %vm3318, %v6928, %v5396
    %v6993 = vsel %vm3318, %v6929, %v5398
    %v6994 = vsel %vm3318, %v6930, %v5400
    %v6995 = vsel %vm3318, %v6931, %v5402
    %v6996 = vsel %vm3318, %v6932, %v5404
    %v6997 = vsel %vm3318, %v6933, %v5406
    %v6998 = vsel %vm3318, %v6934, %v5408
    %v6999 = vsel %vm3318, %v6935, %v5410
    %v7000 = vsel %vm3318, %v6936, %v5412
    %v7001 = vsel %vm3318, %v6937, %v5414
    %v7002 = vsel %vm3318, %v6938, %v5416
    %v7003 = vsel %vm3318, %v6939, %v5418
    %v7004 = vsel %vm3318, %v6940, %v5420
    %v7005 = vsel %vm3318, %v6941, %v5422
    %v7006 = vsel %vm3318, %v6942, %v5424
    %v7007 = vsel %vm3318, %v6943, %v5426
    %v7008 = vsel %vm3318, %v6944, %v5428
    %v7009 = vsel %vm3318, %v6945, %v5430
    %v7010 = vsel %vm3318, %v6946, %v5432
    %v7011 = vsel %vm3318, %v6947, %v5434
    %v7012 = vsel %vm3318, %v6948, %v5436
    %v7013 = vsel %vm3318, %v6949, %v5438
    %v7014 = vsel %vm3318, %v6950, %v5440
    %v7015 = vsel %vm3318, %v6951, %v5442
    %v7016 = vsel %vm3318, %v6952, %v5444
    %v7017 = vsel %vm3318, %v6953, %v5446
    %v7018 = vsel %vm3318, %v6954, %v5448
    %v7019 = vsel %vm3318, %v6955, %v5450
    %v7020 = vsel %vm3318, %v6956, %v5452
    %v7021 = vsel %vm3318, %v6957, %v5454
    %v7022 = vsel %vm3318, %v6958, %v5456
    %v7023 = vsel %vm3318, %v6959, %v5458
    %v7024 = vsel %vm3318, %v6960, %v5460
    %v7025 = vsel %vm3318, %v6961, %v5462
    %v7026 = vsel %vm3318, %v6962, %v5464
    %v7027 = vsel %vm3318, %v6963, %v5466
    %v7028 = vsel %vm3318, %v6964, %v5468
    %v7029 = vsel %vm3318, %v6965, %v5470
    %v7030 = vsel %vm3318, %v6966, %v5472
    %v7031 = vsel %vm3318, %v6967, %v5474
    %v7032 = vsel %vm3318, %v6968, %v5476
    %v7033 = vsel %vm3318, %v6969, %v5478
    %v7034 = vsel %vm3318, %v6970, %v5480
    %v7035 = vsel %vm3318, %v6971, %v5482
    %v7036 = vsel %vm3318, %v6972, %v5484
    %v7037 = vsel %vm3318, %v6973, %v5486
    %v7038 = vsel %vm3318, %v6974, %v5488
    %v7039 = vsel %vm3318, %v6975, %v5490
    %v7040 = vsel %vm3318, %v6976, %v5492
    %v7041 = vsel %vm3318, %v6977, %v5494
    %v7042 = vsel %vm3318, %v6978, %v5496
    %v7043 = vsel %vm3318, %v6979, %v5498
    %v7044 = vsel %vm3318, %v6980, %v5500
    %v7045 = vsel %vm3318, %v6981, %v5502
    %v7046 = vsel %vm3318, %v6982, %v5504
    %v7047 = vsel %vm3318, %v6983, %v5506
    %v7048 = vsel %vm3318, %v6984, %v5508
    %v7049 = vsel %vm3318, %v6985, %v5510
    %v7050 = vsel %vm3318, %v6986, %v5512
    %v7051 = vsel %vm3318, %v6987, %v5514
    %v7052 = vsel %vm3318, %v6988, %v5516
    %v7053 = vsel %vm3448, %v6989, %v5646
    %v7054 = vsel %vm3448, %v6990, %v5648
    %v7055 = vsel %vm3448, %v6991, %v5650
    %v7056 = vsel %vm3448, %v6992, %v5652
    %v7057 = vsel %vm3448, %v6993, %v5654
    %v7058 = vsel %vm3448, %v6994, %v5656
    %v7059 = vsel %vm3448, %v6995, %v5658
    %v7060 = vsel %vm3448, %v6996, %v5660
    %v7061 = vsel %vm3448, %v6997, %v5662
    %v7062 = vsel %vm3448, %v6998, %v5664
    %v7063 = vsel %vm3448, %v6999, %v5666
    %v7064 = vsel %vm3448, %v7000, %v5668
    %v7065 = vsel %vm3448, %v7001, %v5670
    %v7066 = vsel %vm3448, %v7002, %v5672
    %v7067 = vsel %vm3448, %v7003, %v5674
    %v7068 = vsel %vm3448, %v7004, %v5676
    %v7069 = vsel %vm3448, %v7005, %v5678
    %v7070 = vsel %vm3448, %v7006, %v5680
    %v7071 = vsel %vm3448, %v7007, %v5682
    %v7072 = vsel %vm3448, %v7008, %v5684
    %v7073 = vsel %vm3448, %v7009, %v5686
    %v7074 = vsel %vm3448, %v7010, %v5688
    %v7075 = vsel %vm3448, %v7011, %v5690
    %v7076 = vsel %vm3448, %v7012, %v5692
    %v7077 = vsel %vm3448, %v7013, %v5694
    %v7078 = vsel %vm3448, %v7014, %v5696
    %v7079 = vsel %vm3448, %v7015, %v5698
    %v7080 = vsel %vm3448, %v7016, %v5700
    %v7081 = vsel %vm3448, %v7017, %v5702
    %v7082 = vsel %vm3448, %v7018, %v5704
    %v7083 = vsel %vm3448, %v7019, %v5706
    %v7084 = vsel %vm3448, %v7020, %v5708
    %v7085 = vsel %vm3448, %v7021, %v5710
    %v7086 = vsel %vm3448, %v7022, %v5712
    %v7087 = vsel %vm3448, %v7023, %v5714
    %v7088 = vsel %vm3448, %v7024, %v5716
    %v7089 = vsel %vm3448, %v7025, %v5718
    %v7090 = vsel %vm3448, %v7026, %v5720
    %v7091 = vsel %vm3448, %v7027, %v5722
    %v7092 = vsel %vm3448, %v7028, %v5724
    %v7093 = vsel %vm3448, %v7029, %v5726
    %v7094 = vsel %vm3448, %v7030, %v5728
    %v7095 = vsel %vm3448, %v7031, %v5730
    %v7096 = vsel %vm3448, %v7032, %v5732
    %v7097 = vsel %vm3448, %v7033, %v5734
    %v7098 = vsel %vm3448, %v7034, %v5736
    %v7099 = vsel %vm3448, %v7035, %v5738
    %v7100 = vsel %vm3448, %v7036, %v5740
    %v7101 = vsel %vm3448, %v7037, %v5742
    %v7102 = vsel %vm3448, %v7038, %v5744
    %v7103 = vsel %vm3448, %v7039, %v5746
    %v7104 = vsel %vm3448, %v7040, %v5748
    %v7105 = vsel %vm3448, %v7041, %v5750
    %v7106 = vsel %vm3448, %v7042, %v5752
    %v7107 = vsel %vm3448, %v7043, %v5754
    %v7108 = vsel %vm3448, %v7044, %v5756
    %v7109 = vsel %vm3448, %v7045, %v5758
    %v7110 = vsel %vm3448, %v7046, %v5760
    %v7111 = vsel %vm3448, %v7047, %v5762
    %v7112 = vsel %vm3448, %v7048, %v5764
    %v7113 = vsel %vm3448, %v7049, %v5766
    %v7114 = vsel %vm3448, %v7050, %v5768
    %v7115 = vsel %vm3448, %v7051, %v5770
    %v7116 = vsel %vm3448, %v7052, %v5772
    %vm7117 = vcmask 326656
    %v7118 = vsel %vm7117, %v7053, %v5902
    %v7119 = vsel %vm7117, %v7054, %v5904
    %v7120 = vsel %vm7117, %v7055, %v5906
    %v7121 = vsel %vm7117, %v7056, %v5908
    %v7122 = vsel %vm7117, %v7057, %v5910
    %v7123 = vsel %vm7117, %v7058, %v5912
    %v7124 = vsel %vm7117, %v7059, %v5914
    %v7125 = vsel %vm7117, %v7060, %v5916
    %v7126 = vsel %vm7117, %v7061, %v5918
    %v7127 = vsel %vm7117, %v7062, %v5920
    %v7128 = vsel %vm7117, %v7063, %v5922
    %v7129 = vsel %vm7117, %v7064, %v5924
    %v7130 = vsel %vm7117, %v7065, %v5926
    %v7131 = vsel %vm7117, %v7066, %v5928
    %v7132 = vsel %vm7117, %v7067, %v5930
    %v7133 = vsel %vm7117, %v7068, %v5932
    %v7134 = vsel %vm7117, %v7069, %v5934
    %v7135 = vsel %vm7117, %v7070, %v5936
    %v7136 = vsel %vm7117, %v7071, %v5938
    %v7137 = vsel %vm7117, %v7072, %v5940
    %v7138 = vsel %vm7117, %v7073, %v5942
    %v7139 = vsel %vm7117, %v7074, %v5944
    %v7140 = vsel %vm7117, %v7075, %v5946
    %v7141 = vsel %vm7117, %v7076, %v5948
    %v7142 = vsel %vm7117, %v7077, %v5950
    %v7143 = vsel %vm7117, %v7078, %v5952
    %v7144 = vsel %vm7117, %v7079, %v5954
    %v7145 = vsel %vm7117, %v7080, %v5956
    %v7146 = vsel %vm7117, %v7081, %v5958
    %v7147 = vsel %vm7117, %v7082, %v5960
    %v7148 = vsel %vm7117, %v7083, %v5962
    %v7149 = vsel %vm7117, %v7084, %v5964
    %v7150 = vsel %vm7117, %v7085, %v5966
    %v7151 = vsel %vm7117, %v7086, %v5968
    %v7152 = vsel %vm7117, %v7087, %v5970
    %v7153 = vsel %vm7117, %v7088, %v5972
    %v7154 = vsel %vm7117, %v7089, %v5974
    %v7155 = vsel %vm7117, %v7090, %v5976
    %v7156 = vsel %vm7117, %v7091, %v5978
    %v7157 = vsel %vm7117, %v7092, %v5980
    %v7158 = vsel %vm7117, %v7093, %v5982
    %v7159 = vsel %vm7117, %v7094, %v5984
    %v7160 = vsel %vm7117, %v7095, %v5986
    %v7161 = vsel %vm7117, %v7096, %v5988
    %v7162 = vsel %vm7117, %v7097, %v5990
    %v7163 = vsel %vm7117, %v7098, %v5992
    %v7164 = vsel %vm7117, %v7099, %v5994
    %v7165 = vsel %vm7117, %v7100, %v5996
    %v7166 = vsel %vm7117, %v7101, %v5998
    %v7167 = vsel %vm7117, %v7102, %v6000
    %v7168 = vsel %vm7117, %v7103, %v6002
    %v7169 = vsel %vm7117, %v7104, %v6004
    %v7170 = vsel %vm7117, %v7105, %v6006
    %v7171 = vsel %vm7117, %v7106, %v6008
    %v7172 = vsel %vm7117, %v7107, %v6010
    %v7173 = vsel %vm7117, %v7108, %v6012
    %v7174 = vsel %vm7117, %v7109, %v6014
    %v7175 = vsel %vm7117, %v7110, %v6016
    %v7176 = vsel %vm7117, %v7111, %v6018
    %v7177 = vsel %vm7117, %v7112, %v6020
    %v7178 = vsel %vm7117, %v7113, %v6022
    %v7179 = vsel %vm7117, %v7114, %v6024
    %v7180 = vsel %vm7117, %v7115, %v6026
    %v7181 = vsel %vm7117, %v7116, %v6028
    %vm7182 = vcmask 392192
    %v7183 = vsel %vm7182, %v7118, %v6158
    %v7184 = vsel %vm7182, %v7119, %v6160
    %v7185 = vsel %vm7182, %v7120, %v6162
    %v7186 = vsel %vm7182, %v7121, %v6164
    %v7187 = vsel %vm7182, %v7122, %v6166
    %v7188 = vsel %vm7182, %v7123, %v6168
    %v7189 = vsel %vm7182, %v7124, %v6170
    %v7190 = vsel %vm7182, %v7125, %v6172
    %v7191 = vsel %vm7182, %v7126, %v6174
    %v7192 = vsel %vm7182, %v7127, %v6176
    %v7193 = vsel %vm7182, %v7128, %v6178
    %v7194 = vsel %vm7182, %v7129, %v6180
    %v7195 = vsel %vm7182, %v7130, %v6182
    %v7196 = vsel %vm7182, %v7131, %v6184
    %v7197 = vsel %vm7182, %v7132, %v6186
    %v7198 = vsel %vm7182, %v7133, %v6188
    %v7199 = vsel %vm7182, %v7134, %v6190
    %v7200 = vsel %vm7182, %v7135, %v6192
    %v7201 = vsel %vm7182, %v7136, %v6194
    %v7202 = vsel %vm7182, %v7137, %v6196
    %v7203 = vsel %vm7182, %v7138, %v6198
    %v7204 = vsel %vm7182, %v7139, %v6200
    %v7205 = vsel %vm7182, %v7140, %v6202
    %v7206 = vsel %vm7182, %v7141, %v6204
    %v7207 = vsel %vm7182, %v7142, %v6206
    %v7208 = vsel %vm7182, %v7143, %v6208
    %v7209 = vsel %vm7182, %v7144, %v6210
    %v7210 = vsel %vm7182, %v7145, %v6212
    %v7211 = vsel %vm7182, %v7146, %v6214
    %v7212 = vsel %vm7182, %v7147, %v6216
    %v7213 = vsel %vm7182, %v7148, %v6218
    %v7214 = vsel %vm7182, %v7149, %v6220
    %v7215 = vsel %vm7182, %v7150, %v6222
    %v7216 = vsel %vm7182, %v7151, %v6224
    %v7217 = vsel %vm7182, %v7152, %v6226
    %v7218 = vsel %vm7182, %v7153, %v6228
    %v7219 = vsel %vm7182, %v7154, %v6230
    %v7220 = vsel %vm7182, %v7155, %v6232
    %v7221 = vsel %vm7182, %v7156, %v6234
    %v7222 = vsel %vm7182, %v7157, %v6236
    %v7223 = vsel %vm7182, %v7158, %v6238
    %v7224 = vsel %vm7182, %v7159, %v6240
    %v7225 = vsel %vm7182, %v7160, %v6242
    %v7226 = vsel %vm7182, %v7161, %v6244
    %v7227 = vsel %vm7182, %v7162, %v6246
    %v7228 = vsel %vm7182, %v7163, %v6248
    %v7229 = vsel %vm7182, %v7164, %v6250
    %v7230 = vsel %vm7182, %v7165, %v6252
    %v7231 = vsel %vm7182, %v7166, %v6254
    %v7232 = vsel %vm7182, %v7167, %v6256
    %v7233 = vsel %vm7182, %v7168, %v6258
    %v7234 = vsel %vm7182, %v7169, %v6260
    %v7235 = vsel %vm7182, %v7170, %v6262
    %v7236 = vsel %vm7182, %v7171, %v6264
    %v7237 = vsel %vm7182, %v7172, %v6266
    %v7238 = vsel %vm7182, %v7173, %v6268
    %v7239 = vsel %vm7182, %v7174, %v6270
    %v7240 = vsel %vm7182, %v7175, %v6272
    %v7241 = vsel %vm7182, %v7176, %v6274
    %v7242 = vsel %vm7182, %v7177, %v6276
    %v7243 = vsel %vm7182, %v7178, %v6278
    %v7244 = vsel %vm7182, %v7179, %v6280
    %v7245 = vsel %vm7182, %v7180, %v6282
    %v7246 = vsel %vm7182, %v7181, %v6284
    %vm7247 = vcmask 457728
    %v7248 = vsel %vm7247, %v7183, %v6414
    %v7249 = vsel %vm7247, %v7184, %v6416
    %v7250 = vsel %vm7247, %v7185, %v6418
    %v7251 = vsel %vm7247, %v7186, %v6420
    %v7252 = vsel %vm7247, %v7187, %v6422
    %v7253 = vsel %vm7247, %v7188, %v6424
    %v7254 = vsel %vm7247, %v7189, %v6426
    %v7255 = vsel %vm7247, %v7190, %v6428
    %v7256 = vsel %vm7247, %v7191, %v6430
    %v7257 = vsel %vm7247, %v7192, %v6432
    %v7258 = vsel %vm7247, %v7193, %v6434
    %v7259 = vsel %vm7247, %v7194, %v6436
    %v7260 = vsel %vm7247, %v7195, %v6438
    %v7261 = vsel %vm7247, %v7196, %v6440
    %v7262 = vsel %vm7247, %v7197, %v6442
    %v7263 = vsel %vm7247, %v7198, %v6444
    %v7264 = vsel %vm7247, %v7199, %v6446
    %v7265 = vsel %vm7247, %v7200, %v6448
    %v7266 = vsel %vm7247, %v7201, %v6450
    %v7267 = vsel %vm7247, %v7202, %v6452
    %v7268 = vsel %vm7247, %v7203, %v6454
    %v7269 = vsel %vm7247, %v7204, %v6456
    %v7270 = vsel %vm7247, %v7205, %v6458
    %v7271 = vsel %vm7247, %v7206, %v6460
    %v7272 = vsel %vm7247, %v7207, %v6462
    %v7273 = vsel %vm7247, %v7208, %v6464
    %v7274 = vsel %vm7247, %v7209, %v6466
    %v7275 = vsel %vm7247, %v7210, %v6468
    %v7276 = vsel %vm7247, %v7211, %v6470
    %v7277 = vsel %vm7247, %v7212, %v6472
    %v7278 = vsel %vm7247, %v7213, %v6474
    %v7279 = vsel %vm7247, %v7214, %v6476
    %v7280 = vsel %vm7247, %v7215, %v6478
    %v7281 = vsel %vm7247, %v7216, %v6480
    %v7282 = vsel %vm7247, %v7217, %v6482
    %v7283 = vsel %vm7247, %v7218, %v6484
    %v7284 = vsel %vm7247, %v7219, %v6486
    %v7285 = vsel %vm7247, %v7220, %v6488
    %v7286 = vsel %vm7247, %v7221, %v6490
    %v7287 = vsel %vm7247, %v7222, %v6492
    %v7288 = vsel %vm7247, %v7223, %v6494
    %v7289 = vsel %vm7247, %v7224, %v6496
    %v7290 = vsel %vm7247, %v7225, %v6498
    %v7291 = vsel %vm7247, %v7226, %v6500
    %v7292 = vsel %vm7247, %v7227, %v6502
    %v7293 = vsel %vm7247, %v7228, %v6504
    %v7294 = vsel %vm7247, %v7229, %v6506
    %v7295 = vsel %vm7247, %v7230, %v6508
    %v7296 = vsel %vm7247, %v7231, %v6510
    %v7297 = vsel %vm7247, %v7232, %v6512
    %v7298 = vsel %vm7247, %v7233, %v6514
    %v7299 = vsel %vm7247, %v7234, %v6516
    %v7300 = vsel %vm7247, %v7235, %v6518
    %v7301 = vsel %vm7247, %v7236, %v6520
    %v7302 = vsel %vm7247, %v7237, %v6522
    %v7303 = vsel %vm7247, %v7238, %v6524
    %v7304 = vsel %vm7247, %v7239, %v6526
    %v7305 = vsel %vm7247, %v7240, %v6528
    %v7306 = vsel %vm7247, %v7241, %v6530
    %v7307 = vsel %vm7247, %v7242, %v6532
    %v7308 = vsel %vm7247, %v7243, %v6534
    %v7309 = vsel %vm7247, %v7244, %v6536
    %v7310 = vsel %vm7247, %v7245, %v6538
    %v7311 = vsel %vm7247, %v7246, %v6540
    %vm7312 = vcmask 523264
    %v7313 = vsel %vm7312, %v7248, %v6670
    %v7314 = vsel %vm7312, %v7249, %v6672
    %v7315 = vsel %vm7312, %v7250, %v6674
    %v7316 = vsel %vm7312, %v7251, %v6676
    %v7317 = vsel %vm7312, %v7252, %v6678
    %v7318 = vsel %vm7312, %v7253, %v6680
    %v7319 = vsel %vm7312, %v7254, %v6682
    %v7320 = vsel %vm7312, %v7255, %v6684
    %v7321 = vsel %vm7312, %v7256, %v6686
    %v7322 = vsel %vm7312, %v7257, %v6688
    %v7323 = vsel %vm7312, %v7258, %v6690
    %v7324 = vsel %vm7312, %v7259, %v6692
    %v7325 = vsel %vm7312, %v7260, %v6694
    %v7326 = vsel %vm7312, %v7261, %v6696
    %v7327 = vsel %vm7312, %v7262, %v6698
    %v7328 = vsel %vm7312, %v7263, %v6700
    %v7329 = vsel %vm7312, %v7264, %v6702
    %v7330 = vsel %vm7312, %v7265, %v6704
    %v7331 = vsel %vm7312, %v7266, %v6706
    %v7332 = vsel %vm7312, %v7267, %v6708
    %v7333 = vsel %vm7312, %v7268, %v6710
    %v7334 = vsel %vm7312, %v7269, %v6712
    %v7335 = vsel %vm7312, %v7270, %v6714
    %v7336 = vsel %vm7312, %v7271, %v6716
    %v7337 = vsel %vm7312, %v7272, %v6718
    %v7338 = vsel %vm7312, %v7273, %v6720
    %v7339 = vsel %vm7312, %v7274, %v6722
    %v7340 = vsel %vm7312, %v7275, %v6724
    %v7341 = vsel %vm7312, %v7276, %v6726
    %v7342 = vsel %vm7312, %v7277, %v6728
    %v7343 = vsel %vm7312, %v7278, %v6730
    %v7344 = vsel %vm7312, %v7279, %v6732
    %v7345 = vsel %vm7312, %v7280, %v6734
    %v7346 = vsel %vm7312, %v7281, %v6736
    %v7347 = vsel %vm7312, %v7282, %v6738
    %v7348 = vsel %vm7312, %v7283, %v6740
    %v7349 = vsel %vm7312, %v7284, %v6742
    %v7350 = vsel %vm7312, %v7285, %v6744
    %v7351 = vsel %vm7312, %v7286, %v6746
    %v7352 = vsel %vm7312, %v7287, %v6748
    %v7353 = vsel %vm7312, %v7288, %v6750
    %v7354 = vsel %vm7312, %v7289, %v6752
    %v7355 = vsel %vm7312, %v7290, %v6754
    %v7356 = vsel %vm7312, %v7291, %v6756
    %v7357 = vsel %vm7312, %v7292, %v6758
    %v7358 = vsel %vm7312, %v7293, %v6760
    %v7359 = vsel %vm7312, %v7294, %v6762
    %v7360 = vsel %vm7312, %v7295, %v6764
    %v7361 = vsel %vm7312, %v7296, %v6766
    %v7362 = vsel %vm7312, %v7297, %v6768
    %v7363 = vsel %vm7312, %v7298, %v6770
    %v7364 = vsel %vm7312, %v7299, %v6772
    %v7365 = vsel %vm7312, %v7300, %v6774
    %v7366 = vsel %vm7312, %v7301, %v6776
    %v7367 = vsel %vm7312, %v7302, %v6778
    %v7368 = vsel %vm7312, %v7303, %v6780
    %v7369 = vsel %vm7312, %v7304, %v6782
    %v7370 = vsel %vm7312, %v7305, %v6784
    %v7371 = vsel %vm7312, %v7306, %v6786
    %v7372 = vsel %vm7312, %v7307, %v6788
    %v7373 = vsel %vm7312, %v7308, %v6790
    %v7374 = vsel %vm7312, %v7309, %v6792
    %v7375 = vsel %vm7312, %v7310, %v6794
    %v7376 = vsel %vm7312, %v7311, %v6796
    %v7377 = vld [vmem:[%s3] sm:$0xff]
    %v7378 = vld [vmem:[%s3 + $0x8] sm:$0xff]
    %v7379 = vld [vmem:[%s3 + $0x10] sm:$0xff]
    %v7380 = vld [vmem:[%s3 + $0x18] sm:$0xff]
    %v7381 = vld [vmem:[%s3 + $0x20] sm:$0xff]
    %v7382 = vld [vmem:[%s3 + $0x28] sm:$0xff]
    %v7383 = vld [vmem:[%s3 + $0x30] sm:$0xff]
    %v7384 = vld [vmem:[%s3 + $0x38] sm:$0xff]
    %v7385 = vld [vmem:[%s3 + $0x40] sm:$0xff]
    %v7386 = vld [vmem:[%s4] sm:$0x1]
    %v7388 = vlaneseq
    %v7389 = vshrl.u32 %v7388, 7
    %v7390 = vsub.s32 0, %v7389
    %v7391 = vrot.slane %v7386, %v7390
    %vm7393 = vcmask 588800
    %v7395 = vsel %vm7393, %v7313, 0
    %v7398 = vsel %vm7393, %v7314, 0
    %v7401 = vsel %vm7393, %v7315, 0
    %v7404 = vsel %vm7393, %v7316, 0
    %v7407 = vsel %vm7393, %v7317, 0
    %v7410 = vsel %vm7393, %v7318, 0
    %v7413 = vsel %vm7393, %v7319, 0
    %v7416 = vsel %vm7393, %v7320, 0
    %v7419 = vsel %vm7393, %v7321, 0
    %v7422 = vsel %vm7393, %v7322, 0
    %v7425 = vsel %vm7393, %v7323, 0
    %v7428 = vsel %vm7393, %v7324, 0
    %v7431 = vsel %vm7393, %v7325, 0
    %v7434 = vsel %vm7393, %v7326, 0
    %v7437 = vsel %vm7393, %v7327, 0
    %v7440 = vsel %vm7393, %v7328, 0
    %v7443 = vsel %vm7393, %v7329, 0
    %v7446 = vsel %vm7393, %v7330, 0
    %v7449 = vsel %vm7393, %v7331, 0
    %v7452 = vsel %vm7393, %v7332, 0
    %v7455 = vsel %vm7393, %v7333, 0
    %v7458 = vsel %vm7393, %v7334, 0
    %v7461 = vsel %vm7393, %v7335, 0
    %v7464 = vsel %vm7393, %v7336, 0
    %v7467 = vsel %vm7393, %v7337, 0
    %v7470 = vsel %vm7393, %v7338, 0
    %v7473 = vsel %vm7393, %v7339, 0
    %v7476 = vsel %vm7393, %v7340, 0
    %v7479 = vsel %vm7393, %v7341, 0
    %v7482 = vsel %vm7393, %v7342, 0
    %v7485 = vsel %vm7393, %v7343, 0
    %v7488 = vsel %vm7393, %v7344, 0
    %v7491 = vsel %vm7393, %v7345, 0
    %v7494 = vsel %vm7393, %v7346, 0
    %v7497 = vsel %vm7393, %v7347, 0
    %v7500 = vsel %vm7393, %v7348, 0
    %v7503 = vsel %vm7393, %v7349, 0
    %v7506 = vsel %vm7393, %v7350, 0
    %v7509 = vsel %vm7393, %v7351, 0
    %v7512 = vsel %vm7393, %v7352, 0
    %v7515 = vsel %vm7393, %v7353, 0
    %v7518 = vsel %vm7393, %v7354, 0
    %v7521 = vsel %vm7393, %v7355, 0
    %v7524 = vsel %vm7393, %v7356, 0
    %v7527 = vsel %vm7393, %v7357, 0
    %v7530 = vsel %vm7393, %v7358, 0
    %v7533 = vsel %vm7393, %v7359, 0
    %v7536 = vsel %vm7393, %v7360, 0
    %v7539 = vsel %vm7393, %v7361, 0
    %v7542 = vsel %vm7393, %v7362, 0
    %v7545 = vsel %vm7393, %v7363, 0
    %v7548 = vsel %vm7393, %v7364, 0
    %v7551 = vsel %vm7393, %v7365, 0
    %v7554 = vsel %vm7393, %v7366, 0
    %v7557 = vsel %vm7393, %v7367, 0
    %v7560 = vsel %vm7393, %v7368, 0
    %v7563 = vsel %vm7393, %v7369, 0
    %v7566 = vsel %vm7393, %v7370, 0
    %v7569 = vsel %vm7393, %v7371, 0
    %v7572 = vsel %vm7393, %v7372, 0
    %v7575 = vsel %vm7393, %v7373, 0
    %v7578 = vsel %vm7393, %v7374, 0
    %v7581 = vsel %vm7393, %v7375, 0
    %v7584 = vsel %vm7393, %v7376, 0
    %7586 = vmatprep.subr.mxu0 0.0
    %7587 = vmatpush1.msra.mxu0 0.0
    %7588 = vmatprep.subr.mxu0 0.0
    %7589 = vmatpush1.msra.mxu0 0.0
    %7590 = vmatprep.subr.mxu0 0.0
    %7591 = vmatpush1.msra.mxu0 0.0
    %7592 = vmatprep.subr.mxu0 0.0
    %7593 = vmatpush1.msra.mxu0 0.0
    %7594 = vmatprep.subr.mxu0 0.0
    %7595 = vmatpush1.msra.mxu0 0.0
    %7596 = vmatprep.subr.mxu0 0.0
    %7597 = vmatpush1.msra.mxu0 0.0
    %7598 = vmatprep.subr.mxu0 0.0
    %7599 = vmatpush1.msra.mxu0 0.0
    %7600 = vmatprep.subr.mxu0 0.0
    %7601 = vmatpush1.msra.mxu0 %v7385
    %7602 = vmatprep.subr.mxu0 0.0
    %7603 = vmatpush1.msra.mxu0 %v7384
    %7604 = vmatprep.subr.mxu0 0.0
    %7605 = vmatpush1.msra.mxu0 %v7383
    %7606 = vmatprep.subr.mxu0 0.0
    %7607 = vmatpush1.msra.mxu0 %v7382
    %7608 = vmatprep.subr.mxu0 0.0
    %7609 = vmatpush1.msra.mxu0 %v7381
    %7610 = vmatprep.subr.mxu0 0.0
    %7611 = vmatpush1.msra.mxu0 %v7380
    %7612 = vmatprep.subr.mxu0 0.0
    %7613 = vmatpush1.msra.mxu0 %v7379
    %7614 = vmatprep.subr.mxu0 0.0
    %7615 = vmatpush1.msra.mxu0 %v7378
    %7616 = vmatprep.subr.mxu0 0.0
    %7617 = vmatpush1.msra.mxu0 %v7377
    %7618 = vmatprep.subr.mxu0 0.0
    %7619 = vmatpush2.msra.mxu0 0.0
    %7620 = vmatprep.subr.mxu0 0.0
    %7621 = vmatpush2.msra.mxu0 0.0
    %7622 = vmatprep.subr.mxu0 0.0
    %7623 = vmatpush2.msra.mxu0 0.0
    %7624 = vmatprep.subr.mxu0 0.0
    %7625 = vmatpush2.msra.mxu0 0.0
    %7626 = vmatprep.subr.mxu0 0.0
    %7627 = vmatpush2.msra.mxu0 0.0
    %7628 = vmatprep.subr.mxu0 0.0
    %7629 = vmatpush2.msra.mxu0 0.0
    %7630 = vmatprep.subr.mxu0 0.0
    %7631 = vmatpush2.msra.mxu0 0.0
    %7632 = vmatprep.subr.mxu0 0.0
    %7633 = vmatpush2.msra.mxu0 0.0
    %7634 = vmatprep.subr.mxu0 0.0
    %7635 = vmatpush2.msra.mxu0 0.0
    %7636 = vmatprep.subr.mxu0 0.0
    %7637 = vmatpush2.msra.mxu0 0.0
    %7638 = vmatprep.subr.mxu0 0.0
    %7639 = vmatpush2.msra.mxu0 0.0
    %7640 = vmatprep.subr.mxu0 0.0
    %7641 = vmatpush2.msra.mxu0 0.0
    %7642 = vmatprep.subr.mxu0 0.0
    %7643 = vmatpush2.msra.mxu0 0.0
    %7644 = vmatprep.subr.mxu0 0.0
    %7645 = vmatpush2.msra.mxu0 0.0
    %7646 = vmatprep.subr.mxu0 0.0
    %7647 = vmatpush2.msra.mxu0 0.0
    %7648 = vmatprep.subr.mxu0 0.0
    %7649 = vmatpush2.msra.mxu0 0.0
    %7650 = vmatprep.mubr.f32.mxu0 0.0
    %7651 = vmatmul.mubr.f32.gmra.mxu0 %v7395
    %v7652 = vpop.f32.mrf.mxu0
    %v7653 = vadd.f32 %v7391, %v7652
    %v7654 = vpop.f32.mrf.mxu0
    %7655 = vmatprep.mubr.f32.mxu0 0.0
    %7656 = vmatmul.mubr.f32.gmra.mxu0 %v7398
    %v7657 = vpop.f32.mrf.mxu0
    %v7658 = vadd.f32 %v7391, %v7657
    %v7659 = vpop.f32.mrf.mxu0
    %7660 = vmatprep.mubr.f32.mxu0 0.0
    %7661 = vmatmul.mubr.f32.gmra.mxu0 %v7401
    %v7662 = vpop.f32.mrf.mxu0
    %v7663 = vadd.f32 %v7391, %v7662
    %v7664 = vpop.f32.mrf.mxu0
    %7665 = vmatprep.mubr.f32.mxu0 0.0
    %7666 = vmatmul.mubr.f32.gmra.mxu0 %v7404
    %v7667 = vpop.f32.mrf.mxu0
    %v7668 = vadd.f32 %v7391, %v7667
    %v7669 = vpop.f32.mrf.mxu0
    %7670 = vmatprep.mubr.f32.mxu0 0.0
    %7671 = vmatmul.mubr.f32.gmra.mxu0 %v7407
    %v7672 = vpop.f32.mrf.mxu0
    %v7673 = vadd.f32 %v7391, %v7672
    %v7674 = vpop.f32.mrf.mxu0
    %7675 = vmatprep.mubr.f32.mxu0 0.0
    %7676 = vmatmul.mubr.f32.gmra.mxu0 %v7410
    %v7677 = vpop.f32.mrf.mxu0
    %v7678 = vadd.f32 %v7391, %v7677
    %v7679 = vpop.f32.mrf.mxu0
    %7680 = vmatprep.mubr.f32.mxu0 0.0
    %7681 = vmatmul.mubr.f32.gmra.mxu0 %v7413
    %v7682 = vpop.f32.mrf.mxu0
    %v7683 = vadd.f32 %v7391, %v7682
    %v7684 = vpop.f32.mrf.mxu0
    %7685 = vmatprep.mubr.f32.mxu0 0.0
    %7686 = vmatmul.mubr.f32.gmra.mxu0 %v7416
    %v7687 = vpop.f32.mrf.mxu0
    %v7688 = vadd.f32 %v7391, %v7687
    %v7689 = vpop.f32.mrf.mxu0
    %7690 = vmatprep.mubr.f32.mxu0 0.0
    %7691 = vmatmul.mubr.f32.gmra.mxu0 %v7419
    %v7692 = vpop.f32.mrf.mxu0
    %v7693 = vadd.f32 %v7391, %v7692
    %v7694 = vpop.f32.mrf.mxu0
    %7695 = vmatprep.mubr.f32.mxu0 0.0
    %7696 = vmatmul.mubr.f32.gmra.mxu0 %v7422
    %v7697 = vpop.f32.mrf.mxu0
    %v7698 = vadd.f32 %v7391, %v7697
    %v7699 = vpop.f32.mrf.mxu0
    %7700 = vmatprep.mubr.f32.mxu0 0.0
    %7701 = vmatmul.mubr.f32.gmra.mxu0 %v7425
    %v7702 = vpop.f32.mrf.mxu0
    %v7703 = vadd.f32 %v7391, %v7702
    %v7704 = vpop.f32.mrf.mxu0
    %7705 = vmatprep.mubr.f32.mxu0 0.0
    %7706 = vmatmul.mubr.f32.gmra.mxu0 %v7428
    %v7707 = vpop.f32.mrf.mxu0
    %v7708 = vadd.f32 %v7391, %v7707
    %v7709 = vpop.f32.mrf.mxu0
    %7710 = vmatprep.mubr.f32.mxu0 0.0
    %7711 = vmatmul.mubr.f32.gmra.mxu0 %v7431
    %v7712 = vpop.f32.mrf.mxu0
    %v7713 = vadd.f32 %v7391, %v7712
    %v7714 = vpop.f32.mrf.mxu0
    %7715 = vmatprep.mubr.f32.mxu0 0.0
    %7716 = vmatmul.mubr.f32.gmra.mxu0 %v7434
    %v7717 = vpop.f32.mrf.mxu0
    %v7718 = vadd.f32 %v7391, %v7717
    %v7719 = vpop.f32.mrf.mxu0
    %7720 = vmatprep.mubr.f32.mxu0 0.0
    %7721 = vmatmul.mubr.f32.gmra.mxu0 %v7437
    %v7722 = vpop.f32.mrf.mxu0
    %v7723 = vadd.f32 %v7391, %v7722
    %v7724 = vpop.f32.mrf.mxu0
    %7725 = vmatprep.mubr.f32.mxu0 0.0
    %7726 = vmatmul.mubr.f32.gmra.mxu0 %v7440
    %v7727 = vpop.f32.mrf.mxu0
    %v7728 = vadd.f32 %v7391, %v7727
    %v7729 = vpop.f32.mrf.mxu0
    %7730 = vmatprep.mubr.f32.mxu0 0.0
    %7731 = vmatmul.mubr.f32.gmra.mxu0 %v7443
    %v7732 = vpop.f32.mrf.mxu0
    %v7733 = vadd.f32 %v7391, %v7732
    %v7734 = vpop.f32.mrf.mxu0
    %7735 = vmatprep.mubr.f32.mxu0 0.0
    %7736 = vmatmul.mubr.f32.gmra.mxu0 %v7446
    %v7737 = vpop.f32.mrf.mxu0
    %v7738 = vadd.f32 %v7391, %v7737
    %v7739 = vpop.f32.mrf.mxu0
    %7740 = vmatprep.mubr.f32.mxu0 0.0
    %7741 = vmatmul.mubr.f32.gmra.mxu0 %v7449
    %v7742 = vpop.f32.mrf.mxu0
    %v7743 = vadd.f32 %v7391, %v7742
    %v7744 = vpop.f32.mrf.mxu0
    %7745 = vmatprep.mubr.f32.mxu0 0.0
    %7746 = vmatmul.mubr.f32.gmra.mxu0 %v7452
    %v7747 = vpop.f32.mrf.mxu0
    %v7748 = vadd.f32 %v7391, %v7747
    %v7749 = vpop.f32.mrf.mxu0
    %7750 = vmatprep.mubr.f32.mxu0 0.0
    %7751 = vmatmul.mubr.f32.gmra.mxu0 %v7455
    %v7752 = vpop.f32.mrf.mxu0
    %v7753 = vadd.f32 %v7391, %v7752
    %v7754 = vpop.f32.mrf.mxu0
    %7755 = vmatprep.mubr.f32.mxu0 0.0
    %7756 = vmatmul.mubr.f32.gmra.mxu0 %v7458
    %v7757 = vpop.f32.mrf.mxu0
    %v7758 = vadd.f32 %v7391, %v7757
    %v7759 = vpop.f32.mrf.mxu0
    %7760 = vmatprep.mubr.f32.mxu0 0.0
    %7761 = vmatmul.mubr.f32.gmra.mxu0 %v7461
    %v7762 = vpop.f32.mrf.mxu0
    %v7763 = vadd.f32 %v7391, %v7762
    %v7764 = vpop.f32.mrf.mxu0
    %7765 = vmatprep.mubr.f32.mxu0 0.0
    %7766 = vmatmul.mubr.f32.gmra.mxu0 %v7464
    %v7767 = vpop.f32.mrf.mxu0
    %v7768 = vadd.f32 %v7391, %v7767
    %v7769 = vpop.f32.mrf.mxu0
    %7770 = vmatprep.mubr.f32.mxu0 0.0
    %7771 = vmatmul.mubr.f32.gmra.mxu0 %v7467
    %v7772 = vpop.f32.mrf.mxu0
    %v7773 = vadd.f32 %v7391, %v7772
    %v7774 = vpop.f32.mrf.mxu0
    %7775 = vmatprep.mubr.f32.mxu0 0.0
    %7776 = vmatmul.mubr.f32.gmra.mxu0 %v7470
    %v7777 = vpop.f32.mrf.mxu0
    %v7778 = vadd.f32 %v7391, %v7777
    %v7779 = vpop.f32.mrf.mxu0
    %7780 = vmatprep.mubr.f32.mxu0 0.0
    %7781 = vmatmul.mubr.f32.gmra.mxu0 %v7473
    %v7782 = vpop.f32.mrf.mxu0
    %v7783 = vadd.f32 %v7391, %v7782
    %v7784 = vpop.f32.mrf.mxu0
    %7785 = vmatprep.mubr.f32.mxu0 0.0
    %7786 = vmatmul.mubr.f32.gmra.mxu0 %v7476
    %v7787 = vpop.f32.mrf.mxu0
    %v7788 = vadd.f32 %v7391, %v7787
    %v7789 = vpop.f32.mrf.mxu0
    %7790 = vmatprep.mubr.f32.mxu0 0.0
    %7791 = vmatmul.mubr.f32.gmra.mxu0 %v7479
    %v7792 = vpop.f32.mrf.mxu0
    %v7793 = vadd.f32 %v7391, %v7792
    %v7794 = vpop.f32.mrf.mxu0
    %7795 = vmatprep.mubr.f32.mxu0 0.0
    %7796 = vmatmul.mubr.f32.gmra.mxu0 %v7482
    %v7797 = vpop.f32.mrf.mxu0
    %v7798 = vadd.f32 %v7391, %v7797
    %v7799 = vpop.f32.mrf.mxu0
    %7800 = vmatprep.mubr.f32.mxu0 0.0
    %7801 = vmatmul.mubr.f32.gmra.mxu0 %v7485
    %v7802 = vpop.f32.mrf.mxu0
    %v7803 = vadd.f32 %v7391, %v7802
    %v7804 = vpop.f32.mrf.mxu0
    %7805 = vmatprep.mubr.f32.mxu0 0.0
    %7806 = vmatmul.mubr.f32.gmra.mxu0 %v7488
    %v7807 = vpop.f32.mrf.mxu0
    %v7808 = vadd.f32 %v7391, %v7807
    %v7809 = vpop.f32.mrf.mxu0
    %7810 = vmatprep.mubr.f32.mxu0 0.0
    %7811 = vmatmul.mubr.f32.gmra.mxu0 %v7491
    %v7812 = vpop.f32.mrf.mxu0
    %v7813 = vadd.f32 %v7391, %v7812
    %v7814 = vpop.f32.mrf.mxu0
    %7815 = vmatprep.mubr.f32.mxu0 0.0
    %7816 = vmatmul.mubr.f32.gmra.mxu0 %v7494
    %v7817 = vpop.f32.mrf.mxu0
    %v7818 = vadd.f32 %v7391, %v7817
    %v7819 = vpop.f32.mrf.mxu0
    %7820 = vmatprep.mubr.f32.mxu0 0.0
    %7821 = vmatmul.mubr.f32.gmra.mxu0 %v7497
    %v7822 = vpop.f32.mrf.mxu0
    %v7823 = vadd.f32 %v7391, %v7822
    %v7824 = vpop.f32.mrf.mxu0
    %7825 = vmatprep.mubr.f32.mxu0 0.0
    %7826 = vmatmul.mubr.f32.gmra.mxu0 %v7500
    %v7827 = vpop.f32.mrf.mxu0
    %v7828 = vadd.f32 %v7391, %v7827
    %v7829 = vpop.f32.mrf.mxu0
    %7830 = vmatprep.mubr.f32.mxu0 0.0
    %7831 = vmatmul.mubr.f32.gmra.mxu0 %v7503
    %v7832 = vpop.f32.mrf.mxu0
    %v7833 = vadd.f32 %v7391, %v7832
    %v7834 = vpop.f32.mrf.mxu0
    %7835 = vmatprep.mubr.f32.mxu0 0.0
    %7836 = vmatmul.mubr.f32.gmra.mxu0 %v7506
    %v7837 = vpop.f32.mrf.mxu0
    %v7838 = vadd.f32 %v7391, %v7837
    %v7839 = vpop.f32.mrf.mxu0
    %7840 = vmatprep.mubr.f32.mxu0 0.0
    %7841 = vmatmul.mubr.f32.gmra.mxu0 %v7509
    %v7842 = vpop.f32.mrf.mxu0
    %v7843 = vadd.f32 %v7391, %v7842
    %v7844 = vpop.f32.mrf.mxu0
    %7845 = vmatprep.mubr.f32.mxu0 0.0
    %7846 = vmatmul.mubr.f32.gmra.mxu0 %v7512
    %v7847 = vpop.f32.mrf.mxu0
    %v7848 = vadd.f32 %v7391, %v7847
    %v7849 = vpop.f32.mrf.mxu0
    %7850 = vmatprep.mubr.f32.mxu0 0.0
    %7851 = vmatmul.mubr.f32.gmra.mxu0 %v7515
    %v7852 = vpop.f32.mrf.mxu0
    %v7853 = vadd.f32 %v7391, %v7852
    %v7854 = vpop.f32.mrf.mxu0
    %7855 = vmatprep.mubr.f32.mxu0 0.0
    %7856 = vmatmul.mubr.f32.gmra.mxu0 %v7518
    %v7857 = vpop.f32.mrf.mxu0
    %v7858 = vadd.f32 %v7391, %v7857
    %v7859 = vpop.f32.mrf.mxu0
    %7860 = vmatprep.mubr.f32.mxu0 0.0
    %7861 = vmatmul.mubr.f32.gmra.mxu0 %v7521
    %v7862 = vpop.f32.mrf.mxu0
    %v7863 = vadd.f32 %v7391, %v7862
    %v7864 = vpop.f32.mrf.mxu0
    %7865 = vmatprep.mubr.f32.mxu0 0.0
    %7866 = vmatmul.mubr.f32.gmra.mxu0 %v7524
    %v7867 = vpop.f32.mrf.mxu0
    %v7868 = vadd.f32 %v7391, %v7867
    %v7869 = vpop.f32.mrf.mxu0
    %7870 = vmatprep.mubr.f32.mxu0 0.0
    %7871 = vmatmul.mubr.f32.gmra.mxu0 %v7527
    %v7872 = vpop.f32.mrf.mxu0
    %v7873 = vadd.f32 %v7391, %v7872
    %v7874 = vpop.f32.mrf.mxu0
    %7875 = vmatprep.mubr.f32.mxu0 0.0
    %7876 = vmatmul.mubr.f32.gmra.mxu0 %v7530
    %v7877 = vpop.f32.mrf.mxu0
    %v7878 = vadd.f32 %v7391, %v7877
    %v7879 = vpop.f32.mrf.mxu0
    %7880 = vmatprep.mubr.f32.mxu0 0.0
    %7881 = vmatmul.mubr.f32.gmra.mxu0 %v7533
    %v7882 = vpop.f32.mrf.mxu0
    %v7883 = vadd.f32 %v7391, %v7882
    %v7884 = vpop.f32.mrf.mxu0
    %7885 = vmatprep.mubr.f32.mxu0 0.0
    %7886 = vmatmul.mubr.f32.gmra.mxu0 %v7536
    %v7887 = vpop.f32.mrf.mxu0
    %v7888 = vadd.f32 %v7391, %v7887
    %v7889 = vpop.f32.mrf.mxu0
    %7890 = vmatprep.mubr.f32.mxu0 0.0
    %7891 = vmatmul.mubr.f32.gmra.mxu0 %v7539
    %v7892 = vpop.f32.mrf.mxu0
    %v7893 = vadd.f32 %v7391, %v7892
    %v7894 = vpop.f32.mrf.mxu0
    %7895 = vmatprep.mubr.f32.mxu0 0.0
    %7896 = vmatmul.mubr.f32.gmra.mxu0 %v7542
    %v7897 = vpop.f32.mrf.mxu0
    %v7898 = vadd.f32 %v7391, %v7897
    %v7899 = vpop.f32.mrf.mxu0
    %7900 = vmatprep.mubr.f32.mxu0 0.0
    %7901 = vmatmul.mubr.f32.gmra.mxu0 %v7545
    %v7902 = vpop.f32.mrf.mxu0
    %v7903 = vadd.f32 %v7391, %v7902
    %v7904 = vpop.f32.mrf.mxu0
    %7905 = vmatprep.mubr.f32.mxu0 0.0
    %7906 = vmatmul.mubr.f32.gmra.mxu0 %v7548
    %v7907 = vpop.f32.mrf.mxu0
    %v7908 = vadd.f32 %v7391, %v7907
    %v7909 = vpop.f32.mrf.mxu0
    %7910 = vmatprep.mubr.f32.mxu0 0.0
    %7911 = vmatmul.mubr.f32.gmra.mxu0 %v7551
    %v7912 = vpop.f32.mrf.mxu0
    %v7913 = vadd.f32 %v7391, %v7912
    %v7914 = vpop.f32.mrf.mxu0
    %7915 = vmatprep.mubr.f32.mxu0 0.0
    %7916 = vmatmul.mubr.f32.gmra.mxu0 %v7554
    %v7917 = vpop.f32.mrf.mxu0
    %v7918 = vadd.f32 %v7391, %v7917
    %v7919 = vpop.f32.mrf.mxu0
    %7920 = vmatprep.mubr.f32.mxu0 0.0
    %7921 = vmatmul.mubr.f32.gmra.mxu0 %v7557
    %v7922 = vpop.f32.mrf.mxu0
    %v7923 = vadd.f32 %v7391, %v7922
    %v7924 = vpop.f32.mrf.mxu0
    %7925 = vmatprep.mubr.f32.mxu0 0.0
    %7926 = vmatmul.mubr.f32.gmra.mxu0 %v7560
    %v7927 = vpop.f32.mrf.mxu0
    %v7928 = vadd.f32 %v7391, %v7927
    %v7929 = vpop.f32.mrf.mxu0
    %7930 = vmatprep.mubr.f32.mxu0 0.0
    %7931 = vmatmul.mubr.f32.gmra.mxu0 %v7563
    %v7932 = vpop.f32.mrf.mxu0
    %v7933 = vadd.f32 %v7391, %v7932
    %v7934 = vpop.f32.mrf.mxu0
    %7935 = vmatprep.mubr.f32.mxu0 0.0
    %7936 = vmatmul.mubr.f32.gmra.mxu0 %v7566
    %v7937 = vpop.f32.mrf.mxu0
    %v7938 = vadd.f32 %v7391, %v7937
    %v7939 = vpop.f32.mrf.mxu0
    %7940 = vmatprep.mubr.f32.mxu0 0.0
    %7941 = vmatmul.mubr.f32.gmra.mxu0 %v7569
    %v7942 = vpop.f32.mrf.mxu0
    %v7943 = vadd.f32 %v7391, %v7942
    %v7944 = vpop.f32.mrf.mxu0
    %7945 = vmatprep.mubr.f32.mxu0 0.0
    %7946 = vmatmul.mubr.f32.gmra.mxu0 %v7572
    %v7947 = vpop.f32.mrf.mxu0
    %v7948 = vadd.f32 %v7391, %v7947
    %v7949 = vpop.f32.mrf.mxu0
    %7950 = vmatprep.mubr.f32.mxu0 0.0
    %7951 = vmatmul.mubr.f32.gmra.mxu0 %v7575
    %v7952 = vpop.f32.mrf.mxu0
    %v7953 = vadd.f32 %v7391, %v7952
    %v7954 = vpop.f32.mrf.mxu0
    %7955 = vmatprep.mubr.f32.mxu0 0.0
    %7956 = vmatmul.mubr.f32.gmra.mxu0 %v7578
    %v7957 = vpop.f32.mrf.mxu0
    %v7958 = vadd.f32 %v7391, %v7957
    %v7959 = vpop.f32.mrf.mxu0
    %7960 = vmatprep.mubr.f32.mxu0 0.0
    %7961 = vmatmul.mubr.f32.gmra.mxu0 %v7581
    %v7962 = vpop.f32.mrf.mxu0
    %v7963 = vadd.f32 %v7391, %v7962
    %v7964 = vpop.f32.mrf.mxu0
    %7965 = vmatprep.mubr.f32.mxu0 0.0
    %7966 = vmatmul.mubr.f32.gmra.mxu0 %v7584
    %v7967 = vpop.f32.mrf.mxu0
    %v7968 = vadd.f32 %v7391, %v7967
    %v7969 = vpop.f32.mrf.mxu0
    %7970 = vdwg.mxu0
    %v7971 = vmax.f32 %v7653, 0.0
    %v7972 = vmax.f32 %v7658, 0.0
    %v7973 = vmax.f32 %v7663, 0.0
    %v7974 = vmax.f32 %v7668, 0.0
    %v7975 = vmax.f32 %v7673, 0.0
    %v7976 = vmax.f32 %v7678, 0.0
    %v7977 = vmax.f32 %v7683, 0.0
    %v7978 = vmax.f32 %v7688, 0.0
    %v7979 = vmax.f32 %v7693, 0.0
    %v7980 = vmax.f32 %v7698, 0.0
    %v7981 = vmax.f32 %v7703, 0.0
    %v7982 = vmax.f32 %v7708, 0.0
    %v7983 = vmax.f32 %v7713, 0.0
    %v7984 = vmax.f32 %v7718, 0.0
    %v7985 = vmax.f32 %v7723, 0.0
    %v7986 = vmax.f32 %v7728, 0.0
    %v7987 = vmax.f32 %v7733, 0.0
    %v7988 = vmax.f32 %v7738, 0.0
    %v7989 = vmax.f32 %v7743, 0.0
    %v7990 = vmax.f32 %v7748, 0.0
    %v7991 = vmax.f32 %v7753, 0.0
    %v7992 = vmax.f32 %v7758, 0.0
    %v7993 = vmax.f32 %v7763, 0.0
    %v7994 = vmax.f32 %v7768, 0.0
    %v7995 = vmax.f32 %v7773, 0.0
    %v7996 = vmax.f32 %v7778, 0.0
    %v7997 = vmax.f32 %v7783, 0.0
    %v7998 = vmax.f32 %v7788, 0.0
    %v7999 = vmax.f32 %v7793, 0.0
    %v8000 = vmax.f32 %v7798, 0.0
    %v8001 = vmax.f32 %v7803, 0.0
    %v8002 = vmax.f32 %v7808, 0.0
    %v8003 = vmax.f32 %v7813, 0.0
    %v8004 = vmax.f32 %v7818, 0.0
    %v8005 = vmax.f32 %v7823, 0.0
    %v8006 = vmax.f32 %v7828, 0.0
    %v8007 = vmax.f32 %v7833, 0.0
    %v8008 = vmax.f32 %v7838, 0.0
    %v8009 = vmax.f32 %v7843, 0.0
    %v8010 = vmax.f32 %v7848, 0.0
    %v8011 = vmax.f32 %v7853, 0.0
    %v8012 = vmax.f32 %v7858, 0.0
    %v8013 = vmax.f32 %v7863, 0.0
    %v8014 = vmax.f32 %v7868, 0.0
    %v8015 = vmax.f32 %v7873, 0.0
    %v8016 = vmax.f32 %v7878, 0.0
    %v8017 = vmax.f32 %v7883, 0.0
    %v8018 = vmax.f32 %v7888, 0.0
    %v8019 = vmax.f32 %v7893, 0.0
    %v8020 = vmax.f32 %v7898, 0.0
    %v8021 = vmax.f32 %v7903, 0.0
    %v8022 = vmax.f32 %v7908, 0.0
    %v8023 = vmax.f32 %v7913, 0.0
    %v8024 = vmax.f32 %v7918, 0.0
    %v8025 = vmax.f32 %v7923, 0.0
    %v8026 = vmax.f32 %v7928, 0.0
    %v8027 = vmax.f32 %v7933, 0.0
    %v8028 = vmax.f32 %v7938, 0.0
    %v8029 = vmax.f32 %v7943, 0.0
    %v8030 = vmax.f32 %v7948, 0.0
    %v8031 = vmax.f32 %v7953, 0.0
    %v8032 = vmax.f32 %v7958, 0.0
    %v8033 = vmax.f32 %v7963, 0.0
    %v8034 = vmax.f32 %v7968, 0.0
    %v8099 = vcombine.high %v7971, %v7971
    %v8101 = vunpack.c.l.s4 1983009808
    %v8102 = vunpack.c.0.s8 %v8101
    %v8103 = vlaneseq
    %v8104 = vshrl.u32 %v8103, 7
    %v8105 = vsub.s32 %v8102, %v8104
    %v8106 = vrot.slane %v7971, %v8105
    %v8108 = vunpack.c.l.s4 1983009808
    %v8109 = vunpack.c.0.s8 %v8108
    %v8110 = vlaneseq
    %v8111 = vshrl.u32 %v8110, 7
    %v8112 = vsub.s32 %v8109, %v8111
    %v8113 = vrot.slane %v8099, %v8112
    %v8114 = vcombine.high %v8106, %v8106
    %v8115 = vcombine.high %v8113, %v8113
    %v8116 = vcombine.high %v7972, %v7972
    %v8118 = vunpack.c.l.s4 1983009808
    %v8119 = vunpack.c.0.s8 %v8118
    %v8120 = vlaneseq
    %v8121 = vshrl.u32 %v8120, 7
    %v8122 = vsub.s32 %v8119, %v8121
    %v8123 = vrot.slane %v7972, %v8122
    %v8125 = vunpack.c.l.s4 1983009808
    %v8126 = vunpack.c.0.s8 %v8125
    %v8127 = vlaneseq
    %v8128 = vshrl.u32 %v8127, 7
    %v8129 = vsub.s32 %v8126, %v8128
    %v8130 = vrot.slane %v8116, %v8129
    %v8131 = vcombine.high %v8123, %v8123
    %v8132 = vcombine.high %v8130, %v8130
    %v8133 = vcombine.high %v7973, %v7973
    %v8135 = vunpack.c.l.s4 1983009808
    %v8136 = vunpack.c.0.s8 %v8135
    %v8137 = vlaneseq
    %v8138 = vshrl.u32 %v8137, 7
    %v8139 = vsub.s32 %v8136, %v8138
    %v8140 = vrot.slane %v7973, %v8139
    %v8142 = vunpack.c.l.s4 1983009808
    %v8143 = vunpack.c.0.s8 %v8142
    %v8144 = vlaneseq
    %v8145 = vshrl.u32 %v8144, 7
    %v8146 = vsub.s32 %v8143, %v8145
    %v8147 = vrot.slane %v8133, %v8146
    %v8148 = vcombine.high %v8140, %v8140
    %v8149 = vcombine.high %v8147, %v8147
    %v8150 = vcombine.high %v7974, %v7974
    %v8152 = vunpack.c.l.s4 1983009808
    %v8153 = vunpack.c.0.s8 %v8152
    %v8154 = vlaneseq
    %v8155 = vshrl.u32 %v8154, 7
    %v8156 = vsub.s32 %v8153, %v8155
    %v8157 = vrot.slane %v7974, %v8156
    %v8159 = vunpack.c.l.s4 1983009808
    %v8160 = vunpack.c.0.s8 %v8159
    %v8161 = vlaneseq
    %v8162 = vshrl.u32 %v8161, 7
    %v8163 = vsub.s32 %v8160, %v8162
    %v8164 = vrot.slane %v8150, %v8163
    %v8165 = vcombine.high %v8157, %v8157
    %v8166 = vcombine.high %v8164, %v8164
    %v8167 = vcombine.high %v7975, %v7975
    %v8169 = vunpack.c.l.s4 1983009808
    %v8170 = vunpack.c.0.s8 %v8169
    %v8171 = vlaneseq
    %v8172 = vshrl.u32 %v8171, 7
    %v8173 = vsub.s32 %v8170, %v8172
    %v8174 = vrot.slane %v7975, %v8173
    %v8176 = vunpack.c.l.s4 1983009808
    %v8177 = vunpack.c.0.s8 %v8176
    %v8178 = vlaneseq
    %v8179 = vshrl.u32 %v8178, 7
    %v8180 = vsub.s32 %v8177, %v8179
    %v8181 = vrot.slane %v8167, %v8180
    %v8182 = vcombine.high %v8174, %v8174
    %v8183 = vcombine.high %v8181, %v8181
    %v8184 = vcombine.high %v7976, %v7976
    %v8186 = vunpack.c.l.s4 1983009808
    %v8187 = vunpack.c.0.s8 %v8186
    %v8188 = vlaneseq
    %v8189 = vshrl.u32 %v8188, 7
    %v8190 = vsub.s32 %v8187, %v8189
    %v8191 = vrot.slane %v7976, %v8190
    %v8193 = vunpack.c.l.s4 1983009808
    %v8194 = vunpack.c.0.s8 %v8193
    %v8195 = vlaneseq
    %v8196 = vshrl.u32 %v8195, 7
    %v8197 = vsub.s32 %v8194, %v8196
    %v8198 = vrot.slane %v8184, %v8197
    %v8199 = vcombine.high %v8191, %v8191
    %v8200 = vcombine.high %v8198, %v8198
    %v8201 = vcombine.high %v7977, %v7977
    %v8203 = vunpack.c.l.s4 1983009808
    %v8204 = vunpack.c.0.s8 %v8203
    %v8205 = vlaneseq
    %v8206 = vshrl.u32 %v8205, 7
    %v8207 = vsub.s32 %v8204, %v8206
    %v8208 = vrot.slane %v7977, %v8207
    %v8210 = vunpack.c.l.s4 1983009808
    %v8211 = vunpack.c.0.s8 %v8210
    %v8212 = vlaneseq
    %v8213 = vshrl.u32 %v8212, 7
    %v8214 = vsub.s32 %v8211, %v8213
    %v8215 = vrot.slane %v8201, %v8214
    %v8216 = vcombine.high %v8208, %v8208
    %v8217 = vcombine.high %v8215, %v8215
    %v8218 = vcombine.high %v7978, %v7978
    %v8220 = vunpack.c.l.s4 1983009808
    %v8221 = vunpack.c.0.s8 %v8220
    %v8222 = vlaneseq
    %v8223 = vshrl.u32 %v8222, 7
    %v8224 = vsub.s32 %v8221, %v8223
    %v8225 = vrot.slane %v7978, %v8224
    %v8227 = vunpack.c.l.s4 1983009808
    %v8228 = vunpack.c.0.s8 %v8227
    %v8229 = vlaneseq
    %v8230 = vshrl.u32 %v8229, 7
    %v8231 = vsub.s32 %v8228, %v8230
    %v8232 = vrot.slane %v8218, %v8231
    %v8233 = vcombine.high %v8225, %v8225
    %v8234 = vcombine.high %v8232, %v8232
    %v8235 = vcombine.high %v7979, %v7979
    %v8237 = vunpack.c.l.s4 1983009808
    %v8238 = vunpack.c.0.s8 %v8237
    %v8239 = vlaneseq
    %v8240 = vshrl.u32 %v8239, 7
    %v8241 = vsub.s32 %v8238, %v8240
    %v8242 = vrot.slane %v7979, %v8241
    %v8244 = vunpack.c.l.s4 1983009808
    %v8245 = vunpack.c.0.s8 %v8244
    %v8246 = vlaneseq
    %v8247 = vshrl.u32 %v8246, 7
    %v8248 = vsub.s32 %v8245, %v8247
    %v8249 = vrot.slane %v8235, %v8248
    %v8250 = vcombine.high %v8242, %v8242
    %v8251 = vcombine.high %v8249, %v8249
    %v8252 = vcombine.high %v7980, %v7980
    %v8254 = vunpack.c.l.s4 1983009808
    %v8255 = vunpack.c.0.s8 %v8254
    %v8256 = vlaneseq
    %v8257 = vshrl.u32 %v8256, 7
    %v8258 = vsub.s32 %v8255, %v8257
    %v8259 = vrot.slane %v7980, %v8258
    %v8261 = vunpack.c.l.s4 1983009808
    %v8262 = vunpack.c.0.s8 %v8261
    %v8263 = vlaneseq
    %v8264 = vshrl.u32 %v8263, 7
    %v8265 = vsub.s32 %v8262, %v8264
    %v8266 = vrot.slane %v8252, %v8265
    %v8267 = vcombine.high %v8259, %v8259
    %v8268 = vcombine.high %v8266, %v8266
    %v8269 = vcombine.high %v7981, %v7981
    %v8271 = vunpack.c.l.s4 1983009808
    %v8272 = vunpack.c.0.s8 %v8271
    %v8273 = vlaneseq
    %v8274 = vshrl.u32 %v8273, 7
    %v8275 = vsub.s32 %v8272, %v8274
    %v8276 = vrot.slane %v7981, %v8275
    %v8278 = vunpack.c.l.s4 1983009808
    %v8279 = vunpack.c.0.s8 %v8278
    %v8280 = vlaneseq
    %v8281 = vshrl.u32 %v8280, 7
    %v8282 = vsub.s32 %v8279, %v8281
    %v8283 = vrot.slane %v8269, %v8282
    %v8284 = vcombine.high %v8276, %v8276
    %v8285 = vcombine.high %v8283, %v8283
    %v8286 = vcombine.high %v7982, %v7982
    %v8288 = vunpack.c.l.s4 1983009808
    %v8289 = vunpack.c.0.s8 %v8288
    %v8290 = vlaneseq
    %v8291 = vshrl.u32 %v8290, 7
    %v8292 = vsub.s32 %v8289, %v8291
    %v8293 = vrot.slane %v7982, %v8292
    %v8295 = vunpack.c.l.s4 1983009808
    %v8296 = vunpack.c.0.s8 %v8295
    %v8297 = vlaneseq
    %v8298 = vshrl.u32 %v8297, 7
    %v8299 = vsub.s32 %v8296, %v8298
    %v8300 = vrot.slane %v8286, %v8299
    %v8301 = vcombine.high %v8293, %v8293
    %v8302 = vcombine.high %v8300, %v8300
    %v8303 = vcombine.high %v7983, %v7983
    %v8305 = vunpack.c.l.s4 1983009808
    %v8306 = vunpack.c.0.s8 %v8305
    %v8307 = vlaneseq
    %v8308 = vshrl.u32 %v8307, 7
    %v8309 = vsub.s32 %v8306, %v8308
    %v8310 = vrot.slane %v7983, %v8309
    %v8312 = vunpack.c.l.s4 1983009808
    %v8313 = vunpack.c.0.s8 %v8312
    %v8314 = vlaneseq
    %v8315 = vshrl.u32 %v8314, 7
    %v8316 = vsub.s32 %v8313, %v8315
    %v8317 = vrot.slane %v8303, %v8316
    %v8318 = vcombine.high %v8310, %v8310
    %v8319 = vcombine.high %v8317, %v8317
    %v8320 = vcombine.high %v7984, %v7984
    %v8322 = vunpack.c.l.s4 1983009808
    %v8323 = vunpack.c.0.s8 %v8322
    %v8324 = vlaneseq
    %v8325 = vshrl.u32 %v8324, 7
    %v8326 = vsub.s32 %v8323, %v8325
    %v8327 = vrot.slane %v7984, %v8326
    %v8329 = vunpack.c.l.s4 1983009808
    %v8330 = vunpack.c.0.s8 %v8329
    %v8331 = vlaneseq
    %v8332 = vshrl.u32 %v8331, 7
    %v8333 = vsub.s32 %v8330, %v8332
    %v8334 = vrot.slane %v8320, %v8333
    %v8335 = vcombine.high %v8327, %v8327
    %v8336 = vcombine.high %v8334, %v8334
    %v8337 = vcombine.high %v7985, %v7985
    %v8339 = vunpack.c.l.s4 1983009808
    %v8340 = vunpack.c.0.s8 %v8339
    %v8341 = vlaneseq
    %v8342 = vshrl.u32 %v8341, 7
    %v8343 = vsub.s32 %v8340, %v8342
    %v8344 = vrot.slane %v7985, %v8343
    %v8346 = vunpack.c.l.s4 1983009808
    %v8347 = vunpack.c.0.s8 %v8346
    %v8348 = vlaneseq
    %v8349 = vshrl.u32 %v8348, 7
    %v8350 = vsub.s32 %v8347, %v8349
    %v8351 = vrot.slane %v8337, %v8350
    %v8352 = vcombine.high %v8344, %v8344
    %v8353 = vcombine.high %v8351, %v8351
    %v8354 = vcombine.high %v7986, %v7986
    %v8356 = vunpack.c.l.s4 1983009808
    %v8357 = vunpack.c.0.s8 %v8356
    %v8358 = vlaneseq
    %v8359 = vshrl.u32 %v8358, 7
    %v8360 = vsub.s32 %v8357, %v8359
    %v8361 = vrot.slane %v7986, %v8360
    %v8363 = vunpack.c.l.s4 1983009808
    %v8364 = vunpack.c.0.s8 %v8363
    %v8365 = vlaneseq
    %v8366 = vshrl.u32 %v8365, 7
    %v8367 = vsub.s32 %v8364, %v8366
    %v8368 = vrot.slane %v8354, %v8367
    %v8369 = vcombine.high %v8361, %v8361
    %v8370 = vcombine.high %v8368, %v8368
    %v8371 = vcombine.high %v7987, %v7987
    %v8373 = vunpack.c.l.s4 1983009808
    %v8374 = vunpack.c.0.s8 %v8373
    %v8375 = vlaneseq
    %v8376 = vshrl.u32 %v8375, 7
    %v8377 = vsub.s32 %v8374, %v8376
    %v8378 = vrot.slane %v7987, %v8377
    %v8380 = vunpack.c.l.s4 1983009808
    %v8381 = vunpack.c.0.s8 %v8380
    %v8382 = vlaneseq
    %v8383 = vshrl.u32 %v8382, 7
    %v8384 = vsub.s32 %v8381, %v8383
    %v8385 = vrot.slane %v8371, %v8384
    %v8386 = vcombine.high %v8378, %v8378
    %v8387 = vcombine.high %v8385, %v8385
    %v8388 = vcombine.high %v7988, %v7988
    %v8390 = vunpack.c.l.s4 1983009808
    %v8391 = vunpack.c.0.s8 %v8390
    %v8392 = vlaneseq
    %v8393 = vshrl.u32 %v8392, 7
    %v8394 = vsub.s32 %v8391, %v8393
    %v8395 = vrot.slane %v7988, %v8394
    %v8397 = vunpack.c.l.s4 1983009808
    %v8398 = vunpack.c.0.s8 %v8397
    %v8399 = vlaneseq
    %v8400 = vshrl.u32 %v8399, 7
    %v8401 = vsub.s32 %v8398, %v8400
    %v8402 = vrot.slane %v8388, %v8401
    %v8403 = vcombine.high %v8395, %v8395
    %v8404 = vcombine.high %v8402, %v8402
    %v8405 = vcombine.high %v7989, %v7989
    %v8407 = vunpack.c.l.s4 1983009808
    %v8408 = vunpack.c.0.s8 %v8407
    %v8409 = vlaneseq
    %v8410 = vshrl.u32 %v8409, 7
    %v8411 = vsub.s32 %v8408, %v8410
    %v8412 = vrot.slane %v7989, %v8411
    %v8414 = vunpack.c.l.s4 1983009808
    %v8415 = vunpack.c.0.s8 %v8414
    %v8416 = vlaneseq
    %v8417 = vshrl.u32 %v8416, 7
    %v8418 = vsub.s32 %v8415, %v8417
    %v8419 = vrot.slane %v8405, %v8418
    %v8420 = vcombine.high %v8412, %v8412
    %v8421 = vcombine.high %v8419, %v8419
    %v8422 = vcombine.high %v7990, %v7990
    %v8424 = vunpack.c.l.s4 1983009808
    %v8425 = vunpack.c.0.s8 %v8424
    %v8426 = vlaneseq
    %v8427 = vshrl.u32 %v8426, 7
    %v8428 = vsub.s32 %v8425, %v8427
    %v8429 = vrot.slane %v7990, %v8428
    %v8431 = vunpack.c.l.s4 1983009808
    %v8432 = vunpack.c.0.s8 %v8431
    %v8433 = vlaneseq
    %v8434 = vshrl.u32 %v8433, 7
    %v8435 = vsub.s32 %v8432, %v8434
    %v8436 = vrot.slane %v8422, %v8435
    %v8437 = vcombine.high %v8429, %v8429
    %v8438 = vcombine.high %v8436, %v8436
    %v8439 = vcombine.high %v7991, %v7991
    %v8441 = vunpack.c.l.s4 1983009808
    %v8442 = vunpack.c.0.s8 %v8441
    %v8443 = vlaneseq
    %v8444 = vshrl.u32 %v8443, 7
    %v8445 = vsub.s32 %v8442, %v8444
    %v8446 = vrot.slane %v7991, %v8445
    %v8448 = vunpack.c.l.s4 1983009808
    %v8449 = vunpack.c.0.s8 %v8448
    %v8450 = vlaneseq
    %v8451 = vshrl.u32 %v8450, 7
    %v8452 = vsub.s32 %v8449, %v8451
    %v8453 = vrot.slane %v8439, %v8452
    %v8454 = vcombine.high %v8446, %v8446
    %v8455 = vcombine.high %v8453, %v8453
    %v8456 = vcombine.high %v7992, %v7992
    %v8458 = vunpack.c.l.s4 1983009808
    %v8459 = vunpack.c.0.s8 %v8458
    %v8460 = vlaneseq
    %v8461 = vshrl.u32 %v8460, 7
    %v8462 = vsub.s32 %v8459, %v8461
    %v8463 = vrot.slane %v7992, %v8462
    %v8465 = vunpack.c.l.s4 1983009808
    %v8466 = vunpack.c.0.s8 %v8465
    %v8467 = vlaneseq
    %v8468 = vshrl.u32 %v8467, 7
    %v8469 = vsub.s32 %v8466, %v8468
    %v8470 = vrot.slane %v8456, %v8469
    %v8471 = vcombine.high %v8463, %v8463
    %v8472 = vcombine.high %v8470, %v8470
    %v8473 = vcombine.high %v7993, %v7993
    %v8475 = vunpack.c.l.s4 1983009808
    %v8476 = vunpack.c.0.s8 %v8475
    %v8477 = vlaneseq
    %v8478 = vshrl.u32 %v8477, 7
    %v8479 = vsub.s32 %v8476, %v8478
    %v8480 = vrot.slane %v7993, %v8479
    %v8482 = vunpack.c.l.s4 1983009808
    %v8483 = vunpack.c.0.s8 %v8482
    %v8484 = vlaneseq
    %v8485 = vshrl.u32 %v8484, 7
    %v8486 = vsub.s32 %v8483, %v8485
    %v8487 = vrot.slane %v8473, %v8486
    %v8488 = vcombine.high %v8480, %v8480
    %v8489 = vcombine.high %v8487, %v8487
    %v8490 = vcombine.high %v7994, %v7994
    %v8492 = vunpack.c.l.s4 1983009808
    %v8493 = vunpack.c.0.s8 %v8492
    %v8494 = vlaneseq
    %v8495 = vshrl.u32 %v8494, 7
    %v8496 = vsub.s32 %v8493, %v8495
    %v8497 = vrot.slane %v7994, %v8496
    %v8499 = vunpack.c.l.s4 1983009808
    %v8500 = vunpack.c.0.s8 %v8499
    %v8501 = vlaneseq
    %v8502 = vshrl.u32 %v8501, 7
    %v8503 = vsub.s32 %v8500, %v8502
    %v8504 = vrot.slane %v8490, %v8503
    %v8505 = vcombine.high %v8497, %v8497
    %v8506 = vcombine.high %v8504, %v8504
    %v8507 = vcombine.high %v7995, %v7995
    %v8509 = vunpack.c.l.s4 1983009808
    %v8510 = vunpack.c.0.s8 %v8509
    %v8511 = vlaneseq
    %v8512 = vshrl.u32 %v8511, 7
    %v8513 = vsub.s32 %v8510, %v8512
    %v8514 = vrot.slane %v7995, %v8513
    %v8516 = vunpack.c.l.s4 1983009808
    %v8517 = vunpack.c.0.s8 %v8516
    %v8518 = vlaneseq
    %v8519 = vshrl.u32 %v8518, 7
    %v8520 = vsub.s32 %v8517, %v8519
    %v8521 = vrot.slane %v8507, %v8520
    %v8522 = vcombine.high %v8514, %v8514
    %v8523 = vcombine.high %v8521, %v8521
    %v8524 = vcombine.high %v7996, %v7996
    %v8526 = vunpack.c.l.s4 1983009808
    %v8527 = vunpack.c.0.s8 %v8526
    %v8528 = vlaneseq
    %v8529 = vshrl.u32 %v8528, 7
    %v8530 = vsub.s32 %v8527, %v8529
    %v8531 = vrot.slane %v7996, %v8530
    %v8533 = vunpack.c.l.s4 1983009808
    %v8534 = vunpack.c.0.s8 %v8533
    %v8535 = vlaneseq
    %v8536 = vshrl.u32 %v8535, 7
    %v8537 = vsub.s32 %v8534, %v8536
    %v8538 = vrot.slane %v8524, %v8537
    %v8539 = vcombine.high %v8531, %v8531
    %v8540 = vcombine.high %v8538, %v8538
    %v8541 = vcombine.high %v7997, %v7997
    %v8543 = vunpack.c.l.s4 1983009808
    %v8544 = vunpack.c.0.s8 %v8543
    %v8545 = vlaneseq
    %v8546 = vshrl.u32 %v8545, 7
    %v8547 = vsub.s32 %v8544, %v8546
    %v8548 = vrot.slane %v7997, %v8547
    %v8550 = vunpack.c.l.s4 1983009808
    %v8551 = vunpack.c.0.s8 %v8550
    %v8552 = vlaneseq
    %v8553 = vshrl.u32 %v8552, 7
    %v8554 = vsub.s32 %v8551, %v8553
    %v8555 = vrot.slane %v8541, %v8554
    %v8556 = vcombine.high %v8548, %v8548
    %v8557 = vcombine.high %v8555, %v8555
    %v8558 = vcombine.high %v7998, %v7998
    %v8560 = vunpack.c.l.s4 1983009808
    %v8561 = vunpack.c.0.s8 %v8560
    %v8562 = vlaneseq
    %v8563 = vshrl.u32 %v8562, 7
    %v8564 = vsub.s32 %v8561, %v8563
    %v8565 = vrot.slane %v7998, %v8564
    %v8567 = vunpack.c.l.s4 1983009808
    %v8568 = vunpack.c.0.s8 %v8567
    %v8569 = vlaneseq
    %v8570 = vshrl.u32 %v8569, 7
    %v8571 = vsub.s32 %v8568, %v8570
    %v8572 = vrot.slane %v8558, %v8571
    %v8573 = vcombine.high %v8565, %v8565
    %v8574 = vcombine.high %v8572, %v8572
    %v8575 = vcombine.high %v7999, %v7999
    %v8577 = vunpack.c.l.s4 1983009808
    %v8578 = vunpack.c.0.s8 %v8577
    %v8579 = vlaneseq
    %v8580 = vshrl.u32 %v8579, 7
    %v8581 = vsub.s32 %v8578, %v8580
    %v8582 = vrot.slane %v7999, %v8581
    %v8584 = vunpack.c.l.s4 1983009808
    %v8585 = vunpack.c.0.s8 %v8584
    %v8586 = vlaneseq
    %v8587 = vshrl.u32 %v8586, 7
    %v8588 = vsub.s32 %v8585, %v8587
    %v8589 = vrot.slane %v8575, %v8588
    %v8590 = vcombine.high %v8582, %v8582
    %v8591 = vcombine.high %v8589, %v8589
    %v8592 = vcombine.high %v8000, %v8000
    %v8594 = vunpack.c.l.s4 1983009808
    %v8595 = vunpack.c.0.s8 %v8594
    %v8596 = vlaneseq
    %v8597 = vshrl.u32 %v8596, 7
    %v8598 = vsub.s32 %v8595, %v8597
    %v8599 = vrot.slane %v8000, %v8598
    %v8601 = vunpack.c.l.s4 1983009808
    %v8602 = vunpack.c.0.s8 %v8601
    %v8603 = vlaneseq
    %v8604 = vshrl.u32 %v8603, 7
    %v8605 = vsub.s32 %v8602, %v8604
    %v8606 = vrot.slane %v8592, %v8605
    %v8607 = vcombine.high %v8599, %v8599
    %v8608 = vcombine.high %v8606, %v8606
    %v8609 = vcombine.high %v8001, %v8001
    %v8611 = vunpack.c.l.s4 1983009808
    %v8612 = vunpack.c.0.s8 %v8611
    %v8613 = vlaneseq
    %v8614 = vshrl.u32 %v8613, 7
    %v8615 = vsub.s32 %v8612, %v8614
    %v8616 = vrot.slane %v8001, %v8615
    %v8618 = vunpack.c.l.s4 1983009808
    %v8619 = vunpack.c.0.s8 %v8618
    %v8620 = vlaneseq
    %v8621 = vshrl.u32 %v8620, 7
    %v8622 = vsub.s32 %v8619, %v8621
    %v8623 = vrot.slane %v8609, %v8622
    %v8624 = vcombine.high %v8616, %v8616
    %v8625 = vcombine.high %v8623, %v8623
    %v8626 = vcombine.high %v8002, %v8002
    %v8628 = vunpack.c.l.s4 1983009808
    %v8629 = vunpack.c.0.s8 %v8628
    %v8630 = vlaneseq
    %v8631 = vshrl.u32 %v8630, 7
    %v8632 = vsub.s32 %v8629, %v8631
    %v8633 = vrot.slane %v8002, %v8632
    %v8635 = vunpack.c.l.s4 1983009808
    %v8636 = vunpack.c.0.s8 %v8635
    %v8637 = vlaneseq
    %v8638 = vshrl.u32 %v8637, 7
    %v8639 = vsub.s32 %v8636, %v8638
    %v8640 = vrot.slane %v8626, %v8639
    %v8641 = vcombine.high %v8633, %v8633
    %v8642 = vcombine.high %v8640, %v8640
    %v8643 = vcombine.high %v8003, %v8003
    %v8645 = vunpack.c.l.s4 1983009808
    %v8646 = vunpack.c.0.s8 %v8645
    %v8647 = vlaneseq
    %v8648 = vshrl.u32 %v8647, 7
    %v8649 = vsub.s32 %v8646, %v8648
    %v8650 = vrot.slane %v8003, %v8649
    %v8652 = vunpack.c.l.s4 1983009808
    %v8653 = vunpack.c.0.s8 %v8652
    %v8654 = vlaneseq
    %v8655 = vshrl.u32 %v8654, 7
    %v8656 = vsub.s32 %v8653, %v8655
    %v8657 = vrot.slane %v8643, %v8656
    %v8658 = vcombine.high %v8650, %v8650
    %v8659 = vcombine.high %v8657, %v8657
    %v8660 = vcombine.high %v8004, %v8004
    %v8662 = vunpack.c.l.s4 1983009808
    %v8663 = vunpack.c.0.s8 %v8662
    %v8664 = vlaneseq
    %v8665 = vshrl.u32 %v8664, 7
    %v8666 = vsub.s32 %v8663, %v8665
    %v8667 = vrot.slane %v8004, %v8666
    %v8669 = vunpack.c.l.s4 1983009808
    %v8670 = vunpack.c.0.s8 %v8669
    %v8671 = vlaneseq
    %v8672 = vshrl.u32 %v8671, 7
    %v8673 = vsub.s32 %v8670, %v8672
    %v8674 = vrot.slane %v8660, %v8673
    %v8675 = vcombine.high %v8667, %v8667
    %v8676 = vcombine.high %v8674, %v8674
    %v8677 = vcombine.high %v8005, %v8005
    %v8679 = vunpack.c.l.s4 1983009808
    %v8680 = vunpack.c.0.s8 %v8679
    %v8681 = vlaneseq
    %v8682 = vshrl.u32 %v8681, 7
    %v8683 = vsub.s32 %v8680, %v8682
    %v8684 = vrot.slane %v8005, %v8683
    %v8686 = vunpack.c.l.s4 1983009808
    %v8687 = vunpack.c.0.s8 %v8686
    %v8688 = vlaneseq
    %v8689 = vshrl.u32 %v8688, 7
    %v8690 = vsub.s32 %v8687, %v8689
    %v8691 = vrot.slane %v8677, %v8690
    %v8692 = vcombine.high %v8684, %v8684
    %v8693 = vcombine.high %v8691, %v8691
    %v8694 = vcombine.high %v8006, %v8006
    %v8696 = vunpack.c.l.s4 1983009808
    %v8697 = vunpack.c.0.s8 %v8696
    %v8698 = vlaneseq
    %v8699 = vshrl.u32 %v8698, 7
    %v8700 = vsub.s32 %v8697, %v8699
    %v8701 = vrot.slane %v8006, %v8700
    %v8703 = vunpack.c.l.s4 1983009808
    %v8704 = vunpack.c.0.s8 %v8703
    %v8705 = vlaneseq
    %v8706 = vshrl.u32 %v8705, 7
    %v8707 = vsub.s32 %v8704, %v8706
    %v8708 = vrot.slane %v8694, %v8707
    %v8709 = vcombine.high %v8701, %v8701
    %v8710 = vcombine.high %v8708, %v8708
    %v8711 = vcombine.high %v8007, %v8007
    %v8713 = vunpack.c.l.s4 1983009808
    %v8714 = vunpack.c.0.s8 %v8713
    %v8715 = vlaneseq
    %v8716 = vshrl.u32 %v8715, 7
    %v8717 = vsub.s32 %v8714, %v8716
    %v8718 = vrot.slane %v8007, %v8717
    %v8720 = vunpack.c.l.s4 1983009808
    %v8721 = vunpack.c.0.s8 %v8720
    %v8722 = vlaneseq
    %v8723 = vshrl.u32 %v8722, 7
    %v8724 = vsub.s32 %v8721, %v8723
    %v8725 = vrot.slane %v8711, %v8724
    %v8726 = vcombine.high %v8718, %v8718
    %v8727 = vcombine.high %v8725, %v8725
    %v8728 = vcombine.high %v8008, %v8008
    %v8730 = vunpack.c.l.s4 1983009808
    %v8731 = vunpack.c.0.s8 %v8730
    %v8732 = vlaneseq
    %v8733 = vshrl.u32 %v8732, 7
    %v8734 = vsub.s32 %v8731, %v8733
    %v8735 = vrot.slane %v8008, %v8734
    %v8737 = vunpack.c.l.s4 1983009808
    %v8738 = vunpack.c.0.s8 %v8737
    %v8739 = vlaneseq
    %v8740 = vshrl.u32 %v8739, 7
    %v8741 = vsub.s32 %v8738, %v8740
    %v8742 = vrot.slane %v8728, %v8741
    %v8743 = vcombine.high %v8735, %v8735
    %v8744 = vcombine.high %v8742, %v8742
    %v8745 = vcombine.high %v8009, %v8009
    %v8747 = vunpack.c.l.s4 1983009808
    %v8748 = vunpack.c.0.s8 %v8747
    %v8749 = vlaneseq
    %v8750 = vshrl.u32 %v8749, 7
    %v8751 = vsub.s32 %v8748, %v8750
    %v8752 = vrot.slane %v8009, %v8751
    %v8754 = vunpack.c.l.s4 1983009808
    %v8755 = vunpack.c.0.s8 %v8754
    %v8756 = vlaneseq
    %v8757 = vshrl.u32 %v8756, 7
    %v8758 = vsub.s32 %v8755, %v8757
    %v8759 = vrot.slane %v8745, %v8758
    %v8760 = vcombine.high %v8752, %v8752
    %v8761 = vcombine.high %v8759, %v8759
    %v8762 = vcombine.high %v8010, %v8010
    %v8764 = vunpack.c.l.s4 1983009808
    %v8765 = vunpack.c.0.s8 %v8764
    %v8766 = vlaneseq
    %v8767 = vshrl.u32 %v8766, 7
    %v8768 = vsub.s32 %v8765, %v8767
    %v8769 = vrot.slane %v8010, %v8768
    %v8771 = vunpack.c.l.s4 1983009808
    %v8772 = vunpack.c.0.s8 %v8771
    %v8773 = vlaneseq
    %v8774 = vshrl.u32 %v8773, 7
    %v8775 = vsub.s32 %v8772, %v8774
    %v8776 = vrot.slane %v8762, %v8775
    %v8777 = vcombine.high %v8769, %v8769
    %v8778 = vcombine.high %v8776, %v8776
    %v8779 = vcombine.high %v8011, %v8011
    %v8781 = vunpack.c.l.s4 1983009808
    %v8782 = vunpack.c.0.s8 %v8781
    %v8783 = vlaneseq
    %v8784 = vshrl.u32 %v8783, 7
    %v8785 = vsub.s32 %v8782, %v8784
    %v8786 = vrot.slane %v8011, %v8785
    %v8788 = vunpack.c.l.s4 1983009808
    %v8789 = vunpack.c.0.s8 %v8788
    %v8790 = vlaneseq
    %v8791 = vshrl.u32 %v8790, 7
    %v8792 = vsub.s32 %v8789, %v8791
    %v8793 = vrot.slane %v8779, %v8792
    %v8794 = vcombine.high %v8786, %v8786
    %v8795 = vcombine.high %v8793, %v8793
    %v8796 = vcombine.high %v8012, %v8012
    %v8798 = vunpack.c.l.s4 1983009808
    %v8799 = vunpack.c.0.s8 %v8798
    %v8800 = vlaneseq
    %v8801 = vshrl.u32 %v8800, 7
    %v8802 = vsub.s32 %v8799, %v8801
    %v8803 = vrot.slane %v8012, %v8802
    %v8805 = vunpack.c.l.s4 1983009808
    %v8806 = vunpack.c.0.s8 %v8805
    %v8807 = vlaneseq
    %v8808 = vshrl.u32 %v8807, 7
    %v8809 = vsub.s32 %v8806, %v8808
    %v8810 = vrot.slane %v8796, %v8809
    %v8811 = vcombine.high %v8803, %v8803
    %v8812 = vcombine.high %v8810, %v8810
    %v8813 = vcombine.high %v8013, %v8013
    %v8815 = vunpack.c.l.s4 1983009808
    %v8816 = vunpack.c.0.s8 %v8815
    %v8817 = vlaneseq
    %v8818 = vshrl.u32 %v8817, 7
    %v8819 = vsub.s32 %v8816, %v8818
    %v8820 = vrot.slane %v8013, %v8819
    %v8822 = vunpack.c.l.s4 1983009808
    %v8823 = vunpack.c.0.s8 %v8822
    %v8824 = vlaneseq
    %v8825 = vshrl.u32 %v8824, 7
    %v8826 = vsub.s32 %v8823, %v8825
    %v8827 = vrot.slane %v8813, %v8826
    %v8828 = vcombine.high %v8820, %v8820
    %v8829 = vcombine.high %v8827, %v8827
    %v8830 = vcombine.high %v8014, %v8014
    %v8832 = vunpack.c.l.s4 1983009808
    %v8833 = vunpack.c.0.s8 %v8832
    %v8834 = vlaneseq
    %v8835 = vshrl.u32 %v8834, 7
    %v8836 = vsub.s32 %v8833, %v8835
    %v8837 = vrot.slane %v8014, %v8836
    %v8839 = vunpack.c.l.s4 1983009808
    %v8840 = vunpack.c.0.s8 %v8839
    %v8841 = vlaneseq
    %v8842 = vshrl.u32 %v8841, 7
    %v8843 = vsub.s32 %v8840, %v8842
    %v8844 = vrot.slane %v8830, %v8843
    %v8845 = vcombine.high %v8837, %v8837
    %v8846 = vcombine.high %v8844, %v8844
    %v8847 = vcombine.high %v8015, %v8015
    %v8849 = vunpack.c.l.s4 1983009808
    %v8850 = vunpack.c.0.s8 %v8849
    %v8851 = vlaneseq
    %v8852 = vshrl.u32 %v8851, 7
    %v8853 = vsub.s32 %v8850, %v8852
    %v8854 = vrot.slane %v8015, %v8853
    %v8856 = vunpack.c.l.s4 1983009808
    %v8857 = vunpack.c.0.s8 %v8856
    %v8858 = vlaneseq
    %v8859 = vshrl.u32 %v8858, 7
    %v8860 = vsub.s32 %v8857, %v8859
    %v8861 = vrot.slane %v8847, %v8860
    %v8862 = vcombine.high %v8854, %v8854
    %v8863 = vcombine.high %v8861, %v8861
    %v8864 = vcombine.high %v8016, %v8016
    %v8866 = vunpack.c.l.s4 1983009808
    %v8867 = vunpack.c.0.s8 %v8866
    %v8868 = vlaneseq
    %v8869 = vshrl.u32 %v8868, 7
    %v8870 = vsub.s32 %v8867, %v8869
    %v8871 = vrot.slane %v8016, %v8870
    %v8873 = vunpack.c.l.s4 1983009808
    %v8874 = vunpack.c.0.s8 %v8873
    %v8875 = vlaneseq
    %v8876 = vshrl.u32 %v8875, 7
    %v8877 = vsub.s32 %v8874, %v8876
    %v8878 = vrot.slane %v8864, %v8877
    %v8879 = vcombine.high %v8871, %v8871
    %v8880 = vcombine.high %v8878, %v8878
    %v8881 = vcombine.high %v8017, %v8017
    %v8883 = vunpack.c.l.s4 1983009808
    %v8884 = vunpack.c.0.s8 %v8883
    %v8885 = vlaneseq
    %v8886 = vshrl.u32 %v8885, 7
    %v8887 = vsub.s32 %v8884, %v8886
    %v8888 = vrot.slane %v8017, %v8887
    %v8890 = vunpack.c.l.s4 1983009808
    %v8891 = vunpack.c.0.s8 %v8890
    %v8892 = vlaneseq
    %v8893 = vshrl.u32 %v8892, 7
    %v8894 = vsub.s32 %v8891, %v8893
    %v8895 = vrot.slane %v8881, %v8894
    %v8896 = vcombine.high %v8888, %v8888
    %v8897 = vcombine.high %v8895, %v8895
    %v8898 = vcombine.high %v8018, %v8018
    %v8900 = vunpack.c.l.s4 1983009808
    %v8901 = vunpack.c.0.s8 %v8900
    %v8902 = vlaneseq
    %v8903 = vshrl.u32 %v8902, 7
    %v8904 = vsub.s32 %v8901, %v8903
    %v8905 = vrot.slane %v8018, %v8904
    %v8907 = vunpack.c.l.s4 1983009808
    %v8908 = vunpack.c.0.s8 %v8907
    %v8909 = vlaneseq
    %v8910 = vshrl.u32 %v8909, 7
    %v8911 = vsub.s32 %v8908, %v8910
    %v8912 = vrot.slane %v8898, %v8911
    %v8913 = vcombine.high %v8905, %v8905
    %v8914 = vcombine.high %v8912, %v8912
    %v8915 = vcombine.high %v8019, %v8019
    %v8917 = vunpack.c.l.s4 1983009808
    %v8918 = vunpack.c.0.s8 %v8917
    %v8919 = vlaneseq
    %v8920 = vshrl.u32 %v8919, 7
    %v8921 = vsub.s32 %v8918, %v8920
    %v8922 = vrot.slane %v8019, %v8921
    %v8924 = vunpack.c.l.s4 1983009808
    %v8925 = vunpack.c.0.s8 %v8924
    %v8926 = vlaneseq
    %v8927 = vshrl.u32 %v8926, 7
    %v8928 = vsub.s32 %v8925, %v8927
    %v8929 = vrot.slane %v8915, %v8928
    %v8930 = vcombine.high %v8922, %v8922
    %v8931 = vcombine.high %v8929, %v8929
    %v8932 = vcombine.high %v8020, %v8020
    %v8934 = vunpack.c.l.s4 1983009808
    %v8935 = vunpack.c.0.s8 %v8934
    %v8936 = vlaneseq
    %v8937 = vshrl.u32 %v8936, 7
    %v8938 = vsub.s32 %v8935, %v8937
    %v8939 = vrot.slane %v8020, %v8938
    %v8941 = vunpack.c.l.s4 1983009808
    %v8942 = vunpack.c.0.s8 %v8941
    %v8943 = vlaneseq
    %v8944 = vshrl.u32 %v8943, 7
    %v8945 = vsub.s32 %v8942, %v8944
    %v8946 = vrot.slane %v8932, %v8945
    %v8947 = vcombine.high %v8939, %v8939
    %v8948 = vcombine.high %v8946, %v8946
    %v8949 = vcombine.high %v8021, %v8021
    %v8951 = vunpack.c.l.s4 1983009808
    %v8952 = vunpack.c.0.s8 %v8951
    %v8953 = vlaneseq
    %v8954 = vshrl.u32 %v8953, 7
    %v8955 = vsub.s32 %v8952, %v8954
    %v8956 = vrot.slane %v8021, %v8955
    %v8958 = vunpack.c.l.s4 1983009808
    %v8959 = vunpack.c.0.s8 %v8958
    %v8960 = vlaneseq
    %v8961 = vshrl.u32 %v8960, 7
    %v8962 = vsub.s32 %v8959, %v8961
    %v8963 = vrot.slane %v8949, %v8962
    %v8964 = vcombine.high %v8956, %v8956
    %v8965 = vcombine.high %v8963, %v8963
    %v8966 = vcombine.high %v8022, %v8022
    %v8968 = vunpack.c.l.s4 1983009808
    %v8969 = vunpack.c.0.s8 %v8968
    %v8970 = vlaneseq
    %v8971 = vshrl.u32 %v8970, 7
    %v8972 = vsub.s32 %v8969, %v8971
    %v8973 = vrot.slane %v8022, %v8972
    %v8975 = vunpack.c.l.s4 1983009808
    %v8976 = vunpack.c.0.s8 %v8975
    %v8977 = vlaneseq
    %v8978 = vshrl.u32 %v8977, 7
    %v8979 = vsub.s32 %v8976, %v8978
    %v8980 = vrot.slane %v8966, %v8979
    %v8981 = vcombine.high %v8973, %v8973
    %v8982 = vcombine.high %v8980, %v8980
    %v8983 = vcombine.high %v8023, %v8023
    %v8985 = vunpack.c.l.s4 1983009808
    %v8986 = vunpack.c.0.s8 %v8985
    %v8987 = vlaneseq
    %v8988 = vshrl.u32 %v8987, 7
    %v8989 = vsub.s32 %v8986, %v8988
    %v8990 = vrot.slane %v8023, %v8989
    %v8992 = vunpack.c.l.s4 1983009808
    %v8993 = vunpack.c.0.s8 %v8992
    %v8994 = vlaneseq
    %v8995 = vshrl.u32 %v8994, 7
    %v8996 = vsub.s32 %v8993, %v8995
    %v8997 = vrot.slane %v8983, %v8996
    %v8998 = vcombine.high %v8990, %v8990
    %v8999 = vcombine.high %v8997, %v8997
    %v9000 = vcombine.high %v8024, %v8024
    %v9002 = vunpack.c.l.s4 1983009808
    %v9003 = vunpack.c.0.s8 %v9002
    %v9004 = vlaneseq
    %v9005 = vshrl.u32 %v9004, 7
    %v9006 = vsub.s32 %v9003, %v9005
    %v9007 = vrot.slane %v8024, %v9006
    %v9009 = vunpack.c.l.s4 1983009808
    %v9010 = vunpack.c.0.s8 %v9009
    %v9011 = vlaneseq
    %v9012 = vshrl.u32 %v9011, 7
    %v9013 = vsub.s32 %v9010, %v9012
    %v9014 = vrot.slane %v9000, %v9013
    %v9015 = vcombine.high %v9007, %v9007
    %v9016 = vcombine.high %v9014, %v9014
    %v9017 = vcombine.high %v8025, %v8025
    %v9019 = vunpack.c.l.s4 1983009808
    %v9020 = vunpack.c.0.s8 %v9019
    %v9021 = vlaneseq
    %v9022 = vshrl.u32 %v9021, 7
    %v9023 = vsub.s32 %v9020, %v9022
    %v9024 = vrot.slane %v8025, %v9023
    %v9026 = vunpack.c.l.s4 1983009808
    %v9027 = vunpack.c.0.s8 %v9026
    %v9028 = vlaneseq
    %v9029 = vshrl.u32 %v9028, 7
    %v9030 = vsub.s32 %v9027, %v9029
    %v9031 = vrot.slane %v9017, %v9030
    %v9032 = vcombine.high %v9024, %v9024
    %v9033 = vcombine.high %v9031, %v9031
    %v9034 = vcombine.high %v8026, %v8026
    %v9036 = vunpack.c.l.s4 1983009808
    %v9037 = vunpack.c.0.s8 %v9036
    %v9038 = vlaneseq
    %v9039 = vshrl.u32 %v9038, 7
    %v9040 = vsub.s32 %v9037, %v9039
    %v9041 = vrot.slane %v8026, %v9040
    %v9043 = vunpack.c.l.s4 1983009808
    %v9044 = vunpack.c.0.s8 %v9043
    %v9045 = vlaneseq
    %v9046 = vshrl.u32 %v9045, 7
    %v9047 = vsub.s32 %v9044, %v9046
    %v9048 = vrot.slane %v9034, %v9047
    %v9049 = vcombine.high %v9041, %v9041
    %v9050 = vcombine.high %v9048, %v9048
    %v9051 = vcombine.high %v8027, %v8027
    %v9053 = vunpack.c.l.s4 1983009808
    %v9054 = vunpack.c.0.s8 %v9053
    %v9055 = vlaneseq
    %v9056 = vshrl.u32 %v9055, 7
    %v9057 = vsub.s32 %v9054, %v9056
    %v9058 = vrot.slane %v8027, %v9057
    %v9060 = vunpack.c.l.s4 1983009808
    %v9061 = vunpack.c.0.s8 %v9060
    %v9062 = vlaneseq
    %v9063 = vshrl.u32 %v9062, 7
    %v9064 = vsub.s32 %v9061, %v9063
    %v9065 = vrot.slane %v9051, %v9064
    %v9066 = vcombine.high %v9058, %v9058
    %v9067 = vcombine.high %v9065, %v9065
    %v9068 = vcombine.high %v8028, %v8028
    %v9070 = vunpack.c.l.s4 1983009808
    %v9071 = vunpack.c.0.s8 %v9070
    %v9072 = vlaneseq
    %v9073 = vshrl.u32 %v9072, 7
    %v9074 = vsub.s32 %v9071, %v9073
    %v9075 = vrot.slane %v8028, %v9074
    %v9077 = vunpack.c.l.s4 1983009808
    %v9078 = vunpack.c.0.s8 %v9077
    %v9079 = vlaneseq
    %v9080 = vshrl.u32 %v9079, 7
    %v9081 = vsub.s32 %v9078, %v9080
    %v9082 = vrot.slane %v9068, %v9081
    %v9083 = vcombine.high %v9075, %v9075
    %v9084 = vcombine.high %v9082, %v9082
    %v9085 = vcombine.high %v8029, %v8029
    %v9087 = vunpack.c.l.s4 1983009808
    %v9088 = vunpack.c.0.s8 %v9087
    %v9089 = vlaneseq
    %v9090 = vshrl.u32 %v9089, 7
    %v9091 = vsub.s32 %v9088, %v9090
    %v9092 = vrot.slane %v8029, %v9091
    %v9094 = vunpack.c.l.s4 1983009808
    %v9095 = vunpack.c.0.s8 %v9094
    %v9096 = vlaneseq
    %v9097 = vshrl.u32 %v9096, 7
    %v9098 = vsub.s32 %v9095, %v9097
    %v9099 = vrot.slane %v9085, %v9098
    %v9100 = vcombine.high %v9092, %v9092
    %v9101 = vcombine.high %v9099, %v9099
    %v9102 = vcombine.high %v8030, %v8030
    %v9104 = vunpack.c.l.s4 1983009808
    %v9105 = vunpack.c.0.s8 %v9104
    %v9106 = vlaneseq
    %v9107 = vshrl.u32 %v9106, 7
    %v9108 = vsub.s32 %v9105, %v9107
    %v9109 = vrot.slane %v8030, %v9108
    %v9111 = vunpack.c.l.s4 1983009808
    %v9112 = vunpack.c.0.s8 %v9111
    %v9113 = vlaneseq
    %v9114 = vshrl.u32 %v9113, 7
    %v9115 = vsub.s32 %v9112, %v9114
    %v9116 = vrot.slane %v9102, %v9115
    %v9117 = vcombine.high %v9109, %v9109
    %v9118 = vcombine.high %v9116, %v9116
    %v9119 = vcombine.high %v8031, %v8031
    %v9121 = vunpack.c.l.s4 1983009808
    %v9122 = vunpack.c.0.s8 %v9121
    %v9123 = vlaneseq
    %v9124 = vshrl.u32 %v9123, 7
    %v9125 = vsub.s32 %v9122, %v9124
    %v9126 = vrot.slane %v8031, %v9125
    %v9128 = vunpack.c.l.s4 1983009808
    %v9129 = vunpack.c.0.s8 %v9128
    %v9130 = vlaneseq
    %v9131 = vshrl.u32 %v9130, 7
    %v9132 = vsub.s32 %v9129, %v9131
    %v9133 = vrot.slane %v9119, %v9132
    %v9134 = vcombine.high %v9126, %v9126
    %v9135 = vcombine.high %v9133, %v9133
    %v9136 = vcombine.high %v8032, %v8032
    %v9138 = vunpack.c.l.s4 1983009808
    %v9139 = vunpack.c.0.s8 %v9138
    %v9140 = vlaneseq
    %v9141 = vshrl.u32 %v9140, 7
    %v9142 = vsub.s32 %v9139, %v9141
    %v9143 = vrot.slane %v8032, %v9142
    %v9145 = vunpack.c.l.s4 1983009808
    %v9146 = vunpack.c.0.s8 %v9145
    %v9147 = vlaneseq
    %v9148 = vshrl.u32 %v9147, 7
    %v9149 = vsub.s32 %v9146, %v9148
    %v9150 = vrot.slane %v9136, %v9149
    %v9151 = vcombine.high %v9143, %v9143
    %v9152 = vcombine.high %v9150, %v9150
    %v9153 = vcombine.high %v8033, %v8033
    %v9155 = vunpack.c.l.s4 1983009808
    %v9156 = vunpack.c.0.s8 %v9155
    %v9157 = vlaneseq
    %v9158 = vshrl.u32 %v9157, 7
    %v9159 = vsub.s32 %v9156, %v9158
    %v9160 = vrot.slane %v8033, %v9159
    %v9162 = vunpack.c.l.s4 1983009808
    %v9163 = vunpack.c.0.s8 %v9162
    %v9164 = vlaneseq
    %v9165 = vshrl.u32 %v9164, 7
    %v9166 = vsub.s32 %v9163, %v9165
    %v9167 = vrot.slane %v9153, %v9166
    %v9168 = vcombine.high %v9160, %v9160
    %v9169 = vcombine.high %v9167, %v9167
    %v9170 = vcombine.high %v8034, %v8034
    %v9172 = vunpack.c.l.s4 1983009808
    %v9173 = vunpack.c.0.s8 %v9172
    %v9174 = vlaneseq
    %v9175 = vshrl.u32 %v9174, 7
    %v9176 = vsub.s32 %v9173, %v9175
    %v9177 = vrot.slane %v8034, %v9176
    %v9179 = vunpack.c.l.s4 1983009808
    %v9180 = vunpack.c.0.s8 %v9179
    %v9181 = vlaneseq
    %v9182 = vshrl.u32 %v9181, 7
    %v9183 = vsub.s32 %v9180, %v9182
    %v9184 = vrot.slane %v9170, %v9183
    %v9185 = vcombine.high %v9177, %v9177
    %v9186 = vcombine.high %v9184, %v9184
    %v9443 = vsel %vm134, %v8106, -inf
    %v9444 = vrot.slane %v9443, 4
    %v9445 = vmax.f32 %v9443, %v9444
    %v9446 = vrot.slane %v9445, 2
    %v9447 = vmax.f32 %v9445, %v9446
    %v9448 = vrot.slane %v9447, 1
    %v9449 = vmax.f32 %v9447, %v9448
    %v9450 = vsel %vm134, %v8114, -inf
    %v9451 = vrot.slane %v9450, 4
    %v9452 = vmax.f32 %v9450, %v9451
    %v9453 = vrot.slane %v9452, 2
    %v9454 = vmax.f32 %v9452, %v9453
    %v9455 = vrot.slane %v9454, 1
    %v9456 = vmax.f32 %v9454, %v9455
    %v9457 = vsel %vm134, %v8113, -inf
    %v9458 = vrot.slane %v9457, 4
    %v9459 = vmax.f32 %v9457, %v9458
    %v9460 = vrot.slane %v9459, 2
    %v9461 = vmax.f32 %v9459, %v9460
    %v9462 = vrot.slane %v9461, 1
    %v9463 = vmax.f32 %v9461, %v9462
    %v9464 = vsel %vm134, %v8115, -inf
    %v9465 = vrot.slane %v9464, 4
    %v9466 = vmax.f32 %v9464, %v9465
    %v9467 = vrot.slane %v9466, 2
    %v9468 = vmax.f32 %v9466, %v9467
    %v9469 = vrot.slane %v9468, 1
    %v9470 = vmax.f32 %v9468, %v9469
    %v9471 = vsel %vm134, %v8123, -inf
    %v9472 = vrot.slane %v9471, 4
    %v9473 = vmax.f32 %v9471, %v9472
    %v9474 = vrot.slane %v9473, 2
    %v9475 = vmax.f32 %v9473, %v9474
    %v9476 = vrot.slane %v9475, 1
    %v9477 = vmax.f32 %v9475, %v9476
    %v9478 = vsel %vm134, %v8131, -inf
    %v9479 = vrot.slane %v9478, 4
    %v9480 = vmax.f32 %v9478, %v9479
    %v9481 = vrot.slane %v9480, 2
    %v9482 = vmax.f32 %v9480, %v9481
    %v9483 = vrot.slane %v9482, 1
    %v9484 = vmax.f32 %v9482, %v9483
    %v9485 = vsel %vm134, %v8130, -inf
    %v9486 = vrot.slane %v9485, 4
    %v9487 = vmax.f32 %v9485, %v9486
    %v9488 = vrot.slane %v9487, 2
    %v9489 = vmax.f32 %v9487, %v9488
    %v9490 = vrot.slane %v9489, 1
    %v9491 = vmax.f32 %v9489, %v9490
    %v9492 = vsel %vm134, %v8132, -inf
    %v9493 = vrot.slane %v9492, 4
    %v9494 = vmax.f32 %v9492, %v9493
    %v9495 = vrot.slane %v9494, 2
    %v9496 = vmax.f32 %v9494, %v9495
    %v9497 = vrot.slane %v9496, 1
    %v9498 = vmax.f32 %v9496, %v9497
    %v9499 = vsel %vm134, %v8140, -inf
    %v9500 = vrot.slane %v9499, 4
    %v9501 = vmax.f32 %v9499, %v9500
    %v9502 = vrot.slane %v9501, 2
    %v9503 = vmax.f32 %v9501, %v9502
    %v9504 = vrot.slane %v9503, 1
    %v9505 = vmax.f32 %v9503, %v9504
    %v9506 = vsel %vm134, %v8148, -inf
    %v9507 = vrot.slane %v9506, 4
    %v9508 = vmax.f32 %v9506, %v9507
    %v9509 = vrot.slane %v9508, 2
    %v9510 = vmax.f32 %v9508, %v9509
    %v9511 = vrot.slane %v9510, 1
    %v9512 = vmax.f32 %v9510, %v9511
    %v9513 = vsel %vm134, %v8147, -inf
    %v9514 = vrot.slane %v9513, 4
    %v9515 = vmax.f32 %v9513, %v9514
    %v9516 = vrot.slane %v9515, 2
    %v9517 = vmax.f32 %v9515, %v9516
    %v9518 = vrot.slane %v9517, 1
    %v9519 = vmax.f32 %v9517, %v9518
    %v9520 = vsel %vm134, %v8149, -inf
    %v9521 = vrot.slane %v9520, 4
    %v9522 = vmax.f32 %v9520, %v9521
    %v9523 = vrot.slane %v9522, 2
    %v9524 = vmax.f32 %v9522, %v9523
    %v9525 = vrot.slane %v9524, 1
    %v9526 = vmax.f32 %v9524, %v9525
    %v9527 = vsel %vm134, %v8157, -inf
    %v9528 = vrot.slane %v9527, 4
    %v9529 = vmax.f32 %v9527, %v9528
    %v9530 = vrot.slane %v9529, 2
    %v9531 = vmax.f32 %v9529, %v9530
    %v9532 = vrot.slane %v9531, 1
    %v9533 = vmax.f32 %v9531, %v9532
    %v9534 = vsel %vm134, %v8165, -inf
    %v9535 = vrot.slane %v9534, 4
    %v9536 = vmax.f32 %v9534, %v9535
    %v9537 = vrot.slane %v9536, 2
    %v9538 = vmax.f32 %v9536, %v9537
    %v9539 = vrot.slane %v9538, 1
    %v9540 = vmax.f32 %v9538, %v9539
    %v9541 = vsel %vm134, %v8164, -inf
    %v9542 = vrot.slane %v9541, 4
    %v9543 = vmax.f32 %v9541, %v9542
    %v9544 = vrot.slane %v9543, 2
    %v9545 = vmax.f32 %v9543, %v9544
    %v9546 = vrot.slane %v9545, 1
    %v9547 = vmax.f32 %v9545, %v9546
    %v9548 = vsel %vm134, %v8166, -inf
    %v9549 = vrot.slane %v9548, 4
    %v9550 = vmax.f32 %v9548, %v9549
    %v9551 = vrot.slane %v9550, 2
    %v9552 = vmax.f32 %v9550, %v9551
    %v9553 = vrot.slane %v9552, 1
    %v9554 = vmax.f32 %v9552, %v9553
    %v9555 = vsel %vm134, %v8174, -inf
    %v9556 = vrot.slane %v9555, 4
    %v9557 = vmax.f32 %v9555, %v9556
    %v9558 = vrot.slane %v9557, 2
    %v9559 = vmax.f32 %v9557, %v9558
    %v9560 = vrot.slane %v9559, 1
    %v9561 = vmax.f32 %v9559, %v9560
    %v9562 = vsel %vm134, %v8182, -inf
    %v9563 = vrot.slane %v9562, 4
    %v9564 = vmax.f32 %v9562, %v9563
    %v9565 = vrot.slane %v9564, 2
    %v9566 = vmax.f32 %v9564, %v9565
    %v9567 = vrot.slane %v9566, 1
    %v9568 = vmax.f32 %v9566, %v9567
    %v9569 = vsel %vm134, %v8181, -inf
    %v9570 = vrot.slane %v9569, 4
    %v9571 = vmax.f32 %v9569, %v9570
    %v9572 = vrot.slane %v9571, 2
    %v9573 = vmax.f32 %v9571, %v9572
    %v9574 = vrot.slane %v9573, 1
    %v9575 = vmax.f32 %v9573, %v9574
    %v9576 = vsel %vm134, %v8183, -inf
    %v9577 = vrot.slane %v9576, 4
    %v9578 = vmax.f32 %v9576, %v9577
    %v9579 = vrot.slane %v9578, 2
    %v9580 = vmax.f32 %v9578, %v9579
    %v9581 = vrot.slane %v9580, 1
    %v9582 = vmax.f32 %v9580, %v9581
    %v9583 = vsel %vm134, %v8191, -inf
    %v9584 = vrot.slane %v9583, 4
    %v9585 = vmax.f32 %v9583, %v9584
    %v9586 = vrot.slane %v9585, 2
    %v9587 = vmax.f32 %v9585, %v9586
    %v9588 = vrot.slane %v9587, 1
    %v9589 = vmax.f32 %v9587, %v9588
    %v9590 = vsel %vm134, %v8199, -inf
    %v9591 = vrot.slane %v9590, 4
    %v9592 = vmax.f32 %v9590, %v9591
    %v9593 = vrot.slane %v9592, 2
    %v9594 = vmax.f32 %v9592, %v9593
    %v9595 = vrot.slane %v9594, 1
    %v9596 = vmax.f32 %v9594, %v9595
    %v9597 = vsel %vm134, %v8198, -inf
    %v9598 = vrot.slane %v9597, 4
    %v9599 = vmax.f32 %v9597, %v9598
    %v9600 = vrot.slane %v9599, 2
    %v9601 = vmax.f32 %v9599, %v9600
    %v9602 = vrot.slane %v9601, 1
    %v9603 = vmax.f32 %v9601, %v9602
    %v9604 = vsel %vm134, %v8200, -inf
    %v9605 = vrot.slane %v9604, 4
    %v9606 = vmax.f32 %v9604, %v9605
    %v9607 = vrot.slane %v9606, 2
    %v9608 = vmax.f32 %v9606, %v9607
    %v9609 = vrot.slane %v9608, 1
    %v9610 = vmax.f32 %v9608, %v9609
    %v9611 = vsel %vm134, %v8208, -inf
    %v9612 = vrot.slane %v9611, 4
    %v9613 = vmax.f32 %v9611, %v9612
    %v9614 = vrot.slane %v9613, 2
    %v9615 = vmax.f32 %v9613, %v9614
    %v9616 = vrot.slane %v9615, 1
    %v9617 = vmax.f32 %v9615, %v9616
    %v9618 = vsel %vm134, %v8216, -inf
    %v9619 = vrot.slane %v9618, 4
    %v9620 = vmax.f32 %v9618, %v9619
    %v9621 = vrot.slane %v9620, 2
    %v9622 = vmax.f32 %v9620, %v9621
    %v9623 = vrot.slane %v9622, 1
    %v9624 = vmax.f32 %v9622, %v9623
    %v9625 = vsel %vm134, %v8215, -inf
    %v9626 = vrot.slane %v9625, 4
    %v9627 = vmax.f32 %v9625, %v9626
    %v9628 = vrot.slane %v9627, 2
    %v9629 = vmax.f32 %v9627, %v9628
    %v9630 = vrot.slane %v9629, 1
    %v9631 = vmax.f32 %v9629, %v9630
    %v9632 = vsel %vm134, %v8217, -inf
    %v9633 = vrot.slane %v9632, 4
    %v9634 = vmax.f32 %v9632, %v9633
    %v9635 = vrot.slane %v9634, 2
    %v9636 = vmax.f32 %v9634, %v9635
    %v9637 = vrot.slane %v9636, 1
    %v9638 = vmax.f32 %v9636, %v9637
    %v9639 = vsel %vm134, %v8225, -inf
    %v9640 = vrot.slane %v9639, 4
    %v9641 = vmax.f32 %v9639, %v9640
    %v9642 = vrot.slane %v9641, 2
    %v9643 = vmax.f32 %v9641, %v9642
    %v9644 = vrot.slane %v9643, 1
    %v9645 = vmax.f32 %v9643, %v9644
    %v9646 = vsel %vm134, %v8233, -inf
    %v9647 = vrot.slane %v9646, 4
    %v9648 = vmax.f32 %v9646, %v9647
    %v9649 = vrot.slane %v9648, 2
    %v9650 = vmax.f32 %v9648, %v9649
    %v9651 = vrot.slane %v9650, 1
    %v9652 = vmax.f32 %v9650, %v9651
    %v9653 = vsel %vm134, %v8232, -inf
    %v9654 = vrot.slane %v9653, 4
    %v9655 = vmax.f32 %v9653, %v9654
    %v9656 = vrot.slane %v9655, 2
    %v9657 = vmax.f32 %v9655, %v9656
    %v9658 = vrot.slane %v9657, 1
    %v9659 = vmax.f32 %v9657, %v9658
    %v9660 = vsel %vm134, %v8234, -inf
    %v9661 = vrot.slane %v9660, 4
    %v9662 = vmax.f32 %v9660, %v9661
    %v9663 = vrot.slane %v9662, 2
    %v9664 = vmax.f32 %v9662, %v9663
    %v9665 = vrot.slane %v9664, 1
    %v9666 = vmax.f32 %v9664, %v9665
    %v9667 = vsel %vm134, %v8242, -inf
    %v9668 = vrot.slane %v9667, 4
    %v9669 = vmax.f32 %v9667, %v9668
    %v9670 = vrot.slane %v9669, 2
    %v9671 = vmax.f32 %v9669, %v9670
    %v9672 = vrot.slane %v9671, 1
    %v9673 = vmax.f32 %v9671, %v9672
    %v9674 = vsel %vm134, %v8250, -inf
    %v9675 = vrot.slane %v9674, 4
    %v9676 = vmax.f32 %v9674, %v9675
    %v9677 = vrot.slane %v9676, 2
    %v9678 = vmax.f32 %v9676, %v9677
    %v9679 = vrot.slane %v9678, 1
    %v9680 = vmax.f32 %v9678, %v9679
    %v9681 = vsel %vm134, %v8249, -inf
    %v9682 = vrot.slane %v9681, 4
    %v9683 = vmax.f32 %v9681, %v9682
    %v9684 = vrot.slane %v9683, 2
    %v9685 = vmax.f32 %v9683, %v9684
    %v9686 = vrot.slane %v9685, 1
    %v9687 = vmax.f32 %v9685, %v9686
    %v9688 = vsel %vm134, %v8251, -inf
    %v9689 = vrot.slane %v9688, 4
    %v9690 = vmax.f32 %v9688, %v9689
    %v9691 = vrot.slane %v9690, 2
    %v9692 = vmax.f32 %v9690, %v9691
    %v9693 = vrot.slane %v9692, 1
    %v9694 = vmax.f32 %v9692, %v9693
    %v9695 = vsel %vm134, %v8259, -inf
    %v9696 = vrot.slane %v9695, 4
    %v9697 = vmax.f32 %v9695, %v9696
    %v9698 = vrot.slane %v9697, 2
    %v9699 = vmax.f32 %v9697, %v9698
    %v9700 = vrot.slane %v9699, 1
    %v9701 = vmax.f32 %v9699, %v9700
    %v9702 = vsel %vm134, %v8267, -inf
    %v9703 = vrot.slane %v9702, 4
    %v9704 = vmax.f32 %v9702, %v9703
    %v9705 = vrot.slane %v9704, 2
    %v9706 = vmax.f32 %v9704, %v9705
    %v9707 = vrot.slane %v9706, 1
    %v9708 = vmax.f32 %v9706, %v9707
    %v9709 = vsel %vm134, %v8266, -inf
    %v9710 = vrot.slane %v9709, 4
    %v9711 = vmax.f32 %v9709, %v9710
    %v9712 = vrot.slane %v9711, 2
    %v9713 = vmax.f32 %v9711, %v9712
    %v9714 = vrot.slane %v9713, 1
    %v9715 = vmax.f32 %v9713, %v9714
    %v9716 = vsel %vm134, %v8268, -inf
    %v9717 = vrot.slane %v9716, 4
    %v9718 = vmax.f32 %v9716, %v9717
    %v9719 = vrot.slane %v9718, 2
    %v9720 = vmax.f32 %v9718, %v9719
    %v9721 = vrot.slane %v9720, 1
    %v9722 = vmax.f32 %v9720, %v9721
    %v9723 = vsel %vm134, %v8276, -inf
    %v9724 = vrot.slane %v9723, 4
    %v9725 = vmax.f32 %v9723, %v9724
    %v9726 = vrot.slane %v9725, 2
    %v9727 = vmax.f32 %v9725, %v9726
    %v9728 = vrot.slane %v9727, 1
    %v9729 = vmax.f32 %v9727, %v9728
    %v9730 = vsel %vm134, %v8284, -inf
    %v9731 = vrot.slane %v9730, 4
    %v9732 = vmax.f32 %v9730, %v9731
    %v9733 = vrot.slane %v9732, 2
    %v9734 = vmax.f32 %v9732, %v9733
    %v9735 = vrot.slane %v9734, 1
    %v9736 = vmax.f32 %v9734, %v9735
    %v9737 = vsel %vm134, %v8283, -inf
    %v9738 = vrot.slane %v9737, 4
    %v9739 = vmax.f32 %v9737, %v9738
    %v9740 = vrot.slane %v9739, 2
    %v9741 = vmax.f32 %v9739, %v9740
    %v9742 = vrot.slane %v9741, 1
    %v9743 = vmax.f32 %v9741, %v9742
    %v9744 = vsel %vm134, %v8285, -inf
    %v9745 = vrot.slane %v9744, 4
    %v9746 = vmax.f32 %v9744, %v9745
    %v9747 = vrot.slane %v9746, 2
    %v9748 = vmax.f32 %v9746, %v9747
    %v9749 = vrot.slane %v9748, 1
    %v9750 = vmax.f32 %v9748, %v9749
    %v9751 = vsel %vm134, %v8293, -inf
    %v9752 = vrot.slane %v9751, 4
    %v9753 = vmax.f32 %v9751, %v9752
    %v9754 = vrot.slane %v9753, 2
    %v9755 = vmax.f32 %v9753, %v9754
    %v9756 = vrot.slane %v9755, 1
    %v9757 = vmax.f32 %v9755, %v9756
    %v9758 = vsel %vm134, %v8301, -inf
    %v9759 = vrot.slane %v9758, 4
    %v9760 = vmax.f32 %v9758, %v9759
    %v9761 = vrot.slane %v9760, 2
    %v9762 = vmax.f32 %v9760, %v9761
    %v9763 = vrot.slane %v9762, 1
    %v9764 = vmax.f32 %v9762, %v9763
    %v9765 = vsel %vm134, %v8300, -inf
    %v9766 = vrot.slane %v9765, 4
    %v9767 = vmax.f32 %v9765, %v9766
    %v9768 = vrot.slane %v9767, 2
    %v9769 = vmax.f32 %v9767, %v9768
    %v9770 = vrot.slane %v9769, 1
    %v9771 = vmax.f32 %v9769, %v9770
    %v9772 = vsel %vm134, %v8302, -inf
    %v9773 = vrot.slane %v9772, 4
    %v9774 = vmax.f32 %v9772, %v9773
    %v9775 = vrot.slane %v9774, 2
    %v9776 = vmax.f32 %v9774, %v9775
    %v9777 = vrot.slane %v9776, 1
    %v9778 = vmax.f32 %v9776, %v9777
    %v9779 = vsel %vm134, %v8310, -inf
    %v9780 = vrot.slane %v9779, 4
    %v9781 = vmax.f32 %v9779, %v9780
    %v9782 = vrot.slane %v9781, 2
    %v9783 = vmax.f32 %v9781, %v9782
    %v9784 = vrot.slane %v9783, 1
    %v9785 = vmax.f32 %v9783, %v9784
    %v9786 = vsel %vm134, %v8318, -inf
    %v9787 = vrot.slane %v9786, 4
    %v9788 = vmax.f32 %v9786, %v9787
    %v9789 = vrot.slane %v9788, 2
    %v9790 = vmax.f32 %v9788, %v9789
    %v9791 = vrot.slane %v9790, 1
    %v9792 = vmax.f32 %v9790, %v9791
    %v9793 = vsel %vm134, %v8317, -inf
    %v9794 = vrot.slane %v9793, 4
    %v9795 = vmax.f32 %v9793, %v9794
    %v9796 = vrot.slane %v9795, 2
    %v9797 = vmax.f32 %v9795, %v9796
    %v9798 = vrot.slane %v9797, 1
    %v9799 = vmax.f32 %v9797, %v9798
    %v9800 = vsel %vm134, %v8319, -inf
    %v9801 = vrot.slane %v9800, 4
    %v9802 = vmax.f32 %v9800, %v9801
    %v9803 = vrot.slane %v9802, 2
    %v9804 = vmax.f32 %v9802, %v9803
    %v9805 = vrot.slane %v9804, 1
    %v9806 = vmax.f32 %v9804, %v9805
    %v9807 = vsel %vm134, %v8327, -inf
    %v9808 = vrot.slane %v9807, 4
    %v9809 = vmax.f32 %v9807, %v9808
    %v9810 = vrot.slane %v9809, 2
    %v9811 = vmax.f32 %v9809, %v9810
    %v9812 = vrot.slane %v9811, 1
    %v9813 = vmax.f32 %v9811, %v9812
    %v9814 = vsel %vm134, %v8335, -inf
    %v9815 = vrot.slane %v9814, 4
    %v9816 = vmax.f32 %v9814, %v9815
    %v9817 = vrot.slane %v9816, 2
    %v9818 = vmax.f32 %v9816, %v9817
    %v9819 = vrot.slane %v9818, 1
    %v9820 = vmax.f32 %v9818, %v9819
    %v9821 = vsel %vm134, %v8334, -inf
    %v9822 = vrot.slane %v9821, 4
    %v9823 = vmax.f32 %v9821, %v9822
    %v9824 = vrot.slane %v9823, 2
    %v9825 = vmax.f32 %v9823, %v9824
    %v9826 = vrot.slane %v9825, 1
    %v9827 = vmax.f32 %v9825, %v9826
    %v9828 = vsel %vm134, %v8336, -inf
    %v9829 = vrot.slane %v9828, 4
    %v9830 = vmax.f32 %v9828, %v9829
    %v9831 = vrot.slane %v9830, 2
    %v9832 = vmax.f32 %v9830, %v9831
    %v9833 = vrot.slane %v9832, 1
    %v9834 = vmax.f32 %v9832, %v9833
    %v9835 = vsel %vm134, %v8344, -inf
    %v9836 = vrot.slane %v9835, 4
    %v9837 = vmax.f32 %v9835, %v9836
    %v9838 = vrot.slane %v9837, 2
    %v9839 = vmax.f32 %v9837, %v9838
    %v9840 = vrot.slane %v9839, 1
    %v9841 = vmax.f32 %v9839, %v9840
    %v9842 = vsel %vm134, %v8352, -inf
    %v9843 = vrot.slane %v9842, 4
    %v9844 = vmax.f32 %v9842, %v9843
    %v9845 = vrot.slane %v9844, 2
    %v9846 = vmax.f32 %v9844, %v9845
    %v9847 = vrot.slane %v9846, 1
    %v9848 = vmax.f32 %v9846, %v9847
    %v9849 = vsel %vm134, %v8351, -inf
    %v9850 = vrot.slane %v9849, 4
    %v9851 = vmax.f32 %v9849, %v9850
    %v9852 = vrot.slane %v9851, 2
    %v9853 = vmax.f32 %v9851, %v9852
    %v9854 = vrot.slane %v9853, 1
    %v9855 = vmax.f32 %v9853, %v9854
    %v9856 = vsel %vm134, %v8353, -inf
    %v9857 = vrot.slane %v9856, 4
    %v9858 = vmax.f32 %v9856, %v9857
    %v9859 = vrot.slane %v9858, 2
    %v9860 = vmax.f32 %v9858, %v9859
    %v9861 = vrot.slane %v9860, 1
    %v9862 = vmax.f32 %v9860, %v9861
    %v9863 = vsel %vm134, %v8361, -inf
    %v9864 = vrot.slane %v9863, 4
    %v9865 = vmax.f32 %v9863, %v9864
    %v9866 = vrot.slane %v9865, 2
    %v9867 = vmax.f32 %v9865, %v9866
    %v9868 = vrot.slane %v9867, 1
    %v9869 = vmax.f32 %v9867, %v9868
    %v9870 = vsel %vm134, %v8369, -inf
    %v9871 = vrot.slane %v9870, 4
    %v9872 = vmax.f32 %v9870, %v9871
    %v9873 = vrot.slane %v9872, 2
    %v9874 = vmax.f32 %v9872, %v9873
    %v9875 = vrot.slane %v9874, 1
    %v9876 = vmax.f32 %v9874, %v9875
    %v9877 = vsel %vm134, %v8368, -inf
    %v9878 = vrot.slane %v9877, 4
    %v9879 = vmax.f32 %v9877, %v9878
    %v9880 = vrot.slane %v9879, 2
    %v9881 = vmax.f32 %v9879, %v9880
    %v9882 = vrot.slane %v9881, 1
    %v9883 = vmax.f32 %v9881, %v9882
    %v9884 = vsel %vm134, %v8370, -inf
    %v9885 = vrot.slane %v9884, 4
    %v9886 = vmax.f32 %v9884, %v9885
    %v9887 = vrot.slane %v9886, 2
    %v9888 = vmax.f32 %v9886, %v9887
    %v9889 = vrot.slane %v9888, 1
    %v9890 = vmax.f32 %v9888, %v9889
    %v9891 = vsel %vm134, %v8378, -inf
    %v9892 = vrot.slane %v9891, 4
    %v9893 = vmax.f32 %v9891, %v9892
    %v9894 = vrot.slane %v9893, 2
    %v9895 = vmax.f32 %v9893, %v9894
    %v9896 = vrot.slane %v9895, 1
    %v9897 = vmax.f32 %v9895, %v9896
    %v9898 = vsel %vm134, %v8386, -inf
    %v9899 = vrot.slane %v9898, 4
    %v9900 = vmax.f32 %v9898, %v9899
    %v9901 = vrot.slane %v9900, 2
    %v9902 = vmax.f32 %v9900, %v9901
    %v9903 = vrot.slane %v9902, 1
    %v9904 = vmax.f32 %v9902, %v9903
    %v9905 = vsel %vm134, %v8385, -inf
    %v9906 = vrot.slane %v9905, 4
    %v9907 = vmax.f32 %v9905, %v9906
    %v9908 = vrot.slane %v9907, 2
    %v9909 = vmax.f32 %v9907, %v9908
    %v9910 = vrot.slane %v9909, 1
    %v9911 = vmax.f32 %v9909, %v9910
    %v9912 = vsel %vm134, %v8387, -inf
    %v9913 = vrot.slane %v9912, 4
    %v9914 = vmax.f32 %v9912, %v9913
    %v9915 = vrot.slane %v9914, 2
    %v9916 = vmax.f32 %v9914, %v9915
    %v9917 = vrot.slane %v9916, 1
    %v9918 = vmax.f32 %v9916, %v9917
    %v9919 = vsel %vm134, %v8395, -inf
    %v9920 = vrot.slane %v9919, 4
    %v9921 = vmax.f32 %v9919, %v9920
    %v9922 = vrot.slane %v9921, 2
    %v9923 = vmax.f32 %v9921, %v9922
    %v9924 = vrot.slane %v9923, 1
    %v9925 = vmax.f32 %v9923, %v9924
    %v9926 = vsel %vm134, %v8403, -inf
    %v9927 = vrot.slane %v9926, 4
    %v9928 = vmax.f32 %v9926, %v9927
    %v9929 = vrot.slane %v9928, 2
    %v9930 = vmax.f32 %v9928, %v9929
    %v9931 = vrot.slane %v9930, 1
    %v9932 = vmax.f32 %v9930, %v9931
    %v9933 = vsel %vm134, %v8402, -inf
    %v9934 = vrot.slane %v9933, 4
    %v9935 = vmax.f32 %v9933, %v9934
    %v9936 = vrot.slane %v9935, 2
    %v9937 = vmax.f32 %v9935, %v9936
    %v9938 = vrot.slane %v9937, 1
    %v9939 = vmax.f32 %v9937, %v9938
    %v9940 = vsel %vm134, %v8404, -inf
    %v9941 = vrot.slane %v9940, 4
    %v9942 = vmax.f32 %v9940, %v9941
    %v9943 = vrot.slane %v9942, 2
    %v9944 = vmax.f32 %v9942, %v9943
    %v9945 = vrot.slane %v9944, 1
    %v9946 = vmax.f32 %v9944, %v9945
    %v9947 = vsel %vm134, %v8412, -inf
    %v9948 = vrot.slane %v9947, 4
    %v9949 = vmax.f32 %v9947, %v9948
    %v9950 = vrot.slane %v9949, 2
    %v9951 = vmax.f32 %v9949, %v9950
    %v9952 = vrot.slane %v9951, 1
    %v9953 = vmax.f32 %v9951, %v9952
    %v9954 = vsel %vm134, %v8420, -inf
    %v9955 = vrot.slane %v9954, 4
    %v9956 = vmax.f32 %v9954, %v9955
    %v9957 = vrot.slane %v9956, 2
    %v9958 = vmax.f32 %v9956, %v9957
    %v9959 = vrot.slane %v9958, 1
    %v9960 = vmax.f32 %v9958, %v9959
    %v9961 = vsel %vm134, %v8419, -inf
    %v9962 = vrot.slane %v9961, 4
    %v9963 = vmax.f32 %v9961, %v9962
    %v9964 = vrot.slane %v9963, 2
    %v9965 = vmax.f32 %v9963, %v9964
    %v9966 = vrot.slane %v9965, 1
    %v9967 = vmax.f32 %v9965, %v9966
    %v9968 = vsel %vm134, %v8421, -inf
    %v9969 = vrot.slane %v9968, 4
    %v9970 = vmax.f32 %v9968, %v9969
    %v9971 = vrot.slane %v9970, 2
    %v9972 = vmax.f32 %v9970, %v9971
    %v9973 = vrot.slane %v9972, 1
    %v9974 = vmax.f32 %v9972, %v9973
    %v9975 = vsel %vm134, %v8429, -inf
    %v9976 = vrot.slane %v9975, 4
    %v9977 = vmax.f32 %v9975, %v9976
    %v9978 = vrot.slane %v9977, 2
    %v9979 = vmax.f32 %v9977, %v9978
    %v9980 = vrot.slane %v9979, 1
    %v9981 = vmax.f32 %v9979, %v9980
    %v9982 = vsel %vm134, %v8437, -inf
    %v9983 = vrot.slane %v9982, 4
    %v9984 = vmax.f32 %v9982, %v9983
    %v9985 = vrot.slane %v9984, 2
    %v9986 = vmax.f32 %v9984, %v9985
    %v9987 = vrot.slane %v9986, 1
    %v9988 = vmax.f32 %v9986, %v9987
    %v9989 = vsel %vm134, %v8436, -inf
    %v9990 = vrot.slane %v9989, 4
    %v9991 = vmax.f32 %v9989, %v9990
    %v9992 = vrot.slane %v9991, 2
    %v9993 = vmax.f32 %v9991, %v9992
    %v9994 = vrot.slane %v9993, 1
    %v9995 = vmax.f32 %v9993, %v9994
    %v9996 = vsel %vm134, %v8438, -inf
    %v9997 = vrot.slane %v9996, 4
    %v9998 = vmax.f32 %v9996, %v9997
    %v9999 = vrot.slane %v9998, 2
    %v10000 = vmax.f32 %v9998, %v9999
    %v10001 = vrot.slane %v10000, 1
    %v10002 = vmax.f32 %v10000, %v10001
    %v10003 = vsel %vm134, %v8446, -inf
    %v10004 = vrot.slane %v10003, 4
    %v10005 = vmax.f32 %v10003, %v10004
    %v10006 = vrot.slane %v10005, 2
    %v10007 = vmax.f32 %v10005, %v10006
    %v10008 = vrot.slane %v10007, 1
    %v10009 = vmax.f32 %v10007, %v10008
    %v10010 = vsel %vm134, %v8454, -inf
    %v10011 = vrot.slane %v10010, 4
    %v10012 = vmax.f32 %v10010, %v10011
    %v10013 = vrot.slane %v10012, 2
    %v10014 = vmax.f32 %v10012, %v10013
    %v10015 = vrot.slane %v10014, 1
    %v10016 = vmax.f32 %v10014, %v10015
    %v10017 = vsel %vm134, %v8453, -inf
    %v10018 = vrot.slane %v10017, 4
    %v10019 = vmax.f32 %v10017, %v10018
    %v10020 = vrot.slane %v10019, 2
    %v10021 = vmax.f32 %v10019, %v10020
    %v10022 = vrot.slane %v10021, 1
    %v10023 = vmax.f32 %v10021, %v10022
    %v10024 = vsel %vm134, %v8455, -inf
    %v10025 = vrot.slane %v10024, 4
    %v10026 = vmax.f32 %v10024, %v10025
    %v10027 = vrot.slane %v10026, 2
    %v10028 = vmax.f32 %v10026, %v10027
    %v10029 = vrot.slane %v10028, 1
    %v10030 = vmax.f32 %v10028, %v10029
    %v10031 = vsel %vm134, %v8463, -inf
    %v10032 = vrot.slane %v10031, 4
    %v10033 = vmax.f32 %v10031, %v10032
    %v10034 = vrot.slane %v10033, 2
    %v10035 = vmax.f32 %v10033, %v10034
    %v10036 = vrot.slane %v10035, 1
    %v10037 = vmax.f32 %v10035, %v10036
    %v10038 = vsel %vm134, %v8471, -inf
    %v10039 = vrot.slane %v10038, 4
    %v10040 = vmax.f32 %v10038, %v10039
    %v10041 = vrot.slane %v10040, 2
    %v10042 = vmax.f32 %v10040, %v10041
    %v10043 = vrot.slane %v10042, 1
    %v10044 = vmax.f32 %v10042, %v10043
    %v10045 = vsel %vm134, %v8470, -inf
    %v10046 = vrot.slane %v10045, 4
    %v10047 = vmax.f32 %v10045, %v10046
    %v10048 = vrot.slane %v10047, 2
    %v10049 = vmax.f32 %v10047, %v10048
    %v10050 = vrot.slane %v10049, 1
    %v10051 = vmax.f32 %v10049, %v10050
    %v10052 = vsel %vm134, %v8472, -inf
    %v10053 = vrot.slane %v10052, 4
    %v10054 = vmax.f32 %v10052, %v10053
    %v10055 = vrot.slane %v10054, 2
    %v10056 = vmax.f32 %v10054, %v10055
    %v10057 = vrot.slane %v10056, 1
    %v10058 = vmax.f32 %v10056, %v10057
    %v10059 = vsel %vm134, %v8480, -inf
    %v10060 = vrot.slane %v10059, 4
    %v10061 = vmax.f32 %v10059, %v10060
    %v10062 = vrot.slane %v10061, 2
    %v10063 = vmax.f32 %v10061, %v10062
    %v10064 = vrot.slane %v10063, 1
    %v10065 = vmax.f32 %v10063, %v10064
    %v10066 = vsel %vm134, %v8488, -inf
    %v10067 = vrot.slane %v10066, 4
    %v10068 = vmax.f32 %v10066, %v10067
    %v10069 = vrot.slane %v10068, 2
    %v10070 = vmax.f32 %v10068, %v10069
    %v10071 = vrot.slane %v10070, 1
    %v10072 = vmax.f32 %v10070, %v10071
    %v10073 = vsel %vm134, %v8487, -inf
    %v10074 = vrot.slane %v10073, 4
    %v10075 = vmax.f32 %v10073, %v10074
    %v10076 = vrot.slane %v10075, 2
    %v10077 = vmax.f32 %v10075, %v10076
    %v10078 = vrot.slane %v10077, 1
    %v10079 = vmax.f32 %v10077, %v10078
    %v10080 = vsel %vm134, %v8489, -inf
    %v10081 = vrot.slane %v10080, 4
    %v10082 = vmax.f32 %v10080, %v10081
    %v10083 = vrot.slane %v10082, 2
    %v10084 = vmax.f32 %v10082, %v10083
    %v10085 = vrot.slane %v10084, 1
    %v10086 = vmax.f32 %v10084, %v10085
    %v10087 = vsel %vm134, %v8497, -inf
    %v10088 = vrot.slane %v10087, 4
    %v10089 = vmax.f32 %v10087, %v10088
    %v10090 = vrot.slane %v10089, 2
    %v10091 = vmax.f32 %v10089, %v10090
    %v10092 = vrot.slane %v10091, 1
    %v10093 = vmax.f32 %v10091, %v10092
    %v10094 = vsel %vm134, %v8505, -inf
    %v10095 = vrot.slane %v10094, 4
    %v10096 = vmax.f32 %v10094, %v10095
    %v10097 = vrot.slane %v10096, 2
    %v10098 = vmax.f32 %v10096, %v10097
    %v10099 = vrot.slane %v10098, 1
    %v10100 = vmax.f32 %v10098, %v10099
    %v10101 = vsel %vm134, %v8504, -inf
    %v10102 = vrot.slane %v10101, 4
    %v10103 = vmax.f32 %v10101, %v10102
    %v10104 = vrot.slane %v10103, 2
    %v10105 = vmax.f32 %v10103, %v10104
    %v10106 = vrot.slane %v10105, 1
    %v10107 = vmax.f32 %v10105, %v10106
    %v10108 = vsel %vm134, %v8506, -inf
    %v10109 = vrot.slane %v10108, 4
    %v10110 = vmax.f32 %v10108, %v10109
    %v10111 = vrot.slane %v10110, 2
    %v10112 = vmax.f32 %v10110, %v10111
    %v10113 = vrot.slane %v10112, 1
    %v10114 = vmax.f32 %v10112, %v10113
    %v10115 = vsel %vm134, %v8514, -inf
    %v10116 = vrot.slane %v10115, 4
    %v10117 = vmax.f32 %v10115, %v10116
    %v10118 = vrot.slane %v10117, 2
    %v10119 = vmax.f32 %v10117, %v10118
    %v10120 = vrot.slane %v10119, 1
    %v10121 = vmax.f32 %v10119, %v10120
    %v10122 = vsel %vm134, %v8522, -inf
    %v10123 = vrot.slane %v10122, 4
    %v10124 = vmax.f32 %v10122, %v10123
    %v10125 = vrot.slane %v10124, 2
    %v10126 = vmax.f32 %v10124, %v10125
    %v10127 = vrot.slane %v10126, 1
    %v10128 = vmax.f32 %v10126, %v10127
    %v10129 = vsel %vm134, %v8521, -inf
    %v10130 = vrot.slane %v10129, 4
    %v10131 = vmax.f32 %v10129, %v10130
    %v10132 = vrot.slane %v10131, 2
    %v10133 = vmax.f32 %v10131, %v10132
    %v10134 = vrot.slane %v10133, 1
    %v10135 = vmax.f32 %v10133, %v10134
    %v10136 = vsel %vm134, %v8523, -inf
    %v10137 = vrot.slane %v10136, 4
    %v10138 = vmax.f32 %v10136, %v10137
    %v10139 = vrot.slane %v10138, 2
    %v10140 = vmax.f32 %v10138, %v10139
    %v10141 = vrot.slane %v10140, 1
    %v10142 = vmax.f32 %v10140, %v10141
    %v10143 = vsel %vm134, %v8531, -inf
    %v10144 = vrot.slane %v10143, 4
    %v10145 = vmax.f32 %v10143, %v10144
    %v10146 = vrot.slane %v10145, 2
    %v10147 = vmax.f32 %v10145, %v10146
    %v10148 = vrot.slane %v10147, 1
    %v10149 = vmax.f32 %v10147, %v10148
    %v10150 = vsel %vm134, %v8539, -inf
    %v10151 = vrot.slane %v10150, 4
    %v10152 = vmax.f32 %v10150, %v10151
    %v10153 = vrot.slane %v10152, 2
    %v10154 = vmax.f32 %v10152, %v10153
    %v10155 = vrot.slane %v10154, 1
    %v10156 = vmax.f32 %v10154, %v10155
    %v10157 = vsel %vm134, %v8538, -inf
    %v10158 = vrot.slane %v10157, 4
    %v10159 = vmax.f32 %v10157, %v10158
    %v10160 = vrot.slane %v10159, 2
    %v10161 = vmax.f32 %v10159, %v10160
    %v10162 = vrot.slane %v10161, 1
    %v10163 = vmax.f32 %v10161, %v10162
    %v10164 = vsel %vm134, %v8540, -inf
    %v10165 = vrot.slane %v10164, 4
    %v10166 = vmax.f32 %v10164, %v10165
    %v10167 = vrot.slane %v10166, 2
    %v10168 = vmax.f32 %v10166, %v10167
    %v10169 = vrot.slane %v10168, 1
    %v10170 = vmax.f32 %v10168, %v10169
    %v10171 = vsel %vm134, %v8548, -inf
    %v10172 = vrot.slane %v10171, 4
    %v10173 = vmax.f32 %v10171, %v10172
    %v10174 = vrot.slane %v10173, 2
    %v10175 = vmax.f32 %v10173, %v10174
    %v10176 = vrot.slane %v10175, 1
    %v10177 = vmax.f32 %v10175, %v10176
    %v10178 = vsel %vm134, %v8556, -inf
    %v10179 = vrot.slane %v10178, 4
    %v10180 = vmax.f32 %v10178, %v10179
    %v10181 = vrot.slane %v10180, 2
    %v10182 = vmax.f32 %v10180, %v10181
    %v10183 = vrot.slane %v10182, 1
    %v10184 = vmax.f32 %v10182, %v10183
    %v10185 = vsel %vm134, %v8555, -inf
    %v10186 = vrot.slane %v10185, 4
    %v10187 = vmax.f32 %v10185, %v10186
    %v10188 = vrot.slane %v10187, 2
    %v10189 = vmax.f32 %v10187, %v10188
    %v10190 = vrot.slane %v10189, 1
    %v10191 = vmax.f32 %v10189, %v10190
    %v10192 = vsel %vm134, %v8557, -inf
    %v10193 = vrot.slane %v10192, 4
    %v10194 = vmax.f32 %v10192, %v10193
    %v10195 = vrot.slane %v10194, 2
    %v10196 = vmax.f32 %v10194, %v10195
    %v10197 = vrot.slane %v10196, 1
    %v10198 = vmax.f32 %v10196, %v10197
    %v10199 = vsel %vm134, %v8565, -inf
    %v10200 = vrot.slane %v10199, 4
    %v10201 = vmax.f32 %v10199, %v10200
    %v10202 = vrot.slane %v10201, 2
    %v10203 = vmax.f32 %v10201, %v10202
    %v10204 = vrot.slane %v10203, 1
    %v10205 = vmax.f32 %v10203, %v10204
    %v10206 = vsel %vm134, %v8573, -inf
    %v10207 = vrot.slane %v10206, 4
    %v10208 = vmax.f32 %v10206, %v10207
    %v10209 = vrot.slane %v10208, 2
    %v10210 = vmax.f32 %v10208, %v10209
    %v10211 = vrot.slane %v10210, 1
    %v10212 = vmax.f32 %v10210, %v10211
    %v10213 = vsel %vm134, %v8572, -inf
    %v10214 = vrot.slane %v10213, 4
    %v10215 = vmax.f32 %v10213, %v10214
    %v10216 = vrot.slane %v10215, 2
    %v10217 = vmax.f32 %v10215, %v10216
    %v10218 = vrot.slane %v10217, 1
    %v10219 = vmax.f32 %v10217, %v10218
    %v10220 = vsel %vm134, %v8574, -inf
    %v10221 = vrot.slane %v10220, 4
    %v10222 = vmax.f32 %v10220, %v10221
    %v10223 = vrot.slane %v10222, 2
    %v10224 = vmax.f32 %v10222, %v10223
    %v10225 = vrot.slane %v10224, 1
    %v10226 = vmax.f32 %v10224, %v10225
    %v10227 = vsel %vm134, %v8582, -inf
    %v10228 = vrot.slane %v10227, 4
    %v10229 = vmax.f32 %v10227, %v10228
    %v10230 = vrot.slane %v10229, 2
    %v10231 = vmax.f32 %v10229, %v10230
    %v10232 = vrot.slane %v10231, 1
    %v10233 = vmax.f32 %v10231, %v10232
    %v10234 = vsel %vm134, %v8590, -inf
    %v10235 = vrot.slane %v10234, 4
    %v10236 = vmax.f32 %v10234, %v10235
    %v10237 = vrot.slane %v10236, 2
    %v10238 = vmax.f32 %v10236, %v10237
    %v10239 = vrot.slane %v10238, 1
    %v10240 = vmax.f32 %v10238, %v10239
    %v10241 = vsel %vm134, %v8589, -inf
    %v10242 = vrot.slane %v10241, 4
    %v10243 = vmax.f32 %v10241, %v10242
    %v10244 = vrot.slane %v10243, 2
    %v10245 = vmax.f32 %v10243, %v10244
    %v10246 = vrot.slane %v10245, 1
    %v10247 = vmax.f32 %v10245, %v10246
    %v10248 = vsel %vm134, %v8591, -inf
    %v10249 = vrot.slane %v10248, 4
    %v10250 = vmax.f32 %v10248, %v10249
    %v10251 = vrot.slane %v10250, 2
    %v10252 = vmax.f32 %v10250, %v10251
    %v10253 = vrot.slane %v10252, 1
    %v10254 = vmax.f32 %v10252, %v10253
    %v10255 = vsel %vm134, %v8599, -inf
    %v10256 = vrot.slane %v10255, 4
    %v10257 = vmax.f32 %v10255, %v10256
    %v10258 = vrot.slane %v10257, 2
    %v10259 = vmax.f32 %v10257, %v10258
    %v10260 = vrot.slane %v10259, 1
    %v10261 = vmax.f32 %v10259, %v10260
    %v10262 = vsel %vm134, %v8607, -inf
    %v10263 = vrot.slane %v10262, 4
    %v10264 = vmax.f32 %v10262, %v10263
    %v10265 = vrot.slane %v10264, 2
    %v10266 = vmax.f32 %v10264, %v10265
    %v10267 = vrot.slane %v10266, 1
    %v10268 = vmax.f32 %v10266, %v10267
    %v10269 = vsel %vm134, %v8606, -inf
    %v10270 = vrot.slane %v10269, 4
    %v10271 = vmax.f32 %v10269, %v10270
    %v10272 = vrot.slane %v10271, 2
    %v10273 = vmax.f32 %v10271, %v10272
    %v10274 = vrot.slane %v10273, 1
    %v10275 = vmax.f32 %v10273, %v10274
    %v10276 = vsel %vm134, %v8608, -inf
    %v10277 = vrot.slane %v10276, 4
    %v10278 = vmax.f32 %v10276, %v10277
    %v10279 = vrot.slane %v10278, 2
    %v10280 = vmax.f32 %v10278, %v10279
    %v10281 = vrot.slane %v10280, 1
    %v10282 = vmax.f32 %v10280, %v10281
    %v10283 = vsel %vm134, %v8616, -inf
    %v10284 = vrot.slane %v10283, 4
    %v10285 = vmax.f32 %v10283, %v10284
    %v10286 = vrot.slane %v10285, 2
    %v10287 = vmax.f32 %v10285, %v10286
    %v10288 = vrot.slane %v10287, 1
    %v10289 = vmax.f32 %v10287, %v10288
    %v10290 = vsel %vm134, %v8624, -inf
    %v10291 = vrot.slane %v10290, 4
    %v10292 = vmax.f32 %v10290, %v10291
    %v10293 = vrot.slane %v10292, 2
    %v10294 = vmax.f32 %v10292, %v10293
    %v10295 = vrot.slane %v10294, 1
    %v10296 = vmax.f32 %v10294, %v10295
    %v10297 = vsel %vm134, %v8623, -inf
    %v10298 = vrot.slane %v10297, 4
    %v10299 = vmax.f32 %v10297, %v10298
    %v10300 = vrot.slane %v10299, 2
    %v10301 = vmax.f32 %v10299, %v10300
    %v10302 = vrot.slane %v10301, 1
    %v10303 = vmax.f32 %v10301, %v10302
    %v10304 = vsel %vm134, %v8625, -inf
    %v10305 = vrot.slane %v10304, 4
    %v10306 = vmax.f32 %v10304, %v10305
    %v10307 = vrot.slane %v10306, 2
    %v10308 = vmax.f32 %v10306, %v10307
    %v10309 = vrot.slane %v10308, 1
    %v10310 = vmax.f32 %v10308, %v10309
    %v10311 = vsel %vm134, %v8633, -inf
    %v10312 = vrot.slane %v10311, 4
    %v10313 = vmax.f32 %v10311, %v10312
    %v10314 = vrot.slane %v10313, 2
    %v10315 = vmax.f32 %v10313, %v10314
    %v10316 = vrot.slane %v10315, 1
    %v10317 = vmax.f32 %v10315, %v10316
    %v10318 = vsel %vm134, %v8641, -inf
    %v10319 = vrot.slane %v10318, 4
    %v10320 = vmax.f32 %v10318, %v10319
    %v10321 = vrot.slane %v10320, 2
    %v10322 = vmax.f32 %v10320, %v10321
    %v10323 = vrot.slane %v10322, 1
    %v10324 = vmax.f32 %v10322, %v10323
    %v10325 = vsel %vm134, %v8640, -inf
    %v10326 = vrot.slane %v10325, 4
    %v10327 = vmax.f32 %v10325, %v10326
    %v10328 = vrot.slane %v10327, 2
    %v10329 = vmax.f32 %v10327, %v10328
    %v10330 = vrot.slane %v10329, 1
    %v10331 = vmax.f32 %v10329, %v10330
    %v10332 = vsel %vm134, %v8642, -inf
    %v10333 = vrot.slane %v10332, 4
    %v10334 = vmax.f32 %v10332, %v10333
    %v10335 = vrot.slane %v10334, 2
    %v10336 = vmax.f32 %v10334, %v10335
    %v10337 = vrot.slane %v10336, 1
    %v10338 = vmax.f32 %v10336, %v10337
    %v10339 = vsel %vm134, %v8650, -inf
    %v10340 = vrot.slane %v10339, 4
    %v10341 = vmax.f32 %v10339, %v10340
    %v10342 = vrot.slane %v10341, 2
    %v10343 = vmax.f32 %v10341, %v10342
    %v10344 = vrot.slane %v10343, 1
    %v10345 = vmax.f32 %v10343, %v10344
    %v10346 = vsel %vm134, %v8658, -inf
    %v10347 = vrot.slane %v10346, 4
    %v10348 = vmax.f32 %v10346, %v10347
    %v10349 = vrot.slane %v10348, 2
    %v10350 = vmax.f32 %v10348, %v10349
    %v10351 = vrot.slane %v10350, 1
    %v10352 = vmax.f32 %v10350, %v10351
    %v10353 = vsel %vm134, %v8657, -inf
    %v10354 = vrot.slane %v10353, 4
    %v10355 = vmax.f32 %v10353, %v10354
    %v10356 = vrot.slane %v10355, 2
    %v10357 = vmax.f32 %v10355, %v10356
    %v10358 = vrot.slane %v10357, 1
    %v10359 = vmax.f32 %v10357, %v10358
    %v10360 = vsel %vm134, %v8659, -inf
    %v10361 = vrot.slane %v10360, 4
    %v10362 = vmax.f32 %v10360, %v10361
    %v10363 = vrot.slane %v10362, 2
    %v10364 = vmax.f32 %v10362, %v10363
    %v10365 = vrot.slane %v10364, 1
    %v10366 = vmax.f32 %v10364, %v10365
    %v10367 = vsel %vm134, %v8667, -inf
    %v10368 = vrot.slane %v10367, 4
    %v10369 = vmax.f32 %v10367, %v10368
    %v10370 = vrot.slane %v10369, 2
    %v10371 = vmax.f32 %v10369, %v10370
    %v10372 = vrot.slane %v10371, 1
    %v10373 = vmax.f32 %v10371, %v10372
    %v10374 = vsel %vm134, %v8675, -inf
    %v10375 = vrot.slane %v10374, 4
    %v10376 = vmax.f32 %v10374, %v10375
    %v10377 = vrot.slane %v10376, 2
    %v10378 = vmax.f32 %v10376, %v10377
    %v10379 = vrot.slane %v10378, 1
    %v10380 = vmax.f32 %v10378, %v10379
    %v10381 = vsel %vm134, %v8674, -inf
    %v10382 = vrot.slane %v10381, 4
    %v10383 = vmax.f32 %v10381, %v10382
    %v10384 = vrot.slane %v10383, 2
    %v10385 = vmax.f32 %v10383, %v10384
    %v10386 = vrot.slane %v10385, 1
    %v10387 = vmax.f32 %v10385, %v10386
    %v10388 = vsel %vm134, %v8676, -inf
    %v10389 = vrot.slane %v10388, 4
    %v10390 = vmax.f32 %v10388, %v10389
    %v10391 = vrot.slane %v10390, 2
    %v10392 = vmax.f32 %v10390, %v10391
    %v10393 = vrot.slane %v10392, 1
    %v10394 = vmax.f32 %v10392, %v10393
    %v10395 = vsel %vm134, %v8684, -inf
    %v10396 = vrot.slane %v10395, 4
    %v10397 = vmax.f32 %v10395, %v10396
    %v10398 = vrot.slane %v10397, 2
    %v10399 = vmax.f32 %v10397, %v10398
    %v10400 = vrot.slane %v10399, 1
    %v10401 = vmax.f32 %v10399, %v10400
    %v10402 = vsel %vm134, %v8692, -inf
    %v10403 = vrot.slane %v10402, 4
    %v10404 = vmax.f32 %v10402, %v10403
    %v10405 = vrot.slane %v10404, 2
    %v10406 = vmax.f32 %v10404, %v10405
    %v10407 = vrot.slane %v10406, 1
    %v10408 = vmax.f32 %v10406, %v10407
    %v10409 = vsel %vm134, %v8691, -inf
    %v10410 = vrot.slane %v10409, 4
    %v10411 = vmax.f32 %v10409, %v10410
    %v10412 = vrot.slane %v10411, 2
    %v10413 = vmax.f32 %v10411, %v10412
    %v10414 = vrot.slane %v10413, 1
    %v10415 = vmax.f32 %v10413, %v10414
    %v10416 = vsel %vm134, %v8693, -inf
    %v10417 = vrot.slane %v10416, 4
    %v10418 = vmax.f32 %v10416, %v10417
    %v10419 = vrot.slane %v10418, 2
    %v10420 = vmax.f32 %v10418, %v10419
    %v10421 = vrot.slane %v10420, 1
    %v10422 = vmax.f32 %v10420, %v10421
    %v10423 = vsel %vm134, %v8701, -inf
    %v10424 = vrot.slane %v10423, 4
    %v10425 = vmax.f32 %v10423, %v10424
    %v10426 = vrot.slane %v10425, 2
    %v10427 = vmax.f32 %v10425, %v10426
    %v10428 = vrot.slane %v10427, 1
    %v10429 = vmax.f32 %v10427, %v10428
    %v10430 = vsel %vm134, %v8709, -inf
    %v10431 = vrot.slane %v10430, 4
    %v10432 = vmax.f32 %v10430, %v10431
    %v10433 = vrot.slane %v10432, 2
    %v10434 = vmax.f32 %v10432, %v10433
    %v10435 = vrot.slane %v10434, 1
    %v10436 = vmax.f32 %v10434, %v10435
    %v10437 = vsel %vm134, %v8708, -inf
    %v10438 = vrot.slane %v10437, 4
    %v10439 = vmax.f32 %v10437, %v10438
    %v10440 = vrot.slane %v10439, 2
    %v10441 = vmax.f32 %v10439, %v10440
    %v10442 = vrot.slane %v10441, 1
    %v10443 = vmax.f32 %v10441, %v10442
    %v10444 = vsel %vm134, %v8710, -inf
    %v10445 = vrot.slane %v10444, 4
    %v10446 = vmax.f32 %v10444, %v10445
    %v10447 = vrot.slane %v10446, 2
    %v10448 = vmax.f32 %v10446, %v10447
    %v10449 = vrot.slane %v10448, 1
    %v10450 = vmax.f32 %v10448, %v10449
    %v10451 = vsel %vm134, %v8718, -inf
    %v10452 = vrot.slane %v10451, 4
    %v10453 = vmax.f32 %v10451, %v10452
    %v10454 = vrot.slane %v10453, 2
    %v10455 = vmax.f32 %v10453, %v10454
    %v10456 = vrot.slane %v10455, 1
    %v10457 = vmax.f32 %v10455, %v10456
    %v10458 = vsel %vm134, %v8726, -inf
    %v10459 = vrot.slane %v10458, 4
    %v10460 = vmax.f32 %v10458, %v10459
    %v10461 = vrot.slane %v10460, 2
    %v10462 = vmax.f32 %v10460, %v10461
    %v10463 = vrot.slane %v10462, 1
    %v10464 = vmax.f32 %v10462, %v10463
    %v10465 = vsel %vm134, %v8725, -inf
    %v10466 = vrot.slane %v10465, 4
    %v10467 = vmax.f32 %v10465, %v10466
    %v10468 = vrot.slane %v10467, 2
    %v10469 = vmax.f32 %v10467, %v10468
    %v10470 = vrot.slane %v10469, 1
    %v10471 = vmax.f32 %v10469, %v10470
    %v10472 = vsel %vm134, %v8727, -inf
    %v10473 = vrot.slane %v10472, 4
    %v10474 = vmax.f32 %v10472, %v10473
    %v10475 = vrot.slane %v10474, 2
    %v10476 = vmax.f32 %v10474, %v10475
    %v10477 = vrot.slane %v10476, 1
    %v10478 = vmax.f32 %v10476, %v10477
    %v10479 = vsel %vm134, %v8735, -inf
    %v10480 = vrot.slane %v10479, 4
    %v10481 = vmax.f32 %v10479, %v10480
    %v10482 = vrot.slane %v10481, 2
    %v10483 = vmax.f32 %v10481, %v10482
    %v10484 = vrot.slane %v10483, 1
    %v10485 = vmax.f32 %v10483, %v10484
    %v10486 = vsel %vm134, %v8743, -inf
    %v10487 = vrot.slane %v10486, 4
    %v10488 = vmax.f32 %v10486, %v10487
    %v10489 = vrot.slane %v10488, 2
    %v10490 = vmax.f32 %v10488, %v10489
    %v10491 = vrot.slane %v10490, 1
    %v10492 = vmax.f32 %v10490, %v10491
    %v10493 = vsel %vm134, %v8742, -inf
    %v10494 = vrot.slane %v10493, 4
    %v10495 = vmax.f32 %v10493, %v10494
    %v10496 = vrot.slane %v10495, 2
    %v10497 = vmax.f32 %v10495, %v10496
    %v10498 = vrot.slane %v10497, 1
    %v10499 = vmax.f32 %v10497, %v10498
    %v10500 = vsel %vm134, %v8744, -inf
    %v10501 = vrot.slane %v10500, 4
    %v10502 = vmax.f32 %v10500, %v10501
    %v10503 = vrot.slane %v10502, 2
    %v10504 = vmax.f32 %v10502, %v10503
    %v10505 = vrot.slane %v10504, 1
    %v10506 = vmax.f32 %v10504, %v10505
    %v10507 = vsel %vm134, %v8752, -inf
    %v10508 = vrot.slane %v10507, 4
    %v10509 = vmax.f32 %v10507, %v10508
    %v10510 = vrot.slane %v10509, 2
    %v10511 = vmax.f32 %v10509, %v10510
    %v10512 = vrot.slane %v10511, 1
    %v10513 = vmax.f32 %v10511, %v10512
    %v10514 = vsel %vm134, %v8760, -inf
    %v10515 = vrot.slane %v10514, 4
    %v10516 = vmax.f32 %v10514, %v10515
    %v10517 = vrot.slane %v10516, 2
    %v10518 = vmax.f32 %v10516, %v10517
    %v10519 = vrot.slane %v10518, 1
    %v10520 = vmax.f32 %v10518, %v10519
    %v10521 = vsel %vm134, %v8759, -inf
    %v10522 = vrot.slane %v10521, 4
    %v10523 = vmax.f32 %v10521, %v10522
    %v10524 = vrot.slane %v10523, 2
    %v10525 = vmax.f32 %v10523, %v10524
    %v10526 = vrot.slane %v10525, 1
    %v10527 = vmax.f32 %v10525, %v10526
    %v10528 = vsel %vm134, %v8761, -inf
    %v10529 = vrot.slane %v10528, 4
    %v10530 = vmax.f32 %v10528, %v10529
    %v10531 = vrot.slane %v10530, 2
    %v10532 = vmax.f32 %v10530, %v10531
    %v10533 = vrot.slane %v10532, 1
    %v10534 = vmax.f32 %v10532, %v10533
    %v10535 = vsel %vm134, %v8769, -inf
    %v10536 = vrot.slane %v10535, 4
    %v10537 = vmax.f32 %v10535, %v10536
    %v10538 = vrot.slane %v10537, 2
    %v10539 = vmax.f32 %v10537, %v10538
    %v10540 = vrot.slane %v10539, 1
    %v10541 = vmax.f32 %v10539, %v10540
    %v10542 = vsel %vm134, %v8777, -inf
    %v10543 = vrot.slane %v10542, 4
    %v10544 = vmax.f32 %v10542, %v10543
    %v10545 = vrot.slane %v10544, 2
    %v10546 = vmax.f32 %v10544, %v10545
    %v10547 = vrot.slane %v10546, 1
    %v10548 = vmax.f32 %v10546, %v10547
    %v10549 = vsel %vm134, %v8776, -inf
    %v10550 = vrot.slane %v10549, 4
    %v10551 = vmax.f32 %v10549, %v10550
    %v10552 = vrot.slane %v10551, 2
    %v10553 = vmax.f32 %v10551, %v10552
    %v10554 = vrot.slane %v10553, 1
    %v10555 = vmax.f32 %v10553, %v10554
    %v10556 = vsel %vm134, %v8778, -inf
    %v10557 = vrot.slane %v10556, 4
    %v10558 = vmax.f32 %v10556, %v10557
    %v10559 = vrot.slane %v10558, 2
    %v10560 = vmax.f32 %v10558, %v10559
    %v10561 = vrot.slane %v10560, 1
    %v10562 = vmax.f32 %v10560, %v10561
    %v10563 = vsel %vm134, %v8786, -inf
    %v10564 = vrot.slane %v10563, 4
    %v10565 = vmax.f32 %v10563, %v10564
    %v10566 = vrot.slane %v10565, 2
    %v10567 = vmax.f32 %v10565, %v10566
    %v10568 = vrot.slane %v10567, 1
    %v10569 = vmax.f32 %v10567, %v10568
    %v10570 = vsel %vm134, %v8794, -inf
    %v10571 = vrot.slane %v10570, 4
    %v10572 = vmax.f32 %v10570, %v10571
    %v10573 = vrot.slane %v10572, 2
    %v10574 = vmax.f32 %v10572, %v10573
    %v10575 = vrot.slane %v10574, 1
    %v10576 = vmax.f32 %v10574, %v10575
    %v10577 = vsel %vm134, %v8793, -inf
    %v10578 = vrot.slane %v10577, 4
    %v10579 = vmax.f32 %v10577, %v10578
    %v10580 = vrot.slane %v10579, 2
    %v10581 = vmax.f32 %v10579, %v10580
    %v10582 = vrot.slane %v10581, 1
    %v10583 = vmax.f32 %v10581, %v10582
    %v10584 = vsel %vm134, %v8795, -inf
    %v10585 = vrot.slane %v10584, 4
    %v10586 = vmax.f32 %v10584, %v10585
    %v10587 = vrot.slane %v10586, 2
    %v10588 = vmax.f32 %v10586, %v10587
    %v10589 = vrot.slane %v10588, 1
    %v10590 = vmax.f32 %v10588, %v10589
    %v10591 = vsel %vm134, %v8803, -inf
    %v10592 = vrot.slane %v10591, 4
    %v10593 = vmax.f32 %v10591, %v10592
    %v10594 = vrot.slane %v10593, 2
    %v10595 = vmax.f32 %v10593, %v10594
    %v10596 = vrot.slane %v10595, 1
    %v10597 = vmax.f32 %v10595, %v10596
    %v10598 = vsel %vm134, %v8811, -inf
    %v10599 = vrot.slane %v10598, 4
    %v10600 = vmax.f32 %v10598, %v10599
    %v10601 = vrot.slane %v10600, 2
    %v10602 = vmax.f32 %v10600, %v10601
    %v10603 = vrot.slane %v10602, 1
    %v10604 = vmax.f32 %v10602, %v10603
    %v10605 = vsel %vm134, %v8810, -inf
    %v10606 = vrot.slane %v10605, 4
    %v10607 = vmax.f32 %v10605, %v10606
    %v10608 = vrot.slane %v10607, 2
    %v10609 = vmax.f32 %v10607, %v10608
    %v10610 = vrot.slane %v10609, 1
    %v10611 = vmax.f32 %v10609, %v10610
    %v10612 = vsel %vm134, %v8812, -inf
    %v10613 = vrot.slane %v10612, 4
    %v10614 = vmax.f32 %v10612, %v10613
    %v10615 = vrot.slane %v10614, 2
    %v10616 = vmax.f32 %v10614, %v10615
    %v10617 = vrot.slane %v10616, 1
    %v10618 = vmax.f32 %v10616, %v10617
    %v10619 = vsel %vm134, %v8820, -inf
    %v10620 = vrot.slane %v10619, 4
    %v10621 = vmax.f32 %v10619, %v10620
    %v10622 = vrot.slane %v10621, 2
    %v10623 = vmax.f32 %v10621, %v10622
    %v10624 = vrot.slane %v10623, 1
    %v10625 = vmax.f32 %v10623, %v10624
    %v10626 = vsel %vm134, %v8828, -inf
    %v10627 = vrot.slane %v10626, 4
    %v10628 = vmax.f32 %v10626, %v10627
    %v10629 = vrot.slane %v10628, 2
    %v10630 = vmax.f32 %v10628, %v10629
    %v10631 = vrot.slane %v10630, 1
    %v10632 = vmax.f32 %v10630, %v10631
    %v10633 = vsel %vm134, %v8827, -inf
    %v10634 = vrot.slane %v10633, 4
    %v10635 = vmax.f32 %v10633, %v10634
    %v10636 = vrot.slane %v10635, 2
    %v10637 = vmax.f32 %v10635, %v10636
    %v10638 = vrot.slane %v10637, 1
    %v10639 = vmax.f32 %v10637, %v10638
    %v10640 = vsel %vm134, %v8829, -inf
    %v10641 = vrot.slane %v10640, 4
    %v10642 = vmax.f32 %v10640, %v10641
    %v10643 = vrot.slane %v10642, 2
    %v10644 = vmax.f32 %v10642, %v10643
    %v10645 = vrot.slane %v10644, 1
    %v10646 = vmax.f32 %v10644, %v10645
    %v10647 = vsel %vm134, %v8837, -inf
    %v10648 = vrot.slane %v10647, 4
    %v10649 = vmax.f32 %v10647, %v10648
    %v10650 = vrot.slane %v10649, 2
    %v10651 = vmax.f32 %v10649, %v10650
    %v10652 = vrot.slane %v10651, 1
    %v10653 = vmax.f32 %v10651, %v10652
    %v10654 = vsel %vm134, %v8845, -inf
    %v10655 = vrot.slane %v10654, 4
    %v10656 = vmax.f32 %v10654, %v10655
    %v10657 = vrot.slane %v10656, 2
    %v10658 = vmax.f32 %v10656, %v10657
    %v10659 = vrot.slane %v10658, 1
    %v10660 = vmax.f32 %v10658, %v10659
    %v10661 = vsel %vm134, %v8844, -inf
    %v10662 = vrot.slane %v10661, 4
    %v10663 = vmax.f32 %v10661, %v10662
    %v10664 = vrot.slane %v10663, 2
    %v10665 = vmax.f32 %v10663, %v10664
    %v10666 = vrot.slane %v10665, 1
    %v10667 = vmax.f32 %v10665, %v10666
    %v10668 = vsel %vm134, %v8846, -inf
    %v10669 = vrot.slane %v10668, 4
    %v10670 = vmax.f32 %v10668, %v10669
    %v10671 = vrot.slane %v10670, 2
    %v10672 = vmax.f32 %v10670, %v10671
    %v10673 = vrot.slane %v10672, 1
    %v10674 = vmax.f32 %v10672, %v10673
    %v10675 = vsel %vm134, %v8854, -inf
    %v10676 = vrot.slane %v10675, 4
    %v10677 = vmax.f32 %v10675, %v10676
    %v10678 = vrot.slane %v10677, 2
    %v10679 = vmax.f32 %v10677, %v10678
    %v10680 = vrot.slane %v10679, 1
    %v10681 = vmax.f32 %v10679, %v10680
    %v10682 = vsel %vm134, %v8862, -inf
    %v10683 = vrot.slane %v10682, 4
    %v10684 = vmax.f32 %v10682, %v10683
    %v10685 = vrot.slane %v10684, 2
    %v10686 = vmax.f32 %v10684, %v10685
    %v10687 = vrot.slane %v10686, 1
    %v10688 = vmax.f32 %v10686, %v10687
    %v10689 = vsel %vm134, %v8861, -inf
    %v10690 = vrot.slane %v10689, 4
    %v10691 = vmax.f32 %v10689, %v10690
    %v10692 = vrot.slane %v10691, 2
    %v10693 = vmax.f32 %v10691, %v10692
    %v10694 = vrot.slane %v10693, 1
    %v10695 = vmax.f32 %v10693, %v10694
    %v10696 = vsel %vm134, %v8863, -inf
    %v10697 = vrot.slane %v10696, 4
    %v10698 = vmax.f32 %v10696, %v10697
    %v10699 = vrot.slane %v10698, 2
    %v10700 = vmax.f32 %v10698, %v10699
    %v10701 = vrot.slane %v10700, 1
    %v10702 = vmax.f32 %v10700, %v10701
    %v10703 = vsel %vm134, %v8871, -inf
    %v10704 = vrot.slane %v10703, 4
    %v10705 = vmax.f32 %v10703, %v10704
    %v10706 = vrot.slane %v10705, 2
    %v10707 = vmax.f32 %v10705, %v10706
    %v10708 = vrot.slane %v10707, 1
    %v10709 = vmax.f32 %v10707, %v10708
    %v10710 = vsel %vm134, %v8879, -inf
    %v10711 = vrot.slane %v10710, 4
    %v10712 = vmax.f32 %v10710, %v10711
    %v10713 = vrot.slane %v10712, 2
    %v10714 = vmax.f32 %v10712, %v10713
    %v10715 = vrot.slane %v10714, 1
    %v10716 = vmax.f32 %v10714, %v10715
    %v10717 = vsel %vm134, %v8878, -inf
    %v10718 = vrot.slane %v10717, 4
    %v10719 = vmax.f32 %v10717, %v10718
    %v10720 = vrot.slane %v10719, 2
    %v10721 = vmax.f32 %v10719, %v10720
    %v10722 = vrot.slane %v10721, 1
    %v10723 = vmax.f32 %v10721, %v10722
    %v10724 = vsel %vm134, %v8880, -inf
    %v10725 = vrot.slane %v10724, 4
    %v10726 = vmax.f32 %v10724, %v10725
    %v10727 = vrot.slane %v10726, 2
    %v10728 = vmax.f32 %v10726, %v10727
    %v10729 = vrot.slane %v10728, 1
    %v10730 = vmax.f32 %v10728, %v10729
    %v10731 = vsel %vm134, %v8888, -inf
    %v10732 = vrot.slane %v10731, 4
    %v10733 = vmax.f32 %v10731, %v10732
    %v10734 = vrot.slane %v10733, 2
    %v10735 = vmax.f32 %v10733, %v10734
    %v10736 = vrot.slane %v10735, 1
    %v10737 = vmax.f32 %v10735, %v10736
    %v10738 = vsel %vm134, %v8896, -inf
    %v10739 = vrot.slane %v10738, 4
    %v10740 = vmax.f32 %v10738, %v10739
    %v10741 = vrot.slane %v10740, 2
    %v10742 = vmax.f32 %v10740, %v10741
    %v10743 = vrot.slane %v10742, 1
    %v10744 = vmax.f32 %v10742, %v10743
    %v10745 = vsel %vm134, %v8895, -inf
    %v10746 = vrot.slane %v10745, 4
    %v10747 = vmax.f32 %v10745, %v10746
    %v10748 = vrot.slane %v10747, 2
    %v10749 = vmax.f32 %v10747, %v10748
    %v10750 = vrot.slane %v10749, 1
    %v10751 = vmax.f32 %v10749, %v10750
    %v10752 = vsel %vm134, %v8897, -inf
    %v10753 = vrot.slane %v10752, 4
    %v10754 = vmax.f32 %v10752, %v10753
    %v10755 = vrot.slane %v10754, 2
    %v10756 = vmax.f32 %v10754, %v10755
    %v10757 = vrot.slane %v10756, 1
    %v10758 = vmax.f32 %v10756, %v10757
    %v10759 = vsel %vm134, %v8905, -inf
    %v10760 = vrot.slane %v10759, 4
    %v10761 = vmax.f32 %v10759, %v10760
    %v10762 = vrot.slane %v10761, 2
    %v10763 = vmax.f32 %v10761, %v10762
    %v10764 = vrot.slane %v10763, 1
    %v10765 = vmax.f32 %v10763, %v10764
    %v10766 = vsel %vm134, %v8913, -inf
    %v10767 = vrot.slane %v10766, 4
    %v10768 = vmax.f32 %v10766, %v10767
    %v10769 = vrot.slane %v10768, 2
    %v10770 = vmax.f32 %v10768, %v10769
    %v10771 = vrot.slane %v10770, 1
    %v10772 = vmax.f32 %v10770, %v10771
    %v10773 = vsel %vm134, %v8912, -inf
    %v10774 = vrot.slane %v10773, 4
    %v10775 = vmax.f32 %v10773, %v10774
    %v10776 = vrot.slane %v10775, 2
    %v10777 = vmax.f32 %v10775, %v10776
    %v10778 = vrot.slane %v10777, 1
    %v10779 = vmax.f32 %v10777, %v10778
    %v10780 = vsel %vm134, %v8914, -inf
    %v10781 = vrot.slane %v10780, 4
    %v10782 = vmax.f32 %v10780, %v10781
    %v10783 = vrot.slane %v10782, 2
    %v10784 = vmax.f32 %v10782, %v10783
    %v10785 = vrot.slane %v10784, 1
    %v10786 = vmax.f32 %v10784, %v10785
    %v10787 = vsel %vm134, %v8922, -inf
    %v10788 = vrot.slane %v10787, 4
    %v10789 = vmax.f32 %v10787, %v10788
    %v10790 = vrot.slane %v10789, 2
    %v10791 = vmax.f32 %v10789, %v10790
    %v10792 = vrot.slane %v10791, 1
    %v10793 = vmax.f32 %v10791, %v10792
    %v10794 = vsel %vm134, %v8930, -inf
    %v10795 = vrot.slane %v10794, 4
    %v10796 = vmax.f32 %v10794, %v10795
    %v10797 = vrot.slane %v10796, 2
    %v10798 = vmax.f32 %v10796, %v10797
    %v10799 = vrot.slane %v10798, 1
    %v10800 = vmax.f32 %v10798, %v10799
    %v10801 = vsel %vm134, %v8929, -inf
    %v10802 = vrot.slane %v10801, 4
    %v10803 = vmax.f32 %v10801, %v10802
    %v10804 = vrot.slane %v10803, 2
    %v10805 = vmax.f32 %v10803, %v10804
    %v10806 = vrot.slane %v10805, 1
    %v10807 = vmax.f32 %v10805, %v10806
    %v10808 = vsel %vm134, %v8931, -inf
    %v10809 = vrot.slane %v10808, 4
    %v10810 = vmax.f32 %v10808, %v10809
    %v10811 = vrot.slane %v10810, 2
    %v10812 = vmax.f32 %v10810, %v10811
    %v10813 = vrot.slane %v10812, 1
    %v10814 = vmax.f32 %v10812, %v10813
    %v10815 = vsel %vm134, %v8939, -inf
    %v10816 = vrot.slane %v10815, 4
    %v10817 = vmax.f32 %v10815, %v10816
    %v10818 = vrot.slane %v10817, 2
    %v10819 = vmax.f32 %v10817, %v10818
    %v10820 = vrot.slane %v10819, 1
    %v10821 = vmax.f32 %v10819, %v10820
    %v10822 = vsel %vm134, %v8947, -inf
    %v10823 = vrot.slane %v10822, 4
    %v10824 = vmax.f32 %v10822, %v10823
    %v10825 = vrot.slane %v10824, 2
    %v10826 = vmax.f32 %v10824, %v10825
    %v10827 = vrot.slane %v10826, 1
    %v10828 = vmax.f32 %v10826, %v10827
    %v10829 = vsel %vm134, %v8946, -inf
    %v10830 = vrot.slane %v10829, 4
    %v10831 = vmax.f32 %v10829, %v10830
    %v10832 = vrot.slane %v10831, 2
    %v10833 = vmax.f32 %v10831, %v10832
    %v10834 = vrot.slane %v10833, 1
    %v10835 = vmax.f32 %v10833, %v10834
    %v10836 = vsel %vm134, %v8948, -inf
    %v10837 = vrot.slane %v10836, 4
    %v10838 = vmax.f32 %v10836, %v10837
    %v10839 = vrot.slane %v10838, 2
    %v10840 = vmax.f32 %v10838, %v10839
    %v10841 = vrot.slane %v10840, 1
    %v10842 = vmax.f32 %v10840, %v10841
    %v10843 = vsel %vm134, %v8956, -inf
    %v10844 = vrot.slane %v10843, 4
    %v10845 = vmax.f32 %v10843, %v10844
    %v10846 = vrot.slane %v10845, 2
    %v10847 = vmax.f32 %v10845, %v10846
    %v10848 = vrot.slane %v10847, 1
    %v10849 = vmax.f32 %v10847, %v10848
    %v10850 = vsel %vm134, %v8964, -inf
    %v10851 = vrot.slane %v10850, 4
    %v10852 = vmax.f32 %v10850, %v10851
    %v10853 = vrot.slane %v10852, 2
    %v10854 = vmax.f32 %v10852, %v10853
    %v10855 = vrot.slane %v10854, 1
    %v10856 = vmax.f32 %v10854, %v10855
    %v10857 = vsel %vm134, %v8963, -inf
    %v10858 = vrot.slane %v10857, 4
    %v10859 = vmax.f32 %v10857, %v10858
    %v10860 = vrot.slane %v10859, 2
    %v10861 = vmax.f32 %v10859, %v10860
    %v10862 = vrot.slane %v10861, 1
    %v10863 = vmax.f32 %v10861, %v10862
    %v10864 = vsel %vm134, %v8965, -inf
    %v10865 = vrot.slane %v10864, 4
    %v10866 = vmax.f32 %v10864, %v10865
    %v10867 = vrot.slane %v10866, 2
    %v10868 = vmax.f32 %v10866, %v10867
    %v10869 = vrot.slane %v10868, 1
    %v10870 = vmax.f32 %v10868, %v10869
    %v10871 = vsel %vm134, %v8973, -inf
    %v10872 = vrot.slane %v10871, 4
    %v10873 = vmax.f32 %v10871, %v10872
    %v10874 = vrot.slane %v10873, 2
    %v10875 = vmax.f32 %v10873, %v10874
    %v10876 = vrot.slane %v10875, 1
    %v10877 = vmax.f32 %v10875, %v10876
    %v10878 = vsel %vm134, %v8981, -inf
    %v10879 = vrot.slane %v10878, 4
    %v10880 = vmax.f32 %v10878, %v10879
    %v10881 = vrot.slane %v10880, 2
    %v10882 = vmax.f32 %v10880, %v10881
    %v10883 = vrot.slane %v10882, 1
    %v10884 = vmax.f32 %v10882, %v10883
    %v10885 = vsel %vm134, %v8980, -inf
    %v10886 = vrot.slane %v10885, 4
    %v10887 = vmax.f32 %v10885, %v10886
    %v10888 = vrot.slane %v10887, 2
    %v10889 = vmax.f32 %v10887, %v10888
    %v10890 = vrot.slane %v10889, 1
    %v10891 = vmax.f32 %v10889, %v10890
    %v10892 = vsel %vm134, %v8982, -inf
    %v10893 = vrot.slane %v10892, 4
    %v10894 = vmax.f32 %v10892, %v10893
    %v10895 = vrot.slane %v10894, 2
    %v10896 = vmax.f32 %v10894, %v10895
    %v10897 = vrot.slane %v10896, 1
    %v10898 = vmax.f32 %v10896, %v10897
    %v10899 = vsel %vm134, %v8990, -inf
    %v10900 = vrot.slane %v10899, 4
    %v10901 = vmax.f32 %v10899, %v10900
    %v10902 = vrot.slane %v10901, 2
    %v10903 = vmax.f32 %v10901, %v10902
    %v10904 = vrot.slane %v10903, 1
    %v10905 = vmax.f32 %v10903, %v10904
    %v10906 = vsel %vm134, %v8998, -inf
    %v10907 = vrot.slane %v10906, 4
    %v10908 = vmax.f32 %v10906, %v10907
    %v10909 = vrot.slane %v10908, 2
    %v10910 = vmax.f32 %v10908, %v10909
    %v10911 = vrot.slane %v10910, 1
    %v10912 = vmax.f32 %v10910, %v10911
    %v10913 = vsel %vm134, %v8997, -inf
    %v10914 = vrot.slane %v10913, 4
    %v10915 = vmax.f32 %v10913, %v10914
    %v10916 = vrot.slane %v10915, 2
    %v10917 = vmax.f32 %v10915, %v10916
    %v10918 = vrot.slane %v10917, 1
    %v10919 = vmax.f32 %v10917, %v10918
    %v10920 = vsel %vm134, %v8999, -inf
    %v10921 = vrot.slane %v10920, 4
    %v10922 = vmax.f32 %v10920, %v10921
    %v10923 = vrot.slane %v10922, 2
    %v10924 = vmax.f32 %v10922, %v10923
    %v10925 = vrot.slane %v10924, 1
    %v10926 = vmax.f32 %v10924, %v10925
    %v10927 = vsel %vm134, %v9007, -inf
    %v10928 = vrot.slane %v10927, 4
    %v10929 = vmax.f32 %v10927, %v10928
    %v10930 = vrot.slane %v10929, 2
    %v10931 = vmax.f32 %v10929, %v10930
    %v10932 = vrot.slane %v10931, 1
    %v10933 = vmax.f32 %v10931, %v10932
    %v10934 = vsel %vm134, %v9015, -inf
    %v10935 = vrot.slane %v10934, 4
    %v10936 = vmax.f32 %v10934, %v10935
    %v10937 = vrot.slane %v10936, 2
    %v10938 = vmax.f32 %v10936, %v10937
    %v10939 = vrot.slane %v10938, 1
    %v10940 = vmax.f32 %v10938, %v10939
    %v10941 = vsel %vm134, %v9014, -inf
    %v10942 = vrot.slane %v10941, 4
    %v10943 = vmax.f32 %v10941, %v10942
    %v10944 = vrot.slane %v10943, 2
    %v10945 = vmax.f32 %v10943, %v10944
    %v10946 = vrot.slane %v10945, 1
    %v10947 = vmax.f32 %v10945, %v10946
    %v10948 = vsel %vm134, %v9016, -inf
    %v10949 = vrot.slane %v10948, 4
    %v10950 = vmax.f32 %v10948, %v10949
    %v10951 = vrot.slane %v10950, 2
    %v10952 = vmax.f32 %v10950, %v10951
    %v10953 = vrot.slane %v10952, 1
    %v10954 = vmax.f32 %v10952, %v10953
    %v10955 = vsel %vm134, %v9024, -inf
    %v10956 = vrot.slane %v10955, 4
    %v10957 = vmax.f32 %v10955, %v10956
    %v10958 = vrot.slane %v10957, 2
    %v10959 = vmax.f32 %v10957, %v10958
    %v10960 = vrot.slane %v10959, 1
    %v10961 = vmax.f32 %v10959, %v10960
    %v10962 = vsel %vm134, %v9032, -inf
    %v10963 = vrot.slane %v10962, 4
    %v10964 = vmax.f32 %v10962, %v10963
    %v10965 = vrot.slane %v10964, 2
    %v10966 = vmax.f32 %v10964, %v10965
    %v10967 = vrot.slane %v10966, 1
    %v10968 = vmax.f32 %v10966, %v10967
    %v10969 = vsel %vm134, %v9031, -inf
    %v10970 = vrot.slane %v10969, 4
    %v10971 = vmax.f32 %v10969, %v10970
    %v10972 = vrot.slane %v10971, 2
    %v10973 = vmax.f32 %v10971, %v10972
    %v10974 = vrot.slane %v10973, 1
    %v10975 = vmax.f32 %v10973, %v10974
    %v10976 = vsel %vm134, %v9033, -inf
    %v10977 = vrot.slane %v10976, 4
    %v10978 = vmax.f32 %v10976, %v10977
    %v10979 = vrot.slane %v10978, 2
    %v10980 = vmax.f32 %v10978, %v10979
    %v10981 = vrot.slane %v10980, 1
    %v10982 = vmax.f32 %v10980, %v10981
    %v10983 = vsel %vm134, %v9041, -inf
    %v10984 = vrot.slane %v10983, 4
    %v10985 = vmax.f32 %v10983, %v10984
    %v10986 = vrot.slane %v10985, 2
    %v10987 = vmax.f32 %v10985, %v10986
    %v10988 = vrot.slane %v10987, 1
    %v10989 = vmax.f32 %v10987, %v10988
    %v10990 = vsel %vm134, %v9049, -inf
    %v10991 = vrot.slane %v10990, 4
    %v10992 = vmax.f32 %v10990, %v10991
    %v10993 = vrot.slane %v10992, 2
    %v10994 = vmax.f32 %v10992, %v10993
    %v10995 = vrot.slane %v10994, 1
    %v10996 = vmax.f32 %v10994, %v10995
    %v10997 = vsel %vm134, %v9048, -inf
    %v10998 = vrot.slane %v10997, 4
    %v10999 = vmax.f32 %v10997, %v10998
    %v11000 = vrot.slane %v10999, 2
    %v11001 = vmax.f32 %v10999, %v11000
    %v11002 = vrot.slane %v11001, 1
    %v11003 = vmax.f32 %v11001, %v11002
    %v11004 = vsel %vm134, %v9050, -inf
    %v11005 = vrot.slane %v11004, 4
    %v11006 = vmax.f32 %v11004, %v11005
    %v11007 = vrot.slane %v11006, 2
    %v11008 = vmax.f32 %v11006, %v11007
    %v11009 = vrot.slane %v11008, 1
    %v11010 = vmax.f32 %v11008, %v11009
    %v11011 = vsel %vm134, %v9058, -inf
    %v11012 = vrot.slane %v11011, 4
    %v11013 = vmax.f32 %v11011, %v11012
    %v11014 = vrot.slane %v11013, 2
    %v11015 = vmax.f32 %v11013, %v11014
    %v11016 = vrot.slane %v11015, 1
    %v11017 = vmax.f32 %v11015, %v11016
    %v11018 = vsel %vm134, %v9066, -inf
    %v11019 = vrot.slane %v11018, 4
    %v11020 = vmax.f32 %v11018, %v11019
    %v11021 = vrot.slane %v11020, 2
    %v11022 = vmax.f32 %v11020, %v11021
    %v11023 = vrot.slane %v11022, 1
    %v11024 = vmax.f32 %v11022, %v11023
    %v11025 = vsel %vm134, %v9065, -inf
    %v11026 = vrot.slane %v11025, 4
    %v11027 = vmax.f32 %v11025, %v11026
    %v11028 = vrot.slane %v11027, 2
    %v11029 = vmax.f32 %v11027, %v11028
    %v11030 = vrot.slane %v11029, 1
    %v11031 = vmax.f32 %v11029, %v11030
    %v11032 = vsel %vm134, %v9067, -inf
    %v11033 = vrot.slane %v11032, 4
    %v11034 = vmax.f32 %v11032, %v11033
    %v11035 = vrot.slane %v11034, 2
    %v11036 = vmax.f32 %v11034, %v11035
    %v11037 = vrot.slane %v11036, 1
    %v11038 = vmax.f32 %v11036, %v11037
    %v11039 = vsel %vm134, %v9075, -inf
    %v11040 = vrot.slane %v11039, 4
    %v11041 = vmax.f32 %v11039, %v11040
    %v11042 = vrot.slane %v11041, 2
    %v11043 = vmax.f32 %v11041, %v11042
    %v11044 = vrot.slane %v11043, 1
    %v11045 = vmax.f32 %v11043, %v11044
    %v11046 = vsel %vm134, %v9083, -inf
    %v11047 = vrot.slane %v11046, 4
    %v11048 = vmax.f32 %v11046, %v11047
    %v11049 = vrot.slane %v11048, 2
    %v11050 = vmax.f32 %v11048, %v11049
    %v11051 = vrot.slane %v11050, 1
    %v11052 = vmax.f32 %v11050, %v11051
    %v11053 = vsel %vm134, %v9082, -inf
    %v11054 = vrot.slane %v11053, 4
    %v11055 = vmax.f32 %v11053, %v11054
    %v11056 = vrot.slane %v11055, 2
    %v11057 = vmax.f32 %v11055, %v11056
    %v11058 = vrot.slane %v11057, 1
    %v11059 = vmax.f32 %v11057, %v11058
    %v11060 = vsel %vm134, %v9084, -inf
    %v11061 = vrot.slane %v11060, 4
    %v11062 = vmax.f32 %v11060, %v11061
    %v11063 = vrot.slane %v11062, 2
    %v11064 = vmax.f32 %v11062, %v11063
    %v11065 = vrot.slane %v11064, 1
    %v11066 = vmax.f32 %v11064, %v11065
    %v11067 = vsel %vm134, %v9092, -inf
    %v11068 = vrot.slane %v11067, 4
    %v11069 = vmax.f32 %v11067, %v11068
    %v11070 = vrot.slane %v11069, 2
    %v11071 = vmax.f32 %v11069, %v11070
    %v11072 = vrot.slane %v11071, 1
    %v11073 = vmax.f32 %v11071, %v11072
    %v11074 = vsel %vm134, %v9100, -inf
    %v11075 = vrot.slane %v11074, 4
    %v11076 = vmax.f32 %v11074, %v11075
    %v11077 = vrot.slane %v11076, 2
    %v11078 = vmax.f32 %v11076, %v11077
    %v11079 = vrot.slane %v11078, 1
    %v11080 = vmax.f32 %v11078, %v11079
    %v11081 = vsel %vm134, %v9099, -inf
    %v11082 = vrot.slane %v11081, 4
    %v11083 = vmax.f32 %v11081, %v11082
    %v11084 = vrot.slane %v11083, 2
    %v11085 = vmax.f32 %v11083, %v11084
    %v11086 = vrot.slane %v11085, 1
    %v11087 = vmax.f32 %v11085, %v11086
    %v11088 = vsel %vm134, %v9101, -inf
    %v11089 = vrot.slane %v11088, 4
    %v11090 = vmax.f32 %v11088, %v11089
    %v11091 = vrot.slane %v11090, 2
    %v11092 = vmax.f32 %v11090, %v11091
    %v11093 = vrot.slane %v11092, 1
    %v11094 = vmax.f32 %v11092, %v11093
    %v11095 = vsel %vm134, %v9109, -inf
    %v11096 = vrot.slane %v11095, 4
    %v11097 = vmax.f32 %v11095, %v11096
    %v11098 = vrot.slane %v11097, 2
    %v11099 = vmax.f32 %v11097, %v11098
    %v11100 = vrot.slane %v11099, 1
    %v11101 = vmax.f32 %v11099, %v11100
    %v11102 = vsel %vm134, %v9117, -inf
    %v11103 = vrot.slane %v11102, 4
    %v11104 = vmax.f32 %v11102, %v11103
    %v11105 = vrot.slane %v11104, 2
    %v11106 = vmax.f32 %v11104, %v11105
    %v11107 = vrot.slane %v11106, 1
    %v11108 = vmax.f32 %v11106, %v11107
    %v11109 = vsel %vm134, %v9116, -inf
    %v11110 = vrot.slane %v11109, 4
    %v11111 = vmax.f32 %v11109, %v11110
    %v11112 = vrot.slane %v11111, 2
    %v11113 = vmax.f32 %v11111, %v11112
    %v11114 = vrot.slane %v11113, 1
    %v11115 = vmax.f32 %v11113, %v11114
    %v11116 = vsel %vm134, %v9118, -inf
    %v11117 = vrot.slane %v11116, 4
    %v11118 = vmax.f32 %v11116, %v11117
    %v11119 = vrot.slane %v11118, 2
    %v11120 = vmax.f32 %v11118, %v11119
    %v11121 = vrot.slane %v11120, 1
    %v11122 = vmax.f32 %v11120, %v11121
    %v11123 = vsel %vm134, %v9126, -inf
    %v11124 = vrot.slane %v11123, 4
    %v11125 = vmax.f32 %v11123, %v11124
    %v11126 = vrot.slane %v11125, 2
    %v11127 = vmax.f32 %v11125, %v11126
    %v11128 = vrot.slane %v11127, 1
    %v11129 = vmax.f32 %v11127, %v11128
    %v11130 = vsel %vm134, %v9134, -inf
    %v11131 = vrot.slane %v11130, 4
    %v11132 = vmax.f32 %v11130, %v11131
    %v11133 = vrot.slane %v11132, 2
    %v11134 = vmax.f32 %v11132, %v11133
    %v11135 = vrot.slane %v11134, 1
    %v11136 = vmax.f32 %v11134, %v11135
    %v11137 = vsel %vm134, %v9133, -inf
    %v11138 = vrot.slane %v11137, 4
    %v11139 = vmax.f32 %v11137, %v11138
    %v11140 = vrot.slane %v11139, 2
    %v11141 = vmax.f32 %v11139, %v11140
    %v11142 = vrot.slane %v11141, 1
    %v11143 = vmax.f32 %v11141, %v11142
    %v11144 = vsel %vm134, %v9135, -inf
    %v11145 = vrot.slane %v11144, 4
    %v11146 = vmax.f32 %v11144, %v11145
    %v11147 = vrot.slane %v11146, 2
    %v11148 = vmax.f32 %v11146, %v11147
    %v11149 = vrot.slane %v11148, 1
    %v11150 = vmax.f32 %v11148, %v11149
    %v11151 = vsel %vm134, %v9143, -inf
    %v11152 = vrot.slane %v11151, 4
    %v11153 = vmax.f32 %v11151, %v11152
    %v11154 = vrot.slane %v11153, 2
    %v11155 = vmax.f32 %v11153, %v11154
    %v11156 = vrot.slane %v11155, 1
    %v11157 = vmax.f32 %v11155, %v11156
    %v11158 = vsel %vm134, %v9151, -inf
    %v11159 = vrot.slane %v11158, 4
    %v11160 = vmax.f32 %v11158, %v11159
    %v11161 = vrot.slane %v11160, 2
    %v11162 = vmax.f32 %v11160, %v11161
    %v11163 = vrot.slane %v11162, 1
    %v11164 = vmax.f32 %v11162, %v11163
    %v11165 = vsel %vm134, %v9150, -inf
    %v11166 = vrot.slane %v11165, 4
    %v11167 = vmax.f32 %v11165, %v11166
    %v11168 = vrot.slane %v11167, 2
    %v11169 = vmax.f32 %v11167, %v11168
    %v11170 = vrot.slane %v11169, 1
    %v11171 = vmax.f32 %v11169, %v11170
    %v11172 = vsel %vm134, %v9152, -inf
    %v11173 = vrot.slane %v11172, 4
    %v11174 = vmax.f32 %v11172, %v11173
    %v11175 = vrot.slane %v11174, 2
    %v11176 = vmax.f32 %v11174, %v11175
    %v11177 = vrot.slane %v11176, 1
    %v11178 = vmax.f32 %v11176, %v11177
    %v11179 = vsel %vm134, %v9160, -inf
    %v11180 = vrot.slane %v11179, 4
    %v11181 = vmax.f32 %v11179, %v11180
    %v11182 = vrot.slane %v11181, 2
    %v11183 = vmax.f32 %v11181, %v11182
    %v11184 = vrot.slane %v11183, 1
    %v11185 = vmax.f32 %v11183, %v11184
    %v11186 = vsel %vm134, %v9168, -inf
    %v11187 = vrot.slane %v11186, 4
    %v11188 = vmax.f32 %v11186, %v11187
    %v11189 = vrot.slane %v11188, 2
    %v11190 = vmax.f32 %v11188, %v11189
    %v11191 = vrot.slane %v11190, 1
    %v11192 = vmax.f32 %v11190, %v11191
    %v11193 = vsel %vm134, %v9167, -inf
    %v11194 = vrot.slane %v11193, 4
    %v11195 = vmax.f32 %v11193, %v11194
    %v11196 = vrot.slane %v11195, 2
    %v11197 = vmax.f32 %v11195, %v11196
    %v11198 = vrot.slane %v11197, 1
    %v11199 = vmax.f32 %v11197, %v11198
    %v11200 = vsel %vm134, %v9169, -inf
    %v11201 = vrot.slane %v11200, 4
    %v11202 = vmax.f32 %v11200, %v11201
    %v11203 = vrot.slane %v11202, 2
    %v11204 = vmax.f32 %v11202, %v11203
    %v11205 = vrot.slane %v11204, 1
    %v11206 = vmax.f32 %v11204, %v11205
    %v11207 = vsel %vm134, %v9177, -inf
    %v11208 = vrot.slane %v11207, 4
    %v11209 = vmax.f32 %v11207, %v11208
    %v11210 = vrot.slane %v11209, 2
    %v11211 = vmax.f32 %v11209, %v11210
    %v11212 = vrot.slane %v11211, 1
    %v11213 = vmax.f32 %v11211, %v11212
    %v11214 = vsel %vm134, %v9185, -inf
    %v11215 = vrot.slane %v11214, 4
    %v11216 = vmax.f32 %v11214, %v11215
    %v11217 = vrot.slane %v11216, 2
    %v11218 = vmax.f32 %v11216, %v11217
    %v11219 = vrot.slane %v11218, 1
    %v11220 = vmax.f32 %v11218, %v11219
    %v11221 = vsel %vm134, %v9184, -inf
    %v11222 = vrot.slane %v11221, 4
    %v11223 = vmax.f32 %v11221, %v11222
    %v11224 = vrot.slane %v11223, 2
    %v11225 = vmax.f32 %v11223, %v11224
    %v11226 = vrot.slane %v11225, 1
    %v11227 = vmax.f32 %v11225, %v11226
    %v11228 = vsel %vm134, %v9186, -inf
    %v11229 = vrot.slane %v11228, 4
    %v11230 = vmax.f32 %v11228, %v11229
    %v11231 = vrot.slane %v11230, 2
    %v11232 = vmax.f32 %v11230, %v11231
    %v11233 = vrot.slane %v11232, 1
    %v11234 = vmax.f32 %v11232, %v11233
    %vm11491 = vcmask 1041409
    %v11492 = vsel %vm11491, %v9456, %v9449
    %vm11493 = vcmask 1042434
    %v11494 = vsel %vm11493, %v9463, %v11492
    %vm11495 = vcmask 1043459
    %v11496 = vsel %vm11495, %v9470, %v11494
    %vm11497 = vcmask 1044484
    %v11498 = vsel %vm11497, %v9477, %v11496
    %vm11499 = vcmask 1045509
    %v11500 = vsel %vm11499, %v9484, %v11498
    %vm11501 = vcmask 1046534
    %v11502 = vsel %vm11501, %v9491, %v11500
    %vm11503 = vcmask 1047559
    %v11504 = vsel %vm11503, %v9498, %v11502
    %v11505 = vsel %vm11491, %v9512, %v9505
    %v11506 = vsel %vm11493, %v9519, %v11505
    %v11507 = vsel %vm11495, %v9526, %v11506
    %v11508 = vsel %vm11497, %v9533, %v11507
    %v11509 = vsel %vm11499, %v9540, %v11508
    %v11510 = vsel %vm11501, %v9547, %v11509
    %v11511 = vsel %vm11503, %v9554, %v11510
    %v11512 = vsel %vm11491, %v9568, %v9561
    %v11513 = vsel %vm11493, %v9575, %v11512
    %v11514 = vsel %vm11495, %v9582, %v11513
    %v11515 = vsel %vm11497, %v9589, %v11514
    %v11516 = vsel %vm11499, %v9596, %v11515
    %v11517 = vsel %vm11501, %v9603, %v11516
    %v11518 = vsel %vm11503, %v9610, %v11517
    %v11519 = vsel %vm11491, %v9624, %v9617
    %v11520 = vsel %vm11493, %v9631, %v11519
    %v11521 = vsel %vm11495, %v9638, %v11520
    %v11522 = vsel %vm11497, %v9645, %v11521
    %v11523 = vsel %vm11499, %v9652, %v11522
    %v11524 = vsel %vm11501, %v9659, %v11523
    %v11525 = vsel %vm11503, %v9666, %v11524
    %v11526 = vsel %vm11491, %v9680, %v9673
    %v11527 = vsel %vm11493, %v9687, %v11526
    %v11528 = vsel %vm11495, %v9694, %v11527
    %v11529 = vsel %vm11497, %v9701, %v11528
    %v11530 = vsel %vm11499, %v9708, %v11529
    %v11531 = vsel %vm11501, %v9715, %v11530
    %v11532 = vsel %vm11503, %v9722, %v11531
    %v11533 = vsel %vm11491, %v9736, %v9729
    %v11534 = vsel %vm11493, %v9743, %v11533
    %v11535 = vsel %vm11495, %v9750, %v11534
    %v11536 = vsel %vm11497, %v9757, %v11535
    %v11537 = vsel %vm11499, %v9764, %v11536
    %v11538 = vsel %vm11501, %v9771, %v11537
    %v11539 = vsel %vm11503, %v9778, %v11538
    %v11540 = vsel %vm11491, %v9792, %v9785
    %v11541 = vsel %vm11493, %v9799, %v11540
    %v11542 = vsel %vm11495, %v9806, %v11541
    %v11543 = vsel %vm11497, %v9813, %v11542
    %v11544 = vsel %vm11499, %v9820, %v11543
    %v11545 = vsel %vm11501, %v9827, %v11544
    %v11546 = vsel %vm11503, %v9834, %v11545
    %v11547 = vsel %vm11491, %v9848, %v9841
    %v11548 = vsel %vm11493, %v9855, %v11547
    %v11549 = vsel %vm11495, %v9862, %v11548
    %v11550 = vsel %vm11497, %v9869, %v11549
    %v11551 = vsel %vm11499, %v9876, %v11550
    %v11552 = vsel %vm11501, %v9883, %v11551
    %v11553 = vsel %vm11503, %v9890, %v11552
    %v11554 = vsel %vm11491, %v9904, %v9897
    %v11555 = vsel %vm11493, %v9911, %v11554
    %v11556 = vsel %vm11495, %v9918, %v11555
    %v11557 = vsel %vm11497, %v9925, %v11556
    %v11558 = vsel %vm11499, %v9932, %v11557
    %v11559 = vsel %vm11501, %v9939, %v11558
    %v11560 = vsel %vm11503, %v9946, %v11559
    %v11561 = vsel %vm11491, %v9960, %v9953
    %v11562 = vsel %vm11493, %v9967, %v11561
    %v11563 = vsel %vm11495, %v9974, %v11562
    %v11564 = vsel %vm11497, %v9981, %v11563
    %v11565 = vsel %vm11499, %v9988, %v11564
    %v11566 = vsel %vm11501, %v9995, %v11565
    %v11567 = vsel %vm11503, %v10002, %v11566
    %v11568 = vsel %vm11491, %v10016, %v10009
    %v11569 = vsel %vm11493, %v10023, %v11568
    %v11570 = vsel %vm11495, %v10030, %v11569
    %v11571 = vsel %vm11497, %v10037, %v11570
    %v11572 = vsel %vm11499, %v10044, %v11571
    %v11573 = vsel %vm11501, %v10051, %v11572
    %v11574 = vsel %vm11503, %v10058, %v11573
    %v11575 = vsel %vm11491, %v10072, %v10065
    %v11576 = vsel %vm11493, %v10079, %v11575
    %v11577 = vsel %vm11495, %v10086, %v11576
    %v11578 = vsel %vm11497, %v10093, %v11577
    %v11579 = vsel %vm11499, %v10100, %v11578
    %v11580 = vsel %vm11501, %v10107, %v11579
    %v11581 = vsel %vm11503, %v10114, %v11580
    %v11582 = vsel %vm11491, %v10128, %v10121
    %v11583 = vsel %vm11493, %v10135, %v11582
    %v11584 = vsel %vm11495, %v10142, %v11583
    %v11585 = vsel %vm11497, %v10149, %v11584
    %v11586 = vsel %vm11499, %v10156, %v11585
    %v11587 = vsel %vm11501, %v10163, %v11586
    %v11588 = vsel %vm11503, %v10170, %v11587
    %v11589 = vsel %vm11491, %v10184, %v10177
    %v11590 = vsel %vm11493, %v10191, %v11589
    %v11591 = vsel %vm11495, %v10198, %v11590
    %v11592 = vsel %vm11497, %v10205, %v11591
    %v11593 = vsel %vm11499, %v10212, %v11592
    %v11594 = vsel %vm11501, %v10219, %v11593
    %v11595 = vsel %vm11503, %v10226, %v11594
    %v11596 = vsel %vm11491, %v10240, %v10233
    %v11597 = vsel %vm11493, %v10247, %v11596
    %v11598 = vsel %vm11495, %v10254, %v11597
    %v11599 = vsel %vm11497, %v10261, %v11598
    %v11600 = vsel %vm11499, %v10268, %v11599
    %v11601 = vsel %vm11501, %v10275, %v11600
    %v11602 = vsel %vm11503, %v10282, %v11601
    %v11603 = vsel %vm11491, %v10296, %v10289
    %v11604 = vsel %vm11493, %v10303, %v11603
    %v11605 = vsel %vm11495, %v10310, %v11604
    %v11606 = vsel %vm11497, %v10317, %v11605
    %v11607 = vsel %vm11499, %v10324, %v11606
    %v11608 = vsel %vm11501, %v10331, %v11607
    %v11609 = vsel %vm11503, %v10338, %v11608
    %v11610 = vsel %vm11491, %v10352, %v10345
    %v11611 = vsel %vm11493, %v10359, %v11610
    %v11612 = vsel %vm11495, %v10366, %v11611
    %v11613 = vsel %vm11497, %v10373, %v11612
    %v11614 = vsel %vm11499, %v10380, %v11613
    %v11615 = vsel %vm11501, %v10387, %v11614
    %v11616 = vsel %vm11503, %v10394, %v11615
    %v11617 = vsel %vm11491, %v10408, %v10401
    %v11618 = vsel %vm11493, %v10415, %v11617
    %v11619 = vsel %vm11495, %v10422, %v11618
    %v11620 = vsel %vm11497, %v10429, %v11619
    %v11621 = vsel %vm11499, %v10436, %v11620
    %v11622 = vsel %vm11501, %v10443, %v11621
    %v11623 = vsel %vm11503, %v10450, %v11622
    %v11624 = vsel %vm11491, %v10464, %v10457
    %v11625 = vsel %vm11493, %v10471, %v11624
    %v11626 = vsel %vm11495, %v10478, %v11625
    %v11627 = vsel %vm11497, %v10485, %v11626
    %v11628 = vsel %vm11499, %v10492, %v11627
    %v11629 = vsel %vm11501, %v10499, %v11628
    %v11630 = vsel %vm11503, %v10506, %v11629
    %v11631 = vsel %vm11491, %v10520, %v10513
    %v11632 = vsel %vm11493, %v10527, %v11631
    %v11633 = vsel %vm11495, %v10534, %v11632
    %v11634 = vsel %vm11497, %v10541, %v11633
    %v11635 = vsel %vm11499, %v10548, %v11634
    %v11636 = vsel %vm11501, %v10555, %v11635
    %v11637 = vsel %vm11503, %v10562, %v11636
    %v11638 = vsel %vm11491, %v10576, %v10569
    %v11639 = vsel %vm11493, %v10583, %v11638
    %v11640 = vsel %vm11495, %v10590, %v11639
    %v11641 = vsel %vm11497, %v10597, %v11640
    %v11642 = vsel %vm11499, %v10604, %v11641
    %v11643 = vsel %vm11501, %v10611, %v11642
    %v11644 = vsel %vm11503, %v10618, %v11643
    %v11645 = vsel %vm11491, %v10632, %v10625
    %v11646 = vsel %vm11493, %v10639, %v11645
    %v11647 = vsel %vm11495, %v10646, %v11646
    %v11648 = vsel %vm11497, %v10653, %v11647
    %v11649 = vsel %vm11499, %v10660, %v11648
    %v11650 = vsel %vm11501, %v10667, %v11649
    %v11651 = vsel %vm11503, %v10674, %v11650
    %v11652 = vsel %vm11491, %v10688, %v10681
    %v11653 = vsel %vm11493, %v10695, %v11652
    %v11654 = vsel %vm11495, %v10702, %v11653
    %v11655 = vsel %vm11497, %v10709, %v11654
    %v11656 = vsel %vm11499, %v10716, %v11655
    %v11657 = vsel %vm11501, %v10723, %v11656
    %v11658 = vsel %vm11503, %v10730, %v11657
    %v11659 = vsel %vm11491, %v10744, %v10737
    %v11660 = vsel %vm11493, %v10751, %v11659
    %v11661 = vsel %vm11495, %v10758, %v11660
    %v11662 = vsel %vm11497, %v10765, %v11661
    %v11663 = vsel %vm11499, %v10772, %v11662
    %v11664 = vsel %vm11501, %v10779, %v11663
    %v11665 = vsel %vm11503, %v10786, %v11664
    %v11666 = vsel %vm11491, %v10800, %v10793
    %v11667 = vsel %vm11493, %v10807, %v11666
    %v11668 = vsel %vm11495, %v10814, %v11667
    %v11669 = vsel %vm11497, %v10821, %v11668
    %v11670 = vsel %vm11499, %v10828, %v11669
    %v11671 = vsel %vm11501, %v10835, %v11670
    %v11672 = vsel %vm11503, %v10842, %v11671
    %v11673 = vsel %vm11491, %v10856, %v10849
    %v11674 = vsel %vm11493, %v10863, %v11673
    %v11675 = vsel %vm11495, %v10870, %v11674
    %v11676 = vsel %vm11497, %v10877, %v11675
    %v11677 = vsel %vm11499, %v10884, %v11676
    %v11678 = vsel %vm11501, %v10891, %v11677
    %v11679 = vsel %vm11503, %v10898, %v11678
    %v11680 = vsel %vm11491, %v10912, %v10905
    %v11681 = vsel %vm11493, %v10919, %v11680
    %v11682 = vsel %vm11495, %v10926, %v11681
    %v11683 = vsel %vm11497, %v10933, %v11682
    %v11684 = vsel %vm11499, %v10940, %v11683
    %v11685 = vsel %vm11501, %v10947, %v11684
    %v11686 = vsel %vm11503, %v10954, %v11685
    %v11687 = vsel %vm11491, %v10968, %v10961
    %v11688 = vsel %vm11493, %v10975, %v11687
    %v11689 = vsel %vm11495, %v10982, %v11688
    %v11690 = vsel %vm11497, %v10989, %v11689
    %v11691 = vsel %vm11499, %v10996, %v11690
    %v11692 = vsel %vm11501, %v11003, %v11691
    %v11693 = vsel %vm11503, %v11010, %v11692
    %v11694 = vsel %vm11491, %v11024, %v11017
    %v11695 = vsel %vm11493, %v11031, %v11694
    %v11696 = vsel %vm11495, %v11038, %v11695
    %v11697 = vsel %vm11497, %v11045, %v11696
    %v11698 = vsel %vm11499, %v11052, %v11697
    %v11699 = vsel %vm11501, %v11059, %v11698
    %v11700 = vsel %vm11503, %v11066, %v11699
    %v11701 = vsel %vm11491, %v11080, %v11073
    %v11702 = vsel %vm11493, %v11087, %v11701
    %v11703 = vsel %vm11495, %v11094, %v11702
    %v11704 = vsel %vm11497, %v11101, %v11703
    %v11705 = vsel %vm11499, %v11108, %v11704
    %v11706 = vsel %vm11501, %v11115, %v11705
    %v11707 = vsel %vm11503, %v11122, %v11706
    %v11708 = vsel %vm11491, %v11136, %v11129
    %v11709 = vsel %vm11493, %v11143, %v11708
    %v11710 = vsel %vm11495, %v11150, %v11709
    %v11711 = vsel %vm11497, %v11157, %v11710
    %v11712 = vsel %vm11499, %v11164, %v11711
    %v11713 = vsel %vm11501, %v11171, %v11712
    %v11714 = vsel %vm11503, %v11178, %v11713
    %v11715 = vsel %vm11491, %v11192, %v11185
    %v11716 = vsel %vm11493, %v11199, %v11715
    %v11717 = vsel %vm11495, %v11206, %v11716
    %v11718 = vsel %vm11497, %v11213, %v11717
    %v11719 = vsel %vm11499, %v11220, %v11718
    %v11720 = vsel %vm11501, %v11227, %v11719
    %v11721 = vsel %vm11503, %v11234, %v11720
    %v11754 = vcombine.high %v11504, 0.0
    %v11756 = vunpack.c.l.s4 1983009808
    %v11757 = vunpack.c.0.s8 %v11756
    %v11758 = vlaneseq
    %v11759 = vshrl.u32 %v11758, 7
    %v11760 = vsub.s32 %v11757, %v11759
    %v11761 = vrot.slane %v11504, %v11760
    %v11763 = vunpack.c.l.s4 1983009808
    %v11764 = vunpack.c.0.s8 %v11763
    %v11765 = vlaneseq
    %v11766 = vshrl.u32 %v11765, 7
    %v11767 = vsub.s32 %v11764, %v11766
    %v11768 = vrot.slane %v11754, %v11767
    %v11769 = vcombine.high %v11511, 0.0
    %v11771 = vunpack.c.l.s4 1983009808
    %v11772 = vunpack.c.0.s8 %v11771
    %v11773 = vlaneseq
    %v11774 = vshrl.u32 %v11773, 7
    %v11775 = vsub.s32 %v11772, %v11774
    %v11776 = vrot.slane %v11511, %v11775
    %v11778 = vunpack.c.l.s4 1983009808
    %v11779 = vunpack.c.0.s8 %v11778
    %v11780 = vlaneseq
    %v11781 = vshrl.u32 %v11780, 7
    %v11782 = vsub.s32 %v11779, %v11781
    %v11783 = vrot.slane %v11769, %v11782
    %v11784 = vcombine.low %v11761, %v11776
    %v11785 = vcombine.high %v11761, %v11776
    %v11787 = vunpack.c.l.s4 1934713408
    %v11788 = vunpack.c.0.s8 %v11787
    %v11789 = vlaneseq
    %v11790 = vshrl.u32 %v11789, 7
    %v11791 = vsub.s32 %v11788, %v11790
    %v11792 = vrot.slane %v11784, %v11791
    %v11794 = vunpack.c.l.s4 1934713408
    %v11795 = vunpack.c.0.s8 %v11794
    %v11796 = vlaneseq
    %v11797 = vshrl.u32 %v11796, 7
    %v11798 = vsub.s32 %v11795, %v11797
    %v11799 = vrot.slane %v11785, %v11798
    %v11800 = vcombine.low %v11768, %v11783
    %v11801 = vcombine.high %v11768, %v11783
    %v11803 = vunpack.c.l.s4 1934713408
    %v11804 = vunpack.c.0.s8 %v11803
    %v11805 = vlaneseq
    %v11806 = vshrl.u32 %v11805, 7
    %v11807 = vsub.s32 %v11804, %v11806
    %v11808 = vrot.slane %v11800, %v11807
    %v11810 = vunpack.c.l.s4 1934713408
    %v11811 = vunpack.c.0.s8 %v11810
    %v11812 = vlaneseq
    %v11813 = vshrl.u32 %v11812, 7
    %v11814 = vsub.s32 %v11811, %v11813
    %v11815 = vrot.slane %v11801, %v11814
    %v11816 = vcombine.high %v11792, 0.0
    %v11817 = vcombine.high %v11799, 0.0
    %v11818 = vcombine.high %v11808, 0.0
    %v11819 = vcombine.high %v11815, 0.0
    %v11820 = vcombine.high %v11518, 0.0
    %v11822 = vunpack.c.l.s4 1983009808
    %v11823 = vunpack.c.0.s8 %v11822
    %v11824 = vlaneseq
    %v11825 = vshrl.u32 %v11824, 7
    %v11826 = vsub.s32 %v11823, %v11825
    %v11827 = vrot.slane %v11518, %v11826
    %v11829 = vunpack.c.l.s4 1983009808
    %v11830 = vunpack.c.0.s8 %v11829
    %v11831 = vlaneseq
    %v11832 = vshrl.u32 %v11831, 7
    %v11833 = vsub.s32 %v11830, %v11832
    %v11834 = vrot.slane %v11820, %v11833
    %v11835 = vcombine.high %v11525, 0.0
    %v11837 = vunpack.c.l.s4 1983009808
    %v11838 = vunpack.c.0.s8 %v11837
    %v11839 = vlaneseq
    %v11840 = vshrl.u32 %v11839, 7
    %v11841 = vsub.s32 %v11838, %v11840
    %v11842 = vrot.slane %v11525, %v11841
    %v11844 = vunpack.c.l.s4 1983009808
    %v11845 = vunpack.c.0.s8 %v11844
    %v11846 = vlaneseq
    %v11847 = vshrl.u32 %v11846, 7
    %v11848 = vsub.s32 %v11845, %v11847
    %v11849 = vrot.slane %v11835, %v11848
    %v11850 = vcombine.low %v11827, %v11842
    %v11851 = vcombine.high %v11827, %v11842
    %v11853 = vunpack.c.l.s4 1934713408
    %v11854 = vunpack.c.0.s8 %v11853
    %v11855 = vlaneseq
    %v11856 = vshrl.u32 %v11855, 7
    %v11857 = vsub.s32 %v11854, %v11856
    %v11858 = vrot.slane %v11850, %v11857
    %v11860 = vunpack.c.l.s4 1934713408
    %v11861 = vunpack.c.0.s8 %v11860
    %v11862 = vlaneseq
    %v11863 = vshrl.u32 %v11862, 7
    %v11864 = vsub.s32 %v11861, %v11863
    %v11865 = vrot.slane %v11851, %v11864
    %v11866 = vcombine.low %v11834, %v11849
    %v11867 = vcombine.high %v11834, %v11849
    %v11869 = vunpack.c.l.s4 1934713408
    %v11870 = vunpack.c.0.s8 %v11869
    %v11871 = vlaneseq
    %v11872 = vshrl.u32 %v11871, 7
    %v11873 = vsub.s32 %v11870, %v11872
    %v11874 = vrot.slane %v11866, %v11873
    %v11876 = vunpack.c.l.s4 1934713408
    %v11877 = vunpack.c.0.s8 %v11876
    %v11878 = vlaneseq
    %v11879 = vshrl.u32 %v11878, 7
    %v11880 = vsub.s32 %v11877, %v11879
    %v11881 = vrot.slane %v11867, %v11880
    %v11882 = vcombine.high %v11858, 0.0
    %v11883 = vcombine.high %v11865, 0.0
    %v11884 = vcombine.high %v11874, 0.0
    %v11885 = vcombine.high %v11881, 0.0
    %v11886 = vcombine.high %v11532, 0.0
    %v11888 = vunpack.c.l.s4 1983009808
    %v11889 = vunpack.c.0.s8 %v11888
    %v11890 = vlaneseq
    %v11891 = vshrl.u32 %v11890, 7
    %v11892 = vsub.s32 %v11889, %v11891
    %v11893 = vrot.slane %v11532, %v11892
    %v11895 = vunpack.c.l.s4 1983009808
    %v11896 = vunpack.c.0.s8 %v11895
    %v11897 = vlaneseq
    %v11898 = vshrl.u32 %v11897, 7
    %v11899 = vsub.s32 %v11896, %v11898
    %v11900 = vrot.slane %v11886, %v11899
    %v11901 = vcombine.high %v11539, 0.0
    %v11903 = vunpack.c.l.s4 1983009808
    %v11904 = vunpack.c.0.s8 %v11903
    %v11905 = vlaneseq
    %v11906 = vshrl.u32 %v11905, 7
    %v11907 = vsub.s32 %v11904, %v11906
    %v11908 = vrot.slane %v11539, %v11907
    %v11910 = vunpack.c.l.s4 1983009808
    %v11911 = vunpack.c.0.s8 %v11910
    %v11912 = vlaneseq
    %v11913 = vshrl.u32 %v11912, 7
    %v11914 = vsub.s32 %v11911, %v11913
    %v11915 = vrot.slane %v11901, %v11914
    %v11916 = vcombine.low %v11893, %v11908
    %v11917 = vcombine.high %v11893, %v11908
    %v11919 = vunpack.c.l.s4 1934713408
    %v11920 = vunpack.c.0.s8 %v11919
    %v11921 = vlaneseq
    %v11922 = vshrl.u32 %v11921, 7
    %v11923 = vsub.s32 %v11920, %v11922
    %v11924 = vrot.slane %v11916, %v11923
    %v11926 = vunpack.c.l.s4 1934713408
    %v11927 = vunpack.c.0.s8 %v11926
    %v11928 = vlaneseq
    %v11929 = vshrl.u32 %v11928, 7
    %v11930 = vsub.s32 %v11927, %v11929
    %v11931 = vrot.slane %v11917, %v11930
    %v11932 = vcombine.low %v11900, %v11915
    %v11933 = vcombine.high %v11900, %v11915
    %v11935 = vunpack.c.l.s4 1934713408
    %v11936 = vunpack.c.0.s8 %v11935
    %v11937 = vlaneseq
    %v11938 = vshrl.u32 %v11937, 7
    %v11939 = vsub.s32 %v11936, %v11938
    %v11940 = vrot.slane %v11932, %v11939
    %v11942 = vunpack.c.l.s4 1934713408
    %v11943 = vunpack.c.0.s8 %v11942
    %v11944 = vlaneseq
    %v11945 = vshrl.u32 %v11944, 7
    %v11946 = vsub.s32 %v11943, %v11945
    %v11947 = vrot.slane %v11933, %v11946
    %v11948 = vcombine.high %v11924, 0.0
    %v11949 = vcombine.high %v11931, 0.0
    %v11950 = vcombine.high %v11940, 0.0
    %v11951 = vcombine.high %v11947, 0.0
    %v11952 = vcombine.high %v11546, 0.0
    %v11954 = vunpack.c.l.s4 1983009808
    %v11955 = vunpack.c.0.s8 %v11954
    %v11956 = vlaneseq
    %v11957 = vshrl.u32 %v11956, 7
    %v11958 = vsub.s32 %v11955, %v11957
    %v11959 = vrot.slane %v11546, %v11958
    %v11961 = vunpack.c.l.s4 1983009808
    %v11962 = vunpack.c.0.s8 %v11961
    %v11963 = vlaneseq
    %v11964 = vshrl.u32 %v11963, 7
    %v11965 = vsub.s32 %v11962, %v11964
    %v11966 = vrot.slane %v11952, %v11965
    %v11967 = vcombine.high %v11553, 0.0
    %v11969 = vunpack.c.l.s4 1983009808
    %v11970 = vunpack.c.0.s8 %v11969
    %v11971 = vlaneseq
    %v11972 = vshrl.u32 %v11971, 7
    %v11973 = vsub.s32 %v11970, %v11972
    %v11974 = vrot.slane %v11553, %v11973
    %v11976 = vunpack.c.l.s4 1983009808
    %v11977 = vunpack.c.0.s8 %v11976
    %v11978 = vlaneseq
    %v11979 = vshrl.u32 %v11978, 7
    %v11980 = vsub.s32 %v11977, %v11979
    %v11981 = vrot.slane %v11967, %v11980
    %v11982 = vcombine.low %v11959, %v11974
    %v11983 = vcombine.high %v11959, %v11974
    %v11985 = vunpack.c.l.s4 1934713408
    %v11986 = vunpack.c.0.s8 %v11985
    %v11987 = vlaneseq
    %v11988 = vshrl.u32 %v11987, 7
    %v11989 = vsub.s32 %v11986, %v11988
    %v11990 = vrot.slane %v11982, %v11989
    %v11992 = vunpack.c.l.s4 1934713408
    %v11993 = vunpack.c.0.s8 %v11992
    %v11994 = vlaneseq
    %v11995 = vshrl.u32 %v11994, 7
    %v11996 = vsub.s32 %v11993, %v11995
    %v11997 = vrot.slane %v11983, %v11996
    %v11998 = vcombine.low %v11966, %v11981
    %v11999 = vcombine.high %v11966, %v11981
    %v12001 = vunpack.c.l.s4 1934713408
    %v12002 = vunpack.c.0.s8 %v12001
    %v12003 = vlaneseq
    %v12004 = vshrl.u32 %v12003, 7
    %v12005 = vsub.s32 %v12002, %v12004
    %v12006 = vrot.slane %v11998, %v12005
    %v12008 = vunpack.c.l.s4 1934713408
    %v12009 = vunpack.c.0.s8 %v12008
    %v12010 = vlaneseq
    %v12011 = vshrl.u32 %v12010, 7
    %v12012 = vsub.s32 %v12009, %v12011
    %v12013 = vrot.slane %v11999, %v12012
    %v12014 = vcombine.high %v11990, 0.0
    %v12015 = vcombine.high %v11997, 0.0
    %v12016 = vcombine.high %v12006, 0.0
    %v12017 = vcombine.high %v12013, 0.0
    %v12018 = vcombine.high %v11560, 0.0
    %v12020 = vunpack.c.l.s4 1983009808
    %v12021 = vunpack.c.0.s8 %v12020
    %v12022 = vlaneseq
    %v12023 = vshrl.u32 %v12022, 7
    %v12024 = vsub.s32 %v12021, %v12023
    %v12025 = vrot.slane %v11560, %v12024
    %v12027 = vunpack.c.l.s4 1983009808
    %v12028 = vunpack.c.0.s8 %v12027
    %v12029 = vlaneseq
    %v12030 = vshrl.u32 %v12029, 7
    %v12031 = vsub.s32 %v12028, %v12030
    %v12032 = vrot.slane %v12018, %v12031
    %v12033 = vcombine.high %v11567, 0.0
    %v12035 = vunpack.c.l.s4 1983009808
    %v12036 = vunpack.c.0.s8 %v12035
    %v12037 = vlaneseq
    %v12038 = vshrl.u32 %v12037, 7
    %v12039 = vsub.s32 %v12036, %v12038
    %v12040 = vrot.slane %v11567, %v12039
    %v12042 = vunpack.c.l.s4 1983009808
    %v12043 = vunpack.c.0.s8 %v12042
    %v12044 = vlaneseq
    %v12045 = vshrl.u32 %v12044, 7
    %v12046 = vsub.s32 %v12043, %v12045
    %v12047 = vrot.slane %v12033, %v12046
    %v12048 = vcombine.low %v12025, %v12040
    %v12049 = vcombine.high %v12025, %v12040
    %v12051 = vunpack.c.l.s4 1934713408
    %v12052 = vunpack.c.0.s8 %v12051
    %v12053 = vlaneseq
    %v12054 = vshrl.u32 %v12053, 7
    %v12055 = vsub.s32 %v12052, %v12054
    %v12056 = vrot.slane %v12048, %v12055
    %v12058 = vunpack.c.l.s4 1934713408
    %v12059 = vunpack.c.0.s8 %v12058
    %v12060 = vlaneseq
    %v12061 = vshrl.u32 %v12060, 7
    %v12062 = vsub.s32 %v12059, %v12061
    %v12063 = vrot.slane %v12049, %v12062
    %v12064 = vcombine.low %v12032, %v12047
    %v12065 = vcombine.high %v12032, %v12047
    %v12067 = vunpack.c.l.s4 1934713408
    %v12068 = vunpack.c.0.s8 %v12067
    %v12069 = vlaneseq
    %v12070 = vshrl.u32 %v12069, 7
    %v12071 = vsub.s32 %v12068, %v12070
    %v12072 = vrot.slane %v12064, %v12071
    %v12074 = vunpack.c.l.s4 1934713408
    %v12075 = vunpack.c.0.s8 %v12074
    %v12076 = vlaneseq
    %v12077 = vshrl.u32 %v12076, 7
    %v12078 = vsub.s32 %v12075, %v12077
    %v12079 = vrot.slane %v12065, %v12078
    %v12080 = vcombine.high %v12056, 0.0
    %v12081 = vcombine.high %v12063, 0.0
    %v12082 = vcombine.high %v12072, 0.0
    %v12083 = vcombine.high %v12079, 0.0
    %v12084 = vcombine.high %v11574, 0.0
    %v12086 = vunpack.c.l.s4 1983009808
    %v12087 = vunpack.c.0.s8 %v12086
    %v12088 = vlaneseq
    %v12089 = vshrl.u32 %v12088, 7
    %v12090 = vsub.s32 %v12087, %v12089
    %v12091 = vrot.slane %v11574, %v12090
    %v12093 = vunpack.c.l.s4 1983009808
    %v12094 = vunpack.c.0.s8 %v12093
    %v12095 = vlaneseq
    %v12096 = vshrl.u32 %v12095, 7
    %v12097 = vsub.s32 %v12094, %v12096
    %v12098 = vrot.slane %v12084, %v12097
    %v12099 = vcombine.high %v11581, 0.0
    %v12101 = vunpack.c.l.s4 1983009808
    %v12102 = vunpack.c.0.s8 %v12101
    %v12103 = vlaneseq
    %v12104 = vshrl.u32 %v12103, 7
    %v12105 = vsub.s32 %v12102, %v12104
    %v12106 = vrot.slane %v11581, %v12105
    %v12108 = vunpack.c.l.s4 1983009808
    %v12109 = vunpack.c.0.s8 %v12108
    %v12110 = vlaneseq
    %v12111 = vshrl.u32 %v12110, 7
    %v12112 = vsub.s32 %v12109, %v12111
    %v12113 = vrot.slane %v12099, %v12112
    %v12114 = vcombine.low %v12091, %v12106
    %v12115 = vcombine.high %v12091, %v12106
    %v12117 = vunpack.c.l.s4 1934713408
    %v12118 = vunpack.c.0.s8 %v12117
    %v12119 = vlaneseq
    %v12120 = vshrl.u32 %v12119, 7
    %v12121 = vsub.s32 %v12118, %v12120
    %v12122 = vrot.slane %v12114, %v12121
    %v12124 = vunpack.c.l.s4 1934713408
    %v12125 = vunpack.c.0.s8 %v12124
    %v12126 = vlaneseq
    %v12127 = vshrl.u32 %v12126, 7
    %v12128 = vsub.s32 %v12125, %v12127
    %v12129 = vrot.slane %v12115, %v12128
    %v12130 = vcombine.low %v12098, %v12113
    %v12131 = vcombine.high %v12098, %v12113
    %v12133 = vunpack.c.l.s4 1934713408
    %v12134 = vunpack.c.0.s8 %v12133
    %v12135 = vlaneseq
    %v12136 = vshrl.u32 %v12135, 7
    %v12137 = vsub.s32 %v12134, %v12136
    %v12138 = vrot.slane %v12130, %v12137
    %v12140 = vunpack.c.l.s4 1934713408
    %v12141 = vunpack.c.0.s8 %v12140
    %v12142 = vlaneseq
    %v12143 = vshrl.u32 %v12142, 7
    %v12144 = vsub.s32 %v12141, %v12143
    %v12145 = vrot.slane %v12131, %v12144
    %v12146 = vcombine.high %v12122, 0.0
    %v12147 = vcombine.high %v12129, 0.0
    %v12148 = vcombine.high %v12138, 0.0
    %v12149 = vcombine.high %v12145, 0.0
    %v12150 = vcombine.high %v11588, 0.0
    %v12152 = vunpack.c.l.s4 1983009808
    %v12153 = vunpack.c.0.s8 %v12152
    %v12154 = vlaneseq
    %v12155 = vshrl.u32 %v12154, 7
    %v12156 = vsub.s32 %v12153, %v12155
    %v12157 = vrot.slane %v11588, %v12156
    %v12159 = vunpack.c.l.s4 1983009808
    %v12160 = vunpack.c.0.s8 %v12159
    %v12161 = vlaneseq
    %v12162 = vshrl.u32 %v12161, 7
    %v12163 = vsub.s32 %v12160, %v12162
    %v12164 = vrot.slane %v12150, %v12163
    %v12165 = vcombine.high %v11595, 0.0
    %v12167 = vunpack.c.l.s4 1983009808
    %v12168 = vunpack.c.0.s8 %v12167
    %v12169 = vlaneseq
    %v12170 = vshrl.u32 %v12169, 7
    %v12171 = vsub.s32 %v12168, %v12170
    %v12172 = vrot.slane %v11595, %v12171
    %v12174 = vunpack.c.l.s4 1983009808
    %v12175 = vunpack.c.0.s8 %v12174
    %v12176 = vlaneseq
    %v12177 = vshrl.u32 %v12176, 7
    %v12178 = vsub.s32 %v12175, %v12177
    %v12179 = vrot.slane %v12165, %v12178
    %v12180 = vcombine.low %v12157, %v12172
    %v12181 = vcombine.high %v12157, %v12172
    %v12183 = vunpack.c.l.s4 1934713408
    %v12184 = vunpack.c.0.s8 %v12183
    %v12185 = vlaneseq
    %v12186 = vshrl.u32 %v12185, 7
    %v12187 = vsub.s32 %v12184, %v12186
    %v12188 = vrot.slane %v12180, %v12187
    %v12190 = vunpack.c.l.s4 1934713408
    %v12191 = vunpack.c.0.s8 %v12190
    %v12192 = vlaneseq
    %v12193 = vshrl.u32 %v12192, 7
    %v12194 = vsub.s32 %v12191, %v12193
    %v12195 = vrot.slane %v12181, %v12194
    %v12196 = vcombine.low %v12164, %v12179
    %v12197 = vcombine.high %v12164, %v12179
    %v12199 = vunpack.c.l.s4 1934713408
    %v12200 = vunpack.c.0.s8 %v12199
    %v12201 = vlaneseq
    %v12202 = vshrl.u32 %v12201, 7
    %v12203 = vsub.s32 %v12200, %v12202
    %v12204 = vrot.slane %v12196, %v12203
    %v12206 = vunpack.c.l.s4 1934713408
    %v12207 = vunpack.c.0.s8 %v12206
    %v12208 = vlaneseq
    %v12209 = vshrl.u32 %v12208, 7
    %v12210 = vsub.s32 %v12207, %v12209
    %v12211 = vrot.slane %v12197, %v12210
    %v12212 = vcombine.high %v12188, 0.0
    %v12213 = vcombine.high %v12195, 0.0
    %v12214 = vcombine.high %v12204, 0.0
    %v12215 = vcombine.high %v12211, 0.0
    %v12216 = vcombine.high %v11602, 0.0
    %v12218 = vunpack.c.l.s4 1983009808
    %v12219 = vunpack.c.0.s8 %v12218
    %v12220 = vlaneseq
    %v12221 = vshrl.u32 %v12220, 7
    %v12222 = vsub.s32 %v12219, %v12221
    %v12223 = vrot.slane %v11602, %v12222
    %v12225 = vunpack.c.l.s4 1983009808
    %v12226 = vunpack.c.0.s8 %v12225
    %v12227 = vlaneseq
    %v12228 = vshrl.u32 %v12227, 7
    %v12229 = vsub.s32 %v12226, %v12228
    %v12230 = vrot.slane %v12216, %v12229
    %v12231 = vcombine.high %v11609, 0.0
    %v12233 = vunpack.c.l.s4 1983009808
    %v12234 = vunpack.c.0.s8 %v12233
    %v12235 = vlaneseq
    %v12236 = vshrl.u32 %v12235, 7
    %v12237 = vsub.s32 %v12234, %v12236
    %v12238 = vrot.slane %v11609, %v12237
    %v12240 = vunpack.c.l.s4 1983009808
    %v12241 = vunpack.c.0.s8 %v12240
    %v12242 = vlaneseq
    %v12243 = vshrl.u32 %v12242, 7
    %v12244 = vsub.s32 %v12241, %v12243
    %v12245 = vrot.slane %v12231, %v12244
    %v12246 = vcombine.low %v12223, %v12238
    %v12247 = vcombine.high %v12223, %v12238
    %v12249 = vunpack.c.l.s4 1934713408
    %v12250 = vunpack.c.0.s8 %v12249
    %v12251 = vlaneseq
    %v12252 = vshrl.u32 %v12251, 7
    %v12253 = vsub.s32 %v12250, %v12252
    %v12254 = vrot.slane %v12246, %v12253
    %v12256 = vunpack.c.l.s4 1934713408
    %v12257 = vunpack.c.0.s8 %v12256
    %v12258 = vlaneseq
    %v12259 = vshrl.u32 %v12258, 7
    %v12260 = vsub.s32 %v12257, %v12259
    %v12261 = vrot.slane %v12247, %v12260
    %v12262 = vcombine.low %v12230, %v12245
    %v12263 = vcombine.high %v12230, %v12245
    %v12265 = vunpack.c.l.s4 1934713408
    %v12266 = vunpack.c.0.s8 %v12265
    %v12267 = vlaneseq
    %v12268 = vshrl.u32 %v12267, 7
    %v12269 = vsub.s32 %v12266, %v12268
    %v12270 = vrot.slane %v12262, %v12269
    %v12272 = vunpack.c.l.s4 1934713408
    %v12273 = vunpack.c.0.s8 %v12272
    %v12274 = vlaneseq
    %v12275 = vshrl.u32 %v12274, 7
    %v12276 = vsub.s32 %v12273, %v12275
    %v12277 = vrot.slane %v12263, %v12276
    %v12278 = vcombine.high %v12254, 0.0
    %v12279 = vcombine.high %v12261, 0.0
    %v12280 = vcombine.high %v12270, 0.0
    %v12281 = vcombine.high %v12277, 0.0
    %v12282 = vcombine.high %v11616, 0.0
    %v12284 = vunpack.c.l.s4 1983009808
    %v12285 = vunpack.c.0.s8 %v12284
    %v12286 = vlaneseq
    %v12287 = vshrl.u32 %v12286, 7
    %v12288 = vsub.s32 %v12285, %v12287
    %v12289 = vrot.slane %v11616, %v12288
    %v12291 = vunpack.c.l.s4 1983009808
    %v12292 = vunpack.c.0.s8 %v12291
    %v12293 = vlaneseq
    %v12294 = vshrl.u32 %v12293, 7
    %v12295 = vsub.s32 %v12292, %v12294
    %v12296 = vrot.slane %v12282, %v12295
    %v12297 = vcombine.high %v11623, 0.0
    %v12299 = vunpack.c.l.s4 1983009808
    %v12300 = vunpack.c.0.s8 %v12299
    %v12301 = vlaneseq
    %v12302 = vshrl.u32 %v12301, 7
    %v12303 = vsub.s32 %v12300, %v12302
    %v12304 = vrot.slane %v11623, %v12303
    %v12306 = vunpack.c.l.s4 1983009808
    %v12307 = vunpack.c.0.s8 %v12306
    %v12308 = vlaneseq
    %v12309 = vshrl.u32 %v12308, 7
    %v12310 = vsub.s32 %v12307, %v12309
    %v12311 = vrot.slane %v12297, %v12310
    %v12312 = vcombine.low %v12289, %v12304
    %v12313 = vcombine.high %v12289, %v12304
    %v12315 = vunpack.c.l.s4 1934713408
    %v12316 = vunpack.c.0.s8 %v12315
    %v12317 = vlaneseq
    %v12318 = vshrl.u32 %v12317, 7
    %v12319 = vsub.s32 %v12316, %v12318
    %v12320 = vrot.slane %v12312, %v12319
    %v12322 = vunpack.c.l.s4 1934713408
    %v12323 = vunpack.c.0.s8 %v12322
    %v12324 = vlaneseq
    %v12325 = vshrl.u32 %v12324, 7
    %v12326 = vsub.s32 %v12323, %v12325
    %v12327 = vrot.slane %v12313, %v12326
    %v12328 = vcombine.low %v12296, %v12311
    %v12329 = vcombine.high %v12296, %v12311
    %v12331 = vunpack.c.l.s4 1934713408
    %v12332 = vunpack.c.0.s8 %v12331
    %v12333 = vlaneseq
    %v12334 = vshrl.u32 %v12333, 7
    %v12335 = vsub.s32 %v12332, %v12334
    %v12336 = vrot.slane %v12328, %v12335
    %v12338 = vunpack.c.l.s4 1934713408
    %v12339 = vunpack.c.0.s8 %v12338
    %v12340 = vlaneseq
    %v12341 = vshrl.u32 %v12340, 7
    %v12342 = vsub.s32 %v12339, %v12341
    %v12343 = vrot.slane %v12329, %v12342
    %v12344 = vcombine.high %v12320, 0.0
    %v12345 = vcombine.high %v12327, 0.0
    %v12346 = vcombine.high %v12336, 0.0
    %v12347 = vcombine.high %v12343, 0.0
    %v12348 = vcombine.high %v11630, 0.0
    %v12350 = vunpack.c.l.s4 1983009808
    %v12351 = vunpack.c.0.s8 %v12350
    %v12352 = vlaneseq
    %v12353 = vshrl.u32 %v12352, 7
    %v12354 = vsub.s32 %v12351, %v12353
    %v12355 = vrot.slane %v11630, %v12354
    %v12357 = vunpack.c.l.s4 1983009808
    %v12358 = vunpack.c.0.s8 %v12357
    %v12359 = vlaneseq
    %v12360 = vshrl.u32 %v12359, 7
    %v12361 = vsub.s32 %v12358, %v12360
    %v12362 = vrot.slane %v12348, %v12361
    %v12363 = vcombine.high %v11637, 0.0
    %v12365 = vunpack.c.l.s4 1983009808
    %v12366 = vunpack.c.0.s8 %v12365
    %v12367 = vlaneseq
    %v12368 = vshrl.u32 %v12367, 7
    %v12369 = vsub.s32 %v12366, %v12368
    %v12370 = vrot.slane %v11637, %v12369
    %v12372 = vunpack.c.l.s4 1983009808
    %v12373 = vunpack.c.0.s8 %v12372
    %v12374 = vlaneseq
    %v12375 = vshrl.u32 %v12374, 7
    %v12376 = vsub.s32 %v12373, %v12375
    %v12377 = vrot.slane %v12363, %v12376
    %v12378 = vcombine.low %v12355, %v12370
    %v12379 = vcombine.high %v12355, %v12370
    %v12381 = vunpack.c.l.s4 1934713408
    %v12382 = vunpack.c.0.s8 %v12381
    %v12383 = vlaneseq
    %v12384 = vshrl.u32 %v12383, 7
    %v12385 = vsub.s32 %v12382, %v12384
    %v12386 = vrot.slane %v12378, %v12385
    %v12388 = vunpack.c.l.s4 1934713408
    %v12389 = vunpack.c.0.s8 %v12388
    %v12390 = vlaneseq
    %v12391 = vshrl.u32 %v12390, 7
    %v12392 = vsub.s32 %v12389, %v12391
    %v12393 = vrot.slane %v12379, %v12392
    %v12394 = vcombine.low %v12362, %v12377
    %v12395 = vcombine.high %v12362, %v12377
    %v12397 = vunpack.c.l.s4 1934713408
    %v12398 = vunpack.c.0.s8 %v12397
    %v12399 = vlaneseq
    %v12400 = vshrl.u32 %v12399, 7
    %v12401 = vsub.s32 %v12398, %v12400
    %v12402 = vrot.slane %v12394, %v12401
    %v12404 = vunpack.c.l.s4 1934713408
    %v12405 = vunpack.c.0.s8 %v12404
    %v12406 = vlaneseq
    %v12407 = vshrl.u32 %v12406, 7
    %v12408 = vsub.s32 %v12405, %v12407
    %v12409 = vrot.slane %v12395, %v12408
    %v12410 = vcombine.high %v12386, 0.0
    %v12411 = vcombine.high %v12393, 0.0
    %v12412 = vcombine.high %v12402, 0.0
    %v12413 = vcombine.high %v12409, 0.0
    %v12414 = vcombine.high %v11644, 0.0
    %v12416 = vunpack.c.l.s4 1983009808
    %v12417 = vunpack.c.0.s8 %v12416
    %v12418 = vlaneseq
    %v12419 = vshrl.u32 %v12418, 7
    %v12420 = vsub.s32 %v12417, %v12419
    %v12421 = vrot.slane %v11644, %v12420
    %v12423 = vunpack.c.l.s4 1983009808
    %v12424 = vunpack.c.0.s8 %v12423
    %v12425 = vlaneseq
    %v12426 = vshrl.u32 %v12425, 7
    %v12427 = vsub.s32 %v12424, %v12426
    %v12428 = vrot.slane %v12414, %v12427
    %v12429 = vcombine.high %v11651, 0.0
    %v12431 = vunpack.c.l.s4 1983009808
    %v12432 = vunpack.c.0.s8 %v12431
    %v12433 = vlaneseq
    %v12434 = vshrl.u32 %v12433, 7
    %v12435 = vsub.s32 %v12432, %v12434
    %v12436 = vrot.slane %v11651, %v12435
    %v12438 = vunpack.c.l.s4 1983009808
    %v12439 = vunpack.c.0.s8 %v12438
    %v12440 = vlaneseq
    %v12441 = vshrl.u32 %v12440, 7
    %v12442 = vsub.s32 %v12439, %v12441
    %v12443 = vrot.slane %v12429, %v12442
    %v12444 = vcombine.low %v12421, %v12436
    %v12445 = vcombine.high %v12421, %v12436
    %v12447 = vunpack.c.l.s4 1934713408
    %v12448 = vunpack.c.0.s8 %v12447
    %v12449 = vlaneseq
    %v12450 = vshrl.u32 %v12449, 7
    %v12451 = vsub.s32 %v12448, %v12450
    %v12452 = vrot.slane %v12444, %v12451
    %v12454 = vunpack.c.l.s4 1934713408
    %v12455 = vunpack.c.0.s8 %v12454
    %v12456 = vlaneseq
    %v12457 = vshrl.u32 %v12456, 7
    %v12458 = vsub.s32 %v12455, %v12457
    %v12459 = vrot.slane %v12445, %v12458
    %v12460 = vcombine.low %v12428, %v12443
    %v12461 = vcombine.high %v12428, %v12443
    %v12463 = vunpack.c.l.s4 1934713408
    %v12464 = vunpack.c.0.s8 %v12463
    %v12465 = vlaneseq
    %v12466 = vshrl.u32 %v12465, 7
    %v12467 = vsub.s32 %v12464, %v12466
    %v12468 = vrot.slane %v12460, %v12467
    %v12470 = vunpack.c.l.s4 1934713408
    %v12471 = vunpack.c.0.s8 %v12470
    %v12472 = vlaneseq
    %v12473 = vshrl.u32 %v12472, 7
    %v12474 = vsub.s32 %v12471, %v12473
    %v12475 = vrot.slane %v12461, %v12474
    %v12476 = vcombine.high %v12452, 0.0
    %v12477 = vcombine.high %v12459, 0.0
    %v12478 = vcombine.high %v12468, 0.0
    %v12479 = vcombine.high %v12475, 0.0
    %v12480 = vcombine.high %v11658, 0.0
    %v12482 = vunpack.c.l.s4 1983009808
    %v12483 = vunpack.c.0.s8 %v12482
    %v12484 = vlaneseq
    %v12485 = vshrl.u32 %v12484, 7
    %v12486 = vsub.s32 %v12483, %v12485
    %v12487 = vrot.slane %v11658, %v12486
    %v12489 = vunpack.c.l.s4 1983009808
    %v12490 = vunpack.c.0.s8 %v12489
    %v12491 = vlaneseq
    %v12492 = vshrl.u32 %v12491, 7
    %v12493 = vsub.s32 %v12490, %v12492
    %v12494 = vrot.slane %v12480, %v12493
    %v12495 = vcombine.high %v11665, 0.0
    %v12497 = vunpack.c.l.s4 1983009808
    %v12498 = vunpack.c.0.s8 %v12497
    %v12499 = vlaneseq
    %v12500 = vshrl.u32 %v12499, 7
    %v12501 = vsub.s32 %v12498, %v12500
    %v12502 = vrot.slane %v11665, %v12501
    %v12504 = vunpack.c.l.s4 1983009808
    %v12505 = vunpack.c.0.s8 %v12504
    %v12506 = vlaneseq
    %v12507 = vshrl.u32 %v12506, 7
    %v12508 = vsub.s32 %v12505, %v12507
    %v12509 = vrot.slane %v12495, %v12508
    %v12510 = vcombine.low %v12487, %v12502
    %v12511 = vcombine.high %v12487, %v12502
    %v12513 = vunpack.c.l.s4 1934713408
    %v12514 = vunpack.c.0.s8 %v12513
    %v12515 = vlaneseq
    %v12516 = vshrl.u32 %v12515, 7
    %v12517 = vsub.s32 %v12514, %v12516
    %v12518 = vrot.slane %v12510, %v12517
    %v12520 = vunpack.c.l.s4 1934713408
    %v12521 = vunpack.c.0.s8 %v12520
    %v12522 = vlaneseq
    %v12523 = vshrl.u32 %v12522, 7
    %v12524 = vsub.s32 %v12521, %v12523
    %v12525 = vrot.slane %v12511, %v12524
    %v12526 = vcombine.low %v12494, %v12509
    %v12527 = vcombine.high %v12494, %v12509
    %v12529 = vunpack.c.l.s4 1934713408
    %v12530 = vunpack.c.0.s8 %v12529
    %v12531 = vlaneseq
    %v12532 = vshrl.u32 %v12531, 7
    %v12533 = vsub.s32 %v12530, %v12532
    %v12534 = vrot.slane %v12526, %v12533
    %v12536 = vunpack.c.l.s4 1934713408
    %v12537 = vunpack.c.0.s8 %v12536
    %v12538 = vlaneseq
    %v12539 = vshrl.u32 %v12538, 7
    %v12540 = vsub.s32 %v12537, %v12539
    %v12541 = vrot.slane %v12527, %v12540
    %v12542 = vcombine.high %v12518, 0.0
    %v12543 = vcombine.high %v12525, 0.0
    %v12544 = vcombine.high %v12534, 0.0
    %v12545 = vcombine.high %v12541, 0.0
    %v12546 = vcombine.high %v11672, 0.0
    %v12548 = vunpack.c.l.s4 1983009808
    %v12549 = vunpack.c.0.s8 %v12548
    %v12550 = vlaneseq
    %v12551 = vshrl.u32 %v12550, 7
    %v12552 = vsub.s32 %v12549, %v12551
    %v12553 = vrot.slane %v11672, %v12552
    %v12555 = vunpack.c.l.s4 1983009808
    %v12556 = vunpack.c.0.s8 %v12555
    %v12557 = vlaneseq
    %v12558 = vshrl.u32 %v12557, 7
    %v12559 = vsub.s32 %v12556, %v12558
    %v12560 = vrot.slane %v12546, %v12559
    %v12561 = vcombine.high %v11679, 0.0
    %v12563 = vunpack.c.l.s4 1983009808
    %v12564 = vunpack.c.0.s8 %v12563
    %v12565 = vlaneseq
    %v12566 = vshrl.u32 %v12565, 7
    %v12567 = vsub.s32 %v12564, %v12566
    %v12568 = vrot.slane %v11679, %v12567
    %v12570 = vunpack.c.l.s4 1983009808
    %v12571 = vunpack.c.0.s8 %v12570
    %v12572 = vlaneseq
    %v12573 = vshrl.u32 %v12572, 7
    %v12574 = vsub.s32 %v12571, %v12573
    %v12575 = vrot.slane %v12561, %v12574
    %v12576 = vcombine.low %v12553, %v12568
    %v12577 = vcombine.high %v12553, %v12568
    %v12579 = vunpack.c.l.s4 1934713408
    %v12580 = vunpack.c.0.s8 %v12579
    %v12581 = vlaneseq
    %v12582 = vshrl.u32 %v12581, 7
    %v12583 = vsub.s32 %v12580, %v12582
    %v12584 = vrot.slane %v12576, %v12583
    %v12586 = vunpack.c.l.s4 1934713408
    %v12587 = vunpack.c.0.s8 %v12586
    %v12588 = vlaneseq
    %v12589 = vshrl.u32 %v12588, 7
    %v12590 = vsub.s32 %v12587, %v12589
    %v12591 = vrot.slane %v12577, %v12590
    %v12592 = vcombine.low %v12560, %v12575
    %v12593 = vcombine.high %v12560, %v12575
    %v12595 = vunpack.c.l.s4 1934713408
    %v12596 = vunpack.c.0.s8 %v12595
    %v12597 = vlaneseq
    %v12598 = vshrl.u32 %v12597, 7
    %v12599 = vsub.s32 %v12596, %v12598
    %v12600 = vrot.slane %v12592, %v12599
    %v12602 = vunpack.c.l.s4 1934713408
    %v12603 = vunpack.c.0.s8 %v12602
    %v12604 = vlaneseq
    %v12605 = vshrl.u32 %v12604, 7
    %v12606 = vsub.s32 %v12603, %v12605
    %v12607 = vrot.slane %v12593, %v12606
    %v12608 = vcombine.high %v12584, 0.0
    %v12609 = vcombine.high %v12591, 0.0
    %v12610 = vcombine.high %v12600, 0.0
    %v12611 = vcombine.high %v12607, 0.0
    %v12612 = vcombine.high %v11686, 0.0
    %v12614 = vunpack.c.l.s4 1983009808
    %v12615 = vunpack.c.0.s8 %v12614
    %v12616 = vlaneseq
    %v12617 = vshrl.u32 %v12616, 7
    %v12618 = vsub.s32 %v12615, %v12617
    %v12619 = vrot.slane %v11686, %v12618
    %v12621 = vunpack.c.l.s4 1983009808
    %v12622 = vunpack.c.0.s8 %v12621
    %v12623 = vlaneseq
    %v12624 = vshrl.u32 %v12623, 7
    %v12625 = vsub.s32 %v12622, %v12624
    %v12626 = vrot.slane %v12612, %v12625
    %v12627 = vcombine.high %v11693, 0.0
    %v12629 = vunpack.c.l.s4 1983009808
    %v12630 = vunpack.c.0.s8 %v12629
    %v12631 = vlaneseq
    %v12632 = vshrl.u32 %v12631, 7
    %v12633 = vsub.s32 %v12630, %v12632
    %v12634 = vrot.slane %v11693, %v12633
    %v12636 = vunpack.c.l.s4 1983009808
    %v12637 = vunpack.c.0.s8 %v12636
    %v12638 = vlaneseq
    %v12639 = vshrl.u32 %v12638, 7
    %v12640 = vsub.s32 %v12637, %v12639
    %v12641 = vrot.slane %v12627, %v12640
    %v12642 = vcombine.low %v12619, %v12634
    %v12643 = vcombine.high %v12619, %v12634
    %v12645 = vunpack.c.l.s4 1934713408
    %v12646 = vunpack.c.0.s8 %v12645
    %v12647 = vlaneseq
    %v12648 = vshrl.u32 %v12647, 7
    %v12649 = vsub.s32 %v12646, %v12648
    %v12650 = vrot.slane %v12642, %v12649
    %v12652 = vunpack.c.l.s4 1934713408
    %v12653 = vunpack.c.0.s8 %v12652
    %v12654 = vlaneseq
    %v12655 = vshrl.u32 %v12654, 7
    %v12656 = vsub.s32 %v12653, %v12655
    %v12657 = vrot.slane %v12643, %v12656
    %v12658 = vcombine.low %v12626, %v12641
    %v12659 = vcombine.high %v12626, %v12641
    %v12661 = vunpack.c.l.s4 1934713408
    %v12662 = vunpack.c.0.s8 %v12661
    %v12663 = vlaneseq
    %v12664 = vshrl.u32 %v12663, 7
    %v12665 = vsub.s32 %v12662, %v12664
    %v12666 = vrot.slane %v12658, %v12665
    %v12668 = vunpack.c.l.s4 1934713408
    %v12669 = vunpack.c.0.s8 %v12668
    %v12670 = vlaneseq
    %v12671 = vshrl.u32 %v12670, 7
    %v12672 = vsub.s32 %v12669, %v12671
    %v12673 = vrot.slane %v12659, %v12672
    %v12674 = vcombine.high %v12650, 0.0
    %v12675 = vcombine.high %v12657, 0.0
    %v12676 = vcombine.high %v12666, 0.0
    %v12677 = vcombine.high %v12673, 0.0
    %v12678 = vcombine.high %v11700, 0.0
    %v12680 = vunpack.c.l.s4 1983009808
    %v12681 = vunpack.c.0.s8 %v12680
    %v12682 = vlaneseq
    %v12683 = vshrl.u32 %v12682, 7
    %v12684 = vsub.s32 %v12681, %v12683
    %v12685 = vrot.slane %v11700, %v12684
    %v12687 = vunpack.c.l.s4 1983009808
    %v12688 = vunpack.c.0.s8 %v12687
    %v12689 = vlaneseq
    %v12690 = vshrl.u32 %v12689, 7
    %v12691 = vsub.s32 %v12688, %v12690
    %v12692 = vrot.slane %v12678, %v12691
    %v12693 = vcombine.high %v11707, 0.0
    %v12695 = vunpack.c.l.s4 1983009808
    %v12696 = vunpack.c.0.s8 %v12695
    %v12697 = vlaneseq
    %v12698 = vshrl.u32 %v12697, 7
    %v12699 = vsub.s32 %v12696, %v12698
    %v12700 = vrot.slane %v11707, %v12699
    %v12702 = vunpack.c.l.s4 1983009808
    %v12703 = vunpack.c.0.s8 %v12702
    %v12704 = vlaneseq
    %v12705 = vshrl.u32 %v12704, 7
    %v12706 = vsub.s32 %v12703, %v12705
    %v12707 = vrot.slane %v12693, %v12706
    %v12708 = vcombine.low %v12685, %v12700
    %v12709 = vcombine.high %v12685, %v12700
    %v12711 = vunpack.c.l.s4 1934713408
    %v12712 = vunpack.c.0.s8 %v12711
    %v12713 = vlaneseq
    %v12714 = vshrl.u32 %v12713, 7
    %v12715 = vsub.s32 %v12712, %v12714
    %v12716 = vrot.slane %v12708, %v12715
    %v12718 = vunpack.c.l.s4 1934713408
    %v12719 = vunpack.c.0.s8 %v12718
    %v12720 = vlaneseq
    %v12721 = vshrl.u32 %v12720, 7
    %v12722 = vsub.s32 %v12719, %v12721
    %v12723 = vrot.slane %v12709, %v12722
    %v12724 = vcombine.low %v12692, %v12707
    %v12725 = vcombine.high %v12692, %v12707
    %v12727 = vunpack.c.l.s4 1934713408
    %v12728 = vunpack.c.0.s8 %v12727
    %v12729 = vlaneseq
    %v12730 = vshrl.u32 %v12729, 7
    %v12731 = vsub.s32 %v12728, %v12730
    %v12732 = vrot.slane %v12724, %v12731
    %v12734 = vunpack.c.l.s4 1934713408
    %v12735 = vunpack.c.0.s8 %v12734
    %v12736 = vlaneseq
    %v12737 = vshrl.u32 %v12736, 7
    %v12738 = vsub.s32 %v12735, %v12737
    %v12739 = vrot.slane %v12725, %v12738
    %v12740 = vcombine.high %v12716, 0.0
    %v12741 = vcombine.high %v12723, 0.0
    %v12742 = vcombine.high %v12732, 0.0
    %v12743 = vcombine.high %v12739, 0.0
    %v12744 = vcombine.high %v11714, 0.0
    %v12746 = vunpack.c.l.s4 1983009808
    %v12747 = vunpack.c.0.s8 %v12746
    %v12748 = vlaneseq
    %v12749 = vshrl.u32 %v12748, 7
    %v12750 = vsub.s32 %v12747, %v12749
    %v12751 = vrot.slane %v11714, %v12750
    %v12753 = vunpack.c.l.s4 1983009808
    %v12754 = vunpack.c.0.s8 %v12753
    %v12755 = vlaneseq
    %v12756 = vshrl.u32 %v12755, 7
    %v12757 = vsub.s32 %v12754, %v12756
    %v12758 = vrot.slane %v12744, %v12757
    %v12759 = vcombine.high %v11721, 0.0
    %v12761 = vunpack.c.l.s4 1983009808
    %v12762 = vunpack.c.0.s8 %v12761
    %v12763 = vlaneseq
    %v12764 = vshrl.u32 %v12763, 7
    %v12765 = vsub.s32 %v12762, %v12764
    %v12766 = vrot.slane %v11721, %v12765
    %v12768 = vunpack.c.l.s4 1983009808
    %v12769 = vunpack.c.0.s8 %v12768
    %v12770 = vlaneseq
    %v12771 = vshrl.u32 %v12770, 7
    %v12772 = vsub.s32 %v12769, %v12771
    %v12773 = vrot.slane %v12759, %v12772
    %v12774 = vcombine.low %v12751, %v12766
    %v12775 = vcombine.high %v12751, %v12766
    %v12777 = vunpack.c.l.s4 1934713408
    %v12778 = vunpack.c.0.s8 %v12777
    %v12779 = vlaneseq
    %v12780 = vshrl.u32 %v12779, 7
    %v12781 = vsub.s32 %v12778, %v12780
    %v12782 = vrot.slane %v12774, %v12781
    %v12784 = vunpack.c.l.s4 1934713408
    %v12785 = vunpack.c.0.s8 %v12784
    %v12786 = vlaneseq
    %v12787 = vshrl.u32 %v12786, 7
    %v12788 = vsub.s32 %v12785, %v12787
    %v12789 = vrot.slane %v12775, %v12788
    %v12790 = vcombine.low %v12758, %v12773
    %v12791 = vcombine.high %v12758, %v12773
    %v12793 = vunpack.c.l.s4 1934713408
    %v12794 = vunpack.c.0.s8 %v12793
    %v12795 = vlaneseq
    %v12796 = vshrl.u32 %v12795, 7
    %v12797 = vsub.s32 %v12794, %v12796
    %v12798 = vrot.slane %v12790, %v12797
    %v12800 = vunpack.c.l.s4 1934713408
    %v12801 = vunpack.c.0.s8 %v12800
    %v12802 = vlaneseq
    %v12803 = vshrl.u32 %v12802, 7
    %v12804 = vsub.s32 %v12801, %v12803
    %v12805 = vrot.slane %v12791, %v12804
    %v12806 = vcombine.high %v12782, 0.0
    %v12807 = vcombine.high %v12789, 0.0
    %v12808 = vcombine.high %v12798, 0.0
    %v12809 = vcombine.high %v12805, 0.0
    %12826 = vrot.lane.b32.xlu0 %v11816, 8
    %v12827 = vpop.permute.xlu0 %12826
    %12828 = vrot.lane.b32.xlu0 %v11882, 8
    %v12829 = vpop.permute.xlu0 %12828
    %12830 = vrot.lane.b32.xlu0 %v11948, 8
    %v12831 = vpop.permute.xlu0 %12830
    %12832 = vrot.lane.b32.xlu0 %v12014, 8
    %v12833 = vpop.permute.xlu0 %12832
    %12834 = vrot.lane.b32.xlu0 %v12080, 8
    %v12835 = vpop.permute.xlu0 %12834
    %12836 = vrot.lane.b32.xlu0 %v12146, 8
    %v12837 = vpop.permute.xlu0 %12836
    %12838 = vrot.lane.b32.xlu0 %v12212, 8
    %v12839 = vpop.permute.xlu0 %12838
    %12840 = vrot.lane.b32.xlu0 %v12278, 8
    %v12841 = vpop.permute.xlu0 %12840
    %12842 = vrot.lane.b32.xlu0 %v12344, 8
    %v12843 = vpop.permute.xlu0 %12842
    %12844 = vrot.lane.b32.xlu0 %v12410, 8
    %v12845 = vpop.permute.xlu0 %12844
    %12846 = vrot.lane.b32.xlu0 %v12476, 8
    %v12847 = vpop.permute.xlu0 %12846
    %12848 = vrot.lane.b32.xlu0 %v12542, 8
    %v12849 = vpop.permute.xlu0 %12848
    %12850 = vrot.lane.b32.xlu0 %v12608, 8
    %v12851 = vpop.permute.xlu0 %12850
    %12852 = vrot.lane.b32.xlu0 %v12674, 8
    %v12853 = vpop.permute.xlu0 %12852
    %12854 = vrot.lane.b32.xlu0 %v12740, 8
    %v12855 = vpop.permute.xlu0 %12854
    %12856 = vrot.lane.b32.xlu0 %v12806, 8
    %v12857 = vpop.permute.xlu0 %12856
    %12890 = vrot.lane.b32.xlu0 %v11799, 16
    %v12891 = vpop.permute.xlu0 %12890
    %12892 = vrot.lane.b32.xlu0 %v11865, 16
    %v12893 = vpop.permute.xlu0 %12892
    %12894 = vrot.lane.b32.xlu0 %v11931, 16
    %v12895 = vpop.permute.xlu0 %12894
    %12896 = vrot.lane.b32.xlu0 %v11997, 16
    %v12897 = vpop.permute.xlu0 %12896
    %12898 = vrot.lane.b32.xlu0 %v12063, 16
    %v12899 = vpop.permute.xlu0 %12898
    %12900 = vrot.lane.b32.xlu0 %v12129, 16
    %v12901 = vpop.permute.xlu0 %12900
    %12902 = vrot.lane.b32.xlu0 %v12195, 16
    %v12903 = vpop.permute.xlu0 %12902
    %12904 = vrot.lane.b32.xlu0 %v12261, 16
    %v12905 = vpop.permute.xlu0 %12904
    %12906 = vrot.lane.b32.xlu0 %v12327, 16
    %v12907 = vpop.permute.xlu0 %12906
    %12908 = vrot.lane.b32.xlu0 %v12393, 16
    %v12909 = vpop.permute.xlu0 %12908
    %12910 = vrot.lane.b32.xlu0 %v12459, 16
    %v12911 = vpop.permute.xlu0 %12910
    %12912 = vrot.lane.b32.xlu0 %v12525, 16
    %v12913 = vpop.permute.xlu0 %12912
    %12914 = vrot.lane.b32.xlu0 %v12591, 16
    %v12915 = vpop.permute.xlu0 %12914
    %12916 = vrot.lane.b32.xlu0 %v12657, 16
    %v12917 = vpop.permute.xlu0 %12916
    %12918 = vrot.lane.b32.xlu0 %v12723, 16
    %v12919 = vpop.permute.xlu0 %12918
    %12920 = vrot.lane.b32.xlu0 %v12789, 16
    %v12921 = vpop.permute.xlu0 %12920
    %12954 = vrot.lane.b32.xlu0 %v11817, 24
    %v12955 = vpop.permute.xlu0 %12954
    %12956 = vrot.lane.b32.xlu0 %v11883, 24
    %v12957 = vpop.permute.xlu0 %12956
    %12958 = vrot.lane.b32.xlu0 %v11949, 24
    %v12959 = vpop.permute.xlu0 %12958
    %12960 = vrot.lane.b32.xlu0 %v12015, 24
    %v12961 = vpop.permute.xlu0 %12960
    %12962 = vrot.lane.b32.xlu0 %v12081, 24
    %v12963 = vpop.permute.xlu0 %12962
    %12964 = vrot.lane.b32.xlu0 %v12147, 24
    %v12965 = vpop.permute.xlu0 %12964
    %12966 = vrot.lane.b32.xlu0 %v12213, 24
    %v12967 = vpop.permute.xlu0 %12966
    %12968 = vrot.lane.b32.xlu0 %v12279, 24
    %v12969 = vpop.permute.xlu0 %12968
    %12970 = vrot.lane.b32.xlu0 %v12345, 24
    %v12971 = vpop.permute.xlu0 %12970
    %12972 = vrot.lane.b32.xlu0 %v12411, 24
    %v12973 = vpop.permute.xlu0 %12972
    %12974 = vrot.lane.b32.xlu0 %v12477, 24
    %v12975 = vpop.permute.xlu0 %12974
    %12976 = vrot.lane.b32.xlu0 %v12543, 24
    %v12977 = vpop.permute.xlu0 %12976
    %12978 = vrot.lane.b32.xlu0 %v12609, 24
    %v12979 = vpop.permute.xlu0 %12978
    %12980 = vrot.lane.b32.xlu0 %v12675, 24
    %v12981 = vpop.permute.xlu0 %12980
    %12982 = vrot.lane.b32.xlu0 %v12741, 24
    %v12983 = vpop.permute.xlu0 %12982
    %12984 = vrot.lane.b32.xlu0 %v12807, 24
    %v12985 = vpop.permute.xlu0 %12984
    %13018 = vrot.lane.b32.xlu0 %v11808, 32
    %v13019 = vpop.permute.xlu0 %13018
    %13020 = vrot.lane.b32.xlu0 %v11874, 32
    %v13021 = vpop.permute.xlu0 %13020
    %13022 = vrot.lane.b32.xlu0 %v11940, 32
    %v13023 = vpop.permute.xlu0 %13022
    %13024 = vrot.lane.b32.xlu0 %v12006, 32
    %v13025 = vpop.permute.xlu0 %13024
    %13026 = vrot.lane.b32.xlu0 %v12072, 32
    %v13027 = vpop.permute.xlu0 %13026
    %13028 = vrot.lane.b32.xlu0 %v12138, 32
    %v13029 = vpop.permute.xlu0 %13028
    %13030 = vrot.lane.b32.xlu0 %v12204, 32
    %v13031 = vpop.permute.xlu0 %13030
    %13032 = vrot.lane.b32.xlu0 %v12270, 32
    %v13033 = vpop.permute.xlu0 %13032
    %13034 = vrot.lane.b32.xlu0 %v12336, 32
    %v13035 = vpop.permute.xlu0 %13034
    %13036 = vrot.lane.b32.xlu0 %v12402, 32
    %v13037 = vpop.permute.xlu0 %13036
    %13038 = vrot.lane.b32.xlu0 %v12468, 32
    %v13039 = vpop.permute.xlu0 %13038
    %13040 = vrot.lane.b32.xlu0 %v12534, 32
    %v13041 = vpop.permute.xlu0 %13040
    %13042 = vrot.lane.b32.xlu0 %v12600, 32
    %v13043 = vpop.permute.xlu0 %13042
    %13044 = vrot.lane.b32.xlu0 %v12666, 32
    %v13045 = vpop.permute.xlu0 %13044
    %13046 = vrot.lane.b32.xlu0 %v12732, 32
    %v13047 = vpop.permute.xlu0 %13046
    %13048 = vrot.lane.b32.xlu0 %v12798, 32
    %v13049 = vpop.permute.xlu0 %13048
    %13082 = vrot.lane.b32.xlu0 %v11818, 40
    %v13083 = vpop.permute.xlu0 %13082
    %13084 = vrot.lane.b32.xlu0 %v11884, 40
    %v13085 = vpop.permute.xlu0 %13084
    %13086 = vrot.lane.b32.xlu0 %v11950, 40
    %v13087 = vpop.permute.xlu0 %13086
    %13088 = vrot.lane.b32.xlu0 %v12016, 40
    %v13089 = vpop.permute.xlu0 %13088
    %13090 = vrot.lane.b32.xlu0 %v12082, 40
    %v13091 = vpop.permute.xlu0 %13090
    %13092 = vrot.lane.b32.xlu0 %v12148, 40
    %v13093 = vpop.permute.xlu0 %13092
    %13094 = vrot.lane.b32.xlu0 %v12214, 40
    %v13095 = vpop.permute.xlu0 %13094
    %13096 = vrot.lane.b32.xlu0 %v12280, 40
    %v13097 = vpop.permute.xlu0 %13096
    %13098 = vrot.lane.b32.xlu0 %v12346, 40
    %v13099 = vpop.permute.xlu0 %13098
    %13100 = vrot.lane.b32.xlu0 %v12412, 40
    %v13101 = vpop.permute.xlu0 %13100
    %13102 = vrot.lane.b32.xlu0 %v12478, 40
    %v13103 = vpop.permute.xlu0 %13102
    %13104 = vrot.lane.b32.xlu0 %v12544, 40
    %v13105 = vpop.permute.xlu0 %13104
    %13106 = vrot.lane.b32.xlu0 %v12610, 40
    %v13107 = vpop.permute.xlu0 %13106
    %13108 = vrot.lane.b32.xlu0 %v12676, 40
    %v13109 = vpop.permute.xlu0 %13108
    %13110 = vrot.lane.b32.xlu0 %v12742, 40
    %v13111 = vpop.permute.xlu0 %13110
    %13112 = vrot.lane.b32.xlu0 %v12808, 40
    %v13113 = vpop.permute.xlu0 %13112
    %13146 = vrot.lane.b32.xlu0 %v11815, 48
    %v13147 = vpop.permute.xlu0 %13146
    %13148 = vrot.lane.b32.xlu0 %v11881, 48
    %v13149 = vpop.permute.xlu0 %13148
    %13150 = vrot.lane.b32.xlu0 %v11947, 48
    %v13151 = vpop.permute.xlu0 %13150
    %13152 = vrot.lane.b32.xlu0 %v12013, 48
    %v13153 = vpop.permute.xlu0 %13152
    %13154 = vrot.lane.b32.xlu0 %v12079, 48
    %v13155 = vpop.permute.xlu0 %13154
    %13156 = vrot.lane.b32.xlu0 %v12145, 48
    %v13157 = vpop.permute.xlu0 %13156
    %13158 = vrot.lane.b32.xlu0 %v12211, 48
    %v13159 = vpop.permute.xlu0 %13158
    %13160 = vrot.lane.b32.xlu0 %v12277, 48
    %v13161 = vpop.permute.xlu0 %13160
    %13162 = vrot.lane.b32.xlu0 %v12343, 48
    %v13163 = vpop.permute.xlu0 %13162
    %13164 = vrot.lane.b32.xlu0 %v12409, 48
    %v13165 = vpop.permute.xlu0 %13164
    %13166 = vrot.lane.b32.xlu0 %v12475, 48
    %v13167 = vpop.permute.xlu0 %13166
    %13168 = vrot.lane.b32.xlu0 %v12541, 48
    %v13169 = vpop.permute.xlu0 %13168
    %13170 = vrot.lane.b32.xlu0 %v12607, 48
    %v13171 = vpop.permute.xlu0 %13170
    %13172 = vrot.lane.b32.xlu0 %v12673, 48
    %v13173 = vpop.permute.xlu0 %13172
    %13174 = vrot.lane.b32.xlu0 %v12739, 48
    %v13175 = vpop.permute.xlu0 %13174
    %13176 = vrot.lane.b32.xlu0 %v12805, 48
    %v13177 = vpop.permute.xlu0 %13176
    %13210 = vrot.lane.b32.xlu0 %v11819, 56
    %v13211 = vpop.permute.xlu0 %13210
    %13212 = vrot.lane.b32.xlu0 %v11885, 56
    %v13213 = vpop.permute.xlu0 %13212
    %13214 = vrot.lane.b32.xlu0 %v11951, 56
    %v13215 = vpop.permute.xlu0 %13214
    %13216 = vrot.lane.b32.xlu0 %v12017, 56
    %v13217 = vpop.permute.xlu0 %13216
    %13218 = vrot.lane.b32.xlu0 %v12083, 56
    %v13219 = vpop.permute.xlu0 %13218
    %13220 = vrot.lane.b32.xlu0 %v12149, 56
    %v13221 = vpop.permute.xlu0 %13220
    %13222 = vrot.lane.b32.xlu0 %v12215, 56
    %v13223 = vpop.permute.xlu0 %13222
    %13224 = vrot.lane.b32.xlu0 %v12281, 56
    %v13225 = vpop.permute.xlu0 %13224
    %13226 = vrot.lane.b32.xlu0 %v12347, 56
    %v13227 = vpop.permute.xlu0 %13226
    %13228 = vrot.lane.b32.xlu0 %v12413, 56
    %v13229 = vpop.permute.xlu0 %13228
    %13230 = vrot.lane.b32.xlu0 %v12479, 56
    %v13231 = vpop.permute.xlu0 %13230
    %13232 = vrot.lane.b32.xlu0 %v12545, 56
    %v13233 = vpop.permute.xlu0 %13232
    %13234 = vrot.lane.b32.xlu0 %v12611, 56
    %v13235 = vpop.permute.xlu0 %13234
    %13236 = vrot.lane.b32.xlu0 %v12677, 56
    %v13237 = vpop.permute.xlu0 %13236
    %13238 = vrot.lane.b32.xlu0 %v12743, 56
    %v13239 = vpop.permute.xlu0 %13238
    %13240 = vrot.lane.b32.xlu0 %v12809, 56
    %v13241 = vpop.permute.xlu0 %13240
    %v13258 = vsel %vm131, %v11792, %v12827
    %v13259 = vsel %vm131, %v11858, %v12829
    %v13260 = vsel %vm131, %v11924, %v12831
    %v13261 = vsel %vm131, %v11990, %v12833
    %v13262 = vsel %vm131, %v12056, %v12835
    %v13263 = vsel %vm131, %v12122, %v12837
    %v13264 = vsel %vm131, %v12188, %v12839
    %v13265 = vsel %vm131, %v12254, %v12841
    %v13266 = vsel %vm131, %v12320, %v12843
    %v13267 = vsel %vm131, %v12386, %v12845
    %v13268 = vsel %vm131, %v12452, %v12847
    %v13269 = vsel %vm131, %v12518, %v12849
    %v13270 = vsel %vm131, %v12584, %v12851
    %v13271 = vsel %vm131, %v12650, %v12853
    %v13272 = vsel %vm131, %v12716, %v12855
    %v13273 = vsel %vm131, %v12782, %v12857
    %v13274 = vsel %vm3188, %v13258, %v12891
    %v13275 = vsel %vm3188, %v13259, %v12893
    %v13276 = vsel %vm3188, %v13260, %v12895
    %v13277 = vsel %vm3188, %v13261, %v12897
    %v13278 = vsel %vm3188, %v13262, %v12899
    %v13279 = vsel %vm3188, %v13263, %v12901
    %v13280 = vsel %vm3188, %v13264, %v12903
    %v13281 = vsel %vm3188, %v13265, %v12905
    %v13282 = vsel %vm3188, %v13266, %v12907
    %v13283 = vsel %vm3188, %v13267, %v12909
    %v13284 = vsel %vm3188, %v13268, %v12911
    %v13285 = vsel %vm3188, %v13269, %v12913
    %v13286 = vsel %vm3188, %v13270, %v12915
    %v13287 = vsel %vm3188, %v13271, %v12917
    %v13288 = vsel %vm3188, %v13272, %v12919
    %v13289 = vsel %vm3188, %v13273, %v12921
    %v13290 = vsel %vm3318, %v13274, %v12955
    %v13291 = vsel %vm3318, %v13275, %v12957
    %v13292 = vsel %vm3318, %v13276, %v12959
    %v13293 = vsel %vm3318, %v13277, %v12961
    %v13294 = vsel %vm3318, %v13278, %v12963
    %v13295 = vsel %vm3318, %v13279, %v12965
    %v13296 = vsel %vm3318, %v13280, %v12967
    %v13297 = vsel %vm3318, %v13281, %v12969
    %v13298 = vsel %vm3318, %v13282, %v12971
    %v13299 = vsel %vm3318, %v13283, %v12973
    %v13300 = vsel %vm3318, %v13284, %v12975
    %v13301 = vsel %vm3318, %v13285, %v12977
    %v13302 = vsel %vm3318, %v13286, %v12979
    %v13303 = vsel %vm3318, %v13287, %v12981
    %v13304 = vsel %vm3318, %v13288, %v12983
    %v13305 = vsel %vm3318, %v13289, %v12985
    %v13306 = vsel %vm3448, %v13290, %v13019
    %v13307 = vsel %vm3448, %v13291, %v13021
    %v13308 = vsel %vm3448, %v13292, %v13023
    %v13309 = vsel %vm3448, %v13293, %v13025
    %v13310 = vsel %vm3448, %v13294, %v13027
    %v13311 = vsel %vm3448, %v13295, %v13029
    %v13312 = vsel %vm3448, %v13296, %v13031
    %v13313 = vsel %vm3448, %v13297, %v13033
    %v13314 = vsel %vm3448, %v13298, %v13035
    %v13315 = vsel %vm3448, %v13299, %v13037
    %v13316 = vsel %vm3448, %v13300, %v13039
    %v13317 = vsel %vm3448, %v13301, %v13041
    %v13318 = vsel %vm3448, %v13302, %v13043
    %v13319 = vsel %vm3448, %v13303, %v13045
    %v13320 = vsel %vm3448, %v13304, %v13047
    %v13321 = vsel %vm3448, %v13305, %v13049
    %v13322 = vsel %vm7117, %v13306, %v13083
    %v13323 = vsel %vm7117, %v13307, %v13085
    %v13324 = vsel %vm7117, %v13308, %v13087
    %v13325 = vsel %vm7117, %v13309, %v13089
    %v13326 = vsel %vm7117, %v13310, %v13091
    %v13327 = vsel %vm7117, %v13311, %v13093
    %v13328 = vsel %vm7117, %v13312, %v13095
    %v13329 = vsel %vm7117, %v13313, %v13097
    %v13330 = vsel %vm7117, %v13314, %v13099
    %v13331 = vsel %vm7117, %v13315, %v13101
    %v13332 = vsel %vm7117, %v13316, %v13103
    %v13333 = vsel %vm7117, %v13317, %v13105
    %v13334 = vsel %vm7117, %v13318, %v13107
    %v13335 = vsel %vm7117, %v13319, %v13109
    %v13336 = vsel %vm7117, %v13320, %v13111
    %v13337 = vsel %vm7117, %v13321, %v13113
    %v13338 = vsel %vm7182, %v13322, %v13147
    %v13339 = vsel %vm7182, %v13323, %v13149
    %v13340 = vsel %vm7182, %v13324, %v13151
    %v13341 = vsel %vm7182, %v13325, %v13153
    %v13342 = vsel %vm7182, %v13326, %v13155
    %v13343 = vsel %vm7182, %v13327, %v13157
    %v13344 = vsel %vm7182, %v13328, %v13159
    %v13345 = vsel %vm7182, %v13329, %v13161
    %v13346 = vsel %vm7182, %v13330, %v13163
    %v13347 = vsel %vm7182, %v13331, %v13165
    %v13348 = vsel %vm7182, %v13332, %v13167
    %v13349 = vsel %vm7182, %v13333, %v13169
    %v13350 = vsel %vm7182, %v13334, %v13171
    %v13351 = vsel %vm7182, %v13335, %v13173
    %v13352 = vsel %vm7182, %v13336, %v13175
    %v13353 = vsel %vm7182, %v13337, %v13177
    %v13354 = vsel %vm7247, %v13338, %v13211
    %v13355 = vsel %vm7247, %v13339, %v13213
    %v13356 = vsel %vm7247, %v13340, %v13215
    %v13357 = vsel %vm7247, %v13341, %v13217
    %v13358 = vsel %vm7247, %v13342, %v13219
    %v13359 = vsel %vm7247, %v13343, %v13221
    %v13360 = vsel %vm7247, %v13344, %v13223
    %v13361 = vsel %vm7247, %v13345, %v13225
    %v13362 = vsel %vm7247, %v13346, %v13227
    %v13363 = vsel %vm7247, %v13347, %v13229
    %v13364 = vsel %vm7247, %v13348, %v13231
    %v13365 = vsel %vm7247, %v13349, %v13233
    %v13366 = vsel %vm7247, %v13350, %v13235
    %v13367 = vsel %vm7247, %v13351, %v13237
    %v13368 = vsel %vm7247, %v13352, %v13239
    %v13369 = vsel %vm7247, %v13353, %v13241
    %vm13370 = vcmask 517120
    %v13371 = vsel %vm13370, %v13354, -inf
    %v13372 = vrot.slane %v13371, 4
    %v13373 = vmax.f32 %v13371, %v13372
    %v13374 = vrot.slane %v13373, 2
    %v13375 = vmax.f32 %v13373, %v13374
    %v13376 = vrot.slane %v13375, 1
    %v13377 = vmax.f32 %v13375, %v13376
    %v13378 = vsel %vm13370, %v13355, -inf
    %v13379 = vrot.slane %v13378, 4
    %v13380 = vmax.f32 %v13378, %v13379
    %v13381 = vrot.slane %v13380, 2
    %v13382 = vmax.f32 %v13380, %v13381
    %v13383 = vrot.slane %v13382, 1
    %v13384 = vmax.f32 %v13382, %v13383
    %v13385 = vsel %vm13370, %v13356, -inf
    %v13386 = vrot.slane %v13385, 4
    %v13387 = vmax.f32 %v13385, %v13386
    %v13388 = vrot.slane %v13387, 2
    %v13389 = vmax.f32 %v13387, %v13388
    %v13390 = vrot.slane %v13389, 1
    %v13391 = vmax.f32 %v13389, %v13390
    %v13392 = vsel %vm13370, %v13357, -inf
    %v13393 = vrot.slane %v13392, 4
    %v13394 = vmax.f32 %v13392, %v13393
    %v13395 = vrot.slane %v13394, 2
    %v13396 = vmax.f32 %v13394, %v13395
    %v13397 = vrot.slane %v13396, 1
    %v13398 = vmax.f32 %v13396, %v13397
    %v13399 = vsel %vm13370, %v13358, -inf
    %v13400 = vrot.slane %v13399, 4
    %v13401 = vmax.f32 %v13399, %v13400
    %v13402 = vrot.slane %v13401, 2
    %v13403 = vmax.f32 %v13401, %v13402
    %v13404 = vrot.slane %v13403, 1
    %v13405 = vmax.f32 %v13403, %v13404
    %v13406 = vsel %vm13370, %v13359, -inf
    %v13407 = vrot.slane %v13406, 4
    %v13408 = vmax.f32 %v13406, %v13407
    %v13409 = vrot.slane %v13408, 2
    %v13410 = vmax.f32 %v13408, %v13409
    %v13411 = vrot.slane %v13410, 1
    %v13412 = vmax.f32 %v13410, %v13411
    %v13413 = vsel %vm13370, %v13360, -inf
    %v13414 = vrot.slane %v13413, 4
    %v13415 = vmax.f32 %v13413, %v13414
    %v13416 = vrot.slane %v13415, 2
    %v13417 = vmax.f32 %v13415, %v13416
    %v13418 = vrot.slane %v13417, 1
    %v13419 = vmax.f32 %v13417, %v13418
    %v13420 = vsel %vm13370, %v13361, -inf
    %v13421 = vrot.slane %v13420, 4
    %v13422 = vmax.f32 %v13420, %v13421
    %v13423 = vrot.slane %v13422, 2
    %v13424 = vmax.f32 %v13422, %v13423
    %v13425 = vrot.slane %v13424, 1
    %v13426 = vmax.f32 %v13424, %v13425
    %v13427 = vsel %vm13370, %v13362, -inf
    %v13428 = vrot.slane %v13427, 4
    %v13429 = vmax.f32 %v13427, %v13428
    %v13430 = vrot.slane %v13429, 2
    %v13431 = vmax.f32 %v13429, %v13430
    %v13432 = vrot.slane %v13431, 1
    %v13433 = vmax.f32 %v13431, %v13432
    %v13434 = vsel %vm13370, %v13363, -inf
    %v13435 = vrot.slane %v13434, 4
    %v13436 = vmax.f32 %v13434, %v13435
    %v13437 = vrot.slane %v13436, 2
    %v13438 = vmax.f32 %v13436, %v13437
    %v13439 = vrot.slane %v13438, 1
    %v13440 = vmax.f32 %v13438, %v13439
    %v13441 = vsel %vm13370, %v13364, -inf
    %v13442 = vrot.slane %v13441, 4
    %v13443 = vmax.f32 %v13441, %v13442
    %v13444 = vrot.slane %v13443, 2
    %v13445 = vmax.f32 %v13443, %v13444
    %v13446 = vrot.slane %v13445, 1
    %v13447 = vmax.f32 %v13445, %v13446
    %v13448 = vsel %vm13370, %v13365, -inf
    %v13449 = vrot.slane %v13448, 4
    %v13450 = vmax.f32 %v13448, %v13449
    %v13451 = vrot.slane %v13450, 2
    %v13452 = vmax.f32 %v13450, %v13451
    %v13453 = vrot.slane %v13452, 1
    %v13454 = vmax.f32 %v13452, %v13453
    %v13455 = vsel %vm13370, %v13366, -inf
    %v13456 = vrot.slane %v13455, 4
    %v13457 = vmax.f32 %v13455, %v13456
    %v13458 = vrot.slane %v13457, 2
    %v13459 = vmax.f32 %v13457, %v13458
    %v13460 = vrot.slane %v13459, 1
    %v13461 = vmax.f32 %v13459, %v13460
    %v13462 = vsel %vm13370, %v13367, -inf
    %v13463 = vrot.slane %v13462, 4
    %v13464 = vmax.f32 %v13462, %v13463
    %v13465 = vrot.slane %v13464, 2
    %v13466 = vmax.f32 %v13464, %v13465
    %v13467 = vrot.slane %v13466, 1
    %v13468 = vmax.f32 %v13466, %v13467
    %v13469 = vsel %vm13370, %v13368, -inf
    %v13470 = vrot.slane %v13469, 4
    %v13471 = vmax.f32 %v13469, %v13470
    %v13472 = vrot.slane %v13471, 2
    %v13473 = vmax.f32 %v13471, %v13472
    %v13474 = vrot.slane %v13473, 1
    %v13475 = vmax.f32 %v13473, %v13474
    %v13476 = vsel %vm13370, %v13369, -inf
    %v13477 = vrot.slane %v13476, 4
    %v13478 = vmax.f32 %v13476, %v13477
    %v13479 = vrot.slane %v13478, 2
    %v13480 = vmax.f32 %v13478, %v13479
    %v13481 = vrot.slane %v13480, 1
    %v13482 = vmax.f32 %v13480, %v13481
    %v13499 = vsel %vm11491, %v13384, %v13377
    %v13500 = vsel %vm11493, %v13391, %v13499
    %v13501 = vsel %vm11495, %v13398, %v13500
    %v13502 = vsel %vm11497, %v13405, %v13501
    %v13503 = vsel %vm11499, %v13412, %v13502
    %v13504 = vsel %vm11501, %v13419, %v13503
    %v13505 = vsel %vm11503, %v13426, %v13504
    %v13506 = vsel %vm11491, %v13440, %v13433
    %v13507 = vsel %vm11493, %v13447, %v13506
    %v13508 = vsel %vm11495, %v13454, %v13507
    %v13509 = vsel %vm11497, %v13461, %v13508
    %v13510 = vsel %vm11499, %v13468, %v13509
    %v13511 = vsel %vm11501, %v13475, %v13510
    %v13512 = vsel %vm11503, %v13482, %v13511
    %13515 = vst.msk [vmem:[#allocation4] sm:$0xff] %vm7312, %v13505
    %13516 = vst.msk [vmem:[#allocation4 + $0x8] sm:$0xff] %vm7312, %v13512
    // Predicated region
    $region22: #{tpu_custom_call.1} parent=1 // pred_check
      _
    $region23: #{tpu_custom_call.1} parent=1 // pred_check_branch
      %13518 = sbr.rel (0) target = $region25
    $region24: #{tpu_custom_call.1} parent=1 // pred_region
      %s13520 = ssub.s32 256, 256
      %13521 = vsyncadd [#allocation5], %s13520
      %s13522 = sshll.u32 [#allocation4], 4
      %s13523 = int_to_ptr.vmem [resolvable:$true] %s13522
      %13528 = dma.vmem_to_hbm [thread:$0]  %s13523, 256, %s5, [#allocation5], 128, 128, 8
    $region25: #{tpu_custom_call.1} parent=1 // pred_fallthru
      _
    // Predicated region
    $region26: #{tpu_custom_call.1} parent=1 // pred_check
      _
    $region27: #{tpu_custom_call.1} parent=1 // pred_check_branch
      %13530 = sbr.rel (0) target = $region29
    $region28: #{tpu_custom_call.1} parent=1 // pred_region
      %13531 = dma.done [#allocation5], 256
    $region29: #{tpu_custom_call.1} parent=1 // pred_fallthru
      _
    %13532 = vsyncpa [#allocation5], 1

</llo_original>
